<compile_context>
chip_gen: v7x
topology: tpu7x:2x2x1
jax: 0.10.0
libtpu: 0.0.40
codegen_flags: <defaults>
</compile_context>

<pallas_src>
import jax
import jax.numpy as jnp
from jax.experimental import pallas as pl
from jax.experimental.pallas import tpu as pltpu


def h2_kernel(xp_ref, w1_ref, w2_ref, w12_ref, w21_ref, w3_ref, w5_ref, sh_ref,
              o_ref, p1pad_ref, p2pad_ref, t1pad_ref, t2pad_ref):
    f32 = jnp.float32
    _, hp4, wp4, cin = xp_ref.shape          # xp is the input padded by 2 on H and W
    H, W = hp4 - 4, wp4 - 4
    cout = o_ref.shape[3]

    # interior (unpadded) view of the input tile, (H, W, Cin) in bf16
    x_ctr = xp_ref[0, 2:2 + H, 2:2 + W, :]
    x_f32 = x_ctr.astype(f32)

    # ---- adaptive average pools as single cross-axis reductions ---------------------
    p1 = jnp.sum(x_f32, axis=1) * (1.0 / W)        # (H, Cin): AdaptiveAvgPool2d((H, 1))
    p2 = jnp.sum(x_f32, axis=0) * (1.0 / H)        # (W, Cin): AdaptiveAvgPool2d((1, W))

    # ---- branch 1: conv1 (3,1) [bn1 folded] -> conv1_2 (3,1) dil 2 [bias/bn3 folded] -
    # zero-padded scratch + static slices replace the old dense shift-matrix matmuls
    p1pad_ref[...] = jnp.zeros((H + 4, cin), f32)
    p1pad_ref[2:2 + H, :] = p1
    t1 = jnp.zeros((H, cout), f32)
    for k in range(3):                              # tap offset k-1, pad 1
        t1 = t1 + jnp.dot(p1pad_ref[k + 1:k + 1 + H, :], w1_ref[k],
                          preferred_element_type=f32)
    t1 = t1 + sh_ref[0:1, :]                        # folded bn1 shift

    t1pad_ref[...] = jnp.zeros((H + 4, cout), f32)
    t1pad_ref[2:2 + H, :] = t1
    u1 = jnp.zeros((H, cout), f32)
    for k in range(3):                              # tap offset 2k-2, pad 2
        u1 = u1 + jnp.dot(t1pad_ref[2 * k:2 * k + H, :], w12_ref[k],
                          preferred_element_type=f32)
    # conv1_2 bias and bn3 shift are folded into sh_ref[2]

    # ---- branch 2: conv2 (1,3) [bn2 folded] -> conv2_1 (1,3) dil 2 [bias/bn4 folded] -
    p2pad_ref[...] = jnp.zeros((W + 4, cin), f32)
    p2pad_ref[2:2 + W, :] = p2
    t2 = jnp.zeros((W, cout), f32)
    for k in range(3):
        t2 = t2 + jnp.dot(p2pad_ref[k + 1:k + 1 + W, :], w2_ref[k],
                          preferred_element_type=f32)
    t2 = t2 + sh_ref[1:2, :]                        # folded bn2 shift

    t2pad_ref[...] = jnp.zeros((W + 4, cout), f32)
    t2pad_ref[2:2 + W, :] = t2
    u2 = jnp.zeros((W, cout), f32)
    for k in range(3):
        u2 = u2 + jnp.dot(t2pad_ref[2 * k:2 * k + W, :], w21_ref[k],
                          preferred_element_type=f32)

    # ---- conv3 (3x3, dil 2) [bn5 scale folded] and conv5 (1x1) as whole-tile GEMMs ---
    w5 = w5_ref[...]                                               # hoisted, loaded once
    c5 = jnp.dot(x_ctr.reshape(H * W, cin), w5,                    # (H*W, Cout), bf16 MXU
                 preferred_element_type=f32)

    acc = jnp.zeros((H * W, cout), f32)
    for kh in range(3):
        for kw in range(3):
            patch = xp_ref[0, 2 * kh:2 * kh + H, 2 * kw:2 * kw + W, :]
            acc = acc + jnp.dot(patch.reshape(H * W, cin), w3_ref[kh * 3 + kw],
                                preferred_element_type=f32)
    acc = acc + sh_ref[2:3, :]                      # combined bn3/bn4/bn5 shifts + biases

    # ---- combine: x4 = expand(u1) + expand(u2) + conv3', out = conv5(x) * x4 ---------
    x4 = (acc.reshape(H, W, cout)
          + u1[:, None, :]                          # branch1 broadcast over W
          + u2[None, :, :])                         # branch2 broadcast over H
    out = c5.reshape(H, W, cout) * x4
    o_ref[0] = out.astype(o_ref.dtype)              # single lane-dense slab store


def make_params(inplanes, outplanes, key):
    f32 = jnp.float32
    k = jax.random.split(key, 11)

    def rn(kk, shape, fan_in):
        return jax.random.normal(kk, shape, f32) / jnp.sqrt(float(fan_in))

    w1 = rn(k[0], (3, inplanes, outplanes), 3 * inplanes)       # conv1  (3,1), tap-major
    w2 = rn(k[1], (3, inplanes, outplanes), 3 * inplanes)       # conv2  (1,3)
    w12 = rn(k[2], (3, outplanes, outplanes), 3 * outplanes)    # conv1_2 (3,1) dil 2
    w21 = rn(k[3], (3, outplanes, outplanes), 3 * outplanes)    # conv2_1 (1,3) dil 2
    w3 = rn(k[4], (9, inplanes, outplanes), 9 * inplanes)       # conv3 3x3 dil 2 (kh*3+kw)
    w5 = rn(k[5], (inplanes, outplanes), inplanes)              # conv5 1x1
    cb = 0.1 * jax.random.normal(k[6], (2, outplanes), f32)     # conv1_2 / conv2_1 biases

    gamma = 1.0 + 0.1 * jax.random.normal(k[7], (5, outplanes), f32)
    beta = 0.1 * jax.random.normal(k[8], (5, outplanes), f32)
    rmean = 0.1 * jax.random.normal(k[9], (5, outplanes), f32)
    rvar = 1.0 + 0.1 * jnp.abs(jax.random.normal(k[10], (5, outplanes), f32))
    eps = 1e-5
    bns = gamma / jnp.sqrt(rvar + eps)       # folded BN scale (rows: bn1,bn2,bn3,bn4,bn5)
    bnb = beta - rmean * bns                 # folded BN shift
    return dict(w1=w1, w2=w2, w12=w12, w21=w21, w3=w3, w5=w5, cb=cb, bns=bns, bnb=bnb)


@jax.jit
def cnb1lock_forward(x_nchw, params):
    N, Cin, H, W = x_nchw.shape
    Cout = params["w5"].shape[1]
    f32, bf16 = jnp.float32, jnp.bfloat16
    bns, bnb, cb = params["bns"], params["bnb"], params["cb"]

    # Fold inference-mode BN scales (and the conv1_2/conv2_1 biases + BN shifts) into the
    # weights / a single additive per-channel vector.  Big conv weights go bf16 for the MXU.
    w1f = w1 = params["w1"] * bns[0][None, None, :]                # conv1 * s(bn1)
    w2f = params["w2"] * bns[1][None, None, :]                     # conv2 * s(bn2)
    w12f = params["w12"] * bns[2][None, None, :]                   # conv1_2 * s(bn3)
    w21f = params["w21"] * bns[3][None, None, :]                   # conv2_1 * s(bn4)
    w3f = (params["w3"] * bns[4][None, None, :]).astype(bf16)      # conv3 * s(bn5)
    w5b = params["w5"].astype(bf16)
    shifts = jnp.stack([
        bnb[0],                                                    # post-conv1 shift (bn1)
        bnb[1],                                                    # post-conv2 shift (bn2)
        cb[0] * bns[2] + bnb[2] + cb[1] * bns[3] + bnb[3] + bnb[4] # combined final shift
    ]).astype(f32)

    x_nhwc = jnp.transpose(x_nchw, (0, 2, 3, 1)).astype(bf16)
    x_pad = jnp.pad(x_nhwc, ((0, 0), (2, 2), (2, 2), (0, 0)))      # pad 2 for dilated 3x3

    # Whole-image-per-batch blocking: size the scoped VMEM limit from the real block
    # footprint (x2 double buffering).  For production-sized H/W/C (esp. v7x's 64 MiB
    # physical VMEM) tile H into the grid with a +4-row halo instead.
    blk_bytes = 2 * ((H + 4) * (W + 4) * Cin * 2 + H * W * Cout * 4)
    vmem_limit = max(32 * 1024 * 1024, 2 * blk_bytes)

    zero3 = lambda n: (0, 0, 0)
    zero2 = lambda n: (0, 0)

    out_nhwc = pl.pallas_call(
        h2_kernel,
        out_shape=jax.ShapeDtypeStruct((N, H, W, Cout), jnp.float32),
        grid=(N,),
        in_specs=[
            pl.BlockSpec((1, H + 4, W + 4, Cin), lambda n: (n, 0, 0, 0)),
            pl.BlockSpec((3, Cin, Cout), zero3),     # w1  (bn1 folded)
            pl.BlockSpec((3, Cin, Cout), zero3),     # w2  (bn2 folded)
            pl.BlockSpec((3, Cout, Cout), zero3),    # w12 (bn3 folded)
            pl.BlockSpec((3, Cout, Cout), zero3),    # w21 (bn4 folded)
            pl.BlockSpec((9, Cin, Cout), zero3),     # w3  (bn5 folded, bf16)
            pl.BlockSpec((Cin, Cout), zero2),        # w5  (bf16)
            pl.BlockSpec((3, Cout), zero2),          # additive shifts
        ],
        out_specs=pl.BlockSpec((1, H, W, Cout), lambda n: (n, 0, 0, 0)),
        scratch_shapes=[
            pltpu.VMEM((H + 4, Cin), jnp.float32),   # zero-padded pooled column
            pltpu.VMEM((W + 4, Cin), jnp.float32),   # zero-padded pooled row
            pltpu.VMEM((H + 4, Cout), jnp.float32),  # zero-padded branch1 intermediate
            pltpu.VMEM((W + 4, Cout), jnp.float32),  # zero-padded branch2 intermediate
        ],
        compiler_params=pltpu.CompilerParams(
            dimension_semantics=("parallel",),       # batch sharded across TCs on v7x
            vmem_limit_bytes=vmem_limit),
    )(x_pad, w1f, w2f, w12f, w21f, w3f, w5b, shifts)

    return jnp.transpose(out_nhwc, (0, 3, 1, 2))                    # back to NCHW


def reference_forward(x, params):
    # Pure-JAX NCHW reference mirroring the PyTorch module (inference-mode BN).
    dn = ("NCHW", "OIHW", "NCHW")
    prec = jax.lax.Precision.HIGHEST

    def conv(inp, w, padding, dil):
        return jax.lax.conv_general_dilated(inp, w, window_strides=(1, 1),
                                            padding=padding, rhs_dilation=dil,
                                            dimension_numbers=dn, precision=prec)

    def bn(t, i):
        return (t * params["bns"][i][None, :, None, None]
                + params["bnb"][i][None, :, None, None])

    N, Cin, H, W = x.shape
    Cout = params["w5"].shape[1]
    w1 = jnp.transpose(params["w1"], (2, 1, 0))[:, :, :, None]
    w2 = jnp.transpose(params["w2"], (2, 1, 0))[:, :, None, :]
    w12 = jnp.transpose(params["w12"], (2, 1, 0))[:, :, :, None]
    w21 = jnp.transpose(params["w21"], (2, 1, 0))[:, :, None, :]
    w3 = jnp.transpose(params["w3"].reshape(3, 3, Cin, Cout), (3, 2, 0, 1))
    w5 = jnp.transpose(params["w5"], (1, 0))[:, :, None, None]
    b12 = params["cb"][0][None, :, None, None]
    b21 = params["cb"][1][None, :, None, None]

    x1 = jnp.mean(x, axis=3, keepdims=True)
    x1 = bn(conv(x1, w1, ((1, 1), (0, 0)), (1, 1)), 0)
    x1 = bn(conv(x1, w12, ((2, 2), (0, 0)), (2, 1)) + b12, 2)
    x1 = jnp.broadcast_to(x1, (N, Cout, H, W))

    x2 = jnp.mean(x, axis=2, keepdims=True)
    x2 = bn(conv(x2, w2, ((0, 0), (1, 1)), (1, 1)), 1)
    x2 = bn(conv(x2, w21, ((0, 0), (2, 2)), (1, 2)) + b21, 3)
    x2 = jnp.broadcast_to(x2, (N, Cout, H, W))

    x3 = bn(conv(x, w3, ((2, 2), (2, 2)), (2, 2)), 4)

    x4 = x1 + x2 + x3
    x5 = conv(x, w5, ((0, 0), (0, 0)), (1, 1))
    return x5 * x4


if __name__ == "__main__":
    key = jax.random.PRNGKey(0)
    kx, kp = jax.random.split(key)
    N, Cin, Cout, H, W = 2, 4, 8, 16, 16

    x = jax.random.normal(kx, (N, Cin, H, W), jnp.float32)
    params = make_params(Cin, Cout, kp)

    out = cnb1lock_forward(x, params)
    out = jax.block_until_ready(out)

    # Compare against the f32 reference on the same bf16-rounded input the kernel sees.
    # Tolerance accounts for bf16 weights/activations on the MXU vs f32 HIGHEST reference.
    x_q = x.astype(jnp.bfloat16).astype(jnp.float32)
    ref = reference_forward(x_q, params)
    err = float(jnp.max(jnp.abs(out - ref)))
    if not jnp.allclose(out, ref, atol=1e-1, rtol=1e-1):
        raise AssertionError(f"Pallas kernel mismatch vs JAX reference, max |err| = {err}")

    print("KERNEL_OK")
</pallas_src>

<mosaic_0001>
module attributes {stable_mosaic.version = 11 : i64} {
  func.func @h2_kernel(%arg0: i32, %arg1: memref<1x20x20x4xbf16, #tpu.memory_space<vmem>>, %arg2: memref<3x4x8xf32, #tpu.memory_space<vmem>>, %arg3: memref<3x4x8xf32, #tpu.memory_space<vmem>>, %arg4: memref<3x8x8xf32, #tpu.memory_space<vmem>>, %arg5: memref<3x8x8xf32, #tpu.memory_space<vmem>>, %arg6: memref<9x4x8xbf16, #tpu.memory_space<vmem>>, %arg7: memref<4x8xbf16, #tpu.memory_space<vmem>>, %arg8: memref<3x8xf32, #tpu.memory_space<vmem>>, %arg9: memref<1x16x16x8xf32, #tpu.memory_space<vmem>>, %arg10: memref<20x4xf32, #tpu.memory_space<vmem>>, %arg11: memref<20x4xf32, #tpu.memory_space<vmem>>, %arg12: memref<20x8xf32, #tpu.memory_space<vmem>>, %arg13: memref<20x8xf32, #tpu.memory_space<vmem>>) attributes {dimension_semantics = [#tpu.dimension_semantics<parallel>], iteration_bounds = array<i64: 2>, scalar_prefetch = 0 : i64, scratch_operands = 4 : i64, tpu.core_type = #tpu.core_type<tc>, window_params = [{transform_indices = @transform_0, window_bounds = array<i64: 1, 20, 20, 4>}, {pipeline_mode = #tpu.pipeline_mode<synchronous>, transform_indices = @transform_1, window_bounds = array<i64: 3, 4, 8>}, {pipeline_mode = #tpu.pipeline_mode<synchronous>, transform_indices = @transform_2, window_bounds = array<i64: 3, 4, 8>}, {pipeline_mode = #tpu.pipeline_mode<synchronous>, transform_indices = @transform_3, window_bounds = array<i64: 3, 8, 8>}, {pipeline_mode = #tpu.pipeline_mode<synchronous>, transform_indices = @transform_4, window_bounds = array<i64: 3, 8, 8>}, {pipeline_mode = #tpu.pipeline_mode<synchronous>, transform_indices = @transform_5, window_bounds = array<i64: 9, 4, 8>}, {pipeline_mode = #tpu.pipeline_mode<synchronous>, transform_indices = @transform_6, window_bounds = array<i64: 4, 8>}, {pipeline_mode = #tpu.pipeline_mode<synchronous>, transform_indices = @transform_7, window_bounds = array<i64: 3, 8>}, {transform_indices = @transform_8, window_bounds = array<i64: 1, 16, 16, 8>}]} {
    %c0 = arith.constant 0 : index
    %c2 = arith.constant 2 : index
    %c2_0 = arith.constant 2 : index
    %c0_1 = arith.constant 0 : index
    %0 = vector.load %arg1[%c0, %c2, %c2_0, %c0_1] : memref<1x20x20x4xbf16, #tpu.memory_space<vmem>>, vector<1x16x16x4xbf16>
    %1 = vector.shape_cast %0 : vector<1x16x16x4xbf16> to vector<16x16x4xbf16>
    %2 = arith.extf %1 : vector<16x16x4xbf16> to vector<16x16x4xf32>
    %cst = arith.constant dense<0.000000e+00> : vector<16x4xf32>
    %3 = vector.multi_reduction <add>, %2, %cst [1] : vector<16x16x4xf32> to vector<16x4xf32>
    %cst_2 = arith.constant 6.250000e-02 : f32
    %4 = vector.broadcast %cst_2 : f32 to vector<16x4xf32>
    %5 = arith.mulf %3, %4 : vector<16x4xf32>
    %cst_3 = arith.constant dense<0.000000e+00> : vector<16x4xf32>
    %6 = vector.multi_reduction <add>, %2, %cst_3 [0] : vector<16x16x4xf32> to vector<16x4xf32>
    %cst_4 = arith.constant 6.250000e-02 : f32
    %7 = vector.broadcast %cst_4 : f32 to vector<16x4xf32>
    %8 = arith.mulf %6, %7 : vector<16x4xf32>
    %cst_5 = arith.constant 0.000000e+00 : f32
    %9 = vector.broadcast %cst_5 : f32 to vector<20x4xf32>
    %c0_6 = arith.constant 0 : index
    %c0_7 = arith.constant 0 : index
    %10 = vector.load %arg10[%c0_6, %c0_7] : memref<20x4xf32, #tpu.memory_space<vmem>>, vector<20x4xf32>
    tpu.vector_store %arg10[%c0_6, %c0_7], %9 {strides = array<i32>} : memref<20x4xf32, #tpu.memory_space<vmem>>, vector<20x4xf32>,
    %c2_8 = arith.constant 2 : index
    %c0_9 = arith.constant 0 : index
    %11 = vector.load %arg10[%c2_8, %c0_9] : memref<20x4xf32, #tpu.memory_space<vmem>>, vector<16x4xf32>
    tpu.vector_store %arg10[%c2_8, %c0_9], %5 {strides = array<i32>} : memref<20x4xf32, #tpu.memory_space<vmem>>, vector<16x4xf32>,
    %cst_10 = arith.constant 0.000000e+00 : f32
    %12 = vector.broadcast %cst_10 : f32 to vector<16x8xf32>
    %c1 = arith.constant 1 : index
    %c0_11 = arith.constant 0 : index
    %13 = vector.load %arg10[%c1, %c0_11] : memref<20x4xf32, #tpu.memory_space<vmem>>, vector<16x4xf32>
    %c0_12 = arith.constant 0 : index
    %c0_13 = arith.constant 0 : index
    %c0_14 = arith.constant 0 : index
    %14 = vector.load %arg2[%c0_12, %c0_13, %c0_14] : memref<3x4x8xf32, #tpu.memory_space<vmem>>, vector<1x4x8xf32>
    %15 = vector.shape_cast %14 : vector<1x4x8xf32> to vector<4x8xf32>
    %cst_15 = arith.constant dense<0.000000e+00> : vector<16x8xf32>
    %16 = tpu.matmul %13, %15, %cst_15 {dimension_numbers = #tpu.dot_dimension_numbers<[1], [0], [0], [1], [0, 0, 1, 1], [], []>} : vector<16x4xf32>, vector<4x8xf32>, vector<16x8xf32> -> vector<16x8xf32>
    %17 = arith.addf %12, %16 : vector<16x8xf32>
    %c2_16 = arith.constant 2 : index
    %c0_17 = arith.constant 0 : index
    %18 = vector.load %arg10[%c2_16, %c0_17] : memref<20x4xf32, #tpu.memory_space<vmem>>, vector<16x4xf32>
    %c1_18 = arith.constant 1 : index
    %c0_19 = arith.constant 0 : index
    %c0_20 = arith.constant 0 : index
    %19 = vector.load %arg2[%c1_18, %c0_19, %c0_20] : memref<3x4x8xf32, #tpu.memory_space<vmem>>, vector<1x4x8xf32>
    %20 = vector.shape_cast %19 : vector<1x4x8xf32> to vector<4x8xf32>
    %cst_21 = arith.constant dense<0.000000e+00> : vector<16x8xf32>
    %21 = tpu.matmul %18, %20, %cst_21 {dimension_numbers = #tpu.dot_dimension_numbers<[1], [0], [0], [1], [0, 0, 1, 1], [], []>} : vector<16x4xf32>, vector<4x8xf32>, vector<16x8xf32> -> vector<16x8xf32>
    %22 = arith.addf %17, %21 : vector<16x8xf32>
    %c3 = arith.constant 3 : index
    %c0_22 = arith.constant 0 : index
    %23 = vector.load %arg10[%c3, %c0_22] : memref<20x4xf32, #tpu.memory_space<vmem>>, vector<16x4xf32>
    %c2_23 = arith.constant 2 : index
    %c0_24 = arith.constant 0 : index
    %c0_25 = arith.constant 0 : index
    %24 = vector.load %arg2[%c2_23, %c0_24, %c0_25] : memref<3x4x8xf32, #tpu.memory_space<vmem>>, vector<1x4x8xf32>
    %25 = vector.shape_cast %24 : vector<1x4x8xf32> to vector<4x8xf32>
    %cst_26 = arith.constant dense<0.000000e+00> : vector<16x8xf32>
    %26 = tpu.matmul %23, %25, %cst_26 {dimension_numbers = #tpu.dot_dimension_numbers<[1], [0], [0], [1], [0, 0, 1, 1], [], []>} : vector<16x4xf32>, vector<4x8xf32>, vector<16x8xf32> -> vector<16x8xf32>
    %27 = arith.addf %22, %26 : vector<16x8xf32>
    %c0_27 = arith.constant 0 : index
    %c0_28 = arith.constant 0 : index
    %28 = vector.load %arg8[%c0_27, %c0_28] : memref<3x8xf32, #tpu.memory_space<vmem>>, vector<1x8xf32>
    %29 = vector.broadcast %28 : vector<1x8xf32> to vector<16x8xf32>
    %30 = arith.addf %27, %29 : vector<16x8xf32>
    %cst_29 = arith.constant 0.000000e+00 : f32
    %31 = vector.broadcast %cst_29 : f32 to vector<20x8xf32>
    %c0_30 = arith.constant 0 : index
    %c0_31 = arith.constant 0 : index
    %32 = vector.load %arg12[%c0_30, %c0_31] : memref<20x8xf32, #tpu.memory_space<vmem>>, vector<20x8xf32>
    tpu.vector_store %arg12[%c0_30, %c0_31], %31 {strides = array<i32>} : memref<20x8xf32, #tpu.memory_space<vmem>>, vector<20x8xf32>,
    %c2_32 = arith.constant 2 : index
    %c0_33 = arith.constant 0 : index
    %33 = vector.load %arg12[%c2_32, %c0_33] : memref<20x8xf32, #tpu.memory_space<vmem>>, vector<16x8xf32>
    tpu.vector_store %arg12[%c2_32, %c0_33], %30 {strides = array<i32>} : memref<20x8xf32, #tpu.memory_space<vmem>>, vector<16x8xf32>,
    %cst_34 = arith.constant 0.000000e+00 : f32
    %34 = vector.broadcast %cst_34 : f32 to vector<16x8xf32>
    %c0_35 = arith.constant 0 : index
    %c0_36 = arith.constant 0 : index
    %35 = vector.load %arg12[%c0_35, %c0_36] : memref<20x8xf32, #tpu.memory_space<vmem>>, vector<16x8xf32>
    %c0_37 = arith.constant 0 : index
    %c0_38 = arith.constant 0 : index
    %c0_39 = arith.constant 0 : index
    %36 = vector.load %arg4[%c0_37, %c0_38, %c0_39] : memref<3x8x8xf32, #tpu.memory_space<vmem>>, vector<1x8x8xf32>
    %37 = vector.shape_cast %36 : vector<1x8x8xf32> to vector<8x8xf32>
    %cst_40 = arith.constant dense<0.000000e+00> : vector<16x8xf32>
    %38 = tpu.matmul %35, %37, %cst_40 {dimension_numbers = #tpu.dot_dimension_numbers<[1], [0], [0], [1], [0, 0, 1, 1], [], []>} : vector<16x8xf32>, vector<8x8xf32>, vector<16x8xf32> -> vector<16x8xf32>
    %39 = arith.addf %34, %38 : vector<16x8xf32>
    %c2_41 = arith.constant 2 : index
    %c0_42 = arith.constant 0 : index
    %40 = vector.load %arg12[%c2_41, %c0_42] : memref<20x8xf32, #tpu.memory_space<vmem>>, vector<16x8xf32>
    %c1_43 = arith.constant 1 : index
    %c0_44 = arith.constant 0 : index
    %c0_45 = arith.constant 0 : index
    %41 = vector.load %arg4[%c1_43, %c0_44, %c0_45] : memref<3x8x8xf32, #tpu.memory_space<vmem>>, vector<1x8x8xf32>
    %42 = vector.shape_cast %41 : vector<1x8x8xf32> to vector<8x8xf32>
    %cst_46 = arith.constant dense<0.000000e+00> : vector<16x8xf32>
    %43 = tpu.matmul %40, %42, %cst_46 {dimension_numbers = #tpu.dot_dimension_numbers<[1], [0], [0], [1], [0, 0, 1, 1], [], []>} : vector<16x8xf32>, vector<8x8xf32>, vector<16x8xf32> -> vector<16x8xf32>
    %44 = arith.addf %39, %43 : vector<16x8xf32>
    %c4 = arith.constant 4 : index
    %c0_47 = arith.constant 0 : index
    %45 = vector.load %arg12[%c4, %c0_47] : memref<20x8xf32, #tpu.memory_space<vmem>>, vector<16x8xf32>
    %c2_48 = arith.constant 2 : index
    %c0_49 = arith.constant 0 : index
    %c0_50 = arith.constant 0 : index
    %46 = vector.load %arg4[%c2_48, %c0_49, %c0_50] : memref<3x8x8xf32, #tpu.memory_space<vmem>>, vector<1x8x8xf32>
    %47 = vector.shape_cast %46 : vector<1x8x8xf32> to vector<8x8xf32>
    %cst_51 = arith.constant dense<0.000000e+00> : vector<16x8xf32>
    %48 = tpu.matmul %45, %47, %cst_51 {dimension_numbers = #tpu.dot_dimension_numbers<[1], [0], [0], [1], [0, 0, 1, 1], [], []>} : vector<16x8xf32>, vector<8x8xf32>, vector<16x8xf32> -> vector<16x8xf32>
    %49 = arith.addf %44, %48 : vector<16x8xf32>
    %cst_52 = arith.constant 0.000000e+00 : f32
    %50 = vector.broadcast %cst_52 : f32 to vector<20x4xf32>
    %c0_53 = arith.constant 0 : index
    %c0_54 = arith.constant 0 : index
    %51 = vector.load %arg11[%c0_53, %c0_54] : memref<20x4xf32, #tpu.memory_space<vmem>>, vector<20x4xf32>
    tpu.vector_store %arg11[%c0_53, %c0_54], %50 {strides = array<i32>} : memref<20x4xf32, #tpu.memory_space<vmem>>, vector<20x4xf32>,
    %c2_55 = arith.constant 2 : index
    %c0_56 = arith.constant 0 : index
    %52 = vector.load %arg11[%c2_55, %c0_56] : memref<20x4xf32, #tpu.memory_space<vmem>>, vector<16x4xf32>
    tpu.vector_store %arg11[%c2_55, %c0_56], %8 {strides = array<i32>} : memref<20x4xf32, #tpu.memory_space<vmem>>, vector<16x4xf32>,
    %cst_57 = arith.constant 0.000000e+00 : f32
    %53 = vector.broadcast %cst_57 : f32 to vector<16x8xf32>
    %c1_58 = arith.constant 1 : index
    %c0_59 = arith.constant 0 : index
    %54 = vector.load %arg11[%c1_58, %c0_59] : memref<20x4xf32, #tpu.memory_space<vmem>>, vector<16x4xf32>
    %c0_60 = arith.constant 0 : index
    %c0_61 = arith.constant 0 : index
    %c0_62 = arith.constant 0 : index
    %55 = vector.load %arg3[%c0_60, %c0_61, %c0_62] : memref<3x4x8xf32, #tpu.memory_space<vmem>>, vector<1x4x8xf32>
    %56 = vector.shape_cast %55 : vector<1x4x8xf32> to vector<4x8xf32>
    %cst_63 = arith.constant dense<0.000000e+00> : vector<16x8xf32>
    %57 = tpu.matmul %54, %56, %cst_63 {dimension_numbers = #tpu.dot_dimension_numbers<[1], [0], [0], [1], [0, 0, 1, 1], [], []>} : vector<16x4xf32>, vector<4x8xf32>, vector<16x8xf32> -> vector<16x8xf32>
    %58 = arith.addf %53, %57 : vector<16x8xf32>
    %c2_64 = arith.constant 2 : index
    %c0_65 = arith.constant 0 : index
    %59 = vector.load %arg11[%c2_64, %c0_65] : memref<20x4xf32, #tpu.memory_space<vmem>>, vector<16x4xf32>
    %c1_66 = arith.constant 1 : index
    %c0_67 = arith.constant 0 : index
    %c0_68 = arith.constant 0 : index
    %60 = vector.load %arg3[%c1_66, %c0_67, %c0_68] : memref<3x4x8xf32, #tpu.memory_space<vmem>>, vector<1x4x8xf32>
    %61 = vector.shape_cast %60 : vector<1x4x8xf32> to vector<4x8xf32>
    %cst_69 = arith.constant dense<0.000000e+00> : vector<16x8xf32>
    %62 = tpu.matmul %59, %61, %cst_69 {dimension_numbers = #tpu.dot_dimension_numbers<[1], [0], [0], [1], [0, 0, 1, 1], [], []>} : vector<16x4xf32>, vector<4x8xf32>, vector<16x8xf32> -> vector<16x8xf32>
    %63 = arith.addf %58, %62 : vector<16x8xf32>
    %c3_70 = arith.constant 3 : index
    %c0_71 = arith.constant 0 : index
    %64 = vector.load %arg11[%c3_70, %c0_71] : memref<20x4xf32, #tpu.memory_space<vmem>>, vector<16x4xf32>
    %c2_72 = arith.constant 2 : index
    %c0_73 = arith.constant 0 : index
    %c0_74 = arith.constant 0 : index
    %65 = vector.load %arg3[%c2_72, %c0_73, %c0_74] : memref<3x4x8xf32, #tpu.memory_space<vmem>>, vector<1x4x8xf32>
    %66 = vector.shape_cast %65 : vector<1x4x8xf32> to vector<4x8xf32>
    %cst_75 = arith.constant dense<0.000000e+00> : vector<16x8xf32>
    %67 = tpu.matmul %64, %66, %cst_75 {dimension_numbers = #tpu.dot_dimension_numbers<[1], [0], [0], [1], [0, 0, 1, 1], [], []>} : vector<16x4xf32>, vector<4x8xf32>, vector<16x8xf32> -> vector<16x8xf32>
    %68 = arith.addf %63, %67 : vector<16x8xf32>
    %c1_76 = arith.constant 1 : index
    %c0_77 = arith.constant 0 : index
    %69 = vector.load %arg8[%c1_76, %c0_77] : memref<3x8xf32, #tpu.memory_space<vmem>>, vector<1x8xf32>
    %70 = vector.broadcast %69 : vector<1x8xf32> to vector<16x8xf32>
    %71 = arith.addf %68, %70 : vector<16x8xf32>
    %cst_78 = arith.constant 0.000000e+00 : f32
    %72 = vector.broadcast %cst_78 : f32 to vector<20x8xf32>
    %c0_79 = arith.constant 0 : index
    %c0_80 = arith.constant 0 : index
    %73 = vector.load %arg13[%c0_79, %c0_80] : memref<20x8xf32, #tpu.memory_space<vmem>>, vector<20x8xf32>
    tpu.vector_store %arg13[%c0_79, %c0_80], %72 {strides = array<i32>} : memref<20x8xf32, #tpu.memory_space<vmem>>, vector<20x8xf32>,
    %c2_81 = arith.constant 2 : index
    %c0_82 = arith.constant 0 : index
    %74 = vector.load %arg13[%c2_81, %c0_82] : memref<20x8xf32, #tpu.memory_space<vmem>>, vector<16x8xf32>
    tpu.vector_store %arg13[%c2_81, %c0_82], %71 {strides = array<i32>} : memref<20x8xf32, #tpu.memory_space<vmem>>, vector<16x8xf32>,
    %cst_83 = arith.constant 0.000000e+00 : f32
    %75 = vector.broadcast %cst_83 : f32 to vector<16x8xf32>
    %c0_84 = arith.constant 0 : index
    %c0_85 = arith.constant 0 : index
    %76 = vector.load %arg13[%c0_84, %c0_85] : memref<20x8xf32, #tpu.memory_space<vmem>>, vector<16x8xf32>
    %c0_86 = arith.constant 0 : index
    %c0_87 = arith.constant 0 : index
    %c0_88 = arith.constant 0 : index
    %77 = vector.load %arg5[%c0_86, %c0_87, %c0_88] : memref<3x8x8xf32, #tpu.memory_space<vmem>>, vector<1x8x8xf32>
    %78 = vector.shape_cast %77 : vector<1x8x8xf32> to vector<8x8xf32>
    %cst_89 = arith.constant dense<0.000000e+00> : vector<16x8xf32>
    %79 = tpu.matmul %76, %78, %cst_89 {dimension_numbers = #tpu.dot_dimension_numbers<[1], [0], [0], [1], [0, 0, 1, 1], [], []>} : vector<16x8xf32>, vector<8x8xf32>, vector<16x8xf32> -> vector<16x8xf32>
    %80 = arith.addf %75, %79 : vector<16x8xf32>
    %c2_90 = arith.constant 2 : index
    %c0_91 = arith.constant 0 : index
    %81 = vector.load %arg13[%c2_90, %c0_91] : memref<20x8xf32, #tpu.memory_space<vmem>>, vector<16x8xf32>
    %c1_92 = arith.constant 1 : index
    %c0_93 = arith.constant 0 : index
    %c0_94 = arith.constant 0 : index
    %82 = vector.load %arg5[%c1_92, %c0_93, %c0_94] : memref<3x8x8xf32, #tpu.memory_space<vmem>>, vector<1x8x8xf32>
    %83 = vector.shape_cast %82 : vector<1x8x8xf32> to vector<8x8xf32>
    %cst_95 = arith.constant dense<0.000000e+00> : vector<16x8xf32>
    %84 = tpu.matmul %81, %83, %cst_95 {dimension_numbers = #tpu.dot_dimension_numbers<[1], [0], [0], [1], [0, 0, 1, 1], [], []>} : vector<16x8xf32>, vector<8x8xf32>, vector<16x8xf32> -> vector<16x8xf32>
    %85 = arith.addf %80, %84 : vector<16x8xf32>
    %c4_96 = arith.constant 4 : index
    %c0_97 = arith.constant 0 : index
    %86 = vector.load %arg13[%c4_96, %c0_97] : memref<20x8xf32, #tpu.memory_space<vmem>>, vector<16x8xf32>
    %c2_98 = arith.constant 2 : index
    %c0_99 = arith.constant 0 : index
    %c0_100 = arith.constant 0 : index
    %87 = vector.load %arg5[%c2_98, %c0_99, %c0_100] : memref<3x8x8xf32, #tpu.memory_space<vmem>>, vector<1x8x8xf32>
    %88 = vector.shape_cast %87 : vector<1x8x8xf32> to vector<8x8xf32>
    %cst_101 = arith.constant dense<0.000000e+00> : vector<16x8xf32>
    %89 = tpu.matmul %86, %88, %cst_101 {dimension_numbers = #tpu.dot_dimension_numbers<[1], [0], [0], [1], [0, 0, 1, 1], [], []>} : vector<16x8xf32>, vector<8x8xf32>, vector<16x8xf32> -> vector<16x8xf32>
    %90 = arith.addf %85, %89 : vector<16x8xf32>
    %c0_102 = arith.constant 0 : index
    %c0_103 = arith.constant 0 : index
    %91 = vector.load %arg7[%c0_102, %c0_103] : memref<4x8xbf16, #tpu.memory_space<vmem>>, vector<4x8xbf16>
    %92 = vector.shape_cast %1 : vector<16x16x4xbf16> to vector<256x4xbf16>
    %cst_104 = arith.constant dense<0.000000e+00> : vector<256x8xf32>
    %93 = tpu.matmul %92, %91, %cst_104 {dimension_numbers = #tpu.dot_dimension_numbers<[1], [0], [0], [1], [0, 0, 1, 1], [], []>} : vector<256x4xbf16>, vector<4x8xbf16>, vector<256x8xf32> -> vector<256x8xf32>
    %cst_105 = arith.constant 0.000000e+00 : f32
    %94 = vector.broadcast %cst_105 : f32 to vector<256x8xf32>
    %c0_106 = arith.constant 0 : index
    %c0_107 = arith.constant 0 : index
    %c0_108 = arith.constant 0 : index
    %c0_109 = arith.constant 0 : index
    %95 = vector.load %arg1[%c0_106, %c0_107, %c0_108, %c0_109] : memref<1x20x20x4xbf16, #tpu.memory_space<vmem>>, vector<1x16x16x4xbf16>
    %96 = vector.shape_cast %95 : vector<1x16x16x4xbf16> to vector<16x16x4xbf16>
    %97 = vector.shape_cast %96 : vector<16x16x4xbf16> to vector<256x4xbf16>
    %c0_110 = arith.constant 0 : index
    %c0_111 = arith.constant 0 : index
    %c0_112 = arith.constant 0 : index
    %98 = vector.load %arg6[%c0_110, %c0_111, %c0_112] : memref<9x4x8xbf16, #tpu.memory_space<vmem>>, vector<1x4x8xbf16>
    %99 = vector.shape_cast %98 : vector<1x4x8xbf16> to vector<4x8xbf16>
    %cst_113 = arith.constant dense<0.000000e+00> : vector<256x8xf32>
    %100 = tpu.matmul %97, %99, %cst_113 {dimension_numbers = #tpu.dot_dimension_numbers<[1], [0], [0], [1], [0, 0, 1, 1], [], []>} : vector<256x4xbf16>, vector<4x8xbf16>, vector<256x8xf32> -> vector<256x8xf32>
    %101 = arith.addf %94, %100 : vector<256x8xf32>
    %c0_114 = arith.constant 0 : index
    %c0_115 = arith.constant 0 : index
    %c2_116 = arith.constant 2 : index
    %c0_117 = arith.constant 0 : index
    %102 = vector.load %arg1[%c0_114, %c0_115, %c2_116, %c0_117] : memref<1x20x20x4xbf16, #tpu.memory_space<vmem>>, vector<1x16x16x4xbf16>
    %103 = vector.shape_cast %102 : vector<1x16x16x4xbf16> to vector<16x16x4xbf16>
    %104 = vector.shape_cast %103 : vector<16x16x4xbf16> to vector<256x4xbf16>
    %c1_118 = arith.constant 1 : index
    %c0_119 = arith.constant 0 : index
    %c0_120 = arith.constant 0 : index
    %105 = vector.load %arg6[%c1_118, %c0_119, %c0_120] : memref<9x4x8xbf16, #tpu.memory_space<vmem>>, vector<1x4x8xbf16>
    %106 = vector.shape_cast %105 : vector<1x4x8xbf16> to vector<4x8xbf16>
    %cst_121 = arith.constant dense<0.000000e+00> : vector<256x8xf32>
    %107 = tpu.matmul %104, %106, %cst_121 {dimension_numbers = #tpu.dot_dimension_numbers<[1], [0], [0], [1], [0, 0, 1, 1], [], []>} : vector<256x4xbf16>, vector<4x8xbf16>, vector<256x8xf32> -> vector<256x8xf32>
    %108 = arith.addf %101, %107 : vector<256x8xf32>
    %c0_122 = arith.constant 0 : index
    %c0_123 = arith.constant 0 : index
    %c4_124 = arith.constant 4 : index
    %c0_125 = arith.constant 0 : index
    %109 = vector.load %arg1[%c0_122, %c0_123, %c4_124, %c0_125] : memref<1x20x20x4xbf16, #tpu.memory_space<vmem>>, vector<1x16x16x4xbf16>
    %110 = vector.shape_cast %109 : vector<1x16x16x4xbf16> to vector<16x16x4xbf16>
    %111 = vector.shape_cast %110 : vector<16x16x4xbf16> to vector<256x4xbf16>
    %c2_126 = arith.constant 2 : index
    %c0_127 = arith.constant 0 : index
    %c0_128 = arith.constant 0 : index
    %112 = vector.load %arg6[%c2_126, %c0_127, %c0_128] : memref<9x4x8xbf16, #tpu.memory_space<vmem>>, vector<1x4x8xbf16>
    %113 = vector.shape_cast %112 : vector<1x4x8xbf16> to vector<4x8xbf16>
    %cst_129 = arith.constant dense<0.000000e+00> : vector<256x8xf32>
    %114 = tpu.matmul %111, %113, %cst_129 {dimension_numbers = #tpu.dot_dimension_numbers<[1], [0], [0], [1], [0, 0, 1, 1], [], []>} : vector<256x4xbf16>, vector<4x8xbf16>, vector<256x8xf32> -> vector<256x8xf32>
    %115 = arith.addf %108, %114 : vector<256x8xf32>
    %c0_130 = arith.constant 0 : index
    %c2_131 = arith.constant 2 : index
    %c0_132 = arith.constant 0 : index
    %c0_133 = arith.constant 0 : index
    %116 = vector.load %arg1[%c0_130, %c2_131, %c0_132, %c0_133] : memref<1x20x20x4xbf16, #tpu.memory_space<vmem>>, vector<1x16x16x4xbf16>
    %117 = vector.shape_cast %116 : vector<1x16x16x4xbf16> to vector<16x16x4xbf16>
    %118 = vector.shape_cast %117 : vector<16x16x4xbf16> to vector<256x4xbf16>
    %c3_134 = arith.constant 3 : index
    %c0_135 = arith.constant 0 : index
    %c0_136 = arith.constant 0 : index
    %119 = vector.load %arg6[%c3_134, %c0_135, %c0_136] : memref<9x4x8xbf16, #tpu.memory_space<vmem>>, vector<1x4x8xbf16>
    %120 = vector.shape_cast %119 : vector<1x4x8xbf16> to vector<4x8xbf16>
    %cst_137 = arith.constant dense<0.000000e+00> : vector<256x8xf32>
    %121 = tpu.matmul %118, %120, %cst_137 {dimension_numbers = #tpu.dot_dimension_numbers<[1], [0], [0], [1], [0, 0, 1, 1], [], []>} : vector<256x4xbf16>, vector<4x8xbf16>, vector<256x8xf32> -> vector<256x8xf32>
    %122 = arith.addf %115, %121 : vector<256x8xf32>
    %c0_138 = arith.constant 0 : index
    %c2_139 = arith.constant 2 : index
    %c2_140 = arith.constant 2 : index
    %c0_141 = arith.constant 0 : index
    %123 = vector.load %arg1[%c0_138, %c2_139, %c2_140, %c0_141] : memref<1x20x20x4xbf16, #tpu.memory_space<vmem>>, vector<1x16x16x4xbf16>
    %124 = vector.shape_cast %123 : vector<1x16x16x4xbf16> to vector<16x16x4xbf16>
    %125 = vector.shape_cast %124 : vector<16x16x4xbf16> to vector<256x4xbf16>
    %c4_142 = arith.constant 4 : index
    %c0_143 = arith.constant 0 : index
    %c0_144 = arith.constant 0 : index
    %126 = vector.load %arg6[%c4_142, %c0_143, %c0_144] : memref<9x4x8xbf16, #tpu.memory_space<vmem>>, vector<1x4x8xbf16>
    %127 = vector.shape_cast %126 : vector<1x4x8xbf16> to vector<4x8xbf16>
    %cst_145 = arith.constant dense<0.000000e+00> : vector<256x8xf32>
    %128 = tpu.matmul %125, %127, %cst_145 {dimension_numbers = #tpu.dot_dimension_numbers<[1], [0], [0], [1], [0, 0, 1, 1], [], []>} : vector<256x4xbf16>, vector<4x8xbf16>, vector<256x8xf32> -> vector<256x8xf32>
    %129 = arith.addf %122, %128 : vector<256x8xf32>
    %c0_146 = arith.constant 0 : index
    %c2_147 = arith.constant 2 : index
    %c4_148 = arith.constant 4 : index
    %c0_149 = arith.constant 0 : index
    %130 = vector.load %arg1[%c0_146, %c2_147, %c4_148, %c0_149] : memref<1x20x20x4xbf16, #tpu.memory_space<vmem>>, vector<1x16x16x4xbf16>
    %131 = vector.shape_cast %130 : vector<1x16x16x4xbf16> to vector<16x16x4xbf16>
    %132 = vector.shape_cast %131 : vector<16x16x4xbf16> to vector<256x4xbf16>
    %c5 = arith.constant 5 : index
    %c0_150 = arith.constant 0 : index
    %c0_151 = arith.constant 0 : index
    %133 = vector.load %arg6[%c5, %c0_150, %c0_151] : memref<9x4x8xbf16, #tpu.memory_space<vmem>>, vector<1x4x8xbf16>
    %134 = vector.shape_cast %133 : vector<1x4x8xbf16> to vector<4x8xbf16>
    %cst_152 = arith.constant dense<0.000000e+00> : vector<256x8xf32>
    %135 = tpu.matmul %132, %134, %cst_152 {dimension_numbers = #tpu.dot_dimension_numbers<[1], [0], [0], [1], [0, 0, 1, 1], [], []>} : vector<256x4xbf16>, vector<4x8xbf16>, vector<256x8xf32> -> vector<256x8xf32>
    %136 = arith.addf %129, %135 : vector<256x8xf32>
    %c0_153 = arith.constant 0 : index
    %c4_154 = arith.constant 4 : index
    %c0_155 = arith.constant 0 : index
    %c0_156 = arith.constant 0 : index
    %137 = vector.load %arg1[%c0_153, %c4_154, %c0_155, %c0_156] : memref<1x20x20x4xbf16, #tpu.memory_space<vmem>>, vector<1x16x16x4xbf16>
    %138 = vector.shape_cast %137 : vector<1x16x16x4xbf16> to vector<16x16x4xbf16>
    %139 = vector.shape_cast %138 : vector<16x16x4xbf16> to vector<256x4xbf16>
    %c6 = arith.constant 6 : index
    %c0_157 = arith.constant 0 : index
    %c0_158 = arith.constant 0 : index
    %140 = vector.load %arg6[%c6, %c0_157, %c0_158] : memref<9x4x8xbf16, #tpu.memory_space<vmem>>, vector<1x4x8xbf16>
    %141 = vector.shape_cast %140 : vector<1x4x8xbf16> to vector<4x8xbf16>
    %cst_159 = arith.constant dense<0.000000e+00> : vector<256x8xf32>
    %142 = tpu.matmul %139, %141, %cst_159 {dimension_numbers = #tpu.dot_dimension_numbers<[1], [0], [0], [1], [0, 0, 1, 1], [], []>} : vector<256x4xbf16>, vector<4x8xbf16>, vector<256x8xf32> -> vector<256x8xf32>
    %143 = arith.addf %136, %142 : vector<256x8xf32>
    %c0_160 = arith.constant 0 : index
    %c4_161 = arith.constant 4 : index
    %c2_162 = arith.constant 2 : index
    %c0_163 = arith.constant 0 : index
    %144 = vector.load %arg1[%c0_160, %c4_161, %c2_162, %c0_163] : memref<1x20x20x4xbf16, #tpu.memory_space<vmem>>, vector<1x16x16x4xbf16>
    %145 = vector.shape_cast %144 : vector<1x16x16x4xbf16> to vector<16x16x4xbf16>
    %146 = vector.shape_cast %145 : vector<16x16x4xbf16> to vector<256x4xbf16>
    %c7 = arith.constant 7 : index
    %c0_164 = arith.constant 0 : index
    %c0_165 = arith.constant 0 : index
    %147 = vector.load %arg6[%c7, %c0_164, %c0_165] : memref<9x4x8xbf16, #tpu.memory_space<vmem>>, vector<1x4x8xbf16>
    %148 = vector.shape_cast %147 : vector<1x4x8xbf16> to vector<4x8xbf16>
    %cst_166 = arith.constant dense<0.000000e+00> : vector<256x8xf32>
    %149 = tpu.matmul %146, %148, %cst_166 {dimension_numbers = #tpu.dot_dimension_numbers<[1], [0], [0], [1], [0, 0, 1, 1], [], []>} : vector<256x4xbf16>, vector<4x8xbf16>, vector<256x8xf32> -> vector<256x8xf32>
    %150 = arith.addf %143, %149 : vector<256x8xf32>
    %c0_167 = arith.constant 0 : index
    %c4_168 = arith.constant 4 : index
    %c4_169 = arith.constant 4 : index
    %c0_170 = arith.constant 0 : index
    %151 = vector.load %arg1[%c0_167, %c4_168, %c4_169, %c0_170] : memref<1x20x20x4xbf16, #tpu.memory_space<vmem>>, vector<1x16x16x4xbf16>
    %152 = vector.shape_cast %151 : vector<1x16x16x4xbf16> to vector<16x16x4xbf16>
    %153 = vector.shape_cast %152 : vector<16x16x4xbf16> to vector<256x4xbf16>
    %c8 = arith.constant 8 : index
    %c0_171 = arith.constant 0 : index
    %c0_172 = arith.constant 0 : index
    %154 = vector.load %arg6[%c8, %c0_171, %c0_172] : memref<9x4x8xbf16, #tpu.memory_space<vmem>>, vector<1x4x8xbf16>
    %155 = vector.shape_cast %154 : vector<1x4x8xbf16> to vector<4x8xbf16>
    %cst_173 = arith.constant dense<0.000000e+00> : vector<256x8xf32>
    %156 = tpu.matmul %153, %155, %cst_173 {dimension_numbers = #tpu.dot_dimension_numbers<[1], [0], [0], [1], [0, 0, 1, 1], [], []>} : vector<256x4xbf16>, vector<4x8xbf16>, vector<256x8xf32> -> vector<256x8xf32>
    %157 = arith.addf %150, %156 : vector<256x8xf32>
    %c2_174 = arith.constant 2 : index
    %c0_175 = arith.constant 0 : index
    %158 = vector.load %arg8[%c2_174, %c0_175] : memref<3x8xf32, #tpu.memory_space<vmem>>, vector<1x8xf32>
    %159 = vector.broadcast %158 : vector<1x8xf32> to vector<256x8xf32>
    %160 = arith.addf %157, %159 : vector<256x8xf32>
    %161 = vector.shape_cast %160 : vector<256x8xf32> to vector<16x16x8xf32>
    %162 = vector.shape_cast %49 : vector<16x8xf32> to vector<16x1x8xf32>
    %163 = vector.broadcast %162 : vector<16x1x8xf32> to vector<16x16x8xf32>
    %164 = arith.addf %161, %163 : vector<16x16x8xf32>
    %165 = vector.shape_cast %90 : vector<16x8xf32> to vector<1x16x8xf32>
    %166 = vector.broadcast %165 : vector<1x16x8xf32> to vector<16x16x8xf32>
    %167 = arith.addf %164, %166 : vector<16x16x8xf32>
    %168 = vector.shape_cast %93 : vector<256x8xf32> to vector<16x16x8xf32>
    %169 = arith.mulf %168, %167 : vector<16x16x8xf32>
    %c0_176 = arith.constant 0 : index
    %c0_177 = arith.constant 0 : index
    %c0_178 = arith.constant 0 : index
    %c0_179 = arith.constant 0 : index
    %170 = vector.load %arg9[%c0_176, %c0_177, %c0_178, %c0_179] : memref<1x16x16x8xf32, #tpu.memory_space<vmem>>, vector<1x16x16x8xf32>
    %171 = vector.shape_cast %170 : vector<1x16x16x8xf32> to vector<16x16x8xf32>
    %172 = vector.shape_cast %169 : vector<16x16x8xf32> to vector<1x16x16x8xf32>
    tpu.vector_store %arg9[%c0_176, %c0_177, %c0_178, %c0_179], %172 {strides = array<i32>} : memref<1x16x16x8xf32, #tpu.memory_space<vmem>>, vector<1x16x16x8xf32>,
    return
  }
  func.func @transform_0(%arg0: i32) -> (i32, i32, i32, i32) {
    %c0_i32 = arith.constant 0 : i32
    %c0_i32_0 = arith.constant 0 : i32
    %c0_i32_1 = arith.constant 0 : i32
    %c0_i32_2 = arith.constant 0 : i32
    return %arg0, %c0_i32, %c0_i32_0, %c0_i32_1 : i32, i32, i32, i32
  }
  func.func @transform_1(%arg0: i32) -> (i32, i32, i32) {
    %c0_i32 = arith.constant 0 : i32
    %c0_i32_0 = arith.constant 0 : i32
    %c0_i32_1 = arith.constant 0 : i32
    %c0_i32_2 = arith.constant 0 : i32
    return %c0_i32, %c0_i32_0, %c0_i32_1 : i32, i32, i32
  }
  func.func @transform_2(%arg0: i32) -> (i32, i32, i32) {
    %c0_i32 = arith.constant 0 : i32
    %c0_i32_0 = arith.constant 0 : i32
    %c0_i32_1 = arith.constant 0 : i32
    %c0_i32_2 = arith.constant 0 : i32
    return %c0_i32, %c0_i32_0, %c0_i32_1 : i32, i32, i32
  }
  func.func @transform_3(%arg0: i32) -> (i32, i32, i32) {
    %c0_i32 = arith.constant 0 : i32
    %c0_i32_0 = arith.constant 0 : i32
    %c0_i32_1 = arith.constant 0 : i32
    %c0_i32_2 = arith.constant 0 : i32
    return %c0_i32, %c0_i32_0, %c0_i32_1 : i32, i32, i32
  }
  func.func @transform_4(%arg0: i32) -> (i32, i32, i32) {
    %c0_i32 = arith.constant 0 : i32
    %c0_i32_0 = arith.constant 0 : i32
    %c0_i32_1 = arith.constant 0 : i32
    %c0_i32_2 = arith.constant 0 : i32
    return %c0_i32, %c0_i32_0, %c0_i32_1 : i32, i32, i32
  }
  func.func @transform_5(%arg0: i32) -> (i32, i32, i32) {
    %c0_i32 = arith.constant 0 : i32
    %c0_i32_0 = arith.constant 0 : i32
    %c0_i32_1 = arith.constant 0 : i32
    %c0_i32_2 = arith.constant 0 : i32
    return %c0_i32, %c0_i32_0, %c0_i32_1 : i32, i32, i32
  }
  func.func @transform_6(%arg0: i32) -> (i32, i32) {
    %c0_i32 = arith.constant 0 : i32
    %c0_i32_0 = arith.constant 0 : i32
    %c0_i32_1 = arith.constant 0 : i32
    return %c0_i32, %c0_i32_0 : i32, i32
  }
  func.func @transform_7(%arg0: i32) -> (i32, i32) {
    %c0_i32 = arith.constant 0 : i32
    %c0_i32_0 = arith.constant 0 : i32
    %c0_i32_1 = arith.constant 0 : i32
    return %c0_i32, %c0_i32_0 : i32, i32
  }
  func.func @transform_8(%arg0: i32) -> (i32, i32, i32, i32) {
    %c0_i32 = arith.constant 0 : i32
    %c0_i32_0 = arith.constant 0 : i32
    %c0_i32_1 = arith.constant 0 : i32
    %c0_i32_2 = arith.constant 0 : i32
    return %arg0, %c0_i32, %c0_i32_0, %c0_i32_1 : i32, i32, i32, i32
  }
}

</mosaic_0001>

<llo_original>
// kernel: cnb1lock_forward.1
$region0: #{cnb1lock_forward.1}
  #allocation0 [shape = 'u32[]', space=smem, size = 0x4, offset = 0x4, fixed_abs, tag = 'smem constant byte address 0x4 - core index']
  #allocation1 [shape = 'u32[144,128]{1,0:T(1,128)}', space=vmem, size = 0x12000, scoped, tag = 'internal scratch']
  #allocation2 [shape = 'f32[20,4]{1,0:T(8,128)}', space=vmem, size = 0x3000, scoped, tag = 'scratch operand']
  #allocation3 [shape = 'f32[20,4]{1,0:T(8,128)}', space=vmem, size = 0x3000, scoped, tag = 'scratch operand']
  #allocation4 [shape = 'f32[20,8]{1,0:T(8,128)}', space=vmem, size = 0x3000, scoped, tag = 'scratch operand']
  #allocation5 [shape = 'f32[20,8]{1,0:T(8,128)}', space=vmem, size = 0x3000, scoped, tag = 'scratch operand']
  %s0 = inlined_call_operand.vmem [shape: bf16[2,20,20,4], index: 0, kind: input, shape index: {}]
  %s1 = inlined_call_operand.vmem [shape: f32[3,4,8], index: 1, kind: input, shape index: {}]
  %s2 = inlined_call_operand.vmem [shape: f32[3,4,8], index: 2, kind: input, shape index: {}]
  %s3 = inlined_call_operand.vmem [shape: f32[3,8,8], index: 3, kind: input, shape index: {}]
  %s4 = inlined_call_operand.vmem [shape: f32[3,8,8], index: 4, kind: input, shape index: {}]
  %s5 = inlined_call_operand.vmem [shape: bf16[9,4,8], index: 5, kind: input, shape index: {}]
  %s6 = inlined_call_operand.vmem [shape: bf16[4,8], index: 6, kind: input, shape index: {}]
  %s7 = inlined_call_operand.vmem [shape: f32[3,8], index: 7, kind: input, shape index: {}]
  %s8 = inlined_call_operand.vmem [shape: f32[2,16,16,8], index: 8, kind: output, shape index: {}]
  %s9 = sld [smem:[#allocation0]]
  $region65: #{cnb1lock_forward.1} parent=0
    _
  %s11 = ssub.s32 1, %s9
  %s12 = scalar_select 0, %s11, %s9
  loop: start=0, step=1, limit=4
  $region2: #{cnb1lock_forward.1} parent=0 // loop_pre_header
    _
  $region3: #{cnb1lock_forward.1} parent=0 // loop_header
    %s14 = sphi 0, %s18
    %p15 = scmp.ge.s32.totalorder %s14, 4
    %s24 = sphi 0, %s26
    %s27 = sphi 0, %s24
    %s28 = sphi 0, %s27
    %s44 = sphi 0, %s28
    %s48 = sphi 0, %s48
    %s50 = sphi 0, %s48
    %s51 = sphi 0, %s50
    %s65 = sphi 0, %s51
    %s69 = sphi 0, %s69
    %s71 = sphi 0, %s69
    %s72 = sphi 0, %s71
    %s86 = sphi 0, %s72
    %s90 = sphi 0, %s90
    %s92 = sphi 0, %s90
    %s93 = sphi 0, %s92
    %s107 = sphi 0, %s93
    %s111 = sphi 0, %s111
    %s113 = sphi 0, %s111
    %s114 = sphi 0, %s113
    %s128 = sphi 0, %s114
    %s132 = sphi 0, %s132
    %s134 = sphi 0, %s132
    %s135 = sphi 0, %s134
    %s149 = sphi 0, %s135
    %s153 = sphi 0, %s153
    %s155 = sphi 0, %s153
    %s156 = sphi 0, %s155
    %s170 = sphi 0, %s156
    %s174 = sphi 0, %s174
    %s176 = sphi 0, %s174
    %s177 = sphi 0, %s176
    %s191 = sphi 0, %s177
    %s197 = sphi 0, %s199
    %s200 = sphi 0, %s197
    %s201 = sphi 0, %s200
    %s217 = sphi 0, %s201
  $region4: #{cnb1lock_forward.1} parent=0 // loop_header_branch
    %17 = sbr.rel (%p15) target = $region8
  $region5: #{cnb1lock_forward.1} parent=0 // loop_body
    %s19 = ssub.s32 %s14, 1
    %s20 = ssub.s32 %s14, 2
    %s21 = sadd.s32 %s14, 1
    %s22 = ssub.s32 %s14, %s21
    %p23 = scmp.eq.s32.totalorder %s22, 0
    %s25 = sadd.s32 %s24, 1
    %s26 = scalar_select %p23, %s24, %s25
    %p29 = pneg %p23
    %p30 = scmp.eq.s32.totalorder %s14, 1
    %p31 = por %p29, %p30
    %p32 = scmp.ne.s32.totalorder %s24, %s27
    %p33 = scmp.eq.s32.totalorder %s14, 0
    %p34 = por %p32, %p33
    %p35 = scmp.ne.s32.totalorder %s24, %s27
    %p36 = scmp.eq.s32.totalorder %s19, 1
    %p37 = por %p35, %p36
    %p38 = scmp.ne.s32.totalorder %s27, %s28
    %p39 = scmp.eq.s32.totalorder %s19, 0
    %p40 = por %p38, %p39
    %p41 = scmp.ne.s32.totalorder %s27, %s28
    %p42 = scmp.eq.s32.totalorder %s20, 1
    %p43 = por %p41, %p42
    %p45 = scmp.ne.s32.totalorder %s28, %s44
    %p46 = scmp.eq.s32.totalorder %s20, 0
    %p47 = por %p45, %p46
    %s49 = sadd.s32 %s48, 1
    %p52 = scmp.eq.s32.totalorder %s14, 1
    %p53 = scmp.ne.s32.totalorder %s48, %s50
    %p54 = scmp.eq.s32.totalorder %s14, 0
    %p55 = por %p53, %p54
    %p56 = scmp.ne.s32.totalorder %s48, %s50
    %p57 = scmp.eq.s32.totalorder %s19, 1
    %p58 = por %p56, %p57
    %p59 = scmp.ne.s32.totalorder %s50, %s51
    %p60 = scmp.eq.s32.totalorder %s19, 0
    %p61 = por %p59, %p60
    %p62 = scmp.ne.s32.totalorder %s50, %s51
    %p63 = scmp.eq.s32.totalorder %s20, 1
    %p64 = por %p62, %p63
    %p66 = scmp.ne.s32.totalorder %s51, %s65
    %p67 = scmp.eq.s32.totalorder %s20, 0
    %p68 = por %p66, %p67
    %s70 = sadd.s32 %s69, 1
    %p73 = scmp.eq.s32.totalorder %s14, 1
    %p74 = scmp.ne.s32.totalorder %s69, %s71
    %p75 = scmp.eq.s32.totalorder %s14, 0
    %p76 = por %p74, %p75
    %p77 = scmp.ne.s32.totalorder %s69, %s71
    %p78 = scmp.eq.s32.totalorder %s19, 1
    %p79 = por %p77, %p78
    %p80 = scmp.ne.s32.totalorder %s71, %s72
    %p81 = scmp.eq.s32.totalorder %s19, 0
    %p82 = por %p80, %p81
    %p83 = scmp.ne.s32.totalorder %s71, %s72
    %p84 = scmp.eq.s32.totalorder %s20, 1
    %p85 = por %p83, %p84
    %p87 = scmp.ne.s32.totalorder %s72, %s86
    %p88 = scmp.eq.s32.totalorder %s20, 0
    %p89 = por %p87, %p88
    %s91 = sadd.s32 %s90, 1
    %p94 = scmp.eq.s32.totalorder %s14, 1
    %p95 = scmp.ne.s32.totalorder %s90, %s92
    %p96 = scmp.eq.s32.totalorder %s14, 0
    %p97 = por %p95, %p96
    %p98 = scmp.ne.s32.totalorder %s90, %s92
    %p99 = scmp.eq.s32.totalorder %s19, 1
    %p100 = por %p98, %p99
    %p101 = scmp.ne.s32.totalorder %s92, %s93
    %p102 = scmp.eq.s32.totalorder %s19, 0
    %p103 = por %p101, %p102
    %p104 = scmp.ne.s32.totalorder %s92, %s93
    %p105 = scmp.eq.s32.totalorder %s20, 1
    %p106 = por %p104, %p105
    %p108 = scmp.ne.s32.totalorder %s93, %s107
    %p109 = scmp.eq.s32.totalorder %s20, 0
    %p110 = por %p108, %p109
    %s112 = sadd.s32 %s111, 1
    %p115 = scmp.eq.s32.totalorder %s14, 1
    %p116 = scmp.ne.s32.totalorder %s111, %s113
    %p117 = scmp.eq.s32.totalorder %s14, 0
    %p118 = por %p116, %p117
    %p119 = scmp.ne.s32.totalorder %s111, %s113
    %p120 = scmp.eq.s32.totalorder %s19, 1
    %p121 = por %p119, %p120
    %p122 = scmp.ne.s32.totalorder %s113, %s114
    %p123 = scmp.eq.s32.totalorder %s19, 0
    %p124 = por %p122, %p123
    %p125 = scmp.ne.s32.totalorder %s113, %s114
    %p126 = scmp.eq.s32.totalorder %s20, 1
    %p127 = por %p125, %p126
    %p129 = scmp.ne.s32.totalorder %s114, %s128
    %p130 = scmp.eq.s32.totalorder %s20, 0
    %p131 = por %p129, %p130
    %s133 = sadd.s32 %s132, 1
    %p136 = scmp.eq.s32.totalorder %s14, 1
    %p137 = scmp.ne.s32.totalorder %s132, %s134
    %p138 = scmp.eq.s32.totalorder %s14, 0
    %p139 = por %p137, %p138
    %p140 = scmp.ne.s32.totalorder %s132, %s134
    %p141 = scmp.eq.s32.totalorder %s19, 1
    %p142 = por %p140, %p141
    %p143 = scmp.ne.s32.totalorder %s134, %s135
    %p144 = scmp.eq.s32.totalorder %s19, 0
    %p145 = por %p143, %p144
    %p146 = scmp.ne.s32.totalorder %s134, %s135
    %p147 = scmp.eq.s32.totalorder %s20, 1
    %p148 = por %p146, %p147
    %p150 = scmp.ne.s32.totalorder %s135, %s149
    %p151 = scmp.eq.s32.totalorder %s20, 0
    %p152 = por %p150, %p151
    %s154 = sadd.s32 %s153, 1
    %p157 = scmp.eq.s32.totalorder %s14, 1
    %p158 = scmp.ne.s32.totalorder %s153, %s155
    %p159 = scmp.eq.s32.totalorder %s14, 0
    %p160 = por %p158, %p159
    %p161 = scmp.ne.s32.totalorder %s153, %s155
    %p162 = scmp.eq.s32.totalorder %s19, 1
    %p163 = por %p161, %p162
    %p164 = scmp.ne.s32.totalorder %s155, %s156
    %p165 = scmp.eq.s32.totalorder %s19, 0
    %p166 = por %p164, %p165
    %p167 = scmp.ne.s32.totalorder %s155, %s156
    %p168 = scmp.eq.s32.totalorder %s20, 1
    %p169 = por %p167, %p168
    %p171 = scmp.ne.s32.totalorder %s156, %s170
    %p172 = scmp.eq.s32.totalorder %s20, 0
    %p173 = por %p171, %p172
    %s175 = sadd.s32 %s174, 1
    %p178 = scmp.eq.s32.totalorder %s14, 1
    %p179 = scmp.ne.s32.totalorder %s174, %s176
    %p180 = scmp.eq.s32.totalorder %s14, 0
    %p181 = por %p179, %p180
    %p182 = scmp.ne.s32.totalorder %s174, %s176
    %p183 = scmp.eq.s32.totalorder %s19, 1
    %p184 = por %p182, %p183
    %p185 = scmp.ne.s32.totalorder %s176, %s177
    %p186 = scmp.eq.s32.totalorder %s19, 0
    %p187 = por %p185, %p186
    %p188 = scmp.ne.s32.totalorder %s176, %s177
    %p189 = scmp.eq.s32.totalorder %s20, 1
    %p190 = por %p188, %p189
    %p192 = scmp.ne.s32.totalorder %s177, %s191
    %p193 = scmp.eq.s32.totalorder %s20, 0
    %p194 = por %p192, %p193
    %s195 = ssub.s32 %s14, %s21
    %p196 = scmp.eq.s32.totalorder %s195, 0
    %s198 = sadd.s32 %s197, 1
    %s199 = scalar_select %p196, %s197, %s198
    %p202 = pneg %p196
    %p203 = scmp.eq.s32.totalorder %s14, 1
    %p204 = por %p202, %p203
    %p205 = scmp.ne.s32.totalorder %s197, %s200
    %p206 = scmp.eq.s32.totalorder %s14, 0
    %p207 = por %p205, %p206
    %p208 = scmp.ne.s32.totalorder %s197, %s200
    %p209 = scmp.eq.s32.totalorder %s19, 1
    %p210 = por %p208, %p209
    %p211 = scmp.ne.s32.totalorder %s200, %s201
    %p212 = scmp.eq.s32.totalorder %s19, 0
    %p213 = por %p211, %p212
    %p214 = scmp.ne.s32.totalorder %s200, %s201
    %p215 = scmp.eq.s32.totalorder %s20, 1
    %p216 = por %p214, %p215
    %p218 = scmp.ne.s32.totalorder %s201, %s217
    %p219 = scmp.eq.s32.totalorder %s20, 0
    %p220 = por %p218, %p219
    %p221 = scmp.le.s32.totalorder 1, %s14
    %p222 = scmp.lt.s32.totalorder %s14, 3
    %p223 = pnand %p221, %p222
    %p224 = pneg %p223
    // Predicated region
    $region9: #{cnb1lock_forward.1} parent=5 // pred_check
      _
    $region10: #{cnb1lock_forward.1} parent=5 // pred_check_branch
      %226 = sbr.rel (%p223) target = $region12
    $region11: #{cnb1lock_forward.1} parent=5 // pred_region
      %s227 = ssub.s32 %s14, 1
      // Predicated region
      $region13: #{cnb1lock_forward.1} parent=11 // pred_check
        %p228 = pneg %p61
      $region14: #{cnb1lock_forward.1} parent=11 // pred_check_branch
        %230 = sbr.rel (%p228) target = $region16
      $region15: #{cnb1lock_forward.1} parent=11 // pred_region
        _
      $region16: #{cnb1lock_forward.1} parent=11 // pred_fallthru
        _
      // Predicated region
      $region17: #{cnb1lock_forward.1} parent=11 // pred_check
        %p231 = pneg %p82
      $region18: #{cnb1lock_forward.1} parent=11 // pred_check_branch
        %233 = sbr.rel (%p231) target = $region20
      $region19: #{cnb1lock_forward.1} parent=11 // pred_region
        _
      $region20: #{cnb1lock_forward.1} parent=11 // pred_fallthru
        _
      // Predicated region
      $region21: #{cnb1lock_forward.1} parent=11 // pred_check
        %p234 = pneg %p103
      $region22: #{cnb1lock_forward.1} parent=11 // pred_check_branch
        %236 = sbr.rel (%p234) target = $region24
      $region23: #{cnb1lock_forward.1} parent=11 // pred_region
        _
      $region24: #{cnb1lock_forward.1} parent=11 // pred_fallthru
        _
      // Predicated region
      $region25: #{cnb1lock_forward.1} parent=11 // pred_check
        %p237 = pneg %p124
      $region26: #{cnb1lock_forward.1} parent=11 // pred_check_branch
        %239 = sbr.rel (%p237) target = $region28
      $region27: #{cnb1lock_forward.1} parent=11 // pred_region
        _
      $region28: #{cnb1lock_forward.1} parent=11 // pred_fallthru
        _
      // Predicated region
      $region29: #{cnb1lock_forward.1} parent=11 // pred_check
        %p240 = pneg %p145
      $region30: #{cnb1lock_forward.1} parent=11 // pred_check_branch
        %242 = sbr.rel (%p240) target = $region32
      $region31: #{cnb1lock_forward.1} parent=11 // pred_region
        _
      $region32: #{cnb1lock_forward.1} parent=11 // pred_fallthru
        _
      // Predicated region
      $region33: #{cnb1lock_forward.1} parent=11 // pred_check
        %p243 = pneg %p166
      $region34: #{cnb1lock_forward.1} parent=11 // pred_check_branch
        %245 = sbr.rel (%p243) target = $region36
      $region35: #{cnb1lock_forward.1} parent=11 // pred_region
        _
      $region36: #{cnb1lock_forward.1} parent=11 // pred_fallthru
        _
      // Predicated region
      $region37: #{cnb1lock_forward.1} parent=11 // pred_check
        %p246 = pneg %p187
      $region38: #{cnb1lock_forward.1} parent=11 // pred_check_branch
        %248 = sbr.rel (%p246) target = $region40
      $region39: #{cnb1lock_forward.1} parent=11 // pred_region
        _
      $region40: #{cnb1lock_forward.1} parent=11 // pred_fallthru
        _
    $region12: #{cnb1lock_forward.1} parent=5 // pred_fallthru
      _
    %p249 = scmp.lt.s32.totalorder %s14, 2
    // Predicated region
    $region41: #{cnb1lock_forward.1} parent=5 // pred_check
      %p250 = pneg %p249
    $region42: #{cnb1lock_forward.1} parent=5 // pred_check_branch
      %252 = sbr.rel (%p250) target = $region44
    $region43: #{cnb1lock_forward.1} parent=5 // pred_region
      // Predicated region
      $region45: #{cnb1lock_forward.1} parent=43 // pred_check
        %p253 = pneg %p34
      $region46: #{cnb1lock_forward.1} parent=43 // pred_check_branch
        %255 = sbr.rel (%p253) target = $region48
      $region47: #{cnb1lock_forward.1} parent=43 // pred_region
        %p256 = scmp.lt.s32.totalorder %s14, 1
        %s257 = scalar_select %p256, %s14, 1
        %s258 = smul.addr %s257, 60
        %s259 = smul.addr %s258, 4
        %s260 = scalar_lea.vmem %s0, %s259
      $region48: #{cnb1lock_forward.1} parent=43 // pred_fallthru
        _
    $region44: #{cnb1lock_forward.1} parent=5 // pred_fallthru
      _
    %p261 = scmp.le.s32.totalorder 1, %s14
    %p262 = scmp.lt.s32.totalorder %s14, 3
    %p263 = pnand %p261, %p262
    %p264 = pneg %p263
    // Predicated region
    $region49: #{cnb1lock_forward.1} parent=5 // pred_check
      _
    $region50: #{cnb1lock_forward.1} parent=5 // pred_check_branch
      %266 = sbr.rel (%p263) target = $region52
    $region51: #{cnb1lock_forward.1} parent=5 // pred_region
      %s267 = ssub.s32 %s14, 1
      %p268 = scmp.lt.s32.totalorder %s19, 1
      %s269 = scalar_select %p268, %s19, 1
      %s270 = smul.addr %s269, 60
      %s271 = smul.addr %s270, 4
      %s272 = scalar_lea.vmem %s0, %s271
      %p273 = pneg %p40
      %p274 = pneg %p37
      %p275 = pneg %p61
      %p276 = pneg %p58
      %p277 = pneg %p82
      %p278 = pneg %p79
      %p279 = pneg %p103
      %p280 = pneg %p100
      %p281 = pneg %p124
      %p282 = pneg %p121
      %p283 = pneg %p145
      %p284 = pneg %p142
      %p285 = pneg %p166
      %p286 = pneg %p163
      %p287 = pneg %p187
      %p288 = pneg %p184
      %p289 = pneg %p213
      %p290 = pneg %p210
      %p291 = scmp.lt.s32.totalorder %s19, 1
      %s292 = scalar_select %p291, %s19, 1
      %s293 = smul.addr %s292, 32
      %s294 = smul.addr %s293, 8
      %s295 = scalar_lea.vmem %s8, %s294
      %p296 = scmp.lt.s32.totalorder %s19, 1
      %s297 = scalar_select %p296, %s19, 1
      %s298 = smul.addr %s297, 60
      %s299 = smul.addr %s298, 4
      %s300 = scalar_lea.vmem %s0, %s299
      %p301 = scmp.lt.s32.totalorder %s19, 1
      %s302 = scalar_select %p301, %s19, 1
      %s303 = smul.addr %s302, 32
      %s304 = smul.addr %s303, 8
      %s305 = scalar_lea.vmem %s8, %s304
      %s307 = scalar_lea.vmem %s300, 24
      %v308 = vld [vmem:[%s307] sm:$0xe]
      %v309 = vld [vmem:[%s307 + $0x4] sm:$0xf]
      %v310 = vld [vmem:[%s307 + $0x8] sm:$0x1]
      %v311 = vld [vmem:[%s307 + $0xc] sm:$0xe]
      %v312 = vld [vmem:[%s307 + $0x10] sm:$0xf]
      %v313 = vld [vmem:[%s307 + $0x14] sm:$0x1]
      %v314 = vld [vmem:[%s307 + $0x18] sm:$0xe]
      %v315 = vld [vmem:[%s307 + $0x1c] sm:$0xf]
      %v316 = vld [vmem:[%s307 + $0x20] sm:$0x1]
      %v317 = vld [vmem:[%s307 + $0x24] sm:$0xe]
      %v318 = vld [vmem:[%s307 + $0x28] sm:$0xf]
      %v319 = vld [vmem:[%s307 + $0x2c] sm:$0x1]
      %v320 = vld [vmem:[%s307 + $0x30] sm:$0xe]
      %v321 = vld [vmem:[%s307 + $0x34] sm:$0xf]
      %v322 = vld [vmem:[%s307 + $0x38] sm:$0x1]
      %v323 = vld [vmem:[%s307 + $0x3c] sm:$0xe]
      %v324 = vld [vmem:[%s307 + $0x40] sm:$0xf]
      %v325 = vld [vmem:[%s307 + $0x44] sm:$0x1]
      %v326 = vld [vmem:[%s307 + $0x48] sm:$0xe]
      %v327 = vld [vmem:[%s307 + $0x4c] sm:$0xf]
      %v328 = vld [vmem:[%s307 + $0x50] sm:$0x1]
      %v329 = vld [vmem:[%s307 + $0x54] sm:$0xe]
      %v330 = vld [vmem:[%s307 + $0x58] sm:$0xf]
      %v331 = vld [vmem:[%s307 + $0x5c] sm:$0x1]
      %v332 = vld [vmem:[%s307 + $0x60] sm:$0xe]
      %v333 = vld [vmem:[%s307 + $0x64] sm:$0xf]
      %v334 = vld [vmem:[%s307 + $0x68] sm:$0x1]
      %v335 = vld [vmem:[%s307 + $0x6c] sm:$0xe]
      %v336 = vld [vmem:[%s307 + $0x70] sm:$0xf]
      %v337 = vld [vmem:[%s307 + $0x74] sm:$0x1]
      %v338 = vld [vmem:[%s307 + $0x78] sm:$0xe]
      %v339 = vld [vmem:[%s307 + $0x7c] sm:$0xf]
      %v340 = vld [vmem:[%s307 + $0x80] sm:$0x1]
      %v341 = vld [vmem:[%s307 + $0x84] sm:$0xe]
      %v342 = vld [vmem:[%s307 + $0x88] sm:$0xf]
      %v343 = vld [vmem:[%s307 + $0x8c] sm:$0x1]
      %v344 = vld [vmem:[%s307 + $0x90] sm:$0xe]
      %v345 = vld [vmem:[%s307 + $0x94] sm:$0xf]
      %v346 = vld [vmem:[%s307 + $0x98] sm:$0x1]
      %v347 = vld [vmem:[%s307 + $0x9c] sm:$0xe]
      %v348 = vld [vmem:[%s307 + $0xa0] sm:$0xf]
      %v349 = vld [vmem:[%s307 + $0xa4] sm:$0x1]
      %v350 = vld [vmem:[%s307 + $0xa8] sm:$0xe]
      %v351 = vld [vmem:[%s307 + $0xac] sm:$0xf]
      %v352 = vld [vmem:[%s307 + $0xb0] sm:$0x1]
      %v353 = vld [vmem:[%s307 + $0xb4] sm:$0xe]
      %v354 = vld [vmem:[%s307 + $0xb8] sm:$0xf]
      %v355 = vld [vmem:[%s307 + $0xbc] sm:$0x1]
      %v356 = vunpack.c.l.bf16 %v308
      %v357 = vunpack.c.l.bf16 %v309
      %v358 = vunpack.c.l.bf16 %v310
      %v359 = vunpack.c.l.bf16 %v311
      %v360 = vunpack.c.l.bf16 %v312
      %v361 = vunpack.c.l.bf16 %v313
      %v362 = vunpack.c.l.bf16 %v314
      %v363 = vunpack.c.l.bf16 %v315
      %v364 = vunpack.c.l.bf16 %v316
      %v365 = vunpack.c.l.bf16 %v317
      %v366 = vunpack.c.l.bf16 %v318
      %v367 = vunpack.c.l.bf16 %v319
      %v368 = vunpack.c.l.bf16 %v320
      %v369 = vunpack.c.l.bf16 %v321
      %v370 = vunpack.c.l.bf16 %v322
      %v371 = vunpack.c.l.bf16 %v323
      %v372 = vunpack.c.l.bf16 %v324
      %v373 = vunpack.c.l.bf16 %v325
      %v374 = vunpack.c.l.bf16 %v326
      %v375 = vunpack.c.l.bf16 %v327
      %v376 = vunpack.c.l.bf16 %v328
      %v377 = vunpack.c.l.bf16 %v329
      %v378 = vunpack.c.l.bf16 %v330
      %v379 = vunpack.c.l.bf16 %v331
      %v380 = vunpack.c.l.bf16 %v332
      %v381 = vunpack.c.l.bf16 %v333
      %v382 = vunpack.c.l.bf16 %v334
      %v383 = vunpack.c.l.bf16 %v335
      %v384 = vunpack.c.l.bf16 %v336
      %v385 = vunpack.c.l.bf16 %v337
      %v386 = vunpack.c.l.bf16 %v338
      %v387 = vunpack.c.l.bf16 %v339
      %v388 = vunpack.c.l.bf16 %v340
      %v389 = vunpack.c.l.bf16 %v341
      %v390 = vunpack.c.l.bf16 %v342
      %v391 = vunpack.c.l.bf16 %v343
      %v392 = vunpack.c.l.bf16 %v344
      %v393 = vunpack.c.l.bf16 %v345
      %v394 = vunpack.c.l.bf16 %v346
      %v395 = vunpack.c.l.bf16 %v347
      %v396 = vunpack.c.l.bf16 %v348
      %v397 = vunpack.c.l.bf16 %v349
      %v398 = vunpack.c.l.bf16 %v350
      %v399 = vunpack.c.l.bf16 %v351
      %v400 = vunpack.c.l.bf16 %v352
      %v401 = vunpack.c.l.bf16 %v353
      %v402 = vunpack.c.l.bf16 %v354
      %v403 = vunpack.c.l.bf16 %v355
      %vm452 = vcmask 1045504
      %v453 = vrot.slane %v356, 2
      %v454 = vrot.slane %v357, 2
      %v455 = vsel %vm452, %v453, %v454
      %v456 = vrot.slane %v358, 2
      %v457 = vsel %vm452, %v454, %v456
      %v458 = vrot.slane %v359, 2
      %v459 = vrot.slane %v360, 2
      %v460 = vsel %vm452, %v458, %v459
      %v461 = vrot.slane %v361, 2
      %v462 = vsel %vm452, %v459, %v461
      %v463 = vrot.slane %v362, 2
      %v464 = vrot.slane %v363, 2
      %v465 = vsel %vm452, %v463, %v464
      %v466 = vrot.slane %v364, 2
      %v467 = vsel %vm452, %v464, %v466
      %v468 = vrot.slane %v365, 2
      %v469 = vrot.slane %v366, 2
      %v470 = vsel %vm452, %v468, %v469
      %v471 = vrot.slane %v367, 2
      %v472 = vsel %vm452, %v469, %v471
      %v473 = vrot.slane %v368, 2
      %v474 = vrot.slane %v369, 2
      %v475 = vsel %vm452, %v473, %v474
      %v476 = vrot.slane %v370, 2
      %v477 = vsel %vm452, %v474, %v476
      %v478 = vrot.slane %v371, 2
      %v479 = vrot.slane %v372, 2
      %v480 = vsel %vm452, %v478, %v479
      %v481 = vrot.slane %v373, 2
      %v482 = vsel %vm452, %v479, %v481
      %v483 = vrot.slane %v374, 2
      %v484 = vrot.slane %v375, 2
      %v485 = vsel %vm452, %v483, %v484
      %v486 = vrot.slane %v376, 2
      %v487 = vsel %vm452, %v484, %v486
      %v488 = vrot.slane %v377, 2
      %v489 = vrot.slane %v378, 2
      %v490 = vsel %vm452, %v488, %v489
      %v491 = vrot.slane %v379, 2
      %v492 = vsel %vm452, %v489, %v491
      %v493 = vrot.slane %v380, 2
      %v494 = vrot.slane %v381, 2
      %v495 = vsel %vm452, %v493, %v494
      %v496 = vrot.slane %v382, 2
      %v497 = vsel %vm452, %v494, %v496
      %v498 = vrot.slane %v383, 2
      %v499 = vrot.slane %v384, 2
      %v500 = vsel %vm452, %v498, %v499
      %v501 = vrot.slane %v385, 2
      %v502 = vsel %vm452, %v499, %v501
      %v503 = vrot.slane %v386, 2
      %v504 = vrot.slane %v387, 2
      %v505 = vsel %vm452, %v503, %v504
      %v506 = vrot.slane %v388, 2
      %v507 = vsel %vm452, %v504, %v506
      %v508 = vrot.slane %v389, 2
      %v509 = vrot.slane %v390, 2
      %v510 = vsel %vm452, %v508, %v509
      %v511 = vrot.slane %v391, 2
      %v512 = vsel %vm452, %v509, %v511
      %v513 = vrot.slane %v392, 2
      %v514 = vrot.slane %v393, 2
      %v515 = vsel %vm452, %v513, %v514
      %v516 = vrot.slane %v394, 2
      %v517 = vsel %vm452, %v514, %v516
      %v518 = vrot.slane %v395, 2
      %v519 = vrot.slane %v396, 2
      %v520 = vsel %vm452, %v518, %v519
      %v521 = vrot.slane %v397, 2
      %v522 = vsel %vm452, %v519, %v521
      %v523 = vrot.slane %v398, 2
      %v524 = vrot.slane %v399, 2
      %v525 = vsel %vm452, %v523, %v524
      %v526 = vrot.slane %v400, 2
      %v527 = vsel %vm452, %v524, %v526
      %v528 = vrot.slane %v401, 2
      %v529 = vrot.slane %v402, 2
      %v530 = vsel %vm452, %v528, %v529
      %v531 = vrot.slane %v403, 2
      %v532 = vsel %vm452, %v529, %v531
      %vm565 = vcmask 31744
      %v566 = vsel %vm565, %v455, 0.0
      %v567 = vsel %vm565, %v457, 0.0
      %v568 = vadd.f32 %v566, %v567
      %v569 = vrot.slane %v568, 4
      %v570 = vadd.f32 %v568, %v569
      %v571 = vrot.slane %v570, 2
      %v572 = vadd.f32 %v570, %v571
      %v573 = vrot.slane %v572, 1
      %v574 = vadd.f32 %v572, %v573
      %v575 = vsel %vm565, %v460, 0.0
      %v576 = vsel %vm565, %v462, 0.0
      %v577 = vadd.f32 %v575, %v576
      %v578 = vrot.slane %v577, 4
      %v579 = vadd.f32 %v577, %v578
      %v580 = vrot.slane %v579, 2
      %v581 = vadd.f32 %v579, %v580
      %v582 = vrot.slane %v581, 1
      %v583 = vadd.f32 %v581, %v582
      %v584 = vsel %vm565, %v465, 0.0
      %v585 = vsel %vm565, %v467, 0.0
      %v586 = vadd.f32 %v584, %v585
      %v587 = vrot.slane %v586, 4
      %v588 = vadd.f32 %v586, %v587
      %v589 = vrot.slane %v588, 2
      %v590 = vadd.f32 %v588, %v589
      %v591 = vrot.slane %v590, 1
      %v592 = vadd.f32 %v590, %v591
      %v593 = vsel %vm565, %v470, 0.0
      %v594 = vsel %vm565, %v472, 0.0
      %v595 = vadd.f32 %v593, %v594
      %v596 = vrot.slane %v595, 4
      %v597 = vadd.f32 %v595, %v596
      %v598 = vrot.slane %v597, 2
      %v599 = vadd.f32 %v597, %v598
      %v600 = vrot.slane %v599, 1
      %v601 = vadd.f32 %v599, %v600
      %v602 = vsel %vm565, %v475, 0.0
      %v603 = vsel %vm565, %v477, 0.0
      %v604 = vadd.f32 %v602, %v603
      %v605 = vrot.slane %v604, 4
      %v606 = vadd.f32 %v604, %v605
      %v607 = vrot.slane %v606, 2
      %v608 = vadd.f32 %v606, %v607
      %v609 = vrot.slane %v608, 1
      %v610 = vadd.f32 %v608, %v609
      %v611 = vsel %vm565, %v480, 0.0
      %v612 = vsel %vm565, %v482, 0.0
      %v613 = vadd.f32 %v611, %v612
      %v614 = vrot.slane %v613, 4
      %v615 = vadd.f32 %v613, %v614
      %v616 = vrot.slane %v615, 2
      %v617 = vadd.f32 %v615, %v616
      %v618 = vrot.slane %v617, 1
      %v619 = vadd.f32 %v617, %v618
      %v620 = vsel %vm565, %v485, 0.0
      %v621 = vsel %vm565, %v487, 0.0
      %v622 = vadd.f32 %v620, %v621
      %v623 = vrot.slane %v622, 4
      %v624 = vadd.f32 %v622, %v623
      %v625 = vrot.slane %v624, 2
      %v626 = vadd.f32 %v624, %v625
      %v627 = vrot.slane %v626, 1
      %v628 = vadd.f32 %v626, %v627
      %v629 = vsel %vm565, %v490, 0.0
      %v630 = vsel %vm565, %v492, 0.0
      %v631 = vadd.f32 %v629, %v630
      %v632 = vrot.slane %v631, 4
      %v633 = vadd.f32 %v631, %v632
      %v634 = vrot.slane %v633, 2
      %v635 = vadd.f32 %v633, %v634
      %v636 = vrot.slane %v635, 1
      %v637 = vadd.f32 %v635, %v636
      %v638 = vsel %vm565, %v495, 0.0
      %v639 = vsel %vm565, %v497, 0.0
      %v640 = vadd.f32 %v638, %v639
      %v641 = vrot.slane %v640, 4
      %v642 = vadd.f32 %v640, %v641
      %v643 = vrot.slane %v642, 2
      %v644 = vadd.f32 %v642, %v643
      %v645 = vrot.slane %v644, 1
      %v646 = vadd.f32 %v644, %v645
      %v647 = vsel %vm565, %v500, 0.0
      %v648 = vsel %vm565, %v502, 0.0
      %v649 = vadd.f32 %v647, %v648
      %v650 = vrot.slane %v649, 4
      %v651 = vadd.f32 %v649, %v650
      %v652 = vrot.slane %v651, 2
      %v653 = vadd.f32 %v651, %v652
      %v654 = vrot.slane %v653, 1
      %v655 = vadd.f32 %v653, %v654
      %v656 = vsel %vm565, %v505, 0.0
      %v657 = vsel %vm565, %v507, 0.0
      %v658 = vadd.f32 %v656, %v657
      %v659 = vrot.slane %v658, 4
      %v660 = vadd.f32 %v658, %v659
      %v661 = vrot.slane %v660, 2
      %v662 = vadd.f32 %v660, %v661
      %v663 = vrot.slane %v662, 1
      %v664 = vadd.f32 %v662, %v663
      %v665 = vsel %vm565, %v510, 0.0
      %v666 = vsel %vm565, %v512, 0.0
      %v667 = vadd.f32 %v665, %v666
      %v668 = vrot.slane %v667, 4
      %v669 = vadd.f32 %v667, %v668
      %v670 = vrot.slane %v669, 2
      %v671 = vadd.f32 %v669, %v670
      %v672 = vrot.slane %v671, 1
      %v673 = vadd.f32 %v671, %v672
      %v674 = vsel %vm565, %v515, 0.0
      %v675 = vsel %vm565, %v517, 0.0
      %v676 = vadd.f32 %v674, %v675
      %v677 = vrot.slane %v676, 4
      %v678 = vadd.f32 %v676, %v677
      %v679 = vrot.slane %v678, 2
      %v680 = vadd.f32 %v678, %v679
      %v681 = vrot.slane %v680, 1
      %v682 = vadd.f32 %v680, %v681
      %v683 = vsel %vm565, %v520, 0.0
      %v684 = vsel %vm565, %v522, 0.0
      %v685 = vadd.f32 %v683, %v684
      %v686 = vrot.slane %v685, 4
      %v687 = vadd.f32 %v685, %v686
      %v688 = vrot.slane %v687, 2
      %v689 = vadd.f32 %v687, %v688
      %v690 = vrot.slane %v689, 1
      %v691 = vadd.f32 %v689, %v690
      %v692 = vsel %vm565, %v525, 0.0
      %v693 = vsel %vm565, %v527, 0.0
      %v694 = vadd.f32 %v692, %v693
      %v695 = vrot.slane %v694, 4
      %v696 = vadd.f32 %v694, %v695
      %v697 = vrot.slane %v696, 2
      %v698 = vadd.f32 %v696, %v697
      %v699 = vrot.slane %v698, 1
      %v700 = vadd.f32 %v698, %v699
      %v701 = vsel %vm565, %v530, 0.0
      %v702 = vsel %vm565, %v532, 0.0
      %v703 = vadd.f32 %v701, %v702
      %v704 = vrot.slane %v703, 4
      %v705 = vadd.f32 %v703, %v704
      %v706 = vrot.slane %v705, 2
      %v707 = vadd.f32 %v705, %v706
      %v708 = vrot.slane %v707, 1
      %v709 = vadd.f32 %v707, %v708
      %v710 = vmul.f32 %v574, 0.0625
      %v711 = vmul.f32 %v583, 0.0625
      %v712 = vmul.f32 %v592, 0.0625
      %v713 = vmul.f32 %v601, 0.0625
      %v714 = vmul.f32 %v610, 0.0625
      %v715 = vmul.f32 %v619, 0.0625
      %v716 = vmul.f32 %v628, 0.0625
      %v717 = vmul.f32 %v637, 0.0625
      %v718 = vmul.f32 %v646, 0.0625
      %v719 = vmul.f32 %v655, 0.0625
      %v720 = vmul.f32 %v664, 0.0625
      %v721 = vmul.f32 %v673, 0.0625
      %v722 = vmul.f32 %v682, 0.0625
      %v723 = vmul.f32 %v691, 0.0625
      %v724 = vmul.f32 %v700, 0.0625
      %v725 = vmul.f32 %v709, 0.0625
      %vm726 = vcmask 31746
      %v727 = vsel %vm726, %v356, 0.0
      %v728 = vsel %vm726, %v359, 0.0
      %v729 = vadd.f32 %v727, %v728
      %v730 = vsel %vm726, %v362, 0.0
      %v731 = vadd.f32 %v729, %v730
      %v732 = vsel %vm726, %v365, 0.0
      %v733 = vadd.f32 %v731, %v732
      %v734 = vsel %vm726, %v368, 0.0
      %v735 = vadd.f32 %v733, %v734
      %v736 = vsel %vm726, %v371, 0.0
      %v737 = vadd.f32 %v735, %v736
      %v738 = vsel %vm726, %v374, 0.0
      %v739 = vadd.f32 %v737, %v738
      %v740 = vsel %vm726, %v377, 0.0
      %v741 = vadd.f32 %v739, %v740
      %v742 = vsel %vm726, %v380, 0.0
      %v743 = vadd.f32 %v741, %v742
      %v744 = vsel %vm726, %v383, 0.0
      %v745 = vadd.f32 %v743, %v744
      %v746 = vsel %vm726, %v386, 0.0
      %v747 = vadd.f32 %v745, %v746
      %v748 = vsel %vm726, %v389, 0.0
      %v749 = vadd.f32 %v747, %v748
      %v750 = vsel %vm726, %v392, 0.0
      %v751 = vadd.f32 %v749, %v750
      %v752 = vsel %vm726, %v395, 0.0
      %v753 = vadd.f32 %v751, %v752
      %v754 = vsel %vm726, %v398, 0.0
      %v755 = vadd.f32 %v753, %v754
      %v756 = vsel %vm726, %v401, 0.0
      %v757 = vadd.f32 %v755, %v756
      %v758 = vsel %vm565, %v357, 0.0
      %v759 = vsel %vm565, %v360, 0.0
      %v760 = vadd.f32 %v758, %v759
      %v761 = vsel %vm565, %v363, 0.0
      %v762 = vadd.f32 %v760, %v761
      %v763 = vsel %vm565, %v366, 0.0
      %v764 = vadd.f32 %v762, %v763
      %v765 = vsel %vm565, %v369, 0.0
      %v766 = vadd.f32 %v764, %v765
      %v767 = vsel %vm565, %v372, 0.0
      %v768 = vadd.f32 %v766, %v767
      %v769 = vsel %vm565, %v375, 0.0
      %v770 = vadd.f32 %v768, %v769
      %v771 = vsel %vm565, %v378, 0.0
      %v772 = vadd.f32 %v770, %v771
      %v773 = vsel %vm565, %v381, 0.0
      %v774 = vadd.f32 %v772, %v773
      %v775 = vsel %vm565, %v384, 0.0
      %v776 = vadd.f32 %v774, %v775
      %v777 = vsel %vm565, %v387, 0.0
      %v778 = vadd.f32 %v776, %v777
      %v779 = vsel %vm565, %v390, 0.0
      %v780 = vadd.f32 %v778, %v779
      %v781 = vsel %vm565, %v393, 0.0
      %v782 = vadd.f32 %v780, %v781
      %v783 = vsel %vm565, %v396, 0.0
      %v784 = vadd.f32 %v782, %v783
      %v785 = vsel %vm565, %v399, 0.0
      %v786 = vadd.f32 %v784, %v785
      %v787 = vsel %vm565, %v402, 0.0
      %v788 = vadd.f32 %v786, %v787
      %vm789 = vcmask 25600
      %v790 = vsel %vm789, %v358, 0.0
      %v791 = vsel %vm789, %v361, 0.0
      %v792 = vadd.f32 %v790, %v791
      %v793 = vsel %vm789, %v364, 0.0
      %v794 = vadd.f32 %v792, %v793
      %v795 = vsel %vm789, %v367, 0.0
      %v796 = vadd.f32 %v794, %v795
      %v797 = vsel %vm789, %v370, 0.0
      %v798 = vadd.f32 %v796, %v797
      %v799 = vsel %vm789, %v373, 0.0
      %v800 = vadd.f32 %v798, %v799
      %v801 = vsel %vm789, %v376, 0.0
      %v802 = vadd.f32 %v800, %v801
      %v803 = vsel %vm789, %v379, 0.0
      %v804 = vadd.f32 %v802, %v803
      %v805 = vsel %vm789, %v382, 0.0
      %v806 = vadd.f32 %v804, %v805
      %v807 = vsel %vm789, %v385, 0.0
      %v808 = vadd.f32 %v806, %v807
      %v809 = vsel %vm789, %v388, 0.0
      %v810 = vadd.f32 %v808, %v809
      %v811 = vsel %vm789, %v391, 0.0
      %v812 = vadd.f32 %v810, %v811
      %v813 = vsel %vm789, %v394, 0.0
      %v814 = vadd.f32 %v812, %v813
      %v815 = vsel %vm789, %v397, 0.0
      %v816 = vadd.f32 %v814, %v815
      %v817 = vsel %vm789, %v400, 0.0
      %v818 = vadd.f32 %v816, %v817
      %v819 = vsel %vm789, %v403, 0.0
      %v820 = vadd.f32 %v818, %v819
      %v821 = vmul.f32 %v757, 0.0625
      %v822 = vmul.f32 %v788, 0.0625
      %v823 = vmul.f32 %v820, 0.0625
      %824 = vst.msk [vmem:[#allocation2] sm:$0xff] %vm565, 0.0
      %825 = vst.msk [vmem:[#allocation2 + $0x8] sm:$0xff] %vm565, 0.0
      %vm826 = vcmask 27648
      %827 = vst.msk [vmem:[#allocation2 + $0x10] sm:$0xf] %vm826, 0.0
      %vm844 = vcmask 1041409
      %v845 = vsel %vm844, %v711, %v710
      %vm846 = vcmask 1042434
      %v847 = vsel %vm846, %v712, %v845
      %vm848 = vcmask 1043459
      %v849 = vsel %vm848, %v713, %v847
      %vm850 = vcmask 1044484
      %v851 = vsel %vm850, %v714, %v849
      %vm852 = vcmask 1045509
      %v853 = vsel %vm852, %v715, %v851
      %vm854 = vcmask 1046534
      %v855 = vsel %vm854, %v716, %v853
      %vm856 = vcmask 1047559
      %v857 = vsel %vm856, %v717, %v855
      %v858 = vsel %vm844, %v719, %v718
      %v859 = vsel %vm846, %v720, %v858
      %v860 = vsel %vm848, %v721, %v859
      %v861 = vsel %vm850, %v722, %v860
      %v862 = vsel %vm852, %v723, %v861
      %v863 = vsel %vm854, %v724, %v862
      %v864 = vsel %vm856, %v725, %v863
      %867 = vst.msk [vmem:[#allocation2 + $0x2] sm:$0xff] %vm565, %v857
      %868 = vst.msk [vmem:[#allocation2 + $0xa] sm:$0xff] %vm565, %v864
      %v869 = vld [vmem:[#allocation2 + $0x1] sm:$0xff]
      %v870 = vld [vmem:[#allocation2 + $0x9] sm:$0xff]
      %v871 = vld [vmem:[%s1] sm:$0xf]
      %v872 = vld [vmem:[#allocation2 + $0x2] sm:$0xff]
      %v873 = vld [vmem:[#allocation2 + $0xa] sm:$0xff]
      %s874 = scalar_lea.vmem %s1, 4
      %v875 = vld [vmem:[%s874] sm:$0xf]
      %v877 = vsel %vm565, %v872, 0
      %v880 = vsel %vm565, %v873, 0
      %vm882 = vcmask 1043456
      %v884 = vsel %vm882, %v875, 0
      %886 = vmatprep.subr.mxu0 0.0
      %887 = vmatpush1.msra.mxu0 %v884
      %888 = vmatprep.subr.mxu0 0.0
      %889 = vmatpush1.msra.mxu0 0.0
      %890 = vmatprep.subr.mxu0 0.0
      %891 = vmatpush1.msra.mxu0 0.0
      %892 = vmatprep.subr.mxu0 0.0
      %893 = vmatpush1.msra.mxu0 0.0
      %894 = vmatprep.subr.mxu0 0.0
      %895 = vmatpush1.msra.mxu0 0.0
      %896 = vmatprep.subr.mxu0 0.0
      %897 = vmatpush1.msra.mxu0 0.0
      %898 = vmatprep.subr.mxu0 0.0
      %899 = vmatpush1.msra.mxu0 0.0
      %900 = vmatprep.subr.mxu0 0.0
      %901 = vmatpush1.msra.mxu0 0.0
      %902 = vmatprep.subr.mxu0 0.0
      %903 = vmatpush1.msra.mxu0 0.0
      %904 = vmatprep.subr.mxu0 0.0
      %905 = vmatpush1.msra.mxu0 0.0
      %906 = vmatprep.subr.mxu0 0.0
      %907 = vmatpush1.msra.mxu0 0.0
      %908 = vmatprep.subr.mxu0 0.0
      %909 = vmatpush1.msra.mxu0 0.0
      %910 = vmatprep.subr.mxu0 0.0
      %911 = vmatpush1.msra.mxu0 0.0
      %912 = vmatprep.subr.mxu0 0.0
      %913 = vmatpush1.msra.mxu0 0.0
      %914 = vmatprep.subr.mxu0 0.0
      %915 = vmatpush1.msra.mxu0 0.0
      %916 = vmatprep.subr.mxu0 0.0
      %917 = vmatpush1.msra.mxu0 0.0
      %918 = vmatprep.subr.mxu0 0.0
      %919 = vmatpush1.msra.mxu0 0.0
      %920 = vmatprep.subr.mxu0 0.0
      %921 = vmatpush1.msra.mxu0 0.0
      %922 = vmatprep.subr.mxu0 0.0
      %923 = vmatpush1.msra.mxu0 0.0
      %924 = vmatprep.subr.mxu0 0.0
      %925 = vmatpush1.msra.mxu0 0.0
      %926 = vmatprep.subr.mxu0 0.0
      %927 = vmatpush1.msra.mxu0 0.0
      %928 = vmatprep.subr.mxu0 0.0
      %929 = vmatpush1.msra.mxu0 0.0
      %930 = vmatprep.subr.mxu0 0.0
      %931 = vmatpush1.msra.mxu0 0.0
      %932 = vmatprep.subr.mxu0 0.0
      %933 = vmatpush1.msra.mxu0 0.0
      %934 = vmatprep.subr.mxu0 0.0
      %935 = vmatpush1.msra.mxu0 0.0
      %936 = vmatprep.subr.mxu0 0.0
      %937 = vmatpush1.msra.mxu0 0.0
      %938 = vmatprep.subr.mxu0 0.0
      %939 = vmatpush1.msra.mxu0 0.0
      %940 = vmatprep.subr.mxu0 0.0
      %941 = vmatpush1.msra.mxu0 0.0
      %942 = vmatprep.subr.mxu0 0.0
      %943 = vmatpush1.msra.mxu0 0.0
      %944 = vmatprep.subr.mxu0 0.0
      %945 = vmatpush1.msra.mxu0 0.0
      %946 = vmatprep.subr.mxu0 0.0
      %947 = vmatpush1.msra.mxu0 0.0
      %948 = vmatprep.subr.mxu0 0.0
      %949 = vmatpush1.msra.mxu0 0.0
      %950 = vmatprep.mubr.f32.mxu0 0.0
      %951 = vmatmul.mubr.f32.gmra.mrb[0].mxu0 %v877
      %v952 = vpop.f32.mrb[0].mxu0
      %v953 = vadd.f32 0.0, %v952
      %v954 = vpop.f32.mrb[0].mxu0
      %955 = vmatprep.mubr.f32.mxu0 0.0
      %956 = vmatmul.mubr.f32.gmra.mrb[0].mxu0 %v880
      %v957 = vpop.f32.mrb[0].mxu0
      %v958 = vadd.f32 0.0, %v957
      %v959 = vpop.f32.mrb[0].mxu0
      %960 = vdwg.mxu0
      %v962 = vsel %vm565, %v869, 0
      %v965 = vsel %vm565, %v870, 0
      %v968 = vsel %vm882, %v871, 0
      %970 = vmatprep.subr.mxu0 0.0
      %971 = vmatpush1.msra.mxu0 %v968
      %972 = vmatprep.subr.mxu0 0.0
      %973 = vmatpush1.msra.mxu0 0.0
      %974 = vmatprep.subr.mxu0 0.0
      %975 = vmatpush1.msra.mxu0 0.0
      %976 = vmatprep.subr.mxu0 0.0
      %977 = vmatpush1.msra.mxu0 0.0
      %978 = vmatprep.subr.mxu0 0.0
      %979 = vmatpush1.msra.mxu0 0.0
      %980 = vmatprep.subr.mxu0 0.0
      %981 = vmatpush1.msra.mxu0 0.0
      %982 = vmatprep.subr.mxu0 0.0
      %983 = vmatpush1.msra.mxu0 0.0
      %984 = vmatprep.subr.mxu0 0.0
      %985 = vmatpush1.msra.mxu0 0.0
      %986 = vmatprep.subr.mxu0 0.0
      %987 = vmatpush1.msra.mxu0 0.0
      %988 = vmatprep.subr.mxu0 0.0
      %989 = vmatpush1.msra.mxu0 0.0
      %990 = vmatprep.subr.mxu0 0.0
      %991 = vmatpush1.msra.mxu0 0.0
      %992 = vmatprep.subr.mxu0 0.0
      %993 = vmatpush1.msra.mxu0 0.0
      %994 = vmatprep.subr.mxu0 0.0
      %995 = vmatpush1.msra.mxu0 0.0
      %996 = vmatprep.subr.mxu0 0.0
      %997 = vmatpush1.msra.mxu0 0.0
      %998 = vmatprep.subr.mxu0 0.0
      %999 = vmatpush1.msra.mxu0 0.0
      %1000 = vmatprep.subr.mxu0 0.0
      %1001 = vmatpush1.msra.mxu0 0.0
      %1002 = vmatprep.subr.mxu0 0.0
      %1003 = vmatpush1.msra.mxu0 0.0
      %1004 = vmatprep.subr.mxu0 0.0
      %1005 = vmatpush1.msra.mxu0 0.0
      %1006 = vmatprep.subr.mxu0 0.0
      %1007 = vmatpush1.msra.mxu0 0.0
      %1008 = vmatprep.subr.mxu0 0.0
      %1009 = vmatpush1.msra.mxu0 0.0
      %1010 = vmatprep.subr.mxu0 0.0
      %1011 = vmatpush1.msra.mxu0 0.0
      %1012 = vmatprep.subr.mxu0 0.0
      %1013 = vmatpush1.msra.mxu0 0.0
      %1014 = vmatprep.subr.mxu0 0.0
      %1015 = vmatpush1.msra.mxu0 0.0
      %1016 = vmatprep.subr.mxu0 0.0
      %1017 = vmatpush1.msra.mxu0 0.0
      %1018 = vmatprep.subr.mxu0 0.0
      %1019 = vmatpush1.msra.mxu0 0.0
      %1020 = vmatprep.subr.mxu0 0.0
      %1021 = vmatpush1.msra.mxu0 0.0
      %1022 = vmatprep.subr.mxu0 0.0
      %1023 = vmatpush1.msra.mxu0 0.0
      %1024 = vmatprep.subr.mxu0 0.0
      %1025 = vmatpush1.msra.mxu0 0.0
      %1026 = vmatprep.subr.mxu0 0.0
      %1027 = vmatpush1.msra.mxu0 0.0
      %1028 = vmatprep.subr.mxu0 0.0
      %1029 = vmatpush1.msra.mxu0 0.0
      %1030 = vmatprep.subr.mxu0 0.0
      %1031 = vmatpush1.msra.mxu0 0.0
      %1032 = vmatprep.subr.mxu0 0.0
      %1033 = vmatpush1.msra.mxu0 0.0
      %1034 = vmatprep.mubr.f32.mxu0 0.0
      %1035 = vmatmul.mubr.f32.gmra.mrb[0].mxu0 %v962
      %v1036 = vpop.f32.mrb[0].mxu0
      %v1037 = vadd.f32 %v953, %v1036
      %v1038 = vpop.f32.mrb[0].mxu0
      %1039 = vmatprep.mubr.f32.mxu0 0.0
      %1040 = vmatmul.mubr.f32.gmra.mrb[0].mxu0 %v965
      %v1041 = vpop.f32.mrb[0].mxu0
      %v1042 = vadd.f32 %v958, %v1041
      %v1043 = vpop.f32.mrb[0].mxu0
      %1044 = vdwg.mxu0
      %v1045 = vld [vmem:[#allocation2 + $0x3] sm:$0xff]
      %v1046 = vld [vmem:[#allocation2 + $0xb] sm:$0xff]
      %s1047 = scalar_lea.vmem %s1, 8
      %v1048 = vld [vmem:[%s1047] sm:$0xf]
      %v1050 = vsel %vm565, %v1045, 0
      %v1053 = vsel %vm565, %v1046, 0
      %v1056 = vsel %vm882, %v1048, 0
      %1058 = vmatprep.subr.mxu0 0.0
      %1059 = vmatpush1.msra.mxu0 %v1056
      %1060 = vmatprep.subr.mxu0 0.0
      %1061 = vmatpush1.msra.mxu0 0.0
      %1062 = vmatprep.subr.mxu0 0.0
      %1063 = vmatpush1.msra.mxu0 0.0
      %1064 = vmatprep.subr.mxu0 0.0
      %1065 = vmatpush1.msra.mxu0 0.0
      %1066 = vmatprep.subr.mxu0 0.0
      %1067 = vmatpush1.msra.mxu0 0.0
      %1068 = vmatprep.subr.mxu0 0.0
      %1069 = vmatpush1.msra.mxu0 0.0
      %1070 = vmatprep.subr.mxu0 0.0
      %1071 = vmatpush1.msra.mxu0 0.0
      %1072 = vmatprep.subr.mxu0 0.0
      %1073 = vmatpush1.msra.mxu0 0.0
      %1074 = vmatprep.subr.mxu0 0.0
      %1075 = vmatpush1.msra.mxu0 0.0
      %1076 = vmatprep.subr.mxu0 0.0
      %1077 = vmatpush1.msra.mxu0 0.0
      %1078 = vmatprep.subr.mxu0 0.0
      %1079 = vmatpush1.msra.mxu0 0.0
      %1080 = vmatprep.subr.mxu0 0.0
      %1081 = vmatpush1.msra.mxu0 0.0
      %1082 = vmatprep.subr.mxu0 0.0
      %1083 = vmatpush1.msra.mxu0 0.0
      %1084 = vmatprep.subr.mxu0 0.0
      %1085 = vmatpush1.msra.mxu0 0.0
      %1086 = vmatprep.subr.mxu0 0.0
      %1087 = vmatpush1.msra.mxu0 0.0
      %1088 = vmatprep.subr.mxu0 0.0
      %1089 = vmatpush1.msra.mxu0 0.0
      %1090 = vmatprep.subr.mxu0 0.0
      %1091 = vmatpush1.msra.mxu0 0.0
      %1092 = vmatprep.subr.mxu0 0.0
      %1093 = vmatpush1.msra.mxu0 0.0
      %1094 = vmatprep.subr.mxu0 0.0
      %1095 = vmatpush1.msra.mxu0 0.0
      %1096 = vmatprep.subr.mxu0 0.0
      %1097 = vmatpush1.msra.mxu0 0.0
      %1098 = vmatprep.subr.mxu0 0.0
      %1099 = vmatpush1.msra.mxu0 0.0
      %1100 = vmatprep.subr.mxu0 0.0
      %1101 = vmatpush1.msra.mxu0 0.0
      %1102 = vmatprep.subr.mxu0 0.0
      %1103 = vmatpush1.msra.mxu0 0.0
      %1104 = vmatprep.subr.mxu0 0.0
      %1105 = vmatpush1.msra.mxu0 0.0
      %1106 = vmatprep.subr.mxu0 0.0
      %1107 = vmatpush1.msra.mxu0 0.0
      %1108 = vmatprep.subr.mxu0 0.0
      %1109 = vmatpush1.msra.mxu0 0.0
      %1110 = vmatprep.subr.mxu0 0.0
      %1111 = vmatpush1.msra.mxu0 0.0
      %1112 = vmatprep.subr.mxu0 0.0
      %1113 = vmatpush1.msra.mxu0 0.0
      %1114 = vmatprep.subr.mxu0 0.0
      %1115 = vmatpush1.msra.mxu0 0.0
      %1116 = vmatprep.subr.mxu0 0.0
      %1117 = vmatpush1.msra.mxu0 0.0
      %1118 = vmatprep.subr.mxu0 0.0
      %1119 = vmatpush1.msra.mxu0 0.0
      %1120 = vmatprep.subr.mxu0 0.0
      %1121 = vmatpush1.msra.mxu0 0.0
      %1122 = vmatprep.mubr.f32.mxu0 0.0
      %1123 = vmatmul.mubr.f32.gmra.mrb[0].mxu0 %v1050
      %v1124 = vpop.f32.mrb[0].mxu0
      %v1125 = vadd.f32 0.0, %v1124
      %v1126 = vpop.f32.mrb[0].mxu0
      %1127 = vmatprep.mubr.f32.mxu0 0.0
      %1128 = vmatmul.mubr.f32.gmra.mrb[0].mxu0 %v1053
      %v1129 = vpop.f32.mrb[0].mxu0
      %v1130 = vadd.f32 0.0, %v1129
      %v1131 = vpop.f32.mrb[0].mxu0
      %1132 = vdwg.mxu0
      %v1133 = vadd.f32 %v1037, %v1125
      %v1134 = vadd.f32 %v1042, %v1130
      %v1135 = vld [vmem:[%s7] sm:$0x1]
      %v1136 = vlaneseq
      %v1137 = vshrl.u32 %v1136, 7
      %v1138 = vsub.s32 0, %v1137
      %v1139 = vrot.slane %v1135, %v1138
      %v1140 = vadd.f32 %v1133, %v1139
      %v1141 = vadd.f32 %v1134, %v1139
      %vm1142 = vcmask 64512
      %1143 = vst.msk [vmem:[#allocation4] sm:$0xff] %vm1142, 0.0
      %1144 = vst.msk [vmem:[#allocation4 + $0x8] sm:$0xff] %vm1142, 0.0
      %vm1145 = vcmask 60416
      %1146 = vst.msk [vmem:[#allocation4 + $0x10] sm:$0xf] %vm1145, 0.0
      %1147 = vst.msk [vmem:[#allocation4 + $0x2] sm:$0xff] %vm1142, %v1140
      %1148 = vst.msk [vmem:[#allocation4 + $0xa] sm:$0xff] %vm1142, %v1141
      %v1149 = vld [vmem:[#allocation4] sm:$0xff]
      %v1150 = vld [vmem:[#allocation4 + $0x8] sm:$0xff]
      %v1151 = vld [vmem:[%s3] sm:$0xff]
      %v1152 = vld [vmem:[#allocation4 + $0x2] sm:$0xff]
      %v1153 = vld [vmem:[#allocation4 + $0xa] sm:$0xff]
      %s1154 = scalar_lea.vmem %s3, 8
      %v1155 = vld [vmem:[%s1154] sm:$0xff]
      %v1157 = vsel %vm1142, %v1152, 0
      %v1160 = vsel %vm1142, %v1153, 0
      %1162 = vmatprep.subr.mxu0 0.0
      %1163 = vmatpush1.msra.mxu0 %v1155
      %1164 = vmatprep.subr.mxu0 0.0
      %1165 = vmatpush1.msra.mxu0 0.0
      %1166 = vmatprep.subr.mxu0 0.0
      %1167 = vmatpush1.msra.mxu0 0.0
      %1168 = vmatprep.subr.mxu0 0.0
      %1169 = vmatpush1.msra.mxu0 0.0
      %1170 = vmatprep.subr.mxu0 0.0
      %1171 = vmatpush1.msra.mxu0 0.0
      %1172 = vmatprep.subr.mxu0 0.0
      %1173 = vmatpush1.msra.mxu0 0.0
      %1174 = vmatprep.subr.mxu0 0.0
      %1175 = vmatpush1.msra.mxu0 0.0
      %1176 = vmatprep.subr.mxu0 0.0
      %1177 = vmatpush1.msra.mxu0 0.0
      %1178 = vmatprep.subr.mxu0 0.0
      %1179 = vmatpush1.msra.mxu0 0.0
      %1180 = vmatprep.subr.mxu0 0.0
      %1181 = vmatpush1.msra.mxu0 0.0
      %1182 = vmatprep.subr.mxu0 0.0
      %1183 = vmatpush1.msra.mxu0 0.0
      %1184 = vmatprep.subr.mxu0 0.0
      %1185 = vmatpush1.msra.mxu0 0.0
      %1186 = vmatprep.subr.mxu0 0.0
      %1187 = vmatpush1.msra.mxu0 0.0
      %1188 = vmatprep.subr.mxu0 0.0
      %1189 = vmatpush1.msra.mxu0 0.0
      %1190 = vmatprep.subr.mxu0 0.0
      %1191 = vmatpush1.msra.mxu0 0.0
      %1192 = vmatprep.subr.mxu0 0.0
      %1193 = vmatpush1.msra.mxu0 0.0
      %1194 = vmatprep.subr.mxu0 0.0
      %1195 = vmatpush1.msra.mxu0 0.0
      %1196 = vmatprep.subr.mxu0 0.0
      %1197 = vmatpush1.msra.mxu0 0.0
      %1198 = vmatprep.subr.mxu0 0.0
      %1199 = vmatpush1.msra.mxu0 0.0
      %1200 = vmatprep.subr.mxu0 0.0
      %1201 = vmatpush1.msra.mxu0 0.0
      %1202 = vmatprep.subr.mxu0 0.0
      %1203 = vmatpush1.msra.mxu0 0.0
      %1204 = vmatprep.subr.mxu0 0.0
      %1205 = vmatpush1.msra.mxu0 0.0
      %1206 = vmatprep.subr.mxu0 0.0
      %1207 = vmatpush1.msra.mxu0 0.0
      %1208 = vmatprep.subr.mxu0 0.0
      %1209 = vmatpush1.msra.mxu0 0.0
      %1210 = vmatprep.subr.mxu0 0.0
      %1211 = vmatpush1.msra.mxu0 0.0
      %1212 = vmatprep.subr.mxu0 0.0
      %1213 = vmatpush1.msra.mxu0 0.0
      %1214 = vmatprep.subr.mxu0 0.0
      %1215 = vmatpush1.msra.mxu0 0.0
      %1216 = vmatprep.subr.mxu0 0.0
      %1217 = vmatpush1.msra.mxu0 0.0
      %1218 = vmatprep.subr.mxu0 0.0
      %1219 = vmatpush1.msra.mxu0 0.0
      %1220 = vmatprep.subr.mxu0 0.0
      %1221 = vmatpush1.msra.mxu0 0.0
      %1222 = vmatprep.subr.mxu0 0.0
      %1223 = vmatpush1.msra.mxu0 0.0
      %1224 = vmatprep.subr.mxu0 0.0
      %1225 = vmatpush1.msra.mxu0 0.0
      %1226 = vmatprep.mubr.f32.mxu0 0.0
      %1227 = vmatmul.mubr.f32.gmra.mrb[0].mxu0 %v1157
      %v1228 = vpop.f32.mrb[0].mxu0
      %v1229 = vadd.f32 0.0, %v1228
      %v1230 = vpop.f32.mrb[0].mxu0
      %1231 = vmatprep.mubr.f32.mxu0 0.0
      %1232 = vmatmul.mubr.f32.gmra.mrb[0].mxu0 %v1160
      %v1233 = vpop.f32.mrb[0].mxu0
      %v1234 = vadd.f32 0.0, %v1233
      %v1235 = vpop.f32.mrb[0].mxu0
      %1236 = vdwg.mxu0
      %v1238 = vsel %vm1142, %v1149, 0
      %v1241 = vsel %vm1142, %v1150, 0
      %1243 = vmatprep.subr.mxu0 0.0
      %1244 = vmatpush1.msra.mxu0 %v1151
      %1245 = vmatprep.subr.mxu0 0.0
      %1246 = vmatpush1.msra.mxu0 0.0
      %1247 = vmatprep.subr.mxu0 0.0
      %1248 = vmatpush1.msra.mxu0 0.0
      %1249 = vmatprep.subr.mxu0 0.0
      %1250 = vmatpush1.msra.mxu0 0.0
      %1251 = vmatprep.subr.mxu0 0.0
      %1252 = vmatpush1.msra.mxu0 0.0
      %1253 = vmatprep.subr.mxu0 0.0
      %1254 = vmatpush1.msra.mxu0 0.0
      %1255 = vmatprep.subr.mxu0 0.0
      %1256 = vmatpush1.msra.mxu0 0.0
      %1257 = vmatprep.subr.mxu0 0.0
      %1258 = vmatpush1.msra.mxu0 0.0
      %1259 = vmatprep.subr.mxu0 0.0
      %1260 = vmatpush1.msra.mxu0 0.0
      %1261 = vmatprep.subr.mxu0 0.0
      %1262 = vmatpush1.msra.mxu0 0.0
      %1263 = vmatprep.subr.mxu0 0.0
      %1264 = vmatpush1.msra.mxu0 0.0
      %1265 = vmatprep.subr.mxu0 0.0
      %1266 = vmatpush1.msra.mxu0 0.0
      %1267 = vmatprep.subr.mxu0 0.0
      %1268 = vmatpush1.msra.mxu0 0.0
      %1269 = vmatprep.subr.mxu0 0.0
      %1270 = vmatpush1.msra.mxu0 0.0
      %1271 = vmatprep.subr.mxu0 0.0
      %1272 = vmatpush1.msra.mxu0 0.0
      %1273 = vmatprep.subr.mxu0 0.0
      %1274 = vmatpush1.msra.mxu0 0.0
      %1275 = vmatprep.subr.mxu0 0.0
      %1276 = vmatpush1.msra.mxu0 0.0
      %1277 = vmatprep.subr.mxu0 0.0
      %1278 = vmatpush1.msra.mxu0 0.0
      %1279 = vmatprep.subr.mxu0 0.0
      %1280 = vmatpush1.msra.mxu0 0.0
      %1281 = vmatprep.subr.mxu0 0.0
      %1282 = vmatpush1.msra.mxu0 0.0
      %1283 = vmatprep.subr.mxu0 0.0
      %1284 = vmatpush1.msra.mxu0 0.0
      %1285 = vmatprep.subr.mxu0 0.0
      %1286 = vmatpush1.msra.mxu0 0.0
      %1287 = vmatprep.subr.mxu0 0.0
      %1288 = vmatpush1.msra.mxu0 0.0
      %1289 = vmatprep.subr.mxu0 0.0
      %1290 = vmatpush1.msra.mxu0 0.0
      %1291 = vmatprep.subr.mxu0 0.0
      %1292 = vmatpush1.msra.mxu0 0.0
      %1293 = vmatprep.subr.mxu0 0.0
      %1294 = vmatpush1.msra.mxu0 0.0
      %1295 = vmatprep.subr.mxu0 0.0
      %1296 = vmatpush1.msra.mxu0 0.0
      %1297 = vmatprep.subr.mxu0 0.0
      %1298 = vmatpush1.msra.mxu0 0.0
      %1299 = vmatprep.subr.mxu0 0.0
      %1300 = vmatpush1.msra.mxu0 0.0
      %1301 = vmatprep.subr.mxu0 0.0
      %1302 = vmatpush1.msra.mxu0 0.0
      %1303 = vmatprep.subr.mxu0 0.0
      %1304 = vmatpush1.msra.mxu0 0.0
      %1305 = vmatprep.subr.mxu0 0.0
      %1306 = vmatpush1.msra.mxu0 0.0
      %1307 = vmatprep.mubr.f32.mxu0 0.0
      %1308 = vmatmul.mubr.f32.gmra.mrb[0].mxu0 %v1238
      %v1309 = vpop.f32.mrb[0].mxu0
      %v1310 = vadd.f32 %v1229, %v1309
      %v1311 = vpop.f32.mrb[0].mxu0
      %1312 = vmatprep.mubr.f32.mxu0 0.0
      %1313 = vmatmul.mubr.f32.gmra.mrb[0].mxu0 %v1241
      %v1314 = vpop.f32.mrb[0].mxu0
      %v1315 = vadd.f32 %v1234, %v1314
      %v1316 = vpop.f32.mrb[0].mxu0
      %1317 = vdwg.mxu0
      %v1318 = vld [vmem:[#allocation4 + $0x4] sm:$0xff]
      %v1319 = vld [vmem:[#allocation4 + $0xc] sm:$0xff]
      %s1320 = scalar_lea.vmem %s3, 16
      %v1321 = vld [vmem:[%s1320] sm:$0xff]
      %v1323 = vsel %vm1142, %v1318, 0
      %v1326 = vsel %vm1142, %v1319, 0
      %1328 = vmatprep.subr.mxu0 0.0
      %1329 = vmatpush1.msra.mxu0 %v1321
      %1330 = vmatprep.subr.mxu0 0.0
      %1331 = vmatpush1.msra.mxu0 0.0
      %1332 = vmatprep.subr.mxu0 0.0
      %1333 = vmatpush1.msra.mxu0 0.0
      %1334 = vmatprep.subr.mxu0 0.0
      %1335 = vmatpush1.msra.mxu0 0.0
      %1336 = vmatprep.subr.mxu0 0.0
      %1337 = vmatpush1.msra.mxu0 0.0
      %1338 = vmatprep.subr.mxu0 0.0
      %1339 = vmatpush1.msra.mxu0 0.0
      %1340 = vmatprep.subr.mxu0 0.0
      %1341 = vmatpush1.msra.mxu0 0.0
      %1342 = vmatprep.subr.mxu0 0.0
      %1343 = vmatpush1.msra.mxu0 0.0
      %1344 = vmatprep.subr.mxu0 0.0
      %1345 = vmatpush1.msra.mxu0 0.0
      %1346 = vmatprep.subr.mxu0 0.0
      %1347 = vmatpush1.msra.mxu0 0.0
      %1348 = vmatprep.subr.mxu0 0.0
      %1349 = vmatpush1.msra.mxu0 0.0
      %1350 = vmatprep.subr.mxu0 0.0
      %1351 = vmatpush1.msra.mxu0 0.0
      %1352 = vmatprep.subr.mxu0 0.0
      %1353 = vmatpush1.msra.mxu0 0.0
      %1354 = vmatprep.subr.mxu0 0.0
      %1355 = vmatpush1.msra.mxu0 0.0
      %1356 = vmatprep.subr.mxu0 0.0
      %1357 = vmatpush1.msra.mxu0 0.0
      %1358 = vmatprep.subr.mxu0 0.0
      %1359 = vmatpush1.msra.mxu0 0.0
      %1360 = vmatprep.subr.mxu0 0.0
      %1361 = vmatpush1.msra.mxu0 0.0
      %1362 = vmatprep.subr.mxu0 0.0
      %1363 = vmatpush1.msra.mxu0 0.0
      %1364 = vmatprep.subr.mxu0 0.0
      %1365 = vmatpush1.msra.mxu0 0.0
      %1366 = vmatprep.subr.mxu0 0.0
      %1367 = vmatpush1.msra.mxu0 0.0
      %1368 = vmatprep.subr.mxu0 0.0
      %1369 = vmatpush1.msra.mxu0 0.0
      %1370 = vmatprep.subr.mxu0 0.0
      %1371 = vmatpush1.msra.mxu0 0.0
      %1372 = vmatprep.subr.mxu0 0.0
      %1373 = vmatpush1.msra.mxu0 0.0
      %1374 = vmatprep.subr.mxu0 0.0
      %1375 = vmatpush1.msra.mxu0 0.0
      %1376 = vmatprep.subr.mxu0 0.0
      %1377 = vmatpush1.msra.mxu0 0.0
      %1378 = vmatprep.subr.mxu0 0.0
      %1379 = vmatpush1.msra.mxu0 0.0
      %1380 = vmatprep.subr.mxu0 0.0
      %1381 = vmatpush1.msra.mxu0 0.0
      %1382 = vmatprep.subr.mxu0 0.0
      %1383 = vmatpush1.msra.mxu0 0.0
      %1384 = vmatprep.subr.mxu0 0.0
      %1385 = vmatpush1.msra.mxu0 0.0
      %1386 = vmatprep.subr.mxu0 0.0
      %1387 = vmatpush1.msra.mxu0 0.0
      %1388 = vmatprep.subr.mxu0 0.0
      %1389 = vmatpush1.msra.mxu0 0.0
      %1390 = vmatprep.subr.mxu0 0.0
      %1391 = vmatpush1.msra.mxu0 0.0
      %1392 = vmatprep.mubr.f32.mxu0 0.0
      %1393 = vmatmul.mubr.f32.gmra.mrb[0].mxu0 %v1323
      %v1394 = vpop.f32.mrb[0].mxu0
      %v1395 = vadd.f32 0.0, %v1394
      %v1396 = vpop.f32.mrb[0].mxu0
      %1397 = vmatprep.mubr.f32.mxu0 0.0
      %1398 = vmatmul.mubr.f32.gmra.mrb[0].mxu0 %v1326
      %v1399 = vpop.f32.mrb[0].mxu0
      %v1400 = vadd.f32 0.0, %v1399
      %v1401 = vpop.f32.mrb[0].mxu0
      %1402 = vdwg.mxu0
      %v1403 = vadd.f32 %v1310, %v1395
      %v1404 = vadd.f32 %v1315, %v1400
      %1405 = vst.msk [vmem:[#allocation3] sm:$0xff] %vm565, 0.0
      %1406 = vst.msk [vmem:[#allocation3 + $0x8] sm:$0xff] %vm565, 0.0
      %1407 = vst.msk [vmem:[#allocation3 + $0x10] sm:$0xf] %vm826, 0.0
      %1408 = vst.msk [vmem:[#allocation3] sm:$0xfc] %vm726, %v821
      %1409 = vst.msk [vmem:[#allocation3 + $0x8] sm:$0xff] %vm565, %v822
      %1410 = vst.msk [vmem:[#allocation3 + $0x10] sm:$0x3] %vm789, %v823
      %v1411 = vld [vmem:[#allocation3 + $0x1] sm:$0xff]
      %v1412 = vld [vmem:[#allocation3 + $0x9] sm:$0xff]
      %v1413 = vld [vmem:[%s2] sm:$0xf]
      %v1414 = vld [vmem:[#allocation3 + $0x2] sm:$0xff]
      %v1415 = vld [vmem:[#allocation3 + $0xa] sm:$0xff]
      %s1416 = scalar_lea.vmem %s2, 4
      %v1417 = vld [vmem:[%s1416] sm:$0xf]
      %v1419 = vsel %vm565, %v1414, 0
      %v1422 = vsel %vm565, %v1415, 0
      %v1425 = vsel %vm882, %v1417, 0
      %1427 = vmatprep.subr.mxu0 0.0
      %1428 = vmatpush1.msra.mxu0 %v1425
      %1429 = vmatprep.subr.mxu0 0.0
      %1430 = vmatpush1.msra.mxu0 0.0
      %1431 = vmatprep.subr.mxu0 0.0
      %1432 = vmatpush1.msra.mxu0 0.0
      %1433 = vmatprep.subr.mxu0 0.0
      %1434 = vmatpush1.msra.mxu0 0.0
      %1435 = vmatprep.subr.mxu0 0.0
      %1436 = vmatpush1.msra.mxu0 0.0
      %1437 = vmatprep.subr.mxu0 0.0
      %1438 = vmatpush1.msra.mxu0 0.0
      %1439 = vmatprep.subr.mxu0 0.0
      %1440 = vmatpush1.msra.mxu0 0.0
      %1441 = vmatprep.subr.mxu0 0.0
      %1442 = vmatpush1.msra.mxu0 0.0
      %1443 = vmatprep.subr.mxu0 0.0
      %1444 = vmatpush1.msra.mxu0 0.0
      %1445 = vmatprep.subr.mxu0 0.0
      %1446 = vmatpush1.msra.mxu0 0.0
      %1447 = vmatprep.subr.mxu0 0.0
      %1448 = vmatpush1.msra.mxu0 0.0
      %1449 = vmatprep.subr.mxu0 0.0
      %1450 = vmatpush1.msra.mxu0 0.0
      %1451 = vmatprep.subr.mxu0 0.0
      %1452 = vmatpush1.msra.mxu0 0.0
      %1453 = vmatprep.subr.mxu0 0.0
      %1454 = vmatpush1.msra.mxu0 0.0
      %1455 = vmatprep.subr.mxu0 0.0
      %1456 = vmatpush1.msra.mxu0 0.0
      %1457 = vmatprep.subr.mxu0 0.0
      %1458 = vmatpush1.msra.mxu0 0.0
      %1459 = vmatprep.subr.mxu0 0.0
      %1460 = vmatpush1.msra.mxu0 0.0
      %1461 = vmatprep.subr.mxu0 0.0
      %1462 = vmatpush1.msra.mxu0 0.0
      %1463 = vmatprep.subr.mxu0 0.0
      %1464 = vmatpush1.msra.mxu0 0.0
      %1465 = vmatprep.subr.mxu0 0.0
      %1466 = vmatpush1.msra.mxu0 0.0
      %1467 = vmatprep.subr.mxu0 0.0
      %1468 = vmatpush1.msra.mxu0 0.0
      %1469 = vmatprep.subr.mxu0 0.0
      %1470 = vmatpush1.msra.mxu0 0.0
      %1471 = vmatprep.subr.mxu0 0.0
      %1472 = vmatpush1.msra.mxu0 0.0
      %1473 = vmatprep.subr.mxu0 0.0
      %1474 = vmatpush1.msra.mxu0 0.0
      %1475 = vmatprep.subr.mxu0 0.0
      %1476 = vmatpush1.msra.mxu0 0.0
      %1477 = vmatprep.subr.mxu0 0.0
      %1478 = vmatpush1.msra.mxu0 0.0
      %1479 = vmatprep.subr.mxu0 0.0
      %1480 = vmatpush1.msra.mxu0 0.0
      %1481 = vmatprep.subr.mxu0 0.0
      %1482 = vmatpush1.msra.mxu0 0.0
      %1483 = vmatprep.subr.mxu0 0.0
      %1484 = vmatpush1.msra.mxu0 0.0
      %1485 = vmatprep.subr.mxu0 0.0
      %1486 = vmatpush1.msra.mxu0 0.0
      %1487 = vmatprep.subr.mxu0 0.0
      %1488 = vmatpush1.msra.mxu0 0.0
      %1489 = vmatprep.subr.mxu0 0.0
      %1490 = vmatpush1.msra.mxu0 0.0
      %1491 = vmatprep.mubr.f32.mxu0 0.0
      %1492 = vmatmul.mubr.f32.gmra.mrb[0].mxu0 %v1419
      %v1493 = vpop.f32.mrb[0].mxu0
      %v1494 = vadd.f32 0.0, %v1493
      %v1495 = vpop.f32.mrb[0].mxu0
      %1496 = vmatprep.mubr.f32.mxu0 0.0
      %1497 = vmatmul.mubr.f32.gmra.mrb[0].mxu0 %v1422
      %v1498 = vpop.f32.mrb[0].mxu0
      %v1499 = vadd.f32 0.0, %v1498
      %v1500 = vpop.f32.mrb[0].mxu0
      %1501 = vdwg.mxu0
      %v1503 = vsel %vm565, %v1411, 0
      %v1506 = vsel %vm565, %v1412, 0
      %v1509 = vsel %vm882, %v1413, 0
      %1511 = vmatprep.subr.mxu0 0.0
      %1512 = vmatpush1.msra.mxu0 %v1509
      %1513 = vmatprep.subr.mxu0 0.0
      %1514 = vmatpush1.msra.mxu0 0.0
      %1515 = vmatprep.subr.mxu0 0.0
      %1516 = vmatpush1.msra.mxu0 0.0
      %1517 = vmatprep.subr.mxu0 0.0
      %1518 = vmatpush1.msra.mxu0 0.0
      %1519 = vmatprep.subr.mxu0 0.0
      %1520 = vmatpush1.msra.mxu0 0.0
      %1521 = vmatprep.subr.mxu0 0.0
      %1522 = vmatpush1.msra.mxu0 0.0
      %1523 = vmatprep.subr.mxu0 0.0
      %1524 = vmatpush1.msra.mxu0 0.0
      %1525 = vmatprep.subr.mxu0 0.0
      %1526 = vmatpush1.msra.mxu0 0.0
      %1527 = vmatprep.subr.mxu0 0.0
      %1528 = vmatpush1.msra.mxu0 0.0
      %1529 = vmatprep.subr.mxu0 0.0
      %1530 = vmatpush1.msra.mxu0 0.0
      %1531 = vmatprep.subr.mxu0 0.0
      %1532 = vmatpush1.msra.mxu0 0.0
      %1533 = vmatprep.subr.mxu0 0.0
      %1534 = vmatpush1.msra.mxu0 0.0
      %1535 = vmatprep.subr.mxu0 0.0
      %1536 = vmatpush1.msra.mxu0 0.0
      %1537 = vmatprep.subr.mxu0 0.0
      %1538 = vmatpush1.msra.mxu0 0.0
      %1539 = vmatprep.subr.mxu0 0.0
      %1540 = vmatpush1.msra.mxu0 0.0
      %1541 = vmatprep.subr.mxu0 0.0
      %1542 = vmatpush1.msra.mxu0 0.0
      %1543 = vmatprep.subr.mxu0 0.0
      %1544 = vmatpush1.msra.mxu0 0.0
      %1545 = vmatprep.subr.mxu0 0.0
      %1546 = vmatpush1.msra.mxu0 0.0
      %1547 = vmatprep.subr.mxu0 0.0
      %1548 = vmatpush1.msra.mxu0 0.0
      %1549 = vmatprep.subr.mxu0 0.0
      %1550 = vmatpush1.msra.mxu0 0.0
      %1551 = vmatprep.subr.mxu0 0.0
      %1552 = vmatpush1.msra.mxu0 0.0
      %1553 = vmatprep.subr.mxu0 0.0
      %1554 = vmatpush1.msra.mxu0 0.0
      %1555 = vmatprep.subr.mxu0 0.0
      %1556 = vmatpush1.msra.mxu0 0.0
      %1557 = vmatprep.subr.mxu0 0.0
      %1558 = vmatpush1.msra.mxu0 0.0
      %1559 = vmatprep.subr.mxu0 0.0
      %1560 = vmatpush1.msra.mxu0 0.0
      %1561 = vmatprep.subr.mxu0 0.0
      %1562 = vmatpush1.msra.mxu0 0.0
      %1563 = vmatprep.subr.mxu0 0.0
      %1564 = vmatpush1.msra.mxu0 0.0
      %1565 = vmatprep.subr.mxu0 0.0
      %1566 = vmatpush1.msra.mxu0 0.0
      %1567 = vmatprep.subr.mxu0 0.0
      %1568 = vmatpush1.msra.mxu0 0.0
      %1569 = vmatprep.subr.mxu0 0.0
      %1570 = vmatpush1.msra.mxu0 0.0
      %1571 = vmatprep.subr.mxu0 0.0
      %1572 = vmatpush1.msra.mxu0 0.0
      %1573 = vmatprep.subr.mxu0 0.0
      %1574 = vmatpush1.msra.mxu0 0.0
      %1575 = vmatprep.mubr.f32.mxu0 0.0
      %1576 = vmatmul.mubr.f32.gmra.mrb[0].mxu0 %v1503
      %v1577 = vpop.f32.mrb[0].mxu0
      %v1578 = vadd.f32 %v1494, %v1577
      %v1579 = vpop.f32.mrb[0].mxu0
      %1580 = vmatprep.mubr.f32.mxu0 0.0
      %1581 = vmatmul.mubr.f32.gmra.mrb[0].mxu0 %v1506
      %v1582 = vpop.f32.mrb[0].mxu0
      %v1583 = vadd.f32 %v1499, %v1582
      %v1584 = vpop.f32.mrb[0].mxu0
      %1585 = vdwg.mxu0
      %v1586 = vld [vmem:[#allocation3 + $0x3] sm:$0xff]
      %v1587 = vld [vmem:[#allocation3 + $0xb] sm:$0xff]
      %s1588 = scalar_lea.vmem %s2, 8
      %v1589 = vld [vmem:[%s1588] sm:$0xf]
      %v1591 = vsel %vm565, %v1586, 0
      %v1594 = vsel %vm565, %v1587, 0
      %v1597 = vsel %vm882, %v1589, 0
      %1599 = vmatprep.subr.mxu0 0.0
      %1600 = vmatpush1.msra.mxu0 %v1597
      %1601 = vmatprep.subr.mxu0 0.0
      %1602 = vmatpush1.msra.mxu0 0.0
      %1603 = vmatprep.subr.mxu0 0.0
      %1604 = vmatpush1.msra.mxu0 0.0
      %1605 = vmatprep.subr.mxu0 0.0
      %1606 = vmatpush1.msra.mxu0 0.0
      %1607 = vmatprep.subr.mxu0 0.0
      %1608 = vmatpush1.msra.mxu0 0.0
      %1609 = vmatprep.subr.mxu0 0.0
      %1610 = vmatpush1.msra.mxu0 0.0
      %1611 = vmatprep.subr.mxu0 0.0
      %1612 = vmatpush1.msra.mxu0 0.0
      %1613 = vmatprep.subr.mxu0 0.0
      %1614 = vmatpush1.msra.mxu0 0.0
      %1615 = vmatprep.subr.mxu0 0.0
      %1616 = vmatpush1.msra.mxu0 0.0
      %1617 = vmatprep.subr.mxu0 0.0
      %1618 = vmatpush1.msra.mxu0 0.0
      %1619 = vmatprep.subr.mxu0 0.0
      %1620 = vmatpush1.msra.mxu0 0.0
      %1621 = vmatprep.subr.mxu0 0.0
      %1622 = vmatpush1.msra.mxu0 0.0
      %1623 = vmatprep.subr.mxu0 0.0
      %1624 = vmatpush1.msra.mxu0 0.0
      %1625 = vmatprep.subr.mxu0 0.0
      %1626 = vmatpush1.msra.mxu0 0.0
      %1627 = vmatprep.subr.mxu0 0.0
      %1628 = vmatpush1.msra.mxu0 0.0
      %1629 = vmatprep.subr.mxu0 0.0
      %1630 = vmatpush1.msra.mxu0 0.0
      %1631 = vmatprep.subr.mxu0 0.0
      %1632 = vmatpush1.msra.mxu0 0.0
      %1633 = vmatprep.subr.mxu0 0.0
      %1634 = vmatpush1.msra.mxu0 0.0
      %1635 = vmatprep.subr.mxu0 0.0
      %1636 = vmatpush1.msra.mxu0 0.0
      %1637 = vmatprep.subr.mxu0 0.0
      %1638 = vmatpush1.msra.mxu0 0.0
      %1639 = vmatprep.subr.mxu0 0.0
      %1640 = vmatpush1.msra.mxu0 0.0
      %1641 = vmatprep.subr.mxu0 0.0
      %1642 = vmatpush1.msra.mxu0 0.0
      %1643 = vmatprep.subr.mxu0 0.0
      %1644 = vmatpush1.msra.mxu0 0.0
      %1645 = vmatprep.subr.mxu0 0.0
      %1646 = vmatpush1.msra.mxu0 0.0
      %1647 = vmatprep.subr.mxu0 0.0
      %1648 = vmatpush1.msra.mxu0 0.0
      %1649 = vmatprep.subr.mxu0 0.0
      %1650 = vmatpush1.msra.mxu0 0.0
      %1651 = vmatprep.subr.mxu0 0.0
      %1652 = vmatpush1.msra.mxu0 0.0
      %1653 = vmatprep.subr.mxu0 0.0
      %1654 = vmatpush1.msra.mxu0 0.0
      %1655 = vmatprep.subr.mxu0 0.0
      %1656 = vmatpush1.msra.mxu0 0.0
      %1657 = vmatprep.subr.mxu0 0.0
      %1658 = vmatpush1.msra.mxu0 0.0
      %1659 = vmatprep.subr.mxu0 0.0
      %1660 = vmatpush1.msra.mxu0 0.0
      %1661 = vmatprep.subr.mxu0 0.0
      %1662 = vmatpush1.msra.mxu0 0.0
      %1663 = vmatprep.mubr.f32.mxu0 0.0
      %1664 = vmatmul.mubr.f32.gmra.mrb[0].mxu0 %v1591
      %v1665 = vpop.f32.mrb[0].mxu0
      %v1666 = vadd.f32 0.0, %v1665
      %v1667 = vpop.f32.mrb[0].mxu0
      %1668 = vmatprep.mubr.f32.mxu0 0.0
      %1669 = vmatmul.mubr.f32.gmra.mrb[0].mxu0 %v1594
      %v1670 = vpop.f32.mrb[0].mxu0
      %v1671 = vadd.f32 0.0, %v1670
      %v1672 = vpop.f32.mrb[0].mxu0
      %1673 = vdwg.mxu0
      %v1674 = vadd.f32 %v1578, %v1666
      %v1675 = vadd.f32 %v1583, %v1671
      %v1676 = vld [vmem:[%s7 + $0x1] sm:$0x1]
      %v1677 = vlaneseq
      %v1678 = vshrl.u32 %v1677, 7
      %v1679 = vsub.s32 0, %v1678
      %v1680 = vrot.slane %v1676, %v1679
      %v1681 = vadd.f32 %v1674, %v1680
      %v1682 = vadd.f32 %v1675, %v1680
      %1683 = vst.msk [vmem:[#allocation5] sm:$0xff] %vm1142, 0.0
      %1684 = vst.msk [vmem:[#allocation5 + $0x8] sm:$0xff] %vm1142, 0.0
      %1685 = vst.msk [vmem:[#allocation5 + $0x10] sm:$0xf] %vm1145, 0.0
      %1686 = vst.msk [vmem:[#allocation5 + $0x2] sm:$0xff] %vm1142, %v1681
      %1687 = vst.msk [vmem:[#allocation5 + $0xa] sm:$0xff] %vm1142, %v1682
      %v1688 = vld [vmem:[#allocation5] sm:$0xff]
      %v1689 = vld [vmem:[#allocation5 + $0x8] sm:$0xff]
      %v1690 = vld [vmem:[%s4] sm:$0xff]
      %v1691 = vld [vmem:[#allocation5 + $0x2] sm:$0xff]
      %v1692 = vld [vmem:[#allocation5 + $0xa] sm:$0xff]
      %s1693 = scalar_lea.vmem %s4, 8
      %v1694 = vld [vmem:[%s1693] sm:$0xff]
      %v1696 = vsel %vm1142, %v1691, 0
      %v1699 = vsel %vm1142, %v1692, 0
      %1701 = vmatprep.subr.mxu0 0.0
      %1702 = vmatpush1.msra.mxu0 %v1694
      %1703 = vmatprep.subr.mxu0 0.0
      %1704 = vmatpush1.msra.mxu0 0.0
      %1705 = vmatprep.subr.mxu0 0.0
      %1706 = vmatpush1.msra.mxu0 0.0
      %1707 = vmatprep.subr.mxu0 0.0
      %1708 = vmatpush1.msra.mxu0 0.0
      %1709 = vmatprep.subr.mxu0 0.0
      %1710 = vmatpush1.msra.mxu0 0.0
      %1711 = vmatprep.subr.mxu0 0.0
      %1712 = vmatpush1.msra.mxu0 0.0
      %1713 = vmatprep.subr.mxu0 0.0
      %1714 = vmatpush1.msra.mxu0 0.0
      %1715 = vmatprep.subr.mxu0 0.0
      %1716 = vmatpush1.msra.mxu0 0.0
      %1717 = vmatprep.subr.mxu0 0.0
      %1718 = vmatpush1.msra.mxu0 0.0
      %1719 = vmatprep.subr.mxu0 0.0
      %1720 = vmatpush1.msra.mxu0 0.0
      %1721 = vmatprep.subr.mxu0 0.0
      %1722 = vmatpush1.msra.mxu0 0.0
      %1723 = vmatprep.subr.mxu0 0.0
      %1724 = vmatpush1.msra.mxu0 0.0
      %1725 = vmatprep.subr.mxu0 0.0
      %1726 = vmatpush1.msra.mxu0 0.0
      %1727 = vmatprep.subr.mxu0 0.0
      %1728 = vmatpush1.msra.mxu0 0.0
      %1729 = vmatprep.subr.mxu0 0.0
      %1730 = vmatpush1.msra.mxu0 0.0
      %1731 = vmatprep.subr.mxu0 0.0
      %1732 = vmatpush1.msra.mxu0 0.0
      %1733 = vmatprep.subr.mxu0 0.0
      %1734 = vmatpush1.msra.mxu0 0.0
      %1735 = vmatprep.subr.mxu0 0.0
      %1736 = vmatpush1.msra.mxu0 0.0
      %1737 = vmatprep.subr.mxu0 0.0
      %1738 = vmatpush1.msra.mxu0 0.0
      %1739 = vmatprep.subr.mxu0 0.0
      %1740 = vmatpush1.msra.mxu0 0.0
      %1741 = vmatprep.subr.mxu0 0.0
      %1742 = vmatpush1.msra.mxu0 0.0
      %1743 = vmatprep.subr.mxu0 0.0
      %1744 = vmatpush1.msra.mxu0 0.0
      %1745 = vmatprep.subr.mxu0 0.0
      %1746 = vmatpush1.msra.mxu0 0.0
      %1747 = vmatprep.subr.mxu0 0.0
      %1748 = vmatpush1.msra.mxu0 0.0
      %1749 = vmatprep.subr.mxu0 0.0
      %1750 = vmatpush1.msra.mxu0 0.0
      %1751 = vmatprep.subr.mxu0 0.0
      %1752 = vmatpush1.msra.mxu0 0.0
      %1753 = vmatprep.subr.mxu0 0.0
      %1754 = vmatpush1.msra.mxu0 0.0
      %1755 = vmatprep.subr.mxu0 0.0
      %1756 = vmatpush1.msra.mxu0 0.0
      %1757 = vmatprep.subr.mxu0 0.0
      %1758 = vmatpush1.msra.mxu0 0.0
      %1759 = vmatprep.subr.mxu0 0.0
      %1760 = vmatpush1.msra.mxu0 0.0
      %1761 = vmatprep.subr.mxu0 0.0
      %1762 = vmatpush1.msra.mxu0 0.0
      %1763 = vmatprep.subr.mxu0 0.0
      %1764 = vmatpush1.msra.mxu0 0.0
      %1765 = vmatprep.mubr.f32.mxu0 0.0
      %1766 = vmatmul.mubr.f32.gmra.mrb[0].mxu0 %v1696
      %v1767 = vpop.f32.mrb[0].mxu0
      %v1768 = vadd.f32 0.0, %v1767
      %v1769 = vpop.f32.mrb[0].mxu0
      %1770 = vmatprep.mubr.f32.mxu0 0.0
      %1771 = vmatmul.mubr.f32.gmra.mrb[0].mxu0 %v1699
      %v1772 = vpop.f32.mrb[0].mxu0
      %v1773 = vadd.f32 0.0, %v1772
      %v1774 = vpop.f32.mrb[0].mxu0
      %1775 = vdwg.mxu0
      %v1777 = vsel %vm1142, %v1688, 0
      %v1780 = vsel %vm1142, %v1689, 0
      %1782 = vmatprep.subr.mxu0 0.0
      %1783 = vmatpush1.msra.mxu0 %v1690
      %1784 = vmatprep.subr.mxu0 0.0
      %1785 = vmatpush1.msra.mxu0 0.0
      %1786 = vmatprep.subr.mxu0 0.0
      %1787 = vmatpush1.msra.mxu0 0.0
      %1788 = vmatprep.subr.mxu0 0.0
      %1789 = vmatpush1.msra.mxu0 0.0
      %1790 = vmatprep.subr.mxu0 0.0
      %1791 = vmatpush1.msra.mxu0 0.0
      %1792 = vmatprep.subr.mxu0 0.0
      %1793 = vmatpush1.msra.mxu0 0.0
      %1794 = vmatprep.subr.mxu0 0.0
      %1795 = vmatpush1.msra.mxu0 0.0
      %1796 = vmatprep.subr.mxu0 0.0
      %1797 = vmatpush1.msra.mxu0 0.0
      %1798 = vmatprep.subr.mxu0 0.0
      %1799 = vmatpush1.msra.mxu0 0.0
      %1800 = vmatprep.subr.mxu0 0.0
      %1801 = vmatpush1.msra.mxu0 0.0
      %1802 = vmatprep.subr.mxu0 0.0
      %1803 = vmatpush1.msra.mxu0 0.0
      %1804 = vmatprep.subr.mxu0 0.0
      %1805 = vmatpush1.msra.mxu0 0.0
      %1806 = vmatprep.subr.mxu0 0.0
      %1807 = vmatpush1.msra.mxu0 0.0
      %1808 = vmatprep.subr.mxu0 0.0
      %1809 = vmatpush1.msra.mxu0 0.0
      %1810 = vmatprep.subr.mxu0 0.0
      %1811 = vmatpush1.msra.mxu0 0.0
      %1812 = vmatprep.subr.mxu0 0.0
      %1813 = vmatpush1.msra.mxu0 0.0
      %1814 = vmatprep.subr.mxu0 0.0
      %1815 = vmatpush1.msra.mxu0 0.0
      %1816 = vmatprep.subr.mxu0 0.0
      %1817 = vmatpush1.msra.mxu0 0.0
      %1818 = vmatprep.subr.mxu0 0.0
      %1819 = vmatpush1.msra.mxu0 0.0
      %1820 = vmatprep.subr.mxu0 0.0
      %1821 = vmatpush1.msra.mxu0 0.0
      %1822 = vmatprep.subr.mxu0 0.0
      %1823 = vmatpush1.msra.mxu0 0.0
      %1824 = vmatprep.subr.mxu0 0.0
      %1825 = vmatpush1.msra.mxu0 0.0
      %1826 = vmatprep.subr.mxu0 0.0
      %1827 = vmatpush1.msra.mxu0 0.0
      %1828 = vmatprep.subr.mxu0 0.0
      %1829 = vmatpush1.msra.mxu0 0.0
      %1830 = vmatprep.subr.mxu0 0.0
      %1831 = vmatpush1.msra.mxu0 0.0
      %1832 = vmatprep.subr.mxu0 0.0
      %1833 = vmatpush1.msra.mxu0 0.0
      %1834 = vmatprep.subr.mxu0 0.0
      %1835 = vmatpush1.msra.mxu0 0.0
      %1836 = vmatprep.subr.mxu0 0.0
      %1837 = vmatpush1.msra.mxu0 0.0
      %1838 = vmatprep.subr.mxu0 0.0
      %1839 = vmatpush1.msra.mxu0 0.0
      %1840 = vmatprep.subr.mxu0 0.0
      %1841 = vmatpush1.msra.mxu0 0.0
      %1842 = vmatprep.subr.mxu0 0.0
      %1843 = vmatpush1.msra.mxu0 0.0
      %1844 = vmatprep.subr.mxu0 0.0
      %1845 = vmatpush1.msra.mxu0 0.0
      %1846 = vmatprep.mubr.f32.mxu0 0.0
      %1847 = vmatmul.mubr.f32.gmra.mrb[0].mxu0 %v1777
      %v1848 = vpop.f32.mrb[0].mxu0
      %v1849 = vadd.f32 %v1768, %v1848
      %v1850 = vpop.f32.mrb[0].mxu0
      %1851 = vmatprep.mubr.f32.mxu0 0.0
      %1852 = vmatmul.mubr.f32.gmra.mrb[0].mxu0 %v1780
      %v1853 = vpop.f32.mrb[0].mxu0
      %v1854 = vadd.f32 %v1773, %v1853
      %v1855 = vpop.f32.mrb[0].mxu0
      %1856 = vdwg.mxu0
      %v1857 = vld [vmem:[#allocation5 + $0x4] sm:$0xff]
      %v1858 = vld [vmem:[#allocation5 + $0xc] sm:$0xff]
      %s1859 = scalar_lea.vmem %s4, 16
      %v1860 = vld [vmem:[%s1859] sm:$0xff]
      %v1862 = vsel %vm1142, %v1857, 0
      %v1865 = vsel %vm1142, %v1858, 0
      %1867 = vmatprep.subr.mxu0 0.0
      %1868 = vmatpush1.msra.mxu0 %v1860
      %1869 = vmatprep.subr.mxu0 0.0
      %1870 = vmatpush1.msra.mxu0 0.0
      %1871 = vmatprep.subr.mxu0 0.0
      %1872 = vmatpush1.msra.mxu0 0.0
      %1873 = vmatprep.subr.mxu0 0.0
      %1874 = vmatpush1.msra.mxu0 0.0
      %1875 = vmatprep.subr.mxu0 0.0
      %1876 = vmatpush1.msra.mxu0 0.0
      %1877 = vmatprep.subr.mxu0 0.0
      %1878 = vmatpush1.msra.mxu0 0.0
      %1879 = vmatprep.subr.mxu0 0.0
      %1880 = vmatpush1.msra.mxu0 0.0
      %1881 = vmatprep.subr.mxu0 0.0
      %1882 = vmatpush1.msra.mxu0 0.0
      %1883 = vmatprep.subr.mxu0 0.0
      %1884 = vmatpush1.msra.mxu0 0.0
      %1885 = vmatprep.subr.mxu0 0.0
      %1886 = vmatpush1.msra.mxu0 0.0
      %1887 = vmatprep.subr.mxu0 0.0
      %1888 = vmatpush1.msra.mxu0 0.0
      %1889 = vmatprep.subr.mxu0 0.0
      %1890 = vmatpush1.msra.mxu0 0.0
      %1891 = vmatprep.subr.mxu0 0.0
      %1892 = vmatpush1.msra.mxu0 0.0
      %1893 = vmatprep.subr.mxu0 0.0
      %1894 = vmatpush1.msra.mxu0 0.0
      %1895 = vmatprep.subr.mxu0 0.0
      %1896 = vmatpush1.msra.mxu0 0.0
      %1897 = vmatprep.subr.mxu0 0.0
      %1898 = vmatpush1.msra.mxu0 0.0
      %1899 = vmatprep.subr.mxu0 0.0
      %1900 = vmatpush1.msra.mxu0 0.0
      %1901 = vmatprep.subr.mxu0 0.0
      %1902 = vmatpush1.msra.mxu0 0.0
      %1903 = vmatprep.subr.mxu0 0.0
      %1904 = vmatpush1.msra.mxu0 0.0
      %1905 = vmatprep.subr.mxu0 0.0
      %1906 = vmatpush1.msra.mxu0 0.0
      %1907 = vmatprep.subr.mxu0 0.0
      %1908 = vmatpush1.msra.mxu0 0.0
      %1909 = vmatprep.subr.mxu0 0.0
      %1910 = vmatpush1.msra.mxu0 0.0
      %1911 = vmatprep.subr.mxu0 0.0
      %1912 = vmatpush1.msra.mxu0 0.0
      %1913 = vmatprep.subr.mxu0 0.0
      %1914 = vmatpush1.msra.mxu0 0.0
      %1915 = vmatprep.subr.mxu0 0.0
      %1916 = vmatpush1.msra.mxu0 0.0
      %1917 = vmatprep.subr.mxu0 0.0
      %1918 = vmatpush1.msra.mxu0 0.0
      %1919 = vmatprep.subr.mxu0 0.0
      %1920 = vmatpush1.msra.mxu0 0.0
      %1921 = vmatprep.subr.mxu0 0.0
      %1922 = vmatpush1.msra.mxu0 0.0
      %1923 = vmatprep.subr.mxu0 0.0
      %1924 = vmatpush1.msra.mxu0 0.0
      %1925 = vmatprep.subr.mxu0 0.0
      %1926 = vmatpush1.msra.mxu0 0.0
      %1927 = vmatprep.subr.mxu0 0.0
      %1928 = vmatpush1.msra.mxu0 0.0
      %1929 = vmatprep.subr.mxu0 0.0
      %1930 = vmatpush1.msra.mxu0 0.0
      %1931 = vmatprep.mubr.f32.mxu0 0.0
      %1932 = vmatmul.mubr.f32.gmra.mrb[0].mxu0 %v1862
      %v1933 = vpop.f32.mrb[0].mxu0
      %v1934 = vadd.f32 0.0, %v1933
      %v1935 = vpop.f32.mrb[0].mxu0
      %1936 = vmatprep.mubr.f32.mxu0 0.0
      %1937 = vmatmul.mubr.f32.gmra.mrb[0].mxu0 %v1865
      %v1938 = vpop.f32.mrb[0].mxu0
      %v1939 = vadd.f32 0.0, %v1938
      %v1940 = vpop.f32.mrb[0].mxu0
      %1941 = vdwg.mxu0
      %v1942 = vadd.f32 %v1849, %v1934
      %v1943 = vadd.f32 %v1854, %v1939
      %v1944 = vld [vmem:[%s6] sm:$0x3]
      %vm1993 = vcmask 1042432
      %vm1994 = vcmask 1046532
      %vm1995 = vmor %vm1993, %vm1994
      %v1996 = vrot.slane %v308, 5
      %v1997 = vrot.slane %v1996, 4
      %v1998 = vrot.slane %v309, 5
      %v1999 = vsel %vm1995, %v1997, %v1998
      %v2000 = vrot.slane %v1998, 4
      %v2001 = vrot.slane %v310, 5
      %v2002 = vsel %vm1995, %v2000, %v2001
      %v2003 = vrot.slane %v311, 5
      %v2004 = vrot.slane %v2003, 4
      %v2005 = vrot.slane %v312, 5
      %v2006 = vsel %vm1995, %v2004, %v2005
      %v2007 = vrot.slane %v2005, 4
      %v2008 = vrot.slane %v313, 5
      %v2009 = vsel %vm1995, %v2007, %v2008
      %v2010 = vrot.slane %v314, 5
      %v2011 = vrot.slane %v2010, 4
      %v2012 = vrot.slane %v315, 5
      %v2013 = vsel %vm1995, %v2011, %v2012
      %v2014 = vrot.slane %v2012, 4
      %v2015 = vrot.slane %v316, 5
      %v2016 = vsel %vm1995, %v2014, %v2015
      %v2017 = vrot.slane %v317, 5
      %v2018 = vrot.slane %v2017, 4
      %v2019 = vrot.slane %v318, 5
      %v2020 = vsel %vm1995, %v2018, %v2019
      %v2021 = vrot.slane %v2019, 4
      %v2022 = vrot.slane %v319, 5
      %v2023 = vsel %vm1995, %v2021, %v2022
      %v2024 = vrot.slane %v320, 5
      %v2025 = vrot.slane %v2024, 4
      %v2026 = vrot.slane %v321, 5
      %v2027 = vsel %vm1995, %v2025, %v2026
      %v2028 = vrot.slane %v2026, 4
      %v2029 = vrot.slane %v322, 5
      %v2030 = vsel %vm1995, %v2028, %v2029
      %v2031 = vrot.slane %v323, 5
      %v2032 = vrot.slane %v2031, 4
      %v2033 = vrot.slane %v324, 5
      %v2034 = vsel %vm1995, %v2032, %v2033
      %v2035 = vrot.slane %v2033, 4
      %v2036 = vrot.slane %v325, 5
      %v2037 = vsel %vm1995, %v2035, %v2036
      %v2038 = vrot.slane %v326, 5
      %v2039 = vrot.slane %v2038, 4
      %v2040 = vrot.slane %v327, 5
      %v2041 = vsel %vm1995, %v2039, %v2040
      %v2042 = vrot.slane %v2040, 4
      %v2043 = vrot.slane %v328, 5
      %v2044 = vsel %vm1995, %v2042, %v2043
      %v2045 = vrot.slane %v329, 5
      %v2046 = vrot.slane %v2045, 4
      %v2047 = vrot.slane %v330, 5
      %v2048 = vsel %vm1995, %v2046, %v2047
      %v2049 = vrot.slane %v2047, 4
      %v2050 = vrot.slane %v331, 5
      %v2051 = vsel %vm1995, %v2049, %v2050
      %v2052 = vrot.slane %v332, 5
      %v2053 = vrot.slane %v2052, 4
      %v2054 = vrot.slane %v333, 5
      %v2055 = vsel %vm1995, %v2053, %v2054
      %v2056 = vrot.slane %v2054, 4
      %v2057 = vrot.slane %v334, 5
      %v2058 = vsel %vm1995, %v2056, %v2057
      %v2059 = vrot.slane %v335, 5
      %v2060 = vrot.slane %v2059, 4
      %v2061 = vrot.slane %v336, 5
      %v2062 = vsel %vm1995, %v2060, %v2061
      %v2063 = vrot.slane %v2061, 4
      %v2064 = vrot.slane %v337, 5
      %v2065 = vsel %vm1995, %v2063, %v2064
      %v2066 = vrot.slane %v338, 5
      %v2067 = vrot.slane %v2066, 4
      %v2068 = vrot.slane %v339, 5
      %v2069 = vsel %vm1995, %v2067, %v2068
      %v2070 = vrot.slane %v2068, 4
      %v2071 = vrot.slane %v340, 5
      %v2072 = vsel %vm1995, %v2070, %v2071
      %v2073 = vrot.slane %v341, 5
      %v2074 = vrot.slane %v2073, 4
      %v2075 = vrot.slane %v342, 5
      %v2076 = vsel %vm1995, %v2074, %v2075
      %v2077 = vrot.slane %v2075, 4
      %v2078 = vrot.slane %v343, 5
      %v2079 = vsel %vm1995, %v2077, %v2078
      %v2080 = vrot.slane %v344, 5
      %v2081 = vrot.slane %v2080, 4
      %v2082 = vrot.slane %v345, 5
      %v2083 = vsel %vm1995, %v2081, %v2082
      %v2084 = vrot.slane %v2082, 4
      %v2085 = vrot.slane %v346, 5
      %v2086 = vsel %vm1995, %v2084, %v2085
      %v2087 = vrot.slane %v347, 5
      %v2088 = vrot.slane %v2087, 4
      %v2089 = vrot.slane %v348, 5
      %v2090 = vsel %vm1995, %v2088, %v2089
      %v2091 = vrot.slane %v2089, 4
      %v2092 = vrot.slane %v349, 5
      %v2093 = vsel %vm1995, %v2091, %v2092
      %v2094 = vrot.slane %v350, 5
      %v2095 = vrot.slane %v2094, 4
      %v2096 = vrot.slane %v351, 5
      %v2097 = vsel %vm1995, %v2095, %v2096
      %v2098 = vrot.slane %v2096, 4
      %v2099 = vrot.slane %v352, 5
      %v2100 = vsel %vm1995, %v2098, %v2099
      %v2101 = vrot.slane %v353, 5
      %v2102 = vrot.slane %v2101, 4
      %v2103 = vrot.slane %v354, 5
      %v2104 = vsel %vm1995, %v2102, %v2103
      %v2105 = vrot.slane %v2103, 4
      %v2106 = vrot.slane %v355, 5
      %v2107 = vsel %vm1995, %v2105, %v2106
      %v2108 = vunpack.c.l.b16 %v1999
      %v2109 = vunpack.c.l.b16 %v2002
      %v2110 = vunpack.c.l.b16 %v2006
      %v2111 = vunpack.c.l.b16 %v2009
      %v2112 = vunpack.c.l.b16 %v2013
      %v2113 = vunpack.c.l.b16 %v2016
      %v2114 = vunpack.c.l.b16 %v2020
      %v2115 = vunpack.c.l.b16 %v2023
      %v2116 = vunpack.c.l.b16 %v2027
      %v2117 = vunpack.c.l.b16 %v2030
      %v2118 = vunpack.c.l.b16 %v2034
      %v2119 = vunpack.c.l.b16 %v2037
      %v2120 = vunpack.c.l.b16 %v2041
      %v2121 = vunpack.c.l.b16 %v2044
      %v2122 = vunpack.c.l.b16 %v2048
      %v2123 = vunpack.c.l.b16 %v2051
      %v2124 = vunpack.c.l.b16 %v2055
      %v2125 = vunpack.c.l.b16 %v2058
      %v2126 = vunpack.c.l.b16 %v2062
      %v2127 = vunpack.c.l.b16 %v2065
      %v2128 = vunpack.c.l.b16 %v2069
      %v2129 = vunpack.c.l.b16 %v2072
      %v2130 = vunpack.c.l.b16 %v2076
      %v2131 = vunpack.c.l.b16 %v2079
      %v2132 = vunpack.c.l.b16 %v2083
      %v2133 = vunpack.c.l.b16 %v2086
      %v2134 = vunpack.c.l.b16 %v2090
      %v2135 = vunpack.c.l.b16 %v2093
      %v2136 = vunpack.c.l.b16 %v2097
      %v2137 = vunpack.c.l.b16 %v2100
      %v2138 = vunpack.c.l.b16 %v2104
      %v2139 = vunpack.c.l.b16 %v2107
      %v2140 = vpack.c.b16 %v2109, %v2108
      %v2141 = vpack.c.b16 %v2111, %v2110
      %v2142 = vpack.c.b16 %v2113, %v2112
      %v2143 = vpack.c.b16 %v2115, %v2114
      %v2144 = vpack.c.b16 %v2117, %v2116
      %v2145 = vpack.c.b16 %v2119, %v2118
      %v2146 = vpack.c.b16 %v2121, %v2120
      %v2147 = vpack.c.b16 %v2123, %v2122
      %v2148 = vpack.c.b16 %v2125, %v2124
      %v2149 = vpack.c.b16 %v2127, %v2126
      %v2150 = vpack.c.b16 %v2129, %v2128
      %v2151 = vpack.c.b16 %v2131, %v2130
      %v2152 = vpack.c.b16 %v2133, %v2132
      %v2153 = vpack.c.b16 %v2135, %v2134
      %v2154 = vpack.c.b16 %v2137, %v2136
      %v2155 = vpack.c.b16 %v2139, %v2138
      %v2157 = vsel %vm565, %v2140, 0
      %v2160 = vsel %vm565, %v2141, 0
      %v2163 = vsel %vm565, %v2142, 0
      %v2166 = vsel %vm565, %v2143, 0
      %v2169 = vsel %vm565, %v2144, 0
      %v2172 = vsel %vm565, %v2145, 0
      %v2175 = vsel %vm565, %v2146, 0
      %v2178 = vsel %vm565, %v2147, 0
      %v2181 = vsel %vm565, %v2148, 0
      %v2184 = vsel %vm565, %v2149, 0
      %v2187 = vsel %vm565, %v2150, 0
      %v2190 = vsel %vm565, %v2151, 0
      %v2193 = vsel %vm565, %v2152, 0
      %v2196 = vsel %vm565, %v2153, 0
      %v2199 = vsel %vm565, %v2154, 0
      %v2202 = vsel %vm565, %v2155, 0
      %vm2204 = vcmask 1041408
      %v2206 = vsel %vm2204, %v1944, 0
      %2208 = vmatprep.subr.bf16.mxu0 0
      %2209 = vmatpush1.bf16.msra.mxu0 %v2206
      %2210 = vmatprep.subr.bf16.mxu0 0
      %2211 = vmatpush1.bf16.msra.mxu0 0
      %2212 = vmatprep.subr.bf16.mxu0 0
      %2213 = vmatpush1.bf16.msra.mxu0 0
      %2214 = vmatprep.subr.bf16.mxu0 0
      %2215 = vmatpush1.bf16.msra.mxu0 0
      %2216 = vmatprep.subr.bf16.mxu0 0
      %2217 = vmatpush1.bf16.msra.mxu0 0
      %2218 = vmatprep.subr.bf16.mxu0 0
      %2219 = vmatpush1.bf16.msra.mxu0 0
      %2220 = vmatprep.subr.bf16.mxu0 0
      %2221 = vmatpush1.bf16.msra.mxu0 0
      %2222 = vmatprep.subr.bf16.mxu0 0
      %2223 = vmatpush1.bf16.msra.mxu0 0
      %2224 = vmatprep.subr.bf16.mxu0 0
      %2225 = vmatpush1.bf16.msra.mxu0 0
      %2226 = vmatprep.subr.bf16.mxu0 0
      %2227 = vmatpush1.bf16.msra.mxu0 0
      %2228 = vmatprep.subr.bf16.mxu0 0
      %2229 = vmatpush1.bf16.msra.mxu0 0
      %2230 = vmatprep.subr.bf16.mxu0 0
      %2231 = vmatpush1.bf16.msra.mxu0 0
      %2232 = vmatprep.subr.bf16.mxu0 0
      %2233 = vmatpush1.bf16.msra.mxu0 0
      %2234 = vmatprep.subr.bf16.mxu0 0
      %2235 = vmatpush1.bf16.msra.mxu0 0
      %2236 = vmatprep.subr.bf16.mxu0 0
      %2237 = vmatpush1.bf16.msra.mxu0 0
      %2238 = vmatprep.subr.bf16.mxu0 0
      %2239 = vmatpush1.bf16.msra.mxu0 0
      %2240 = vmatprep.mubr.bf16.mxu0 0
      %2241 = vmatmul.mubr.bf16.gmra.mrb[0].mxu0 %v2157
      %v2242 = vpop.f32.mrb[0].mxu0
      %v2243 = vadd.f32 0.0, %v2242
      %v2244 = vpop.f32.mrb[0].mxu0
      %v2245 = vpop.f32.mrb[0].mxu0
      %v2246 = vadd.f32 0.0, %v2245
      %v2247 = vpop.f32.mrb[0].mxu0
      %2248 = vmatprep.mubr.bf16.mxu0 0
      %2249 = vmatmul.mubr.bf16.gmra.mrb[0].mxu0 %v2160
      %v2250 = vpop.f32.mrb[0].mxu0
      %v2251 = vadd.f32 0.0, %v2250
      %v2252 = vpop.f32.mrb[0].mxu0
      %v2253 = vpop.f32.mrb[0].mxu0
      %v2254 = vadd.f32 0.0, %v2253
      %v2255 = vpop.f32.mrb[0].mxu0
      %2256 = vmatprep.mubr.bf16.mxu0 0
      %2257 = vmatmul.mubr.bf16.gmra.mrb[0].mxu0 %v2163
      %v2258 = vpop.f32.mrb[0].mxu0
      %v2259 = vadd.f32 0.0, %v2258
      %v2260 = vpop.f32.mrb[0].mxu0
      %v2261 = vpop.f32.mrb[0].mxu0
      %v2262 = vadd.f32 0.0, %v2261
      %v2263 = vpop.f32.mrb[0].mxu0
      %2264 = vmatprep.mubr.bf16.mxu0 0
      %2265 = vmatmul.mubr.bf16.gmra.mrb[0].mxu0 %v2166
      %v2266 = vpop.f32.mrb[0].mxu0
      %v2267 = vadd.f32 0.0, %v2266
      %v2268 = vpop.f32.mrb[0].mxu0
      %v2269 = vpop.f32.mrb[0].mxu0
      %v2270 = vadd.f32 0.0, %v2269
      %v2271 = vpop.f32.mrb[0].mxu0
      %2272 = vmatprep.mubr.bf16.mxu0 0
      %2273 = vmatmul.mubr.bf16.gmra.mrb[0].mxu0 %v2169
      %v2274 = vpop.f32.mrb[0].mxu0
      %v2275 = vadd.f32 0.0, %v2274
      %v2276 = vpop.f32.mrb[0].mxu0
      %v2277 = vpop.f32.mrb[0].mxu0
      %v2278 = vadd.f32 0.0, %v2277
      %v2279 = vpop.f32.mrb[0].mxu0
      %2280 = vmatprep.mubr.bf16.mxu0 0
      %2281 = vmatmul.mubr.bf16.gmra.mrb[0].mxu0 %v2172
      %v2282 = vpop.f32.mrb[0].mxu0
      %v2283 = vadd.f32 0.0, %v2282
      %v2284 = vpop.f32.mrb[0].mxu0
      %v2285 = vpop.f32.mrb[0].mxu0
      %v2286 = vadd.f32 0.0, %v2285
      %v2287 = vpop.f32.mrb[0].mxu0
      %2288 = vmatprep.mubr.bf16.mxu0 0
      %2289 = vmatmul.mubr.bf16.gmra.mrb[0].mxu0 %v2175
      %v2290 = vpop.f32.mrb[0].mxu0
      %v2291 = vadd.f32 0.0, %v2290
      %v2292 = vpop.f32.mrb[0].mxu0
      %v2293 = vpop.f32.mrb[0].mxu0
      %v2294 = vadd.f32 0.0, %v2293
      %v2295 = vpop.f32.mrb[0].mxu0
      %2296 = vmatprep.mubr.bf16.mxu0 0
      %2297 = vmatmul.mubr.bf16.gmra.mrb[0].mxu0 %v2178
      %v2298 = vpop.f32.mrb[0].mxu0
      %v2299 = vadd.f32 0.0, %v2298
      %v2300 = vpop.f32.mrb[0].mxu0
      %v2301 = vpop.f32.mrb[0].mxu0
      %v2302 = vadd.f32 0.0, %v2301
      %v2303 = vpop.f32.mrb[0].mxu0
      %2304 = vmatprep.mubr.bf16.mxu0 0
      %2305 = vmatmul.mubr.bf16.gmra.mrb[0].mxu0 %v2181
      %v2306 = vpop.f32.mrb[0].mxu0
      %v2307 = vadd.f32 0.0, %v2306
      %v2308 = vpop.f32.mrb[0].mxu0
      %v2309 = vpop.f32.mrb[0].mxu0
      %v2310 = vadd.f32 0.0, %v2309
      %v2311 = vpop.f32.mrb[0].mxu0
      %2312 = vmatprep.mubr.bf16.mxu0 0
      %2313 = vmatmul.mubr.bf16.gmra.mrb[0].mxu0 %v2184
      %v2314 = vpop.f32.mrb[0].mxu0
      %v2315 = vadd.f32 0.0, %v2314
      %v2316 = vpop.f32.mrb[0].mxu0
      %v2317 = vpop.f32.mrb[0].mxu0
      %v2318 = vadd.f32 0.0, %v2317
      %v2319 = vpop.f32.mrb[0].mxu0
      %2320 = vmatprep.mubr.bf16.mxu0 0
      %2321 = vmatmul.mubr.bf16.gmra.mrb[0].mxu0 %v2187
      %v2322 = vpop.f32.mrb[0].mxu0
      %v2323 = vadd.f32 0.0, %v2322
      %v2324 = vpop.f32.mrb[0].mxu0
      %v2325 = vpop.f32.mrb[0].mxu0
      %v2326 = vadd.f32 0.0, %v2325
      %v2327 = vpop.f32.mrb[0].mxu0
      %2328 = vmatprep.mubr.bf16.mxu0 0
      %2329 = vmatmul.mubr.bf16.gmra.mrb[0].mxu0 %v2190
      %v2330 = vpop.f32.mrb[0].mxu0
      %v2331 = vadd.f32 0.0, %v2330
      %v2332 = vpop.f32.mrb[0].mxu0
      %v2333 = vpop.f32.mrb[0].mxu0
      %v2334 = vadd.f32 0.0, %v2333
      %v2335 = vpop.f32.mrb[0].mxu0
      %2336 = vmatprep.mubr.bf16.mxu0 0
      %2337 = vmatmul.mubr.bf16.gmra.mrb[0].mxu0 %v2193
      %v2338 = vpop.f32.mrb[0].mxu0
      %v2339 = vadd.f32 0.0, %v2338
      %v2340 = vpop.f32.mrb[0].mxu0
      %v2341 = vpop.f32.mrb[0].mxu0
      %v2342 = vadd.f32 0.0, %v2341
      %v2343 = vpop.f32.mrb[0].mxu0
      %2344 = vmatprep.mubr.bf16.mxu0 0
      %2345 = vmatmul.mubr.bf16.gmra.mrb[0].mxu0 %v2196
      %v2346 = vpop.f32.mrb[0].mxu0
      %v2347 = vadd.f32 0.0, %v2346
      %v2348 = vpop.f32.mrb[0].mxu0
      %v2349 = vpop.f32.mrb[0].mxu0
      %v2350 = vadd.f32 0.0, %v2349
      %v2351 = vpop.f32.mrb[0].mxu0
      %2352 = vmatprep.mubr.bf16.mxu0 0
      %2353 = vmatmul.mubr.bf16.gmra.mrb[0].mxu0 %v2199
      %v2354 = vpop.f32.mrb[0].mxu0
      %v2355 = vadd.f32 0.0, %v2354
      %v2356 = vpop.f32.mrb[0].mxu0
      %v2357 = vpop.f32.mrb[0].mxu0
      %v2358 = vadd.f32 0.0, %v2357
      %v2359 = vpop.f32.mrb[0].mxu0
      %2360 = vmatprep.mubr.bf16.mxu0 0
      %2361 = vmatmul.mubr.bf16.gmra.mrb[0].mxu0 %v2202
      %v2362 = vpop.f32.mrb[0].mxu0
      %v2363 = vadd.f32 0.0, %v2362
      %v2364 = vpop.f32.mrb[0].mxu0
      %v2365 = vpop.f32.mrb[0].mxu0
      %v2366 = vadd.f32 0.0, %v2365
      %v2367 = vpop.f32.mrb[0].mxu0
      %2368 = vdwg.mxu0
      %v2369 = vld [vmem:[%s300] sm:$0xf]
      %v2370 = vld [vmem:[%s300 + $0x4] sm:$0xf]
      %v2371 = vld [vmem:[%s300 + $0xc] sm:$0xf]
      %v2372 = vld [vmem:[%s300 + $0x10] sm:$0xf]
      %v2373 = vld [vmem:[%s300 + $0x18] sm:$0xf]
      %v2374 = vld [vmem:[%s300 + $0x1c] sm:$0xf]
      %v2375 = vld [vmem:[%s300 + $0x24] sm:$0xf]
      %v2376 = vld [vmem:[%s300 + $0x28] sm:$0xf]
      %v2377 = vld [vmem:[%s300 + $0x30] sm:$0xf]
      %v2378 = vld [vmem:[%s300 + $0x34] sm:$0xf]
      %v2379 = vld [vmem:[%s300 + $0x3c] sm:$0xf]
      %v2380 = vld [vmem:[%s300 + $0x40] sm:$0xf]
      %v2381 = vld [vmem:[%s300 + $0x48] sm:$0xf]
      %v2382 = vld [vmem:[%s300 + $0x4c] sm:$0xf]
      %v2383 = vld [vmem:[%s300 + $0x54] sm:$0xf]
      %v2384 = vld [vmem:[%s300 + $0x58] sm:$0xf]
      %v2385 = vld [vmem:[%s300 + $0x60] sm:$0xf]
      %v2386 = vld [vmem:[%s300 + $0x64] sm:$0xf]
      %v2387 = vld [vmem:[%s300 + $0x6c] sm:$0xf]
      %v2388 = vld [vmem:[%s300 + $0x70] sm:$0xf]
      %v2389 = vld [vmem:[%s300 + $0x78] sm:$0xf]
      %v2390 = vld [vmem:[%s300 + $0x7c] sm:$0xf]
      %v2391 = vld [vmem:[%s300 + $0x84] sm:$0xf]
      %v2392 = vld [vmem:[%s300 + $0x88] sm:$0xf]
      %v2393 = vld [vmem:[%s300 + $0x90] sm:$0xf]
      %v2394 = vld [vmem:[%s300 + $0x94] sm:$0xf]
      %v2395 = vld [vmem:[%s300 + $0x9c] sm:$0xf]
      %v2396 = vld [vmem:[%s300 + $0xa0] sm:$0xf]
      %v2397 = vld [vmem:[%s300 + $0xa8] sm:$0xf]
      %v2398 = vld [vmem:[%s300 + $0xac] sm:$0xf]
      %v2399 = vld [vmem:[%s300 + $0xb4] sm:$0xf]
      %v2400 = vld [vmem:[%s300 + $0xb8] sm:$0xf]
      %v2401 = vld [vmem:[%s5] sm:$0x3]
      %v2402 = vld [vmem:[%s300] sm:$0xe]
      %v2403 = vld [vmem:[%s300 + $0x8] sm:$0x1]
      %v2404 = vld [vmem:[%s300 + $0xc] sm:$0xe]
      %v2405 = vld [vmem:[%s300 + $0x14] sm:$0x1]
      %v2406 = vld [vmem:[%s300 + $0x18] sm:$0xe]
      %v2407 = vld [vmem:[%s300 + $0x20] sm:$0x1]
      %v2408 = vld [vmem:[%s300 + $0x24] sm:$0xe]
      %v2409 = vld [vmem:[%s300 + $0x2c] sm:$0x1]
      %v2410 = vld [vmem:[%s300 + $0x30] sm:$0xe]
      %v2411 = vld [vmem:[%s300 + $0x38] sm:$0x1]
      %v2412 = vld [vmem:[%s300 + $0x3c] sm:$0xe]
      %v2413 = vld [vmem:[%s300 + $0x44] sm:$0x1]
      %v2414 = vld [vmem:[%s300 + $0x48] sm:$0xe]
      %v2415 = vld [vmem:[%s300 + $0x50] sm:$0x1]
      %v2416 = vld [vmem:[%s300 + $0x54] sm:$0xe]
      %v2417 = vld [vmem:[%s300 + $0x5c] sm:$0x1]
      %v2418 = vld [vmem:[%s300 + $0x60] sm:$0xe]
      %v2419 = vld [vmem:[%s300 + $0x68] sm:$0x1]
      %v2420 = vld [vmem:[%s300 + $0x6c] sm:$0xe]
      %v2421 = vld [vmem:[%s300 + $0x74] sm:$0x1]
      %v2422 = vld [vmem:[%s300 + $0x78] sm:$0xe]
      %v2423 = vld [vmem:[%s300 + $0x80] sm:$0x1]
      %v2424 = vld [vmem:[%s300 + $0x84] sm:$0xe]
      %v2425 = vld [vmem:[%s300 + $0x8c] sm:$0x1]
      %v2426 = vld [vmem:[%s300 + $0x90] sm:$0xe]
      %v2427 = vld [vmem:[%s300 + $0x98] sm:$0x1]
      %v2428 = vld [vmem:[%s300 + $0x9c] sm:$0xe]
      %v2429 = vld [vmem:[%s300 + $0xa4] sm:$0x1]
      %v2430 = vld [vmem:[%s300 + $0xa8] sm:$0xe]
      %v2431 = vld [vmem:[%s300 + $0xb0] sm:$0x1]
      %v2432 = vld [vmem:[%s300 + $0xb4] sm:$0xe]
      %v2433 = vld [vmem:[%s300 + $0xbc] sm:$0x1]
      %v2482 = vrot.slane %v2402, 5
      %v2483 = vrot.slane %v2482, 4
      %v2484 = vrot.slane %v2370, 5
      %v2485 = vsel %vm1995, %v2483, %v2484
      %v2486 = vrot.slane %v2484, 4
      %v2487 = vrot.slane %v2403, 5
      %v2488 = vsel %vm1995, %v2486, %v2487
      %v2489 = vrot.slane %v2404, 5
      %v2490 = vrot.slane %v2489, 4
      %v2491 = vrot.slane %v2372, 5
      %v2492 = vsel %vm1995, %v2490, %v2491
      %v2493 = vrot.slane %v2491, 4
      %v2494 = vrot.slane %v2405, 5
      %v2495 = vsel %vm1995, %v2493, %v2494
      %v2496 = vrot.slane %v2406, 5
      %v2497 = vrot.slane %v2496, 4
      %v2498 = vrot.slane %v2374, 5
      %v2499 = vsel %vm1995, %v2497, %v2498
      %v2500 = vrot.slane %v2498, 4
      %v2501 = vrot.slane %v2407, 5
      %v2502 = vsel %vm1995, %v2500, %v2501
      %v2503 = vrot.slane %v2408, 5
      %v2504 = vrot.slane %v2503, 4
      %v2505 = vrot.slane %v2376, 5
      %v2506 = vsel %vm1995, %v2504, %v2505
      %v2507 = vrot.slane %v2505, 4
      %v2508 = vrot.slane %v2409, 5
      %v2509 = vsel %vm1995, %v2507, %v2508
      %v2510 = vrot.slane %v2410, 5
      %v2511 = vrot.slane %v2510, 4
      %v2512 = vrot.slane %v2378, 5
      %v2513 = vsel %vm1995, %v2511, %v2512
      %v2514 = vrot.slane %v2512, 4
      %v2515 = vrot.slane %v2411, 5
      %v2516 = vsel %vm1995, %v2514, %v2515
      %v2517 = vrot.slane %v2412, 5
      %v2518 = vrot.slane %v2517, 4
      %v2519 = vrot.slane %v2380, 5
      %v2520 = vsel %vm1995, %v2518, %v2519
      %v2521 = vrot.slane %v2519, 4
      %v2522 = vrot.slane %v2413, 5
      %v2523 = vsel %vm1995, %v2521, %v2522
      %v2524 = vrot.slane %v2414, 5
      %v2525 = vrot.slane %v2524, 4
      %v2526 = vrot.slane %v2382, 5
      %v2527 = vsel %vm1995, %v2525, %v2526
      %v2528 = vrot.slane %v2526, 4
      %v2529 = vrot.slane %v2415, 5
      %v2530 = vsel %vm1995, %v2528, %v2529
      %v2531 = vrot.slane %v2416, 5
      %v2532 = vrot.slane %v2531, 4
      %v2533 = vrot.slane %v2384, 5
      %v2534 = vsel %vm1995, %v2532, %v2533
      %v2535 = vrot.slane %v2533, 4
      %v2536 = vrot.slane %v2417, 5
      %v2537 = vsel %vm1995, %v2535, %v2536
      %v2538 = vrot.slane %v2418, 5
      %v2539 = vrot.slane %v2538, 4
      %v2540 = vrot.slane %v2386, 5
      %v2541 = vsel %vm1995, %v2539, %v2540
      %v2542 = vrot.slane %v2540, 4
      %v2543 = vrot.slane %v2419, 5
      %v2544 = vsel %vm1995, %v2542, %v2543
      %v2545 = vrot.slane %v2420, 5
      %v2546 = vrot.slane %v2545, 4
      %v2547 = vrot.slane %v2388, 5
      %v2548 = vsel %vm1995, %v2546, %v2547
      %v2549 = vrot.slane %v2547, 4
      %v2550 = vrot.slane %v2421, 5
      %v2551 = vsel %vm1995, %v2549, %v2550
      %v2552 = vrot.slane %v2422, 5
      %v2553 = vrot.slane %v2552, 4
      %v2554 = vrot.slane %v2390, 5
      %v2555 = vsel %vm1995, %v2553, %v2554
      %v2556 = vrot.slane %v2554, 4
      %v2557 = vrot.slane %v2423, 5
      %v2558 = vsel %vm1995, %v2556, %v2557
      %v2559 = vrot.slane %v2424, 5
      %v2560 = vrot.slane %v2559, 4
      %v2561 = vrot.slane %v2392, 5
      %v2562 = vsel %vm1995, %v2560, %v2561
      %v2563 = vrot.slane %v2561, 4
      %v2564 = vrot.slane %v2425, 5
      %v2565 = vsel %vm1995, %v2563, %v2564
      %v2566 = vrot.slane %v2426, 5
      %v2567 = vrot.slane %v2566, 4
      %v2568 = vrot.slane %v2394, 5
      %v2569 = vsel %vm1995, %v2567, %v2568
      %v2570 = vrot.slane %v2568, 4
      %v2571 = vrot.slane %v2427, 5
      %v2572 = vsel %vm1995, %v2570, %v2571
      %v2573 = vrot.slane %v2428, 5
      %v2574 = vrot.slane %v2573, 4
      %v2575 = vrot.slane %v2396, 5
      %v2576 = vsel %vm1995, %v2574, %v2575
      %v2577 = vrot.slane %v2575, 4
      %v2578 = vrot.slane %v2429, 5
      %v2579 = vsel %vm1995, %v2577, %v2578
      %v2580 = vrot.slane %v2430, 5
      %v2581 = vrot.slane %v2580, 4
      %v2582 = vrot.slane %v2398, 5
      %v2583 = vsel %vm1995, %v2581, %v2582
      %v2584 = vrot.slane %v2582, 4
      %v2585 = vrot.slane %v2431, 5
      %v2586 = vsel %vm1995, %v2584, %v2585
      %v2587 = vrot.slane %v2432, 5
      %v2588 = vrot.slane %v2587, 4
      %v2589 = vrot.slane %v2400, 5
      %v2590 = vsel %vm1995, %v2588, %v2589
      %v2591 = vrot.slane %v2589, 4
      %v2592 = vrot.slane %v2433, 5
      %v2593 = vsel %vm1995, %v2591, %v2592
      %s2594 = scalar_lea.vmem %s5, 2
      %v2595 = vld [vmem:[%s2594] sm:$0x3]
      %v2596 = vunpack.c.l.b16 %v2485
      %v2597 = vunpack.c.l.b16 %v2488
      %v2598 = vunpack.c.l.b16 %v2492
      %v2599 = vunpack.c.l.b16 %v2495
      %v2600 = vunpack.c.l.b16 %v2499
      %v2601 = vunpack.c.l.b16 %v2502
      %v2602 = vunpack.c.l.b16 %v2506
      %v2603 = vunpack.c.l.b16 %v2509
      %v2604 = vunpack.c.l.b16 %v2513
      %v2605 = vunpack.c.l.b16 %v2516
      %v2606 = vunpack.c.l.b16 %v2520
      %v2607 = vunpack.c.l.b16 %v2523
      %v2608 = vunpack.c.l.b16 %v2527
      %v2609 = vunpack.c.l.b16 %v2530
      %v2610 = vunpack.c.l.b16 %v2534
      %v2611 = vunpack.c.l.b16 %v2537
      %v2612 = vunpack.c.l.b16 %v2541
      %v2613 = vunpack.c.l.b16 %v2544
      %v2614 = vunpack.c.l.b16 %v2548
      %v2615 = vunpack.c.l.b16 %v2551
      %v2616 = vunpack.c.l.b16 %v2555
      %v2617 = vunpack.c.l.b16 %v2558
      %v2618 = vunpack.c.l.b16 %v2562
      %v2619 = vunpack.c.l.b16 %v2565
      %v2620 = vunpack.c.l.b16 %v2569
      %v2621 = vunpack.c.l.b16 %v2572
      %v2622 = vunpack.c.l.b16 %v2576
      %v2623 = vunpack.c.l.b16 %v2579
      %v2624 = vunpack.c.l.b16 %v2583
      %v2625 = vunpack.c.l.b16 %v2586
      %v2626 = vunpack.c.l.b16 %v2590
      %v2627 = vunpack.c.l.b16 %v2593
      %v2628 = vpack.c.b16 %v2597, %v2596
      %v2629 = vpack.c.b16 %v2599, %v2598
      %v2630 = vpack.c.b16 %v2601, %v2600
      %v2631 = vpack.c.b16 %v2603, %v2602
      %v2632 = vpack.c.b16 %v2605, %v2604
      %v2633 = vpack.c.b16 %v2607, %v2606
      %v2634 = vpack.c.b16 %v2609, %v2608
      %v2635 = vpack.c.b16 %v2611, %v2610
      %v2636 = vpack.c.b16 %v2613, %v2612
      %v2637 = vpack.c.b16 %v2615, %v2614
      %v2638 = vpack.c.b16 %v2617, %v2616
      %v2639 = vpack.c.b16 %v2619, %v2618
      %v2640 = vpack.c.b16 %v2621, %v2620
      %v2641 = vpack.c.b16 %v2623, %v2622
      %v2642 = vpack.c.b16 %v2625, %v2624
      %v2643 = vpack.c.b16 %v2627, %v2626
      %v2645 = vsel %vm565, %v2628, 0
      %v2648 = vsel %vm565, %v2629, 0
      %v2651 = vsel %vm565, %v2630, 0
      %v2654 = vsel %vm565, %v2631, 0
      %v2657 = vsel %vm565, %v2632, 0
      %v2660 = vsel %vm565, %v2633, 0
      %v2663 = vsel %vm565, %v2634, 0
      %v2666 = vsel %vm565, %v2635, 0
      %v2669 = vsel %vm565, %v2636, 0
      %v2672 = vsel %vm565, %v2637, 0
      %v2675 = vsel %vm565, %v2638, 0
      %v2678 = vsel %vm565, %v2639, 0
      %v2681 = vsel %vm565, %v2640, 0
      %v2684 = vsel %vm565, %v2641, 0
      %v2687 = vsel %vm565, %v2642, 0
      %v2690 = vsel %vm565, %v2643, 0
      %v2693 = vsel %vm2204, %v2595, 0
      %2695 = vmatprep.subr.bf16.mxu0 0
      %2696 = vmatpush1.bf16.msra.mxu0 %v2693
      %2697 = vmatprep.subr.bf16.mxu0 0
      %2698 = vmatpush1.bf16.msra.mxu0 0
      %2699 = vmatprep.subr.bf16.mxu0 0
      %2700 = vmatpush1.bf16.msra.mxu0 0
      %2701 = vmatprep.subr.bf16.mxu0 0
      %2702 = vmatpush1.bf16.msra.mxu0 0
      %2703 = vmatprep.subr.bf16.mxu0 0
      %2704 = vmatpush1.bf16.msra.mxu0 0
      %2705 = vmatprep.subr.bf16.mxu0 0
      %2706 = vmatpush1.bf16.msra.mxu0 0
      %2707 = vmatprep.subr.bf16.mxu0 0
      %2708 = vmatpush1.bf16.msra.mxu0 0
      %2709 = vmatprep.subr.bf16.mxu0 0
      %2710 = vmatpush1.bf16.msra.mxu0 0
      %2711 = vmatprep.subr.bf16.mxu0 0
      %2712 = vmatpush1.bf16.msra.mxu0 0
      %2713 = vmatprep.subr.bf16.mxu0 0
      %2714 = vmatpush1.bf16.msra.mxu0 0
      %2715 = vmatprep.subr.bf16.mxu0 0
      %2716 = vmatpush1.bf16.msra.mxu0 0
      %2717 = vmatprep.subr.bf16.mxu0 0
      %2718 = vmatpush1.bf16.msra.mxu0 0
      %2719 = vmatprep.subr.bf16.mxu0 0
      %2720 = vmatpush1.bf16.msra.mxu0 0
      %2721 = vmatprep.subr.bf16.mxu0 0
      %2722 = vmatpush1.bf16.msra.mxu0 0
      %2723 = vmatprep.subr.bf16.mxu0 0
      %2724 = vmatpush1.bf16.msra.mxu0 0
      %2725 = vmatprep.subr.bf16.mxu0 0
      %2726 = vmatpush1.bf16.msra.mxu0 0
      %2727 = vmatprep.mubr.bf16.mxu0 0
      %2728 = vmatmul.mubr.bf16.gmra.mrb[0].mxu0 %v2645
      %v2729 = vpop.f32.mrb[0].mxu0
      %v2730 = vadd.f32 0.0, %v2729
      %v2731 = vpop.f32.mrb[0].mxu0
      %v2732 = vpop.f32.mrb[0].mxu0
      %v2733 = vadd.f32 0.0, %v2732
      %v2734 = vpop.f32.mrb[0].mxu0
      %2735 = vmatprep.mubr.bf16.mxu0 0
      %2736 = vmatmul.mubr.bf16.gmra.mrb[0].mxu0 %v2648
      %v2737 = vpop.f32.mrb[0].mxu0
      %v2738 = vadd.f32 0.0, %v2737
      %v2739 = vpop.f32.mrb[0].mxu0
      %v2740 = vpop.f32.mrb[0].mxu0
      %v2741 = vadd.f32 0.0, %v2740
      %v2742 = vpop.f32.mrb[0].mxu0
      %2743 = vmatprep.mubr.bf16.mxu0 0
      %2744 = vmatmul.mubr.bf16.gmra.mrb[0].mxu0 %v2651
      %v2745 = vpop.f32.mrb[0].mxu0
      %v2746 = vadd.f32 0.0, %v2745
      %v2747 = vpop.f32.mrb[0].mxu0
      %v2748 = vpop.f32.mrb[0].mxu0
      %v2749 = vadd.f32 0.0, %v2748
      %v2750 = vpop.f32.mrb[0].mxu0
      %2751 = vmatprep.mubr.bf16.mxu0 0
      %2752 = vmatmul.mubr.bf16.gmra.mrb[0].mxu0 %v2654
      %v2753 = vpop.f32.mrb[0].mxu0
      %v2754 = vadd.f32 0.0, %v2753
      %v2755 = vpop.f32.mrb[0].mxu0
      %v2756 = vpop.f32.mrb[0].mxu0
      %v2757 = vadd.f32 0.0, %v2756
      %v2758 = vpop.f32.mrb[0].mxu0
      %2759 = vmatprep.mubr.bf16.mxu0 0
      %2760 = vmatmul.mubr.bf16.gmra.mrb[0].mxu0 %v2657
      %v2761 = vpop.f32.mrb[0].mxu0
      %v2762 = vadd.f32 0.0, %v2761
      %v2763 = vpop.f32.mrb[0].mxu0
      %v2764 = vpop.f32.mrb[0].mxu0
      %v2765 = vadd.f32 0.0, %v2764
      %v2766 = vpop.f32.mrb[0].mxu0
      %2767 = vmatprep.mubr.bf16.mxu0 0
      %2768 = vmatmul.mubr.bf16.gmra.mrb[0].mxu0 %v2660
      %v2769 = vpop.f32.mrb[0].mxu0
      %v2770 = vadd.f32 0.0, %v2769
      %v2771 = vpop.f32.mrb[0].mxu0
      %v2772 = vpop.f32.mrb[0].mxu0
      %v2773 = vadd.f32 0.0, %v2772
      %v2774 = vpop.f32.mrb[0].mxu0
      %2775 = vmatprep.mubr.bf16.mxu0 0
      %2776 = vmatmul.mubr.bf16.gmra.mrb[0].mxu0 %v2663
      %v2777 = vpop.f32.mrb[0].mxu0
      %v2778 = vadd.f32 0.0, %v2777
      %v2779 = vpop.f32.mrb[0].mxu0
      %v2780 = vpop.f32.mrb[0].mxu0
      %v2781 = vadd.f32 0.0, %v2780
      %v2782 = vpop.f32.mrb[0].mxu0
      %2783 = vmatprep.mubr.bf16.mxu0 0
      %2784 = vmatmul.mubr.bf16.gmra.mrb[0].mxu0 %v2666
      %v2785 = vpop.f32.mrb[0].mxu0
      %v2786 = vadd.f32 0.0, %v2785
      %v2787 = vpop.f32.mrb[0].mxu0
      %v2788 = vpop.f32.mrb[0].mxu0
      %v2789 = vadd.f32 0.0, %v2788
      %v2790 = vpop.f32.mrb[0].mxu0
      %2791 = vmatprep.mubr.bf16.mxu0 0
      %2792 = vmatmul.mubr.bf16.gmra.mrb[0].mxu0 %v2669
      %v2793 = vpop.f32.mrb[0].mxu0
      %v2794 = vadd.f32 0.0, %v2793
      %v2795 = vpop.f32.mrb[0].mxu0
      %v2796 = vpop.f32.mrb[0].mxu0
      %v2797 = vadd.f32 0.0, %v2796
      %v2798 = vpop.f32.mrb[0].mxu0
      %2799 = vmatprep.mubr.bf16.mxu0 0
      %2800 = vmatmul.mubr.bf16.gmra.mrb[0].mxu0 %v2672
      %v2801 = vpop.f32.mrb[0].mxu0
      %v2802 = vadd.f32 0.0, %v2801
      %v2803 = vpop.f32.mrb[0].mxu0
      %v2804 = vpop.f32.mrb[0].mxu0
      %v2805 = vadd.f32 0.0, %v2804
      %v2806 = vpop.f32.mrb[0].mxu0
      %2807 = vmatprep.mubr.bf16.mxu0 0
      %2808 = vmatmul.mubr.bf16.gmra.mrb[0].mxu0 %v2675
      %v2809 = vpop.f32.mrb[0].mxu0
      %v2810 = vadd.f32 0.0, %v2809
      %v2811 = vpop.f32.mrb[0].mxu0
      %v2812 = vpop.f32.mrb[0].mxu0
      %v2813 = vadd.f32 0.0, %v2812
      %v2814 = vpop.f32.mrb[0].mxu0
      %2815 = vmatprep.mubr.bf16.mxu0 0
      %2816 = vmatmul.mubr.bf16.gmra.mrb[0].mxu0 %v2678
      %v2817 = vpop.f32.mrb[0].mxu0
      %v2818 = vadd.f32 0.0, %v2817
      %v2819 = vpop.f32.mrb[0].mxu0
      %v2820 = vpop.f32.mrb[0].mxu0
      %v2821 = vadd.f32 0.0, %v2820
      %v2822 = vpop.f32.mrb[0].mxu0
      %2823 = vmatprep.mubr.bf16.mxu0 0
      %2824 = vmatmul.mubr.bf16.gmra.mrb[0].mxu0 %v2681
      %v2825 = vpop.f32.mrb[0].mxu0
      %v2826 = vadd.f32 0.0, %v2825
      %v2827 = vpop.f32.mrb[0].mxu0
      %v2828 = vpop.f32.mrb[0].mxu0
      %v2829 = vadd.f32 0.0, %v2828
      %v2830 = vpop.f32.mrb[0].mxu0
      %2831 = vmatprep.mubr.bf16.mxu0 0
      %2832 = vmatmul.mubr.bf16.gmra.mrb[0].mxu0 %v2684
      %v2833 = vpop.f32.mrb[0].mxu0
      %v2834 = vadd.f32 0.0, %v2833
      %v2835 = vpop.f32.mrb[0].mxu0
      %v2836 = vpop.f32.mrb[0].mxu0
      %v2837 = vadd.f32 0.0, %v2836
      %v2838 = vpop.f32.mrb[0].mxu0
      %2839 = vmatprep.mubr.bf16.mxu0 0
      %2840 = vmatmul.mubr.bf16.gmra.mrb[0].mxu0 %v2687
      %v2841 = vpop.f32.mrb[0].mxu0
      %v2842 = vadd.f32 0.0, %v2841
      %v2843 = vpop.f32.mrb[0].mxu0
      %v2844 = vpop.f32.mrb[0].mxu0
      %v2845 = vadd.f32 0.0, %v2844
      %v2846 = vpop.f32.mrb[0].mxu0
      %2847 = vmatprep.mubr.bf16.mxu0 0
      %2848 = vmatmul.mubr.bf16.gmra.mrb[0].mxu0 %v2690
      %v2849 = vpop.f32.mrb[0].mxu0
      %v2850 = vadd.f32 0.0, %v2849
      %v2851 = vpop.f32.mrb[0].mxu0
      %v2852 = vpop.f32.mrb[0].mxu0
      %v2853 = vadd.f32 0.0, %v2852
      %v2854 = vpop.f32.mrb[0].mxu0
      %2855 = vdwg.mxu0
      %v2872 = vunpack.c.l.b16 %v2369
      %v2873 = vunpack.c.l.b16 %v2370
      %v2874 = vunpack.c.l.b16 %v2371
      %v2875 = vunpack.c.l.b16 %v2372
      %v2876 = vunpack.c.l.b16 %v2373
      %v2877 = vunpack.c.l.b16 %v2374
      %v2878 = vunpack.c.l.b16 %v2375
      %v2879 = vunpack.c.l.b16 %v2376
      %v2880 = vunpack.c.l.b16 %v2377
      %v2881 = vunpack.c.l.b16 %v2378
      %v2882 = vunpack.c.l.b16 %v2379
      %v2883 = vunpack.c.l.b16 %v2380
      %v2884 = vunpack.c.l.b16 %v2381
      %v2885 = vunpack.c.l.b16 %v2382
      %v2886 = vunpack.c.l.b16 %v2383
      %v2887 = vunpack.c.l.b16 %v2384
      %v2888 = vunpack.c.l.b16 %v2385
      %v2889 = vunpack.c.l.b16 %v2386
      %v2890 = vunpack.c.l.b16 %v2387
      %v2891 = vunpack.c.l.b16 %v2388
      %v2892 = vunpack.c.l.b16 %v2389
      %v2893 = vunpack.c.l.b16 %v2390
      %v2894 = vunpack.c.l.b16 %v2391
      %v2895 = vunpack.c.l.b16 %v2392
      %v2896 = vunpack.c.l.b16 %v2393
      %v2897 = vunpack.c.l.b16 %v2394
      %v2898 = vunpack.c.l.b16 %v2395
      %v2899 = vunpack.c.l.b16 %v2396
      %v2900 = vunpack.c.l.b16 %v2397
      %v2901 = vunpack.c.l.b16 %v2398
      %v2902 = vunpack.c.l.b16 %v2399
      %v2903 = vunpack.c.l.b16 %v2400
      %v2904 = vpack.c.b16 %v2873, %v2872
      %v2905 = vpack.c.b16 %v2875, %v2874
      %v2906 = vpack.c.b16 %v2877, %v2876
      %v2907 = vpack.c.b16 %v2879, %v2878
      %v2908 = vpack.c.b16 %v2881, %v2880
      %v2909 = vpack.c.b16 %v2883, %v2882
      %v2910 = vpack.c.b16 %v2885, %v2884
      %v2911 = vpack.c.b16 %v2887, %v2886
      %v2912 = vpack.c.b16 %v2889, %v2888
      %v2913 = vpack.c.b16 %v2891, %v2890
      %v2914 = vpack.c.b16 %v2893, %v2892
      %v2915 = vpack.c.b16 %v2895, %v2894
      %v2916 = vpack.c.b16 %v2897, %v2896
      %v2917 = vpack.c.b16 %v2899, %v2898
      %v2918 = vpack.c.b16 %v2901, %v2900
      %v2919 = vpack.c.b16 %v2903, %v2902
      %v2921 = vsel %vm565, %v2904, 0
      %v2924 = vsel %vm565, %v2905, 0
      %v2927 = vsel %vm565, %v2906, 0
      %v2930 = vsel %vm565, %v2907, 0
      %v2933 = vsel %vm565, %v2908, 0
      %v2936 = vsel %vm565, %v2909, 0
      %v2939 = vsel %vm565, %v2910, 0
      %v2942 = vsel %vm565, %v2911, 0
      %v2945 = vsel %vm565, %v2912, 0
      %v2948 = vsel %vm565, %v2913, 0
      %v2951 = vsel %vm565, %v2914, 0
      %v2954 = vsel %vm565, %v2915, 0
      %v2957 = vsel %vm565, %v2916, 0
      %v2960 = vsel %vm565, %v2917, 0
      %v2963 = vsel %vm565, %v2918, 0
      %v2966 = vsel %vm565, %v2919, 0
      %v2969 = vsel %vm2204, %v2401, 0
      %2971 = vmatprep.subr.bf16.mxu0 0
      %2972 = vmatpush1.bf16.msra.mxu0 %v2969
      %2973 = vmatprep.subr.bf16.mxu0 0
      %2974 = vmatpush1.bf16.msra.mxu0 0
      %2975 = vmatprep.subr.bf16.mxu0 0
      %2976 = vmatpush1.bf16.msra.mxu0 0
      %2977 = vmatprep.subr.bf16.mxu0 0
      %2978 = vmatpush1.bf16.msra.mxu0 0
      %2979 = vmatprep.subr.bf16.mxu0 0
      %2980 = vmatpush1.bf16.msra.mxu0 0
      %2981 = vmatprep.subr.bf16.mxu0 0
      %2982 = vmatpush1.bf16.msra.mxu0 0
      %2983 = vmatprep.subr.bf16.mxu0 0
      %2984 = vmatpush1.bf16.msra.mxu0 0
      %2985 = vmatprep.subr.bf16.mxu0 0
      %2986 = vmatpush1.bf16.msra.mxu0 0
      %2987 = vmatprep.subr.bf16.mxu0 0
      %2988 = vmatpush1.bf16.msra.mxu0 0
      %2989 = vmatprep.subr.bf16.mxu0 0
      %2990 = vmatpush1.bf16.msra.mxu0 0
      %2991 = vmatprep.subr.bf16.mxu0 0
      %2992 = vmatpush1.bf16.msra.mxu0 0
      %2993 = vmatprep.subr.bf16.mxu0 0
      %2994 = vmatpush1.bf16.msra.mxu0 0
      %2995 = vmatprep.subr.bf16.mxu0 0
      %2996 = vmatpush1.bf16.msra.mxu0 0
      %2997 = vmatprep.subr.bf16.mxu0 0
      %2998 = vmatpush1.bf16.msra.mxu0 0
      %2999 = vmatprep.subr.bf16.mxu0 0
      %3000 = vmatpush1.bf16.msra.mxu0 0
      %3001 = vmatprep.subr.bf16.mxu0 0
      %3002 = vmatpush1.bf16.msra.mxu0 0
      %3003 = vmatprep.mubr.bf16.mxu0 0
      %3004 = vmatmul.mubr.bf16.gmra.mrb[0].mxu0 %v2921
      %v3005 = vpop.f32.mrb[0].mxu0
      %v3006 = vadd.f32 %v2730, %v3005
      %v3007 = vpop.f32.mrb[0].mxu0
      %v3008 = vpop.f32.mrb[0].mxu0
      %v3009 = vadd.f32 %v2733, %v3008
      %v3010 = vpop.f32.mrb[0].mxu0
      %3011 = vmatprep.mubr.bf16.mxu0 0
      %3012 = vmatmul.mubr.bf16.gmra.mrb[0].mxu0 %v2924
      %v3013 = vpop.f32.mrb[0].mxu0
      %v3014 = vadd.f32 %v2738, %v3013
      %v3015 = vpop.f32.mrb[0].mxu0
      %v3016 = vpop.f32.mrb[0].mxu0
      %v3017 = vadd.f32 %v2741, %v3016
      %v3018 = vpop.f32.mrb[0].mxu0
      %3019 = vmatprep.mubr.bf16.mxu0 0
      %3020 = vmatmul.mubr.bf16.gmra.mrb[0].mxu0 %v2927
      %v3021 = vpop.f32.mrb[0].mxu0
      %v3022 = vadd.f32 %v2746, %v3021
      %v3023 = vpop.f32.mrb[0].mxu0
      %v3024 = vpop.f32.mrb[0].mxu0
      %v3025 = vadd.f32 %v2749, %v3024
      %v3026 = vpop.f32.mrb[0].mxu0
      %3027 = vmatprep.mubr.bf16.mxu0 0
      %3028 = vmatmul.mubr.bf16.gmra.mrb[0].mxu0 %v2930
      %v3029 = vpop.f32.mrb[0].mxu0
      %v3030 = vadd.f32 %v2754, %v3029
      %v3031 = vpop.f32.mrb[0].mxu0
      %v3032 = vpop.f32.mrb[0].mxu0
      %v3033 = vadd.f32 %v2757, %v3032
      %v3034 = vpop.f32.mrb[0].mxu0
      %3035 = vmatprep.mubr.bf16.mxu0 0
      %3036 = vmatmul.mubr.bf16.gmra.mrb[0].mxu0 %v2933
      %v3037 = vpop.f32.mrb[0].mxu0
      %v3038 = vadd.f32 %v2762, %v3037
      %v3039 = vpop.f32.mrb[0].mxu0
      %v3040 = vpop.f32.mrb[0].mxu0
      %v3041 = vadd.f32 %v2765, %v3040
      %v3042 = vpop.f32.mrb[0].mxu0
      %3043 = vmatprep.mubr.bf16.mxu0 0
      %3044 = vmatmul.mubr.bf16.gmra.mrb[0].mxu0 %v2936
      %v3045 = vpop.f32.mrb[0].mxu0
      %v3046 = vadd.f32 %v2770, %v3045
      %v3047 = vpop.f32.mrb[0].mxu0
      %v3048 = vpop.f32.mrb[0].mxu0
      %v3049 = vadd.f32 %v2773, %v3048
      %v3050 = vpop.f32.mrb[0].mxu0
      %3051 = vmatprep.mubr.bf16.mxu0 0
      %3052 = vmatmul.mubr.bf16.gmra.mrb[0].mxu0 %v2939
      %v3053 = vpop.f32.mrb[0].mxu0
      %v3054 = vadd.f32 %v2778, %v3053
      %v3055 = vpop.f32.mrb[0].mxu0
      %v3056 = vpop.f32.mrb[0].mxu0
      %v3057 = vadd.f32 %v2781, %v3056
      %v3058 = vpop.f32.mrb[0].mxu0
      %3059 = vmatprep.mubr.bf16.mxu0 0
      %3060 = vmatmul.mubr.bf16.gmra.mrb[0].mxu0 %v2942
      %v3061 = vpop.f32.mrb[0].mxu0
      %v3062 = vadd.f32 %v2786, %v3061
      %v3063 = vpop.f32.mrb[0].mxu0
      %v3064 = vpop.f32.mrb[0].mxu0
      %v3065 = vadd.f32 %v2789, %v3064
      %v3066 = vpop.f32.mrb[0].mxu0
      %3067 = vmatprep.mubr.bf16.mxu0 0
      %3068 = vmatmul.mubr.bf16.gmra.mrb[0].mxu0 %v2945
      %v3069 = vpop.f32.mrb[0].mxu0
      %v3070 = vadd.f32 %v2794, %v3069
      %v3071 = vpop.f32.mrb[0].mxu0
      %v3072 = vpop.f32.mrb[0].mxu0
      %v3073 = vadd.f32 %v2797, %v3072
      %v3074 = vpop.f32.mrb[0].mxu0
      %3075 = vmatprep.mubr.bf16.mxu0 0
      %3076 = vmatmul.mubr.bf16.gmra.mrb[0].mxu0 %v2948
      %v3077 = vpop.f32.mrb[0].mxu0
      %v3078 = vadd.f32 %v2802, %v3077
      %v3079 = vpop.f32.mrb[0].mxu0
      %v3080 = vpop.f32.mrb[0].mxu0
      %v3081 = vadd.f32 %v2805, %v3080
      %v3082 = vpop.f32.mrb[0].mxu0
      %3083 = vmatprep.mubr.bf16.mxu0 0
      %3084 = vmatmul.mubr.bf16.gmra.mrb[0].mxu0 %v2951
      %v3085 = vpop.f32.mrb[0].mxu0
      %v3086 = vadd.f32 %v2810, %v3085
      %v3087 = vpop.f32.mrb[0].mxu0
      %v3088 = vpop.f32.mrb[0].mxu0
      %v3089 = vadd.f32 %v2813, %v3088
      %v3090 = vpop.f32.mrb[0].mxu0
      %3091 = vmatprep.mubr.bf16.mxu0 0
      %3092 = vmatmul.mubr.bf16.gmra.mrb[0].mxu0 %v2954
      %v3093 = vpop.f32.mrb[0].mxu0
      %v3094 = vadd.f32 %v2818, %v3093
      %v3095 = vpop.f32.mrb[0].mxu0
      %v3096 = vpop.f32.mrb[0].mxu0
      %v3097 = vadd.f32 %v2821, %v3096
      %v3098 = vpop.f32.mrb[0].mxu0
      %3099 = vmatprep.mubr.bf16.mxu0 0
      %3100 = vmatmul.mubr.bf16.gmra.mrb[0].mxu0 %v2957
      %v3101 = vpop.f32.mrb[0].mxu0
      %v3102 = vadd.f32 %v2826, %v3101
      %v3103 = vpop.f32.mrb[0].mxu0
      %v3104 = vpop.f32.mrb[0].mxu0
      %v3105 = vadd.f32 %v2829, %v3104
      %v3106 = vpop.f32.mrb[0].mxu0
      %3107 = vmatprep.mubr.bf16.mxu0 0
      %3108 = vmatmul.mubr.bf16.gmra.mrb[0].mxu0 %v2960
      %v3109 = vpop.f32.mrb[0].mxu0
      %v3110 = vadd.f32 %v2834, %v3109
      %v3111 = vpop.f32.mrb[0].mxu0
      %v3112 = vpop.f32.mrb[0].mxu0
      %v3113 = vadd.f32 %v2837, %v3112
      %v3114 = vpop.f32.mrb[0].mxu0
      %3115 = vmatprep.mubr.bf16.mxu0 0
      %3116 = vmatmul.mubr.bf16.gmra.mrb[0].mxu0 %v2963
      %v3117 = vpop.f32.mrb[0].mxu0
      %v3118 = vadd.f32 %v2842, %v3117
      %v3119 = vpop.f32.mrb[0].mxu0
      %v3120 = vpop.f32.mrb[0].mxu0
      %v3121 = vadd.f32 %v2845, %v3120
      %v3122 = vpop.f32.mrb[0].mxu0
      %3123 = vmatprep.mubr.bf16.mxu0 0
      %3124 = vmatmul.mubr.bf16.gmra.mrb[0].mxu0 %v2966
      %v3125 = vpop.f32.mrb[0].mxu0
      %v3126 = vadd.f32 %v2850, %v3125
      %v3127 = vpop.f32.mrb[0].mxu0
      %v3128 = vpop.f32.mrb[0].mxu0
      %v3129 = vadd.f32 %v2853, %v3128
      %v3130 = vpop.f32.mrb[0].mxu0
      %3131 = vdwg.mxu0
      %v3132 = vld [vmem:[%s300] sm:$0xc]
      %v3133 = vld [vmem:[%s300 + $0x8] sm:$0x3]
      %v3134 = vld [vmem:[%s300 + $0xc] sm:$0xc]
      %v3135 = vld [vmem:[%s300 + $0x14] sm:$0x3]
      %v3136 = vld [vmem:[%s300 + $0x18] sm:$0xc]
      %v3137 = vld [vmem:[%s300 + $0x20] sm:$0x3]
      %v3138 = vld [vmem:[%s300 + $0x24] sm:$0xc]
      %v3139 = vld [vmem:[%s300 + $0x2c] sm:$0x3]
      %v3140 = vld [vmem:[%s300 + $0x30] sm:$0xc]
      %v3141 = vld [vmem:[%s300 + $0x38] sm:$0x3]
      %v3142 = vld [vmem:[%s300 + $0x3c] sm:$0xc]
      %v3143 = vld [vmem:[%s300 + $0x44] sm:$0x3]
      %v3144 = vld [vmem:[%s300 + $0x48] sm:$0xc]
      %v3145 = vld [vmem:[%s300 + $0x50] sm:$0x3]
      %v3146 = vld [vmem:[%s300 + $0x54] sm:$0xc]
      %v3147 = vld [vmem:[%s300 + $0x5c] sm:$0x3]
      %v3148 = vld [vmem:[%s300 + $0x60] sm:$0xc]
      %v3149 = vld [vmem:[%s300 + $0x68] sm:$0x3]
      %v3150 = vld [vmem:[%s300 + $0x6c] sm:$0xc]
      %v3151 = vld [vmem:[%s300 + $0x74] sm:$0x3]
      %v3152 = vld [vmem:[%s300 + $0x78] sm:$0xc]
      %v3153 = vld [vmem:[%s300 + $0x80] sm:$0x3]
      %v3154 = vld [vmem:[%s300 + $0x84] sm:$0xc]
      %v3155 = vld [vmem:[%s300 + $0x8c] sm:$0x3]
      %v3156 = vld [vmem:[%s300 + $0x90] sm:$0xc]
      %v3157 = vld [vmem:[%s300 + $0x98] sm:$0x3]
      %v3158 = vld [vmem:[%s300 + $0x9c] sm:$0xc]
      %v3159 = vld [vmem:[%s300 + $0xa4] sm:$0x3]
      %v3160 = vld [vmem:[%s300 + $0xa8] sm:$0xc]
      %v3161 = vld [vmem:[%s300 + $0xb0] sm:$0x3]
      %v3162 = vld [vmem:[%s300 + $0xb4] sm:$0xc]
      %v3163 = vld [vmem:[%s300 + $0xbc] sm:$0x3]
      %vm3196 = vcmask 1041408
      %vm3197 = vcmask 1045508
      %vm3198 = vmor %vm3196, %vm3197
      %v3199 = vrot.slane %v3132, 6
      %v3200 = vrot.slane %v3199, 4
      %v3201 = vrot.slane %v2370, 6
      %v3202 = vsel %vm3198, %v3200, %v3201
      %v3203 = vrot.slane %v3201, 4
      %v3204 = vrot.slane %v3133, 6
      %v3205 = vsel %vm3198, %v3203, %v3204
      %v3206 = vrot.slane %v3134, 6
      %v3207 = vrot.slane %v3206, 4
      %v3208 = vrot.slane %v2372, 6
      %v3209 = vsel %vm3198, %v3207, %v3208
      %v3210 = vrot.slane %v3208, 4
      %v3211 = vrot.slane %v3135, 6
      %v3212 = vsel %vm3198, %v3210, %v3211
      %v3213 = vrot.slane %v3136, 6
      %v3214 = vrot.slane %v3213, 4
      %v3215 = vrot.slane %v2374, 6
      %v3216 = vsel %vm3198, %v3214, %v3215
      %v3217 = vrot.slane %v3215, 4
      %v3218 = vrot.slane %v3137, 6
      %v3219 = vsel %vm3198, %v3217, %v3218
      %v3220 = vrot.slane %v3138, 6
      %v3221 = vrot.slane %v3220, 4
      %v3222 = vrot.slane %v2376, 6
      %v3223 = vsel %vm3198, %v3221, %v3222
      %v3224 = vrot.slane %v3222, 4
      %v3225 = vrot.slane %v3139, 6
      %v3226 = vsel %vm3198, %v3224, %v3225
      %v3227 = vrot.slane %v3140, 6
      %v3228 = vrot.slane %v3227, 4
      %v3229 = vrot.slane %v2378, 6
      %v3230 = vsel %vm3198, %v3228, %v3229
      %v3231 = vrot.slane %v3229, 4
      %v3232 = vrot.slane %v3141, 6
      %v3233 = vsel %vm3198, %v3231, %v3232
      %v3234 = vrot.slane %v3142, 6
      %v3235 = vrot.slane %v3234, 4
      %v3236 = vrot.slane %v2380, 6
      %v3237 = vsel %vm3198, %v3235, %v3236
      %v3238 = vrot.slane %v3236, 4
      %v3239 = vrot.slane %v3143, 6
      %v3240 = vsel %vm3198, %v3238, %v3239
      %v3241 = vrot.slane %v3144, 6
      %v3242 = vrot.slane %v3241, 4
      %v3243 = vrot.slane %v2382, 6
      %v3244 = vsel %vm3198, %v3242, %v3243
      %v3245 = vrot.slane %v3243, 4
      %v3246 = vrot.slane %v3145, 6
      %v3247 = vsel %vm3198, %v3245, %v3246
      %v3248 = vrot.slane %v3146, 6
      %v3249 = vrot.slane %v3248, 4
      %v3250 = vrot.slane %v2384, 6
      %v3251 = vsel %vm3198, %v3249, %v3250
      %v3252 = vrot.slane %v3250, 4
      %v3253 = vrot.slane %v3147, 6
      %v3254 = vsel %vm3198, %v3252, %v3253
      %v3255 = vrot.slane %v3148, 6
      %v3256 = vrot.slane %v3255, 4
      %v3257 = vrot.slane %v2386, 6
      %v3258 = vsel %vm3198, %v3256, %v3257
      %v3259 = vrot.slane %v3257, 4
      %v3260 = vrot.slane %v3149, 6
      %v3261 = vsel %vm3198, %v3259, %v3260
      %v3262 = vrot.slane %v3150, 6
      %v3263 = vrot.slane %v3262, 4
      %v3264 = vrot.slane %v2388, 6
      %v3265 = vsel %vm3198, %v3263, %v3264
      %v3266 = vrot.slane %v3264, 4
      %v3267 = vrot.slane %v3151, 6
      %v3268 = vsel %vm3198, %v3266, %v3267
      %v3269 = vrot.slane %v3152, 6
      %v3270 = vrot.slane %v3269, 4
      %v3271 = vrot.slane %v2390, 6
      %v3272 = vsel %vm3198, %v3270, %v3271
      %v3273 = vrot.slane %v3271, 4
      %v3274 = vrot.slane %v3153, 6
      %v3275 = vsel %vm3198, %v3273, %v3274
      %v3276 = vrot.slane %v3154, 6
      %v3277 = vrot.slane %v3276, 4
      %v3278 = vrot.slane %v2392, 6
      %v3279 = vsel %vm3198, %v3277, %v3278
      %v3280 = vrot.slane %v3278, 4
      %v3281 = vrot.slane %v3155, 6
      %v3282 = vsel %vm3198, %v3280, %v3281
      %v3283 = vrot.slane %v3156, 6
      %v3284 = vrot.slane %v3283, 4
      %v3285 = vrot.slane %v2394, 6
      %v3286 = vsel %vm3198, %v3284, %v3285
      %v3287 = vrot.slane %v3285, 4
      %v3288 = vrot.slane %v3157, 6
      %v3289 = vsel %vm3198, %v3287, %v3288
      %v3290 = vrot.slane %v3158, 6
      %v3291 = vrot.slane %v3290, 4
      %v3292 = vrot.slane %v2396, 6
      %v3293 = vsel %vm3198, %v3291, %v3292
      %v3294 = vrot.slane %v3292, 4
      %v3295 = vrot.slane %v3159, 6
      %v3296 = vsel %vm3198, %v3294, %v3295
      %v3297 = vrot.slane %v3160, 6
      %v3298 = vrot.slane %v3297, 4
      %v3299 = vrot.slane %v2398, 6
      %v3300 = vsel %vm3198, %v3298, %v3299
      %v3301 = vrot.slane %v3299, 4
      %v3302 = vrot.slane %v3161, 6
      %v3303 = vsel %vm3198, %v3301, %v3302
      %v3304 = vrot.slane %v3162, 6
      %v3305 = vrot.slane %v3304, 4
      %v3306 = vrot.slane %v2400, 6
      %v3307 = vsel %vm3198, %v3305, %v3306
      %v3308 = vrot.slane %v3306, 4
      %v3309 = vrot.slane %v3163, 6
      %v3310 = vsel %vm3198, %v3308, %v3309
      %s3311 = scalar_lea.vmem %s5, 4
      %v3312 = vld [vmem:[%s3311] sm:$0x3]
      %v3313 = vunpack.c.l.b16 %v3202
      %v3314 = vunpack.c.l.b16 %v3205
      %v3315 = vunpack.c.l.b16 %v3209
      %v3316 = vunpack.c.l.b16 %v3212
      %v3317 = vunpack.c.l.b16 %v3216
      %v3318 = vunpack.c.l.b16 %v3219
      %v3319 = vunpack.c.l.b16 %v3223
      %v3320 = vunpack.c.l.b16 %v3226
      %v3321 = vunpack.c.l.b16 %v3230
      %v3322 = vunpack.c.l.b16 %v3233
      %v3323 = vunpack.c.l.b16 %v3237
      %v3324 = vunpack.c.l.b16 %v3240
      %v3325 = vunpack.c.l.b16 %v3244
      %v3326 = vunpack.c.l.b16 %v3247
      %v3327 = vunpack.c.l.b16 %v3251
      %v3328 = vunpack.c.l.b16 %v3254
      %v3329 = vunpack.c.l.b16 %v3258
      %v3330 = vunpack.c.l.b16 %v3261
      %v3331 = vunpack.c.l.b16 %v3265
      %v3332 = vunpack.c.l.b16 %v3268
      %v3333 = vunpack.c.l.b16 %v3272
      %v3334 = vunpack.c.l.b16 %v3275
      %v3335 = vunpack.c.l.b16 %v3279
      %v3336 = vunpack.c.l.b16 %v3282
      %v3337 = vunpack.c.l.b16 %v3286
      %v3338 = vunpack.c.l.b16 %v3289
      %v3339 = vunpack.c.l.b16 %v3293
      %v3340 = vunpack.c.l.b16 %v3296
      %v3341 = vunpack.c.l.b16 %v3300
      %v3342 = vunpack.c.l.b16 %v3303
      %v3343 = vunpack.c.l.b16 %v3307
      %v3344 = vunpack.c.l.b16 %v3310
      %v3345 = vpack.c.b16 %v3314, %v3313
      %v3346 = vpack.c.b16 %v3316, %v3315
      %v3347 = vpack.c.b16 %v3318, %v3317
      %v3348 = vpack.c.b16 %v3320, %v3319
      %v3349 = vpack.c.b16 %v3322, %v3321
      %v3350 = vpack.c.b16 %v3324, %v3323
      %v3351 = vpack.c.b16 %v3326, %v3325
      %v3352 = vpack.c.b16 %v3328, %v3327
      %v3353 = vpack.c.b16 %v3330, %v3329
      %v3354 = vpack.c.b16 %v3332, %v3331
      %v3355 = vpack.c.b16 %v3334, %v3333
      %v3356 = vpack.c.b16 %v3336, %v3335
      %v3357 = vpack.c.b16 %v3338, %v3337
      %v3358 = vpack.c.b16 %v3340, %v3339
      %v3359 = vpack.c.b16 %v3342, %v3341
      %v3360 = vpack.c.b16 %v3344, %v3343
      %v3362 = vsel %vm565, %v3345, 0
      %v3365 = vsel %vm565, %v3346, 0
      %v3368 = vsel %vm565, %v3347, 0
      %v3371 = vsel %vm565, %v3348, 0
      %v3374 = vsel %vm565, %v3349, 0
      %v3377 = vsel %vm565, %v3350, 0
      %v3380 = vsel %vm565, %v3351, 0
      %v3383 = vsel %vm565, %v3352, 0
      %v3386 = vsel %vm565, %v3353, 0
      %v3389 = vsel %vm565, %v3354, 0
      %v3392 = vsel %vm565, %v3355, 0
      %v3395 = vsel %vm565, %v3356, 0
      %v3398 = vsel %vm565, %v3357, 0
      %v3401 = vsel %vm565, %v3358, 0
      %v3404 = vsel %vm565, %v3359, 0
      %v3407 = vsel %vm565, %v3360, 0
      %v3410 = vsel %vm2204, %v3312, 0
      %3412 = vmatprep.subr.bf16.mxu0 0
      %3413 = vmatpush1.bf16.msra.mxu0 %v3410
      %3414 = vmatprep.subr.bf16.mxu0 0
      %3415 = vmatpush1.bf16.msra.mxu0 0
      %3416 = vmatprep.subr.bf16.mxu0 0
      %3417 = vmatpush1.bf16.msra.mxu0 0
      %3418 = vmatprep.subr.bf16.mxu0 0
      %3419 = vmatpush1.bf16.msra.mxu0 0
      %3420 = vmatprep.subr.bf16.mxu0 0
      %3421 = vmatpush1.bf16.msra.mxu0 0
      %3422 = vmatprep.subr.bf16.mxu0 0
      %3423 = vmatpush1.bf16.msra.mxu0 0
      %3424 = vmatprep.subr.bf16.mxu0 0
      %3425 = vmatpush1.bf16.msra.mxu0 0
      %3426 = vmatprep.subr.bf16.mxu0 0
      %3427 = vmatpush1.bf16.msra.mxu0 0
      %3428 = vmatprep.subr.bf16.mxu0 0
      %3429 = vmatpush1.bf16.msra.mxu0 0
      %3430 = vmatprep.subr.bf16.mxu0 0
      %3431 = vmatpush1.bf16.msra.mxu0 0
      %3432 = vmatprep.subr.bf16.mxu0 0
      %3433 = vmatpush1.bf16.msra.mxu0 0
      %3434 = vmatprep.subr.bf16.mxu0 0
      %3435 = vmatpush1.bf16.msra.mxu0 0
      %3436 = vmatprep.subr.bf16.mxu0 0
      %3437 = vmatpush1.bf16.msra.mxu0 0
      %3438 = vmatprep.subr.bf16.mxu0 0
      %3439 = vmatpush1.bf16.msra.mxu0 0
      %3440 = vmatprep.subr.bf16.mxu0 0
      %3441 = vmatpush1.bf16.msra.mxu0 0
      %3442 = vmatprep.subr.bf16.mxu0 0
      %3443 = vmatpush1.bf16.msra.mxu0 0
      %3444 = vmatprep.mubr.bf16.mxu0 0
      %3445 = vmatmul.mubr.bf16.gmra.mrb[0].mxu0 %v3362
      %v3446 = vpop.f32.mrb[0].mxu0
      %v3447 = vadd.f32 0.0, %v3446
      %v3448 = vpop.f32.mrb[0].mxu0
      %v3449 = vpop.f32.mrb[0].mxu0
      %v3450 = vadd.f32 0.0, %v3449
      %v3451 = vpop.f32.mrb[0].mxu0
      %3452 = vmatprep.mubr.bf16.mxu0 0
      %3453 = vmatmul.mubr.bf16.gmra.mrb[0].mxu0 %v3365
      %v3454 = vpop.f32.mrb[0].mxu0
      %v3455 = vadd.f32 0.0, %v3454
      %v3456 = vpop.f32.mrb[0].mxu0
      %v3457 = vpop.f32.mrb[0].mxu0
      %v3458 = vadd.f32 0.0, %v3457
      %v3459 = vpop.f32.mrb[0].mxu0
      %3460 = vmatprep.mubr.bf16.mxu0 0
      %3461 = vmatmul.mubr.bf16.gmra.mrb[0].mxu0 %v3368
      %v3462 = vpop.f32.mrb[0].mxu0
      %v3463 = vadd.f32 0.0, %v3462
      %v3464 = vpop.f32.mrb[0].mxu0
      %v3465 = vpop.f32.mrb[0].mxu0
      %v3466 = vadd.f32 0.0, %v3465
      %v3467 = vpop.f32.mrb[0].mxu0
      %3468 = vmatprep.mubr.bf16.mxu0 0
      %3469 = vmatmul.mubr.bf16.gmra.mrb[0].mxu0 %v3371
      %v3470 = vpop.f32.mrb[0].mxu0
      %v3471 = vadd.f32 0.0, %v3470
      %v3472 = vpop.f32.mrb[0].mxu0
      %v3473 = vpop.f32.mrb[0].mxu0
      %v3474 = vadd.f32 0.0, %v3473
      %v3475 = vpop.f32.mrb[0].mxu0
      %3476 = vmatprep.mubr.bf16.mxu0 0
      %3477 = vmatmul.mubr.bf16.gmra.mrb[0].mxu0 %v3374
      %v3478 = vpop.f32.mrb[0].mxu0
      %v3479 = vadd.f32 0.0, %v3478
      %v3480 = vpop.f32.mrb[0].mxu0
      %v3481 = vpop.f32.mrb[0].mxu0
      %v3482 = vadd.f32 0.0, %v3481
      %v3483 = vpop.f32.mrb[0].mxu0
      %3484 = vmatprep.mubr.bf16.mxu0 0
      %3485 = vmatmul.mubr.bf16.gmra.mrb[0].mxu0 %v3377
      %v3486 = vpop.f32.mrb[0].mxu0
      %v3487 = vadd.f32 0.0, %v3486
      %v3488 = vpop.f32.mrb[0].mxu0
      %v3489 = vpop.f32.mrb[0].mxu0
      %v3490 = vadd.f32 0.0, %v3489
      %v3491 = vpop.f32.mrb[0].mxu0
      %3492 = vmatprep.mubr.bf16.mxu0 0
      %3493 = vmatmul.mubr.bf16.gmra.mrb[0].mxu0 %v3380
      %v3494 = vpop.f32.mrb[0].mxu0
      %v3495 = vadd.f32 0.0, %v3494
      %v3496 = vpop.f32.mrb[0].mxu0
      %v3497 = vpop.f32.mrb[0].mxu0
      %v3498 = vadd.f32 0.0, %v3497
      %v3499 = vpop.f32.mrb[0].mxu0
      %3500 = vmatprep.mubr.bf16.mxu0 0
      %3501 = vmatmul.mubr.bf16.gmra.mrb[0].mxu0 %v3383
      %v3502 = vpop.f32.mrb[0].mxu0
      %v3503 = vadd.f32 0.0, %v3502
      %v3504 = vpop.f32.mrb[0].mxu0
      %v3505 = vpop.f32.mrb[0].mxu0
      %v3506 = vadd.f32 0.0, %v3505
      %v3507 = vpop.f32.mrb[0].mxu0
      %3508 = vmatprep.mubr.bf16.mxu0 0
      %3509 = vmatmul.mubr.bf16.gmra.mrb[0].mxu0 %v3386
      %v3510 = vpop.f32.mrb[0].mxu0
      %v3511 = vadd.f32 0.0, %v3510
      %v3512 = vpop.f32.mrb[0].mxu0
      %v3513 = vpop.f32.mrb[0].mxu0
      %v3514 = vadd.f32 0.0, %v3513
      %v3515 = vpop.f32.mrb[0].mxu0
      %3516 = vmatprep.mubr.bf16.mxu0 0
      %3517 = vmatmul.mubr.bf16.gmra.mrb[0].mxu0 %v3389
      %v3518 = vpop.f32.mrb[0].mxu0
      %v3519 = vadd.f32 0.0, %v3518
      %v3520 = vpop.f32.mrb[0].mxu0
      %v3521 = vpop.f32.mrb[0].mxu0
      %v3522 = vadd.f32 0.0, %v3521
      %v3523 = vpop.f32.mrb[0].mxu0
      %3524 = vmatprep.mubr.bf16.mxu0 0
      %3525 = vmatmul.mubr.bf16.gmra.mrb[0].mxu0 %v3392
      %v3526 = vpop.f32.mrb[0].mxu0
      %v3527 = vadd.f32 0.0, %v3526
      %v3528 = vpop.f32.mrb[0].mxu0
      %v3529 = vpop.f32.mrb[0].mxu0
      %v3530 = vadd.f32 0.0, %v3529
      %v3531 = vpop.f32.mrb[0].mxu0
      %3532 = vmatprep.mubr.bf16.mxu0 0
      %3533 = vmatmul.mubr.bf16.gmra.mrb[0].mxu0 %v3395
      %v3534 = vpop.f32.mrb[0].mxu0
      %v3535 = vadd.f32 0.0, %v3534
      %v3536 = vpop.f32.mrb[0].mxu0
      %v3537 = vpop.f32.mrb[0].mxu0
      %v3538 = vadd.f32 0.0, %v3537
      %v3539 = vpop.f32.mrb[0].mxu0
      %3540 = vmatprep.mubr.bf16.mxu0 0
      %3541 = vmatmul.mubr.bf16.gmra.mrb[0].mxu0 %v3398
      %v3542 = vpop.f32.mrb[0].mxu0
      %v3543 = vadd.f32 0.0, %v3542
      %v3544 = vpop.f32.mrb[0].mxu0
      %v3545 = vpop.f32.mrb[0].mxu0
      %v3546 = vadd.f32 0.0, %v3545
      %v3547 = vpop.f32.mrb[0].mxu0
      %3548 = vmatprep.mubr.bf16.mxu0 0
      %3549 = vmatmul.mubr.bf16.gmra.mrb[0].mxu0 %v3401
      %v3550 = vpop.f32.mrb[0].mxu0
      %v3551 = vadd.f32 0.0, %v3550
      %v3552 = vpop.f32.mrb[0].mxu0
      %v3553 = vpop.f32.mrb[0].mxu0
      %v3554 = vadd.f32 0.0, %v3553
      %v3555 = vpop.f32.mrb[0].mxu0
      %3556 = vmatprep.mubr.bf16.mxu0 0
      %3557 = vmatmul.mubr.bf16.gmra.mrb[0].mxu0 %v3404
      %v3558 = vpop.f32.mrb[0].mxu0
      %v3559 = vadd.f32 0.0, %v3558
      %v3560 = vpop.f32.mrb[0].mxu0
      %v3561 = vpop.f32.mrb[0].mxu0
      %v3562 = vadd.f32 0.0, %v3561
      %v3563 = vpop.f32.mrb[0].mxu0
      %3564 = vmatprep.mubr.bf16.mxu0 0
      %3565 = vmatmul.mubr.bf16.gmra.mrb[0].mxu0 %v3407
      %v3566 = vpop.f32.mrb[0].mxu0
      %v3567 = vadd.f32 0.0, %v3566
      %v3568 = vpop.f32.mrb[0].mxu0
      %v3569 = vpop.f32.mrb[0].mxu0
      %v3570 = vadd.f32 0.0, %v3569
      %v3571 = vpop.f32.mrb[0].mxu0
      %3572 = vdwg.mxu0
      %v3573 = vadd.f32 %v3006, %v3447
      %v3574 = vadd.f32 %v3009, %v3450
      %v3575 = vadd.f32 %v3014, %v3455
      %v3576 = vadd.f32 %v3017, %v3458
      %v3577 = vadd.f32 %v3022, %v3463
      %v3578 = vadd.f32 %v3025, %v3466
      %v3579 = vadd.f32 %v3030, %v3471
      %v3580 = vadd.f32 %v3033, %v3474
      %v3581 = vadd.f32 %v3038, %v3479
      %v3582 = vadd.f32 %v3041, %v3482
      %v3583 = vadd.f32 %v3046, %v3487
      %v3584 = vadd.f32 %v3049, %v3490
      %v3585 = vadd.f32 %v3054, %v3495
      %v3586 = vadd.f32 %v3057, %v3498
      %v3587 = vadd.f32 %v3062, %v3503
      %v3588 = vadd.f32 %v3065, %v3506
      %v3589 = vadd.f32 %v3070, %v3511
      %v3590 = vadd.f32 %v3073, %v3514
      %v3591 = vadd.f32 %v3078, %v3519
      %v3592 = vadd.f32 %v3081, %v3522
      %v3593 = vadd.f32 %v3086, %v3527
      %v3594 = vadd.f32 %v3089, %v3530
      %v3595 = vadd.f32 %v3094, %v3535
      %v3596 = vadd.f32 %v3097, %v3538
      %v3597 = vadd.f32 %v3102, %v3543
      %v3598 = vadd.f32 %v3105, %v3546
      %v3599 = vadd.f32 %v3110, %v3551
      %v3600 = vadd.f32 %v3113, %v3554
      %v3601 = vadd.f32 %v3118, %v3559
      %v3602 = vadd.f32 %v3121, %v3562
      %v3603 = vadd.f32 %v3126, %v3567
      %v3604 = vadd.f32 %v3129, %v3570
      %v3605 = vld [vmem:[%s307] sm:$0xf]
      %v3606 = vld [vmem:[%s307 + $0x4] sm:$0xf]
      %v3607 = vld [vmem:[%s307 + $0xc] sm:$0xf]
      %v3608 = vld [vmem:[%s307 + $0x10] sm:$0xf]
      %v3609 = vld [vmem:[%s307 + $0x18] sm:$0xf]
      %v3610 = vld [vmem:[%s307 + $0x1c] sm:$0xf]
      %v3611 = vld [vmem:[%s307 + $0x24] sm:$0xf]
      %v3612 = vld [vmem:[%s307 + $0x28] sm:$0xf]
      %v3613 = vld [vmem:[%s307 + $0x30] sm:$0xf]
      %v3614 = vld [vmem:[%s307 + $0x34] sm:$0xf]
      %v3615 = vld [vmem:[%s307 + $0x3c] sm:$0xf]
      %v3616 = vld [vmem:[%s307 + $0x40] sm:$0xf]
      %v3617 = vld [vmem:[%s307 + $0x48] sm:$0xf]
      %v3618 = vld [vmem:[%s307 + $0x4c] sm:$0xf]
      %v3619 = vld [vmem:[%s307 + $0x54] sm:$0xf]
      %v3620 = vld [vmem:[%s307 + $0x58] sm:$0xf]
      %v3621 = vld [vmem:[%s307 + $0x60] sm:$0xf]
      %v3622 = vld [vmem:[%s307 + $0x64] sm:$0xf]
      %v3623 = vld [vmem:[%s307 + $0x6c] sm:$0xf]
      %v3624 = vld [vmem:[%s307 + $0x70] sm:$0xf]
      %v3625 = vld [vmem:[%s307 + $0x78] sm:$0xf]
      %v3626 = vld [vmem:[%s307 + $0x7c] sm:$0xf]
      %v3627 = vld [vmem:[%s307 + $0x84] sm:$0xf]
      %v3628 = vld [vmem:[%s307 + $0x88] sm:$0xf]
      %v3629 = vld [vmem:[%s307 + $0x90] sm:$0xf]
      %v3630 = vld [vmem:[%s307 + $0x94] sm:$0xf]
      %v3631 = vld [vmem:[%s307 + $0x9c] sm:$0xf]
      %v3632 = vld [vmem:[%s307 + $0xa0] sm:$0xf]
      %v3633 = vld [vmem:[%s307 + $0xa8] sm:$0xf]
      %v3634 = vld [vmem:[%s307 + $0xac] sm:$0xf]
      %v3635 = vld [vmem:[%s307 + $0xb4] sm:$0xf]
      %v3636 = vld [vmem:[%s307 + $0xb8] sm:$0xf]
      %s3637 = scalar_lea.vmem %s5, 6
      %v3638 = vld [vmem:[%s3637] sm:$0x3]
      %v3671 = vunpack.c.l.b16 %v3605
      %v3672 = vunpack.c.l.b16 %v3606
      %v3673 = vunpack.c.l.b16 %v3607
      %v3674 = vunpack.c.l.b16 %v3608
      %v3675 = vunpack.c.l.b16 %v3609
      %v3676 = vunpack.c.l.b16 %v3610
      %v3677 = vunpack.c.l.b16 %v3611
      %v3678 = vunpack.c.l.b16 %v3612
      %v3679 = vunpack.c.l.b16 %v3613
      %v3680 = vunpack.c.l.b16 %v3614
      %v3681 = vunpack.c.l.b16 %v3615
      %v3682 = vunpack.c.l.b16 %v3616
      %v3683 = vunpack.c.l.b16 %v3617
      %v3684 = vunpack.c.l.b16 %v3618
      %v3685 = vunpack.c.l.b16 %v3619
      %v3686 = vunpack.c.l.b16 %v3620
      %v3687 = vunpack.c.l.b16 %v3621
      %v3688 = vunpack.c.l.b16 %v3622
      %v3689 = vunpack.c.l.b16 %v3623
      %v3690 = vunpack.c.l.b16 %v3624
      %v3691 = vunpack.c.l.b16 %v3625
      %v3692 = vunpack.c.l.b16 %v3626
      %v3693 = vunpack.c.l.b16 %v3627
      %v3694 = vunpack.c.l.b16 %v3628
      %v3695 = vunpack.c.l.b16 %v3629
      %v3696 = vunpack.c.l.b16 %v3630
      %v3697 = vunpack.c.l.b16 %v3631
      %v3698 = vunpack.c.l.b16 %v3632
      %v3699 = vunpack.c.l.b16 %v3633
      %v3700 = vunpack.c.l.b16 %v3634
      %v3701 = vunpack.c.l.b16 %v3635
      %v3702 = vunpack.c.l.b16 %v3636
      %v3703 = vpack.c.b16 %v3672, %v3671
      %v3704 = vpack.c.b16 %v3674, %v3673
      %v3705 = vpack.c.b16 %v3676, %v3675
      %v3706 = vpack.c.b16 %v3678, %v3677
      %v3707 = vpack.c.b16 %v3680, %v3679
      %v3708 = vpack.c.b16 %v3682, %v3681
      %v3709 = vpack.c.b16 %v3684, %v3683
      %v3710 = vpack.c.b16 %v3686, %v3685
      %v3711 = vpack.c.b16 %v3688, %v3687
      %v3712 = vpack.c.b16 %v3690, %v3689
      %v3713 = vpack.c.b16 %v3692, %v3691
      %v3714 = vpack.c.b16 %v3694, %v3693
      %v3715 = vpack.c.b16 %v3696, %v3695
      %v3716 = vpack.c.b16 %v3698, %v3697
      %v3717 = vpack.c.b16 %v3700, %v3699
      %v3718 = vpack.c.b16 %v3702, %v3701
      %v3720 = vsel %vm565, %v3703, 0
      %v3723 = vsel %vm565, %v3704, 0
      %v3726 = vsel %vm565, %v3705, 0
      %v3729 = vsel %vm565, %v3706, 0
      %v3732 = vsel %vm565, %v3707, 0
      %v3735 = vsel %vm565, %v3708, 0
      %v3738 = vsel %vm565, %v3709, 0
      %v3741 = vsel %vm565, %v3710, 0
      %v3744 = vsel %vm565, %v3711, 0
      %v3747 = vsel %vm565, %v3712, 0
      %v3750 = vsel %vm565, %v3713, 0
      %v3753 = vsel %vm565, %v3714, 0
      %v3756 = vsel %vm565, %v3715, 0
      %v3759 = vsel %vm565, %v3716, 0
      %v3762 = vsel %vm565, %v3717, 0
      %v3765 = vsel %vm565, %v3718, 0
      %v3768 = vsel %vm2204, %v3638, 0
      %3770 = vmatprep.subr.bf16.mxu0 0
      %3771 = vmatpush1.bf16.msra.mxu0 %v3768
      %3772 = vmatprep.subr.bf16.mxu0 0
      %3773 = vmatpush1.bf16.msra.mxu0 0
      %3774 = vmatprep.subr.bf16.mxu0 0
      %3775 = vmatpush1.bf16.msra.mxu0 0
      %3776 = vmatprep.subr.bf16.mxu0 0
      %3777 = vmatpush1.bf16.msra.mxu0 0
      %3778 = vmatprep.subr.bf16.mxu0 0
      %3779 = vmatpush1.bf16.msra.mxu0 0
      %3780 = vmatprep.subr.bf16.mxu0 0
      %3781 = vmatpush1.bf16.msra.mxu0 0
      %3782 = vmatprep.subr.bf16.mxu0 0
      %3783 = vmatpush1.bf16.msra.mxu0 0
      %3784 = vmatprep.subr.bf16.mxu0 0
      %3785 = vmatpush1.bf16.msra.mxu0 0
      %3786 = vmatprep.subr.bf16.mxu0 0
      %3787 = vmatpush1.bf16.msra.mxu0 0
      %3788 = vmatprep.subr.bf16.mxu0 0
      %3789 = vmatpush1.bf16.msra.mxu0 0
      %3790 = vmatprep.subr.bf16.mxu0 0
      %3791 = vmatpush1.bf16.msra.mxu0 0
      %3792 = vmatprep.subr.bf16.mxu0 0
      %3793 = vmatpush1.bf16.msra.mxu0 0
      %3794 = vmatprep.subr.bf16.mxu0 0
      %3795 = vmatpush1.bf16.msra.mxu0 0
      %3796 = vmatprep.subr.bf16.mxu0 0
      %3797 = vmatpush1.bf16.msra.mxu0 0
      %3798 = vmatprep.subr.bf16.mxu0 0
      %3799 = vmatpush1.bf16.msra.mxu0 0
      %3800 = vmatprep.subr.bf16.mxu0 0
      %3801 = vmatpush1.bf16.msra.mxu0 0
      %3802 = vmatprep.mubr.bf16.mxu0 0
      %3803 = vmatmul.mubr.bf16.gmra.mrb[0].mxu0 %v3720
      %v3804 = vpop.f32.mrb[0].mxu0
      %v3805 = vadd.f32 0.0, %v3804
      %v3806 = vpop.f32.mrb[0].mxu0
      %v3807 = vpop.f32.mrb[0].mxu0
      %v3808 = vadd.f32 0.0, %v3807
      %v3809 = vpop.f32.mrb[0].mxu0
      %3810 = vmatprep.mubr.bf16.mxu0 0
      %3811 = vmatmul.mubr.bf16.gmra.mrb[0].mxu0 %v3723
      %v3812 = vpop.f32.mrb[0].mxu0
      %v3813 = vadd.f32 0.0, %v3812
      %v3814 = vpop.f32.mrb[0].mxu0
      %v3815 = vpop.f32.mrb[0].mxu0
      %v3816 = vadd.f32 0.0, %v3815
      %v3817 = vpop.f32.mrb[0].mxu0
      %3818 = vmatprep.mubr.bf16.mxu0 0
      %3819 = vmatmul.mubr.bf16.gmra.mrb[0].mxu0 %v3726
      %v3820 = vpop.f32.mrb[0].mxu0
      %v3821 = vadd.f32 0.0, %v3820
      %v3822 = vpop.f32.mrb[0].mxu0
      %v3823 = vpop.f32.mrb[0].mxu0
      %v3824 = vadd.f32 0.0, %v3823
      %v3825 = vpop.f32.mrb[0].mxu0
      %3826 = vmatprep.mubr.bf16.mxu0 0
      %3827 = vmatmul.mubr.bf16.gmra.mrb[0].mxu0 %v3729
      %v3828 = vpop.f32.mrb[0].mxu0
      %v3829 = vadd.f32 0.0, %v3828
      %v3830 = vpop.f32.mrb[0].mxu0
      %v3831 = vpop.f32.mrb[0].mxu0
      %v3832 = vadd.f32 0.0, %v3831
      %v3833 = vpop.f32.mrb[0].mxu0
      %3834 = vmatprep.mubr.bf16.mxu0 0
      %3835 = vmatmul.mubr.bf16.gmra.mrb[0].mxu0 %v3732
      %v3836 = vpop.f32.mrb[0].mxu0
      %v3837 = vadd.f32 0.0, %v3836
      %v3838 = vpop.f32.mrb[0].mxu0
      %v3839 = vpop.f32.mrb[0].mxu0
      %v3840 = vadd.f32 0.0, %v3839
      %v3841 = vpop.f32.mrb[0].mxu0
      %3842 = vmatprep.mubr.bf16.mxu0 0
      %3843 = vmatmul.mubr.bf16.gmra.mrb[0].mxu0 %v3735
      %v3844 = vpop.f32.mrb[0].mxu0
      %v3845 = vadd.f32 0.0, %v3844
      %v3846 = vpop.f32.mrb[0].mxu0
      %v3847 = vpop.f32.mrb[0].mxu0
      %v3848 = vadd.f32 0.0, %v3847
      %v3849 = vpop.f32.mrb[0].mxu0
      %3850 = vmatprep.mubr.bf16.mxu0 0
      %3851 = vmatmul.mubr.bf16.gmra.mrb[0].mxu0 %v3738
      %v3852 = vpop.f32.mrb[0].mxu0
      %v3853 = vadd.f32 0.0, %v3852
      %v3854 = vpop.f32.mrb[0].mxu0
      %v3855 = vpop.f32.mrb[0].mxu0
      %v3856 = vadd.f32 0.0, %v3855
      %v3857 = vpop.f32.mrb[0].mxu0
      %3858 = vmatprep.mubr.bf16.mxu0 0
      %3859 = vmatmul.mubr.bf16.gmra.mrb[0].mxu0 %v3741
      %v3860 = vpop.f32.mrb[0].mxu0
      %v3861 = vadd.f32 0.0, %v3860
      %v3862 = vpop.f32.mrb[0].mxu0
      %v3863 = vpop.f32.mrb[0].mxu0
      %v3864 = vadd.f32 0.0, %v3863
      %v3865 = vpop.f32.mrb[0].mxu0
      %3866 = vmatprep.mubr.bf16.mxu0 0
      %3867 = vmatmul.mubr.bf16.gmra.mrb[0].mxu0 %v3744
      %v3868 = vpop.f32.mrb[0].mxu0
      %v3869 = vadd.f32 0.0, %v3868
      %v3870 = vpop.f32.mrb[0].mxu0
      %v3871 = vpop.f32.mrb[0].mxu0
      %v3872 = vadd.f32 0.0, %v3871
      %v3873 = vpop.f32.mrb[0].mxu0
      %3874 = vmatprep.mubr.bf16.mxu0 0
      %3875 = vmatmul.mubr.bf16.gmra.mrb[0].mxu0 %v3747
      %v3876 = vpop.f32.mrb[0].mxu0
      %v3877 = vadd.f32 0.0, %v3876
      %v3878 = vpop.f32.mrb[0].mxu0
      %v3879 = vpop.f32.mrb[0].mxu0
      %v3880 = vadd.f32 0.0, %v3879
      %v3881 = vpop.f32.mrb[0].mxu0
      %3882 = vmatprep.mubr.bf16.mxu0 0
      %3883 = vmatmul.mubr.bf16.gmra.mrb[0].mxu0 %v3750
      %v3884 = vpop.f32.mrb[0].mxu0
      %v3885 = vadd.f32 0.0, %v3884
      %v3886 = vpop.f32.mrb[0].mxu0
      %v3887 = vpop.f32.mrb[0].mxu0
      %v3888 = vadd.f32 0.0, %v3887
      %v3889 = vpop.f32.mrb[0].mxu0
      %3890 = vmatprep.mubr.bf16.mxu0 0
      %3891 = vmatmul.mubr.bf16.gmra.mrb[0].mxu0 %v3753
      %v3892 = vpop.f32.mrb[0].mxu0
      %v3893 = vadd.f32 0.0, %v3892
      %v3894 = vpop.f32.mrb[0].mxu0
      %v3895 = vpop.f32.mrb[0].mxu0
      %v3896 = vadd.f32 0.0, %v3895
      %v3897 = vpop.f32.mrb[0].mxu0
      %3898 = vmatprep.mubr.bf16.mxu0 0
      %3899 = vmatmul.mubr.bf16.gmra.mrb[0].mxu0 %v3756
      %v3900 = vpop.f32.mrb[0].mxu0
      %v3901 = vadd.f32 0.0, %v3900
      %v3902 = vpop.f32.mrb[0].mxu0
      %v3903 = vpop.f32.mrb[0].mxu0
      %v3904 = vadd.f32 0.0, %v3903
      %v3905 = vpop.f32.mrb[0].mxu0
      %3906 = vmatprep.mubr.bf16.mxu0 0
      %3907 = vmatmul.mubr.bf16.gmra.mrb[0].mxu0 %v3759
      %v3908 = vpop.f32.mrb[0].mxu0
      %v3909 = vadd.f32 0.0, %v3908
      %v3910 = vpop.f32.mrb[0].mxu0
      %v3911 = vpop.f32.mrb[0].mxu0
      %v3912 = vadd.f32 0.0, %v3911
      %v3913 = vpop.f32.mrb[0].mxu0
      %3914 = vmatprep.mubr.bf16.mxu0 0
      %3915 = vmatmul.mubr.bf16.gmra.mrb[0].mxu0 %v3762
      %v3916 = vpop.f32.mrb[0].mxu0
      %v3917 = vadd.f32 0.0, %v3916
      %v3918 = vpop.f32.mrb[0].mxu0
      %v3919 = vpop.f32.mrb[0].mxu0
      %v3920 = vadd.f32 0.0, %v3919
      %v3921 = vpop.f32.mrb[0].mxu0
      %3922 = vmatprep.mubr.bf16.mxu0 0
      %3923 = vmatmul.mubr.bf16.gmra.mrb[0].mxu0 %v3765
      %v3924 = vpop.f32.mrb[0].mxu0
      %v3925 = vadd.f32 0.0, %v3924
      %v3926 = vpop.f32.mrb[0].mxu0
      %v3927 = vpop.f32.mrb[0].mxu0
      %v3928 = vadd.f32 0.0, %v3927
      %v3929 = vpop.f32.mrb[0].mxu0
      %3930 = vdwg.mxu0
      %v3931 = vadd.f32 %v3573, %v3805
      %v3932 = vadd.f32 %v3574, %v3808
      %v3933 = vadd.f32 %v3575, %v3813
      %v3934 = vadd.f32 %v3576, %v3816
      %v3935 = vadd.f32 %v3577, %v3821
      %v3936 = vadd.f32 %v3578, %v3824
      %v3937 = vadd.f32 %v3579, %v3829
      %v3938 = vadd.f32 %v3580, %v3832
      %v3939 = vadd.f32 %v3581, %v3837
      %v3940 = vadd.f32 %v3582, %v3840
      %v3941 = vadd.f32 %v3583, %v3845
      %v3942 = vadd.f32 %v3584, %v3848
      %v3943 = vadd.f32 %v3585, %v3853
      %v3944 = vadd.f32 %v3586, %v3856
      %v3945 = vadd.f32 %v3587, %v3861
      %v3946 = vadd.f32 %v3588, %v3864
      %v3947 = vadd.f32 %v3589, %v3869
      %v3948 = vadd.f32 %v3590, %v3872
      %v3949 = vadd.f32 %v3591, %v3877
      %v3950 = vadd.f32 %v3592, %v3880
      %v3951 = vadd.f32 %v3593, %v3885
      %v3952 = vadd.f32 %v3594, %v3888
      %v3953 = vadd.f32 %v3595, %v3893
      %v3954 = vadd.f32 %v3596, %v3896
      %v3955 = vadd.f32 %v3597, %v3901
      %v3956 = vadd.f32 %v3598, %v3904
      %v3957 = vadd.f32 %v3599, %v3909
      %v3958 = vadd.f32 %v3600, %v3912
      %v3959 = vadd.f32 %v3601, %v3917
      %v3960 = vadd.f32 %v3602, %v3920
      %v3961 = vadd.f32 %v3603, %v3925
      %v3962 = vadd.f32 %v3604, %v3928
      %v3963 = vld [vmem:[%s307] sm:$0xe]
      %v3964 = vld [vmem:[%s307 + $0x4] sm:$0xf]
      %v3965 = vld [vmem:[%s307 + $0x8] sm:$0x1]
      %v3966 = vld [vmem:[%s307 + $0xc] sm:$0xe]
      %v3967 = vld [vmem:[%s307 + $0x10] sm:$0xf]
      %v3968 = vld [vmem:[%s307 + $0x14] sm:$0x1]
      %v3969 = vld [vmem:[%s307 + $0x18] sm:$0xe]
      %v3970 = vld [vmem:[%s307 + $0x1c] sm:$0xf]
      %v3971 = vld [vmem:[%s307 + $0x20] sm:$0x1]
      %v3972 = vld [vmem:[%s307 + $0x24] sm:$0xe]
      %v3973 = vld [vmem:[%s307 + $0x28] sm:$0xf]
      %v3974 = vld [vmem:[%s307 + $0x2c] sm:$0x1]
      %v3975 = vld [vmem:[%s307 + $0x30] sm:$0xe]
      %v3976 = vld [vmem:[%s307 + $0x34] sm:$0xf]
      %v3977 = vld [vmem:[%s307 + $0x38] sm:$0x1]
      %v3978 = vld [vmem:[%s307 + $0x3c] sm:$0xe]
      %v3979 = vld [vmem:[%s307 + $0x40] sm:$0xf]
      %v3980 = vld [vmem:[%s307 + $0x44] sm:$0x1]
      %v3981 = vld [vmem:[%s307 + $0x48] sm:$0xe]
      %v3982 = vld [vmem:[%s307 + $0x4c] sm:$0xf]
      %v3983 = vld [vmem:[%s307 + $0x50] sm:$0x1]
      %v3984 = vld [vmem:[%s307 + $0x54] sm:$0xe]
      %v3985 = vld [vmem:[%s307 + $0x58] sm:$0xf]
      %v3986 = vld [vmem:[%s307 + $0x5c] sm:$0x1]
      %v3987 = vld [vmem:[%s307 + $0x60] sm:$0xe]
      %v3988 = vld [vmem:[%s307 + $0x64] sm:$0xf]
      %v3989 = vld [vmem:[%s307 + $0x68] sm:$0x1]
      %v3990 = vld [vmem:[%s307 + $0x6c] sm:$0xe]
      %v3991 = vld [vmem:[%s307 + $0x70] sm:$0xf]
      %v3992 = vld [vmem:[%s307 + $0x74] sm:$0x1]
      %v3993 = vld [vmem:[%s307 + $0x78] sm:$0xe]
      %v3994 = vld [vmem:[%s307 + $0x7c] sm:$0xf]
      %v3995 = vld [vmem:[%s307 + $0x80] sm:$0x1]
      %v3996 = vld [vmem:[%s307 + $0x84] sm:$0xe]
      %v3997 = vld [vmem:[%s307 + $0x88] sm:$0xf]
      %v3998 = vld [vmem:[%s307 + $0x8c] sm:$0x1]
      %v3999 = vld [vmem:[%s307 + $0x90] sm:$0xe]
      %v4000 = vld [vmem:[%s307 + $0x94] sm:$0xf]
      %v4001 = vld [vmem:[%s307 + $0x98] sm:$0x1]
      %v4002 = vld [vmem:[%s307 + $0x9c] sm:$0xe]
      %v4003 = vld [vmem:[%s307 + $0xa0] sm:$0xf]
      %v4004 = vld [vmem:[%s307 + $0xa4] sm:$0x1]
      %v4005 = vld [vmem:[%s307 + $0xa8] sm:$0xe]
      %v4006 = vld [vmem:[%s307 + $0xac] sm:$0xf]
      %v4007 = vld [vmem:[%s307 + $0xb0] sm:$0x1]
      %v4008 = vld [vmem:[%s307 + $0xb4] sm:$0xe]
      %v4009 = vld [vmem:[%s307 + $0xb8] sm:$0xf]
      %v4010 = vld [vmem:[%s307 + $0xbc] sm:$0x1]
      %v4059 = vrot.slane %v3963, 5
      %v4060 = vrot.slane %v4059, 4
      %v4061 = vrot.slane %v3964, 5
      %v4062 = vsel %vm1995, %v4060, %v4061
      %v4063 = vrot.slane %v4061, 4
      %v4064 = vrot.slane %v3965, 5
      %v4065 = vsel %vm1995, %v4063, %v4064
      %v4066 = vrot.slane %v3966, 5
      %v4067 = vrot.slane %v4066, 4
      %v4068 = vrot.slane %v3967, 5
      %v4069 = vsel %vm1995, %v4067, %v4068
      %v4070 = vrot.slane %v4068, 4
      %v4071 = vrot.slane %v3968, 5
      %v4072 = vsel %vm1995, %v4070, %v4071
      %v4073 = vrot.slane %v3969, 5
      %v4074 = vrot.slane %v4073, 4
      %v4075 = vrot.slane %v3970, 5
      %v4076 = vsel %vm1995, %v4074, %v4075
      %v4077 = vrot.slane %v4075, 4
      %v4078 = vrot.slane %v3971, 5
      %v4079 = vsel %vm1995, %v4077, %v4078
      %v4080 = vrot.slane %v3972, 5
      %v4081 = vrot.slane %v4080, 4
      %v4082 = vrot.slane %v3973, 5
      %v4083 = vsel %vm1995, %v4081, %v4082
      %v4084 = vrot.slane %v4082, 4
      %v4085 = vrot.slane %v3974, 5
      %v4086 = vsel %vm1995, %v4084, %v4085
      %v4087 = vrot.slane %v3975, 5
      %v4088 = vrot.slane %v4087, 4
      %v4089 = vrot.slane %v3976, 5
      %v4090 = vsel %vm1995, %v4088, %v4089
      %v4091 = vrot.slane %v4089, 4
      %v4092 = vrot.slane %v3977, 5
      %v4093 = vsel %vm1995, %v4091, %v4092
      %v4094 = vrot.slane %v3978, 5
      %v4095 = vrot.slane %v4094, 4
      %v4096 = vrot.slane %v3979, 5
      %v4097 = vsel %vm1995, %v4095, %v4096
      %v4098 = vrot.slane %v4096, 4
      %v4099 = vrot.slane %v3980, 5
      %v4100 = vsel %vm1995, %v4098, %v4099
      %v4101 = vrot.slane %v3981, 5
      %v4102 = vrot.slane %v4101, 4
      %v4103 = vrot.slane %v3982, 5
      %v4104 = vsel %vm1995, %v4102, %v4103
      %v4105 = vrot.slane %v4103, 4
      %v4106 = vrot.slane %v3983, 5
      %v4107 = vsel %vm1995, %v4105, %v4106
      %v4108 = vrot.slane %v3984, 5
      %v4109 = vrot.slane %v4108, 4
      %v4110 = vrot.slane %v3985, 5
      %v4111 = vsel %vm1995, %v4109, %v4110
      %v4112 = vrot.slane %v4110, 4
      %v4113 = vrot.slane %v3986, 5
      %v4114 = vsel %vm1995, %v4112, %v4113
      %v4115 = vrot.slane %v3987, 5
      %v4116 = vrot.slane %v4115, 4
      %v4117 = vrot.slane %v3988, 5
      %v4118 = vsel %vm1995, %v4116, %v4117
      %v4119 = vrot.slane %v4117, 4
      %v4120 = vrot.slane %v3989, 5
      %v4121 = vsel %vm1995, %v4119, %v4120
      %v4122 = vrot.slane %v3990, 5
      %v4123 = vrot.slane %v4122, 4
      %v4124 = vrot.slane %v3991, 5
      %v4125 = vsel %vm1995, %v4123, %v4124
      %v4126 = vrot.slane %v4124, 4
      %v4127 = vrot.slane %v3992, 5
      %v4128 = vsel %vm1995, %v4126, %v4127
      %v4129 = vrot.slane %v3993, 5
      %v4130 = vrot.slane %v4129, 4
      %v4131 = vrot.slane %v3994, 5
      %v4132 = vsel %vm1995, %v4130, %v4131
      %v4133 = vrot.slane %v4131, 4
      %v4134 = vrot.slane %v3995, 5
      %v4135 = vsel %vm1995, %v4133, %v4134
      %v4136 = vrot.slane %v3996, 5
      %v4137 = vrot.slane %v4136, 4
      %v4138 = vrot.slane %v3997, 5
      %v4139 = vsel %vm1995, %v4137, %v4138
      %v4140 = vrot.slane %v4138, 4
      %v4141 = vrot.slane %v3998, 5
      %v4142 = vsel %vm1995, %v4140, %v4141
      %v4143 = vrot.slane %v3999, 5
      %v4144 = vrot.slane %v4143, 4
      %v4145 = vrot.slane %v4000, 5
      %v4146 = vsel %vm1995, %v4144, %v4145
      %v4147 = vrot.slane %v4145, 4
      %v4148 = vrot.slane %v4001, 5
      %v4149 = vsel %vm1995, %v4147, %v4148
      %v4150 = vrot.slane %v4002, 5
      %v4151 = vrot.slane %v4150, 4
      %v4152 = vrot.slane %v4003, 5
      %v4153 = vsel %vm1995, %v4151, %v4152
      %v4154 = vrot.slane %v4152, 4
      %v4155 = vrot.slane %v4004, 5
      %v4156 = vsel %vm1995, %v4154, %v4155
      %v4157 = vrot.slane %v4005, 5
      %v4158 = vrot.slane %v4157, 4
      %v4159 = vrot.slane %v4006, 5
      %v4160 = vsel %vm1995, %v4158, %v4159
      %v4161 = vrot.slane %v4159, 4
      %v4162 = vrot.slane %v4007, 5
      %v4163 = vsel %vm1995, %v4161, %v4162
      %v4164 = vrot.slane %v4008, 5
      %v4165 = vrot.slane %v4164, 4
      %v4166 = vrot.slane %v4009, 5
      %v4167 = vsel %vm1995, %v4165, %v4166
      %v4168 = vrot.slane %v4166, 4
      %v4169 = vrot.slane %v4010, 5
      %v4170 = vsel %vm1995, %v4168, %v4169
      %s4171 = scalar_lea.vmem %s5, 8
      %v4172 = vld [vmem:[%s4171] sm:$0x3]
      %v4173 = vunpack.c.l.b16 %v4062
      %v4174 = vunpack.c.l.b16 %v4065
      %v4175 = vunpack.c.l.b16 %v4069
      %v4176 = vunpack.c.l.b16 %v4072
      %v4177 = vunpack.c.l.b16 %v4076
      %v4178 = vunpack.c.l.b16 %v4079
      %v4179 = vunpack.c.l.b16 %v4083
      %v4180 = vunpack.c.l.b16 %v4086
      %v4181 = vunpack.c.l.b16 %v4090
      %v4182 = vunpack.c.l.b16 %v4093
      %v4183 = vunpack.c.l.b16 %v4097
      %v4184 = vunpack.c.l.b16 %v4100
      %v4185 = vunpack.c.l.b16 %v4104
      %v4186 = vunpack.c.l.b16 %v4107
      %v4187 = vunpack.c.l.b16 %v4111
      %v4188 = vunpack.c.l.b16 %v4114
      %v4189 = vunpack.c.l.b16 %v4118
      %v4190 = vunpack.c.l.b16 %v4121
      %v4191 = vunpack.c.l.b16 %v4125
      %v4192 = vunpack.c.l.b16 %v4128
      %v4193 = vunpack.c.l.b16 %v4132
      %v4194 = vunpack.c.l.b16 %v4135
      %v4195 = vunpack.c.l.b16 %v4139
      %v4196 = vunpack.c.l.b16 %v4142
      %v4197 = vunpack.c.l.b16 %v4146
      %v4198 = vunpack.c.l.b16 %v4149
      %v4199 = vunpack.c.l.b16 %v4153
      %v4200 = vunpack.c.l.b16 %v4156
      %v4201 = vunpack.c.l.b16 %v4160
      %v4202 = vunpack.c.l.b16 %v4163
      %v4203 = vunpack.c.l.b16 %v4167
      %v4204 = vunpack.c.l.b16 %v4170
      %v4205 = vpack.c.b16 %v4174, %v4173
      %v4206 = vpack.c.b16 %v4176, %v4175
      %v4207 = vpack.c.b16 %v4178, %v4177
      %v4208 = vpack.c.b16 %v4180, %v4179
      %v4209 = vpack.c.b16 %v4182, %v4181
      %v4210 = vpack.c.b16 %v4184, %v4183
      %v4211 = vpack.c.b16 %v4186, %v4185
      %v4212 = vpack.c.b16 %v4188, %v4187
      %v4213 = vpack.c.b16 %v4190, %v4189
      %v4214 = vpack.c.b16 %v4192, %v4191
      %v4215 = vpack.c.b16 %v4194, %v4193
      %v4216 = vpack.c.b16 %v4196, %v4195
      %v4217 = vpack.c.b16 %v4198, %v4197
      %v4218 = vpack.c.b16 %v4200, %v4199
      %v4219 = vpack.c.b16 %v4202, %v4201
      %v4220 = vpack.c.b16 %v4204, %v4203
      %v4222 = vsel %vm565, %v4205, 0
      %v4225 = vsel %vm565, %v4206, 0
      %v4228 = vsel %vm565, %v4207, 0
      %v4231 = vsel %vm565, %v4208, 0
      %v4234 = vsel %vm565, %v4209, 0
      %v4237 = vsel %vm565, %v4210, 0
      %v4240 = vsel %vm565, %v4211, 0
      %v4243 = vsel %vm565, %v4212, 0
      %v4246 = vsel %vm565, %v4213, 0
      %v4249 = vsel %vm565, %v4214, 0
      %v4252 = vsel %vm565, %v4215, 0
      %v4255 = vsel %vm565, %v4216, 0
      %v4258 = vsel %vm565, %v4217, 0
      %v4261 = vsel %vm565, %v4218, 0
      %v4264 = vsel %vm565, %v4219, 0
      %v4267 = vsel %vm565, %v4220, 0
      %v4270 = vsel %vm2204, %v4172, 0
      %4272 = vmatprep.subr.bf16.mxu0 0
      %4273 = vmatpush1.bf16.msra.mxu0 %v4270
      %4274 = vmatprep.subr.bf16.mxu0 0
      %4275 = vmatpush1.bf16.msra.mxu0 0
      %4276 = vmatprep.subr.bf16.mxu0 0
      %4277 = vmatpush1.bf16.msra.mxu0 0
      %4278 = vmatprep.subr.bf16.mxu0 0
      %4279 = vmatpush1.bf16.msra.mxu0 0
      %4280 = vmatprep.subr.bf16.mxu0 0
      %4281 = vmatpush1.bf16.msra.mxu0 0
      %4282 = vmatprep.subr.bf16.mxu0 0
      %4283 = vmatpush1.bf16.msra.mxu0 0
      %4284 = vmatprep.subr.bf16.mxu0 0
      %4285 = vmatpush1.bf16.msra.mxu0 0
      %4286 = vmatprep.subr.bf16.mxu0 0
      %4287 = vmatpush1.bf16.msra.mxu0 0
      %4288 = vmatprep.subr.bf16.mxu0 0
      %4289 = vmatpush1.bf16.msra.mxu0 0
      %4290 = vmatprep.subr.bf16.mxu0 0
      %4291 = vmatpush1.bf16.msra.mxu0 0
      %4292 = vmatprep.subr.bf16.mxu0 0
      %4293 = vmatpush1.bf16.msra.mxu0 0
      %4294 = vmatprep.subr.bf16.mxu0 0
      %4295 = vmatpush1.bf16.msra.mxu0 0
      %4296 = vmatprep.subr.bf16.mxu0 0
      %4297 = vmatpush1.bf16.msra.mxu0 0
      %4298 = vmatprep.subr.bf16.mxu0 0
      %4299 = vmatpush1.bf16.msra.mxu0 0
      %4300 = vmatprep.subr.bf16.mxu0 0
      %4301 = vmatpush1.bf16.msra.mxu0 0
      %4302 = vmatprep.subr.bf16.mxu0 0
      %4303 = vmatpush1.bf16.msra.mxu0 0
      %4304 = vmatprep.mubr.bf16.mxu0 0
      %4305 = vmatmul.mubr.bf16.gmra.mrb[0].mxu0 %v4222
      %v4306 = vpop.f32.mrb[0].mxu0
      %v4307 = vadd.f32 0.0, %v4306
      %v4308 = vpop.f32.mrb[0].mxu0
      %v4309 = vpop.f32.mrb[0].mxu0
      %v4310 = vadd.f32 0.0, %v4309
      %v4311 = vpop.f32.mrb[0].mxu0
      %4312 = vmatprep.mubr.bf16.mxu0 0
      %4313 = vmatmul.mubr.bf16.gmra.mrb[0].mxu0 %v4225
      %v4314 = vpop.f32.mrb[0].mxu0
      %v4315 = vadd.f32 0.0, %v4314
      %v4316 = vpop.f32.mrb[0].mxu0
      %v4317 = vpop.f32.mrb[0].mxu0
      %v4318 = vadd.f32 0.0, %v4317
      %v4319 = vpop.f32.mrb[0].mxu0
      %4320 = vmatprep.mubr.bf16.mxu0 0
      %4321 = vmatmul.mubr.bf16.gmra.mrb[0].mxu0 %v4228
      %v4322 = vpop.f32.mrb[0].mxu0
      %v4323 = vadd.f32 0.0, %v4322
      %v4324 = vpop.f32.mrb[0].mxu0
      %v4325 = vpop.f32.mrb[0].mxu0
      %v4326 = vadd.f32 0.0, %v4325
      %v4327 = vpop.f32.mrb[0].mxu0
      %4328 = vmatprep.mubr.bf16.mxu0 0
      %4329 = vmatmul.mubr.bf16.gmra.mrb[0].mxu0 %v4231
      %v4330 = vpop.f32.mrb[0].mxu0
      %v4331 = vadd.f32 0.0, %v4330
      %v4332 = vpop.f32.mrb[0].mxu0
      %v4333 = vpop.f32.mrb[0].mxu0
      %v4334 = vadd.f32 0.0, %v4333
      %v4335 = vpop.f32.mrb[0].mxu0
      %4336 = vmatprep.mubr.bf16.mxu0 0
      %4337 = vmatmul.mubr.bf16.gmra.mrb[0].mxu0 %v4234
      %v4338 = vpop.f32.mrb[0].mxu0
      %v4339 = vadd.f32 0.0, %v4338
      %v4340 = vpop.f32.mrb[0].mxu0
      %v4341 = vpop.f32.mrb[0].mxu0
      %v4342 = vadd.f32 0.0, %v4341
      %v4343 = vpop.f32.mrb[0].mxu0
      %4344 = vmatprep.mubr.bf16.mxu0 0
      %4345 = vmatmul.mubr.bf16.gmra.mrb[0].mxu0 %v4237
      %v4346 = vpop.f32.mrb[0].mxu0
      %v4347 = vadd.f32 0.0, %v4346
      %v4348 = vpop.f32.mrb[0].mxu0
      %v4349 = vpop.f32.mrb[0].mxu0
      %v4350 = vadd.f32 0.0, %v4349
      %v4351 = vpop.f32.mrb[0].mxu0
      %4352 = vmatprep.mubr.bf16.mxu0 0
      %4353 = vmatmul.mubr.bf16.gmra.mrb[0].mxu0 %v4240
      %v4354 = vpop.f32.mrb[0].mxu0
      %v4355 = vadd.f32 0.0, %v4354
      %v4356 = vpop.f32.mrb[0].mxu0
      %v4357 = vpop.f32.mrb[0].mxu0
      %v4358 = vadd.f32 0.0, %v4357
      %v4359 = vpop.f32.mrb[0].mxu0
      %4360 = vmatprep.mubr.bf16.mxu0 0
      %4361 = vmatmul.mubr.bf16.gmra.mrb[0].mxu0 %v4243
      %v4362 = vpop.f32.mrb[0].mxu0
      %v4363 = vadd.f32 0.0, %v4362
      %v4364 = vpop.f32.mrb[0].mxu0
      %v4365 = vpop.f32.mrb[0].mxu0
      %v4366 = vadd.f32 0.0, %v4365
      %v4367 = vpop.f32.mrb[0].mxu0
      %4368 = vmatprep.mubr.bf16.mxu0 0
      %4369 = vmatmul.mubr.bf16.gmra.mrb[0].mxu0 %v4246
      %v4370 = vpop.f32.mrb[0].mxu0
      %v4371 = vadd.f32 0.0, %v4370
      %v4372 = vpop.f32.mrb[0].mxu0
      %v4373 = vpop.f32.mrb[0].mxu0
      %v4374 = vadd.f32 0.0, %v4373
      %v4375 = vpop.f32.mrb[0].mxu0
      %4376 = vmatprep.mubr.bf16.mxu0 0
      %4377 = vmatmul.mubr.bf16.gmra.mrb[0].mxu0 %v4249
      %v4378 = vpop.f32.mrb[0].mxu0
      %v4379 = vadd.f32 0.0, %v4378
      %v4380 = vpop.f32.mrb[0].mxu0
      %v4381 = vpop.f32.mrb[0].mxu0
      %v4382 = vadd.f32 0.0, %v4381
      %v4383 = vpop.f32.mrb[0].mxu0
      %4384 = vmatprep.mubr.bf16.mxu0 0
      %4385 = vmatmul.mubr.bf16.gmra.mrb[0].mxu0 %v4252
      %v4386 = vpop.f32.mrb[0].mxu0
      %v4387 = vadd.f32 0.0, %v4386
      %v4388 = vpop.f32.mrb[0].mxu0
      %v4389 = vpop.f32.mrb[0].mxu0
      %v4390 = vadd.f32 0.0, %v4389
      %v4391 = vpop.f32.mrb[0].mxu0
      %4392 = vmatprep.mubr.bf16.mxu0 0
      %4393 = vmatmul.mubr.bf16.gmra.mrb[0].mxu0 %v4255
      %v4394 = vpop.f32.mrb[0].mxu0
      %v4395 = vadd.f32 0.0, %v4394
      %v4396 = vpop.f32.mrb[0].mxu0
      %v4397 = vpop.f32.mrb[0].mxu0
      %v4398 = vadd.f32 0.0, %v4397
      %v4399 = vpop.f32.mrb[0].mxu0
      %4400 = vmatprep.mubr.bf16.mxu0 0
      %4401 = vmatmul.mubr.bf16.gmra.mrb[0].mxu0 %v4258
      %v4402 = vpop.f32.mrb[0].mxu0
      %v4403 = vadd.f32 0.0, %v4402
      %v4404 = vpop.f32.mrb[0].mxu0
      %v4405 = vpop.f32.mrb[0].mxu0
      %v4406 = vadd.f32 0.0, %v4405
      %v4407 = vpop.f32.mrb[0].mxu0
      %4408 = vmatprep.mubr.bf16.mxu0 0
      %4409 = vmatmul.mubr.bf16.gmra.mrb[0].mxu0 %v4261
      %v4410 = vpop.f32.mrb[0].mxu0
      %v4411 = vadd.f32 0.0, %v4410
      %v4412 = vpop.f32.mrb[0].mxu0
      %v4413 = vpop.f32.mrb[0].mxu0
      %v4414 = vadd.f32 0.0, %v4413
      %v4415 = vpop.f32.mrb[0].mxu0
      %4416 = vmatprep.mubr.bf16.mxu0 0
      %4417 = vmatmul.mubr.bf16.gmra.mrb[0].mxu0 %v4264
      %v4418 = vpop.f32.mrb[0].mxu0
      %v4419 = vadd.f32 0.0, %v4418
      %v4420 = vpop.f32.mrb[0].mxu0
      %v4421 = vpop.f32.mrb[0].mxu0
      %v4422 = vadd.f32 0.0, %v4421
      %v4423 = vpop.f32.mrb[0].mxu0
      %4424 = vmatprep.mubr.bf16.mxu0 0
      %4425 = vmatmul.mubr.bf16.gmra.mrb[0].mxu0 %v4267
      %v4426 = vpop.f32.mrb[0].mxu0
      %v4427 = vadd.f32 0.0, %v4426
      %v4428 = vpop.f32.mrb[0].mxu0
      %v4429 = vpop.f32.mrb[0].mxu0
      %v4430 = vadd.f32 0.0, %v4429
      %v4431 = vpop.f32.mrb[0].mxu0
      %4432 = vdwg.mxu0
      %v4433 = vadd.f32 %v3931, %v4307
      %v4434 = vadd.f32 %v3932, %v4310
      %v4435 = vadd.f32 %v3933, %v4315
      %v4436 = vadd.f32 %v3934, %v4318
      %v4437 = vadd.f32 %v3935, %v4323
      %v4438 = vadd.f32 %v3936, %v4326
      %v4439 = vadd.f32 %v3937, %v4331
      %v4440 = vadd.f32 %v3938, %v4334
      %v4441 = vadd.f32 %v3939, %v4339
      %v4442 = vadd.f32 %v3940, %v4342
      %v4443 = vadd.f32 %v3941, %v4347
      %v4444 = vadd.f32 %v3942, %v4350
      %v4445 = vadd.f32 %v3943, %v4355
      %v4446 = vadd.f32 %v3944, %v4358
      %v4447 = vadd.f32 %v3945, %v4363
      %v4448 = vadd.f32 %v3946, %v4366
      %v4449 = vadd.f32 %v3947, %v4371
      %v4450 = vadd.f32 %v3948, %v4374
      %v4451 = vadd.f32 %v3949, %v4379
      %v4452 = vadd.f32 %v3950, %v4382
      %v4453 = vadd.f32 %v3951, %v4387
      %v4454 = vadd.f32 %v3952, %v4390
      %v4455 = vadd.f32 %v3953, %v4395
      %v4456 = vadd.f32 %v3954, %v4398
      %v4457 = vadd.f32 %v3955, %v4403
      %v4458 = vadd.f32 %v3956, %v4406
      %v4459 = vadd.f32 %v3957, %v4411
      %v4460 = vadd.f32 %v3958, %v4414
      %v4461 = vadd.f32 %v3959, %v4419
      %v4462 = vadd.f32 %v3960, %v4422
      %v4463 = vadd.f32 %v3961, %v4427
      %v4464 = vadd.f32 %v3962, %v4430
      %v4465 = vld [vmem:[%s307] sm:$0xc]
      %v4466 = vld [vmem:[%s307 + $0x8] sm:$0x3]
      %v4467 = vld [vmem:[%s307 + $0xc] sm:$0xc]
      %v4468 = vld [vmem:[%s307 + $0x14] sm:$0x3]
      %v4469 = vld [vmem:[%s307 + $0x18] sm:$0xc]
      %v4470 = vld [vmem:[%s307 + $0x20] sm:$0x3]
      %v4471 = vld [vmem:[%s307 + $0x24] sm:$0xc]
      %v4472 = vld [vmem:[%s307 + $0x2c] sm:$0x3]
      %v4473 = vld [vmem:[%s307 + $0x30] sm:$0xc]
      %v4474 = vld [vmem:[%s307 + $0x38] sm:$0x3]
      %v4475 = vld [vmem:[%s307 + $0x3c] sm:$0xc]
      %v4476 = vld [vmem:[%s307 + $0x44] sm:$0x3]
      %v4477 = vld [vmem:[%s307 + $0x48] sm:$0xc]
      %v4478 = vld [vmem:[%s307 + $0x50] sm:$0x3]
      %v4479 = vld [vmem:[%s307 + $0x54] sm:$0xc]
      %v4480 = vld [vmem:[%s307 + $0x5c] sm:$0x3]
      %v4481 = vld [vmem:[%s307 + $0x60] sm:$0xc]
      %v4482 = vld [vmem:[%s307 + $0x68] sm:$0x3]
      %v4483 = vld [vmem:[%s307 + $0x6c] sm:$0xc]
      %v4484 = vld [vmem:[%s307 + $0x74] sm:$0x3]
      %v4485 = vld [vmem:[%s307 + $0x78] sm:$0xc]
      %v4486 = vld [vmem:[%s307 + $0x80] sm:$0x3]
      %v4487 = vld [vmem:[%s307 + $0x84] sm:$0xc]
      %v4488 = vld [vmem:[%s307 + $0x8c] sm:$0x3]
      %v4489 = vld [vmem:[%s307 + $0x90] sm:$0xc]
      %v4490 = vld [vmem:[%s307 + $0x98] sm:$0x3]
      %v4491 = vld [vmem:[%s307 + $0x9c] sm:$0xc]
      %v4492 = vld [vmem:[%s307 + $0xa4] sm:$0x3]
      %v4493 = vld [vmem:[%s307 + $0xa8] sm:$0xc]
      %v4494 = vld [vmem:[%s307 + $0xb0] sm:$0x3]
      %v4495 = vld [vmem:[%s307 + $0xb4] sm:$0xc]
      %v4496 = vld [vmem:[%s307 + $0xbc] sm:$0x3]
      %v4529 = vrot.slane %v4465, 6
      %v4530 = vrot.slane %v4529, 4
      %v4531 = vrot.slane %v3964, 6
      %v4532 = vsel %vm3198, %v4530, %v4531
      %v4533 = vrot.slane %v4531, 4
      %v4534 = vrot.slane %v4466, 6
      %v4535 = vsel %vm3198, %v4533, %v4534
      %v4536 = vrot.slane %v4467, 6
      %v4537 = vrot.slane %v4536, 4
      %v4538 = vrot.slane %v3967, 6
      %v4539 = vsel %vm3198, %v4537, %v4538
      %v4540 = vrot.slane %v4538, 4
      %v4541 = vrot.slane %v4468, 6
      %v4542 = vsel %vm3198, %v4540, %v4541
      %v4543 = vrot.slane %v4469, 6
      %v4544 = vrot.slane %v4543, 4
      %v4545 = vrot.slane %v3970, 6
      %v4546 = vsel %vm3198, %v4544, %v4545
      %v4547 = vrot.slane %v4545, 4
      %v4548 = vrot.slane %v4470, 6
      %v4549 = vsel %vm3198, %v4547, %v4548
      %v4550 = vrot.slane %v4471, 6
      %v4551 = vrot.slane %v4550, 4
      %v4552 = vrot.slane %v3973, 6
      %v4553 = vsel %vm3198, %v4551, %v4552
      %v4554 = vrot.slane %v4552, 4
      %v4555 = vrot.slane %v4472, 6
      %v4556 = vsel %vm3198, %v4554, %v4555
      %v4557 = vrot.slane %v4473, 6
      %v4558 = vrot.slane %v4557, 4
      %v4559 = vrot.slane %v3976, 6
      %v4560 = vsel %vm3198, %v4558, %v4559
      %v4561 = vrot.slane %v4559, 4
      %v4562 = vrot.slane %v4474, 6
      %v4563 = vsel %vm3198, %v4561, %v4562
      %v4564 = vrot.slane %v4475, 6
      %v4565 = vrot.slane %v4564, 4
      %v4566 = vrot.slane %v3979, 6
      %v4567 = vsel %vm3198, %v4565, %v4566
      %v4568 = vrot.slane %v4566, 4
      %v4569 = vrot.slane %v4476, 6
      %v4570 = vsel %vm3198, %v4568, %v4569
      %v4571 = vrot.slane %v4477, 6
      %v4572 = vrot.slane %v4571, 4
      %v4573 = vrot.slane %v3982, 6
      %v4574 = vsel %vm3198, %v4572, %v4573
      %v4575 = vrot.slane %v4573, 4
      %v4576 = vrot.slane %v4478, 6
      %v4577 = vsel %vm3198, %v4575, %v4576
      %v4578 = vrot.slane %v4479, 6
      %v4579 = vrot.slane %v4578, 4
      %v4580 = vrot.slane %v3985, 6
      %v4581 = vsel %vm3198, %v4579, %v4580
      %v4582 = vrot.slane %v4580, 4
      %v4583 = vrot.slane %v4480, 6
      %v4584 = vsel %vm3198, %v4582, %v4583
      %v4585 = vrot.slane %v4481, 6
      %v4586 = vrot.slane %v4585, 4
      %v4587 = vrot.slane %v3988, 6
      %v4588 = vsel %vm3198, %v4586, %v4587
      %v4589 = vrot.slane %v4587, 4
      %v4590 = vrot.slane %v4482, 6
      %v4591 = vsel %vm3198, %v4589, %v4590
      %v4592 = vrot.slane %v4483, 6
      %v4593 = vrot.slane %v4592, 4
      %v4594 = vrot.slane %v3991, 6
      %v4595 = vsel %vm3198, %v4593, %v4594
      %v4596 = vrot.slane %v4594, 4
      %v4597 = vrot.slane %v4484, 6
      %v4598 = vsel %vm3198, %v4596, %v4597
      %v4599 = vrot.slane %v4485, 6
      %v4600 = vrot.slane %v4599, 4
      %v4601 = vrot.slane %v3994, 6
      %v4602 = vsel %vm3198, %v4600, %v4601
      %v4603 = vrot.slane %v4601, 4
      %v4604 = vrot.slane %v4486, 6
      %v4605 = vsel %vm3198, %v4603, %v4604
      %v4606 = vrot.slane %v4487, 6
      %v4607 = vrot.slane %v4606, 4
      %v4608 = vrot.slane %v3997, 6
      %v4609 = vsel %vm3198, %v4607, %v4608
      %v4610 = vrot.slane %v4608, 4
      %v4611 = vrot.slane %v4488, 6
      %v4612 = vsel %vm3198, %v4610, %v4611
      %v4613 = vrot.slane %v4489, 6
      %v4614 = vrot.slane %v4613, 4
      %v4615 = vrot.slane %v4000, 6
      %v4616 = vsel %vm3198, %v4614, %v4615
      %v4617 = vrot.slane %v4615, 4
      %v4618 = vrot.slane %v4490, 6
      %v4619 = vsel %vm3198, %v4617, %v4618
      %v4620 = vrot.slane %v4491, 6
      %v4621 = vrot.slane %v4620, 4
      %v4622 = vrot.slane %v4003, 6
      %v4623 = vsel %vm3198, %v4621, %v4622
      %v4624 = vrot.slane %v4622, 4
      %v4625 = vrot.slane %v4492, 6
      %v4626 = vsel %vm3198, %v4624, %v4625
      %v4627 = vrot.slane %v4493, 6
      %v4628 = vrot.slane %v4627, 4
      %v4629 = vrot.slane %v4006, 6
      %v4630 = vsel %vm3198, %v4628, %v4629
      %v4631 = vrot.slane %v4629, 4
      %v4632 = vrot.slane %v4494, 6
      %v4633 = vsel %vm3198, %v4631, %v4632
      %v4634 = vrot.slane %v4495, 6
      %v4635 = vrot.slane %v4634, 4
      %v4636 = vrot.slane %v4009, 6
      %v4637 = vsel %vm3198, %v4635, %v4636
      %v4638 = vrot.slane %v4636, 4
      %v4639 = vrot.slane %v4496, 6
      %v4640 = vsel %vm3198, %v4638, %v4639
      %s4641 = scalar_lea.vmem %s5, 10
      %v4642 = vld [vmem:[%s4641] sm:$0x3]
      %v4643 = vunpack.c.l.b16 %v4532
      %v4644 = vunpack.c.l.b16 %v4535
      %v4645 = vunpack.c.l.b16 %v4539
      %v4646 = vunpack.c.l.b16 %v4542
      %v4647 = vunpack.c.l.b16 %v4546
      %v4648 = vunpack.c.l.b16 %v4549
      %v4649 = vunpack.c.l.b16 %v4553
      %v4650 = vunpack.c.l.b16 %v4556
      %v4651 = vunpack.c.l.b16 %v4560
      %v4652 = vunpack.c.l.b16 %v4563
      %v4653 = vunpack.c.l.b16 %v4567
      %v4654 = vunpack.c.l.b16 %v4570
      %v4655 = vunpack.c.l.b16 %v4574
      %v4656 = vunpack.c.l.b16 %v4577
      %v4657 = vunpack.c.l.b16 %v4581
      %v4658 = vunpack.c.l.b16 %v4584
      %v4659 = vunpack.c.l.b16 %v4588
      %v4660 = vunpack.c.l.b16 %v4591
      %v4661 = vunpack.c.l.b16 %v4595
      %v4662 = vunpack.c.l.b16 %v4598
      %v4663 = vunpack.c.l.b16 %v4602
      %v4664 = vunpack.c.l.b16 %v4605
      %v4665 = vunpack.c.l.b16 %v4609
      %v4666 = vunpack.c.l.b16 %v4612
      %v4667 = vunpack.c.l.b16 %v4616
      %v4668 = vunpack.c.l.b16 %v4619
      %v4669 = vunpack.c.l.b16 %v4623
      %v4670 = vunpack.c.l.b16 %v4626
      %v4671 = vunpack.c.l.b16 %v4630
      %v4672 = vunpack.c.l.b16 %v4633
      %v4673 = vunpack.c.l.b16 %v4637
      %v4674 = vunpack.c.l.b16 %v4640
      %v4675 = vpack.c.b16 %v4644, %v4643
      %v4676 = vpack.c.b16 %v4646, %v4645
      %v4677 = vpack.c.b16 %v4648, %v4647
      %v4678 = vpack.c.b16 %v4650, %v4649
      %v4679 = vpack.c.b16 %v4652, %v4651
      %v4680 = vpack.c.b16 %v4654, %v4653
      %v4681 = vpack.c.b16 %v4656, %v4655
      %v4682 = vpack.c.b16 %v4658, %v4657
      %v4683 = vpack.c.b16 %v4660, %v4659
      %v4684 = vpack.c.b16 %v4662, %v4661
      %v4685 = vpack.c.b16 %v4664, %v4663
      %v4686 = vpack.c.b16 %v4666, %v4665
      %v4687 = vpack.c.b16 %v4668, %v4667
      %v4688 = vpack.c.b16 %v4670, %v4669
      %v4689 = vpack.c.b16 %v4672, %v4671
      %v4690 = vpack.c.b16 %v4674, %v4673
      %v4692 = vsel %vm565, %v4675, 0
      %v4695 = vsel %vm565, %v4676, 0
      %v4698 = vsel %vm565, %v4677, 0
      %v4701 = vsel %vm565, %v4678, 0
      %v4704 = vsel %vm565, %v4679, 0
      %v4707 = vsel %vm565, %v4680, 0
      %v4710 = vsel %vm565, %v4681, 0
      %v4713 = vsel %vm565, %v4682, 0
      %v4716 = vsel %vm565, %v4683, 0
      %v4719 = vsel %vm565, %v4684, 0
      %v4722 = vsel %vm565, %v4685, 0
      %v4725 = vsel %vm565, %v4686, 0
      %v4728 = vsel %vm565, %v4687, 0
      %v4731 = vsel %vm565, %v4688, 0
      %v4734 = vsel %vm565, %v4689, 0
      %v4737 = vsel %vm565, %v4690, 0
      %v4740 = vsel %vm2204, %v4642, 0
      %4742 = vmatprep.subr.bf16.mxu0 0
      %4743 = vmatpush1.bf16.msra.mxu0 %v4740
      %4744 = vmatprep.subr.bf16.mxu0 0
      %4745 = vmatpush1.bf16.msra.mxu0 0
      %4746 = vmatprep.subr.bf16.mxu0 0
      %4747 = vmatpush1.bf16.msra.mxu0 0
      %4748 = vmatprep.subr.bf16.mxu0 0
      %4749 = vmatpush1.bf16.msra.mxu0 0
      %4750 = vmatprep.subr.bf16.mxu0 0
      %4751 = vmatpush1.bf16.msra.mxu0 0
      %4752 = vmatprep.subr.bf16.mxu0 0
      %4753 = vmatpush1.bf16.msra.mxu0 0
      %4754 = vmatprep.subr.bf16.mxu0 0
      %4755 = vmatpush1.bf16.msra.mxu0 0
      %4756 = vmatprep.subr.bf16.mxu0 0
      %4757 = vmatpush1.bf16.msra.mxu0 0
      %4758 = vmatprep.subr.bf16.mxu0 0
      %4759 = vmatpush1.bf16.msra.mxu0 0
      %4760 = vmatprep.subr.bf16.mxu0 0
      %4761 = vmatpush1.bf16.msra.mxu0 0
      %4762 = vmatprep.subr.bf16.mxu0 0
      %4763 = vmatpush1.bf16.msra.mxu0 0
      %4764 = vmatprep.subr.bf16.mxu0 0
      %4765 = vmatpush1.bf16.msra.mxu0 0
      %4766 = vmatprep.subr.bf16.mxu0 0
      %4767 = vmatpush1.bf16.msra.mxu0 0
      %4768 = vmatprep.subr.bf16.mxu0 0
      %4769 = vmatpush1.bf16.msra.mxu0 0
      %4770 = vmatprep.subr.bf16.mxu0 0
      %4771 = vmatpush1.bf16.msra.mxu0 0
      %4772 = vmatprep.subr.bf16.mxu0 0
      %4773 = vmatpush1.bf16.msra.mxu0 0
      %4774 = vmatprep.mubr.bf16.mxu0 0
      %4775 = vmatmul.mubr.bf16.gmra.mrb[0].mxu0 %v4692
      %v4776 = vpop.f32.mrb[0].mxu0
      %v4777 = vadd.f32 0.0, %v4776
      %v4778 = vpop.f32.mrb[0].mxu0
      %v4779 = vpop.f32.mrb[0].mxu0
      %v4780 = vadd.f32 0.0, %v4779
      %v4781 = vpop.f32.mrb[0].mxu0
      %4782 = vmatprep.mubr.bf16.mxu0 0
      %4783 = vmatmul.mubr.bf16.gmra.mrb[0].mxu0 %v4695
      %v4784 = vpop.f32.mrb[0].mxu0
      %v4785 = vadd.f32 0.0, %v4784
      %v4786 = vpop.f32.mrb[0].mxu0
      %v4787 = vpop.f32.mrb[0].mxu0
      %v4788 = vadd.f32 0.0, %v4787
      %v4789 = vpop.f32.mrb[0].mxu0
      %4790 = vmatprep.mubr.bf16.mxu0 0
      %4791 = vmatmul.mubr.bf16.gmra.mrb[0].mxu0 %v4698
      %v4792 = vpop.f32.mrb[0].mxu0
      %v4793 = vadd.f32 0.0, %v4792
      %v4794 = vpop.f32.mrb[0].mxu0
      %v4795 = vpop.f32.mrb[0].mxu0
      %v4796 = vadd.f32 0.0, %v4795
      %v4797 = vpop.f32.mrb[0].mxu0
      %4798 = vmatprep.mubr.bf16.mxu0 0
      %4799 = vmatmul.mubr.bf16.gmra.mrb[0].mxu0 %v4701
      %v4800 = vpop.f32.mrb[0].mxu0
      %v4801 = vadd.f32 0.0, %v4800
      %v4802 = vpop.f32.mrb[0].mxu0
      %v4803 = vpop.f32.mrb[0].mxu0
      %v4804 = vadd.f32 0.0, %v4803
      %v4805 = vpop.f32.mrb[0].mxu0
      %4806 = vmatprep.mubr.bf16.mxu0 0
      %4807 = vmatmul.mubr.bf16.gmra.mrb[0].mxu0 %v4704
      %v4808 = vpop.f32.mrb[0].mxu0
      %v4809 = vadd.f32 0.0, %v4808
      %v4810 = vpop.f32.mrb[0].mxu0
      %v4811 = vpop.f32.mrb[0].mxu0
      %v4812 = vadd.f32 0.0, %v4811
      %v4813 = vpop.f32.mrb[0].mxu0
      %4814 = vmatprep.mubr.bf16.mxu0 0
      %4815 = vmatmul.mubr.bf16.gmra.mrb[0].mxu0 %v4707
      %v4816 = vpop.f32.mrb[0].mxu0
      %v4817 = vadd.f32 0.0, %v4816
      %v4818 = vpop.f32.mrb[0].mxu0
      %v4819 = vpop.f32.mrb[0].mxu0
      %v4820 = vadd.f32 0.0, %v4819
      %v4821 = vpop.f32.mrb[0].mxu0
      %4822 = vmatprep.mubr.bf16.mxu0 0
      %4823 = vmatmul.mubr.bf16.gmra.mrb[0].mxu0 %v4710
      %v4824 = vpop.f32.mrb[0].mxu0
      %v4825 = vadd.f32 0.0, %v4824
      %v4826 = vpop.f32.mrb[0].mxu0
      %v4827 = vpop.f32.mrb[0].mxu0
      %v4828 = vadd.f32 0.0, %v4827
      %v4829 = vpop.f32.mrb[0].mxu0
      %4830 = vmatprep.mubr.bf16.mxu0 0
      %4831 = vmatmul.mubr.bf16.gmra.mrb[0].mxu0 %v4713
      %v4832 = vpop.f32.mrb[0].mxu0
      %v4833 = vadd.f32 0.0, %v4832
      %v4834 = vpop.f32.mrb[0].mxu0
      %v4835 = vpop.f32.mrb[0].mxu0
      %v4836 = vadd.f32 0.0, %v4835
      %v4837 = vpop.f32.mrb[0].mxu0
      %4838 = vmatprep.mubr.bf16.mxu0 0
      %4839 = vmatmul.mubr.bf16.gmra.mrb[0].mxu0 %v4716
      %v4840 = vpop.f32.mrb[0].mxu0
      %v4841 = vadd.f32 0.0, %v4840
      %v4842 = vpop.f32.mrb[0].mxu0
      %v4843 = vpop.f32.mrb[0].mxu0
      %v4844 = vadd.f32 0.0, %v4843
      %v4845 = vpop.f32.mrb[0].mxu0
      %4846 = vmatprep.mubr.bf16.mxu0 0
      %4847 = vmatmul.mubr.bf16.gmra.mrb[0].mxu0 %v4719
      %v4848 = vpop.f32.mrb[0].mxu0
      %v4849 = vadd.f32 0.0, %v4848
      %v4850 = vpop.f32.mrb[0].mxu0
      %v4851 = vpop.f32.mrb[0].mxu0
      %v4852 = vadd.f32 0.0, %v4851
      %v4853 = vpop.f32.mrb[0].mxu0
      %4854 = vmatprep.mubr.bf16.mxu0 0
      %4855 = vmatmul.mubr.bf16.gmra.mrb[0].mxu0 %v4722
      %v4856 = vpop.f32.mrb[0].mxu0
      %v4857 = vadd.f32 0.0, %v4856
      %v4858 = vpop.f32.mrb[0].mxu0
      %v4859 = vpop.f32.mrb[0].mxu0
      %v4860 = vadd.f32 0.0, %v4859
      %v4861 = vpop.f32.mrb[0].mxu0
      %4862 = vmatprep.mubr.bf16.mxu0 0
      %4863 = vmatmul.mubr.bf16.gmra.mrb[0].mxu0 %v4725
      %v4864 = vpop.f32.mrb[0].mxu0
      %v4865 = vadd.f32 0.0, %v4864
      %v4866 = vpop.f32.mrb[0].mxu0
      %v4867 = vpop.f32.mrb[0].mxu0
      %v4868 = vadd.f32 0.0, %v4867
      %v4869 = vpop.f32.mrb[0].mxu0
      %4870 = vmatprep.mubr.bf16.mxu0 0
      %4871 = vmatmul.mubr.bf16.gmra.mrb[0].mxu0 %v4728
      %v4872 = vpop.f32.mrb[0].mxu0
      %v4873 = vadd.f32 0.0, %v4872
      %v4874 = vpop.f32.mrb[0].mxu0
      %v4875 = vpop.f32.mrb[0].mxu0
      %v4876 = vadd.f32 0.0, %v4875
      %v4877 = vpop.f32.mrb[0].mxu0
      %4878 = vmatprep.mubr.bf16.mxu0 0
      %4879 = vmatmul.mubr.bf16.gmra.mrb[0].mxu0 %v4731
      %v4880 = vpop.f32.mrb[0].mxu0
      %v4881 = vadd.f32 0.0, %v4880
      %v4882 = vpop.f32.mrb[0].mxu0
      %v4883 = vpop.f32.mrb[0].mxu0
      %v4884 = vadd.f32 0.0, %v4883
      %v4885 = vpop.f32.mrb[0].mxu0
      %4886 = vmatprep.mubr.bf16.mxu0 0
      %4887 = vmatmul.mubr.bf16.gmra.mrb[0].mxu0 %v4734
      %v4888 = vpop.f32.mrb[0].mxu0
      %v4889 = vadd.f32 0.0, %v4888
      %v4890 = vpop.f32.mrb[0].mxu0
      %v4891 = vpop.f32.mrb[0].mxu0
      %v4892 = vadd.f32 0.0, %v4891
      %v4893 = vpop.f32.mrb[0].mxu0
      %4894 = vmatprep.mubr.bf16.mxu0 0
      %4895 = vmatmul.mubr.bf16.gmra.mrb[0].mxu0 %v4737
      %v4896 = vpop.f32.mrb[0].mxu0
      %v4897 = vadd.f32 0.0, %v4896
      %v4898 = vpop.f32.mrb[0].mxu0
      %v4899 = vpop.f32.mrb[0].mxu0
      %v4900 = vadd.f32 0.0, %v4899
      %v4901 = vpop.f32.mrb[0].mxu0
      %4902 = vdwg.mxu0
      %v4903 = vadd.f32 %v4433, %v4777
      %v4904 = vadd.f32 %v4434, %v4780
      %v4905 = vadd.f32 %v4435, %v4785
      %v4906 = vadd.f32 %v4436, %v4788
      %v4907 = vadd.f32 %v4437, %v4793
      %v4908 = vadd.f32 %v4438, %v4796
      %v4909 = vadd.f32 %v4439, %v4801
      %v4910 = vadd.f32 %v4440, %v4804
      %v4911 = vadd.f32 %v4441, %v4809
      %v4912 = vadd.f32 %v4442, %v4812
      %v4913 = vadd.f32 %v4443, %v4817
      %v4914 = vadd.f32 %v4444, %v4820
      %v4915 = vadd.f32 %v4445, %v4825
      %v4916 = vadd.f32 %v4446, %v4828
      %v4917 = vadd.f32 %v4447, %v4833
      %v4918 = vadd.f32 %v4448, %v4836
      %v4919 = vadd.f32 %v4449, %v4841
      %v4920 = vadd.f32 %v4450, %v4844
      %v4921 = vadd.f32 %v4451, %v4849
      %v4922 = vadd.f32 %v4452, %v4852
      %v4923 = vadd.f32 %v4453, %v4857
      %v4924 = vadd.f32 %v4454, %v4860
      %v4925 = vadd.f32 %v4455, %v4865
      %v4926 = vadd.f32 %v4456, %v4868
      %v4927 = vadd.f32 %v4457, %v4873
      %v4928 = vadd.f32 %v4458, %v4876
      %v4929 = vadd.f32 %v4459, %v4881
      %v4930 = vadd.f32 %v4460, %v4884
      %v4931 = vadd.f32 %v4461, %v4889
      %v4932 = vadd.f32 %v4462, %v4892
      %v4933 = vadd.f32 %v4463, %v4897
      %v4934 = vadd.f32 %v4464, %v4900
      %s4935 = scalar_lea.vmem %s300, 48
      %v4936 = vld [vmem:[%s4935] sm:$0xf]
      %v4937 = vld [vmem:[%s4935 + $0x4] sm:$0xf]
      %v4938 = vld [vmem:[%s4935 + $0xc] sm:$0xf]
      %v4939 = vld [vmem:[%s4935 + $0x10] sm:$0xf]
      %v4940 = vld [vmem:[%s4935 + $0x18] sm:$0xf]
      %v4941 = vld [vmem:[%s4935 + $0x1c] sm:$0xf]
      %v4942 = vld [vmem:[%s4935 + $0x24] sm:$0xf]
      %v4943 = vld [vmem:[%s4935 + $0x28] sm:$0xf]
      %v4944 = vld [vmem:[%s4935 + $0x30] sm:$0xf]
      %v4945 = vld [vmem:[%s4935 + $0x34] sm:$0xf]
      %v4946 = vld [vmem:[%s4935 + $0x3c] sm:$0xf]
      %v4947 = vld [vmem:[%s4935 + $0x40] sm:$0xf]
      %v4948 = vld [vmem:[%s4935 + $0x48] sm:$0xf]
      %v4949 = vld [vmem:[%s4935 + $0x4c] sm:$0xf]
      %v4950 = vld [vmem:[%s4935 + $0x54] sm:$0xf]
      %v4951 = vld [vmem:[%s4935 + $0x58] sm:$0xf]
      %v4952 = vld [vmem:[%s4935 + $0x60] sm:$0xf]
      %v4953 = vld [vmem:[%s4935 + $0x64] sm:$0xf]
      %v4954 = vld [vmem:[%s4935 + $0x6c] sm:$0xf]
      %v4955 = vld [vmem:[%s4935 + $0x70] sm:$0xf]
      %v4956 = vld [vmem:[%s4935 + $0x78] sm:$0xf]
      %v4957 = vld [vmem:[%s4935 + $0x7c] sm:$0xf]
      %v4958 = vld [vmem:[%s4935 + $0x84] sm:$0xf]
      %v4959 = vld [vmem:[%s4935 + $0x88] sm:$0xf]
      %v4960 = vld [vmem:[%s4935 + $0x90] sm:$0xf]
      %v4961 = vld [vmem:[%s4935 + $0x94] sm:$0xf]
      %v4962 = vld [vmem:[%s4935 + $0x9c] sm:$0xf]
      %v4963 = vld [vmem:[%s4935 + $0xa0] sm:$0xf]
      %v4964 = vld [vmem:[%s4935 + $0xa8] sm:$0xf]
      %v4965 = vld [vmem:[%s4935 + $0xac] sm:$0xf]
      %v4966 = vld [vmem:[%s4935 + $0xb4] sm:$0xf]
      %v4967 = vld [vmem:[%s4935 + $0xb8] sm:$0xf]
      %s4968 = scalar_lea.vmem %s5, 12
      %v4969 = vld [vmem:[%s4968] sm:$0x3]
      %v5002 = vunpack.c.l.b16 %v4936
      %v5003 = vunpack.c.l.b16 %v4937
      %v5004 = vunpack.c.l.b16 %v4938
      %v5005 = vunpack.c.l.b16 %v4939
      %v5006 = vunpack.c.l.b16 %v4940
      %v5007 = vunpack.c.l.b16 %v4941
      %v5008 = vunpack.c.l.b16 %v4942
      %v5009 = vunpack.c.l.b16 %v4943
      %v5010 = vunpack.c.l.b16 %v4944
      %v5011 = vunpack.c.l.b16 %v4945
      %v5012 = vunpack.c.l.b16 %v4946
      %v5013 = vunpack.c.l.b16 %v4947
      %v5014 = vunpack.c.l.b16 %v4948
      %v5015 = vunpack.c.l.b16 %v4949
      %v5016 = vunpack.c.l.b16 %v4950
      %v5017 = vunpack.c.l.b16 %v4951
      %v5018 = vunpack.c.l.b16 %v4952
      %v5019 = vunpack.c.l.b16 %v4953
      %v5020 = vunpack.c.l.b16 %v4954
      %v5021 = vunpack.c.l.b16 %v4955
      %v5022 = vunpack.c.l.b16 %v4956
      %v5023 = vunpack.c.l.b16 %v4957
      %v5024 = vunpack.c.l.b16 %v4958
      %v5025 = vunpack.c.l.b16 %v4959
      %v5026 = vunpack.c.l.b16 %v4960
      %v5027 = vunpack.c.l.b16 %v4961
      %v5028 = vunpack.c.l.b16 %v4962
      %v5029 = vunpack.c.l.b16 %v4963
      %v5030 = vunpack.c.l.b16 %v4964
      %v5031 = vunpack.c.l.b16 %v4965
      %v5032 = vunpack.c.l.b16 %v4966
      %v5033 = vunpack.c.l.b16 %v4967
      %v5034 = vpack.c.b16 %v5003, %v5002
      %v5035 = vpack.c.b16 %v5005, %v5004
      %v5036 = vpack.c.b16 %v5007, %v5006
      %v5037 = vpack.c.b16 %v5009, %v5008
      %v5038 = vpack.c.b16 %v5011, %v5010
      %v5039 = vpack.c.b16 %v5013, %v5012
      %v5040 = vpack.c.b16 %v5015, %v5014
      %v5041 = vpack.c.b16 %v5017, %v5016
      %v5042 = vpack.c.b16 %v5019, %v5018
      %v5043 = vpack.c.b16 %v5021, %v5020
      %v5044 = vpack.c.b16 %v5023, %v5022
      %v5045 = vpack.c.b16 %v5025, %v5024
      %v5046 = vpack.c.b16 %v5027, %v5026
      %v5047 = vpack.c.b16 %v5029, %v5028
      %v5048 = vpack.c.b16 %v5031, %v5030
      %v5049 = vpack.c.b16 %v5033, %v5032
      %v5051 = vsel %vm565, %v5034, 0
      %v5054 = vsel %vm565, %v5035, 0
      %v5057 = vsel %vm565, %v5036, 0
      %v5060 = vsel %vm565, %v5037, 0
      %v5063 = vsel %vm565, %v5038, 0
      %v5066 = vsel %vm565, %v5039, 0
      %v5069 = vsel %vm565, %v5040, 0
      %v5072 = vsel %vm565, %v5041, 0
      %v5075 = vsel %vm565, %v5042, 0
      %v5078 = vsel %vm565, %v5043, 0
      %v5081 = vsel %vm565, %v5044, 0
      %v5084 = vsel %vm565, %v5045, 0
      %v5087 = vsel %vm565, %v5046, 0
      %v5090 = vsel %vm565, %v5047, 0
      %v5093 = vsel %vm565, %v5048, 0
      %v5096 = vsel %vm565, %v5049, 0
      %v5099 = vsel %vm2204, %v4969, 0
      %5101 = vmatprep.subr.bf16.mxu0 0
      %5102 = vmatpush1.bf16.msra.mxu0 %v5099
      %5103 = vmatprep.subr.bf16.mxu0 0
      %5104 = vmatpush1.bf16.msra.mxu0 0
      %5105 = vmatprep.subr.bf16.mxu0 0
      %5106 = vmatpush1.bf16.msra.mxu0 0
      %5107 = vmatprep.subr.bf16.mxu0 0
      %5108 = vmatpush1.bf16.msra.mxu0 0
      %5109 = vmatprep.subr.bf16.mxu0 0
      %5110 = vmatpush1.bf16.msra.mxu0 0
      %5111 = vmatprep.subr.bf16.mxu0 0
      %5112 = vmatpush1.bf16.msra.mxu0 0
      %5113 = vmatprep.subr.bf16.mxu0 0
      %5114 = vmatpush1.bf16.msra.mxu0 0
      %5115 = vmatprep.subr.bf16.mxu0 0
      %5116 = vmatpush1.bf16.msra.mxu0 0
      %5117 = vmatprep.subr.bf16.mxu0 0
      %5118 = vmatpush1.bf16.msra.mxu0 0
      %5119 = vmatprep.subr.bf16.mxu0 0
      %5120 = vmatpush1.bf16.msra.mxu0 0
      %5121 = vmatprep.subr.bf16.mxu0 0
      %5122 = vmatpush1.bf16.msra.mxu0 0
      %5123 = vmatprep.subr.bf16.mxu0 0
      %5124 = vmatpush1.bf16.msra.mxu0 0
      %5125 = vmatprep.subr.bf16.mxu0 0
      %5126 = vmatpush1.bf16.msra.mxu0 0
      %5127 = vmatprep.subr.bf16.mxu0 0
      %5128 = vmatpush1.bf16.msra.mxu0 0
      %5129 = vmatprep.subr.bf16.mxu0 0
      %5130 = vmatpush1.bf16.msra.mxu0 0
      %5131 = vmatprep.subr.bf16.mxu0 0
      %5132 = vmatpush1.bf16.msra.mxu0 0
      %5133 = vmatprep.mubr.bf16.mxu0 0
      %5134 = vmatmul.mubr.bf16.gmra.mrb[0].mxu0 %v5051
      %v5135 = vpop.f32.mrb[0].mxu0
      %v5136 = vadd.f32 0.0, %v5135
      %v5137 = vpop.f32.mrb[0].mxu0
      %v5138 = vpop.f32.mrb[0].mxu0
      %v5139 = vadd.f32 0.0, %v5138
      %v5140 = vpop.f32.mrb[0].mxu0
      %5141 = vmatprep.mubr.bf16.mxu0 0
      %5142 = vmatmul.mubr.bf16.gmra.mrb[0].mxu0 %v5054
      %v5143 = vpop.f32.mrb[0].mxu0
      %v5144 = vadd.f32 0.0, %v5143
      %v5145 = vpop.f32.mrb[0].mxu0
      %v5146 = vpop.f32.mrb[0].mxu0
      %v5147 = vadd.f32 0.0, %v5146
      %v5148 = vpop.f32.mrb[0].mxu0
      %5149 = vmatprep.mubr.bf16.mxu0 0
      %5150 = vmatmul.mubr.bf16.gmra.mrb[0].mxu0 %v5057
      %v5151 = vpop.f32.mrb[0].mxu0
      %v5152 = vadd.f32 0.0, %v5151
      %v5153 = vpop.f32.mrb[0].mxu0
      %v5154 = vpop.f32.mrb[0].mxu0
      %v5155 = vadd.f32 0.0, %v5154
      %v5156 = vpop.f32.mrb[0].mxu0
      %5157 = vmatprep.mubr.bf16.mxu0 0
      %5158 = vmatmul.mubr.bf16.gmra.mrb[0].mxu0 %v5060
      %v5159 = vpop.f32.mrb[0].mxu0
      %v5160 = vadd.f32 0.0, %v5159
      %v5161 = vpop.f32.mrb[0].mxu0
      %v5162 = vpop.f32.mrb[0].mxu0
      %v5163 = vadd.f32 0.0, %v5162
      %v5164 = vpop.f32.mrb[0].mxu0
      %5165 = vmatprep.mubr.bf16.mxu0 0
      %5166 = vmatmul.mubr.bf16.gmra.mrb[0].mxu0 %v5063
      %v5167 = vpop.f32.mrb[0].mxu0
      %v5168 = vadd.f32 0.0, %v5167
      %v5169 = vpop.f32.mrb[0].mxu0
      %v5170 = vpop.f32.mrb[0].mxu0
      %v5171 = vadd.f32 0.0, %v5170
      %v5172 = vpop.f32.mrb[0].mxu0
      %5173 = vmatprep.mubr.bf16.mxu0 0
      %5174 = vmatmul.mubr.bf16.gmra.mrb[0].mxu0 %v5066
      %v5175 = vpop.f32.mrb[0].mxu0
      %v5176 = vadd.f32 0.0, %v5175
      %v5177 = vpop.f32.mrb[0].mxu0
      %v5178 = vpop.f32.mrb[0].mxu0
      %v5179 = vadd.f32 0.0, %v5178
      %v5180 = vpop.f32.mrb[0].mxu0
      %5181 = vmatprep.mubr.bf16.mxu0 0
      %5182 = vmatmul.mubr.bf16.gmra.mrb[0].mxu0 %v5069
      %v5183 = vpop.f32.mrb[0].mxu0
      %v5184 = vadd.f32 0.0, %v5183
      %v5185 = vpop.f32.mrb[0].mxu0
      %v5186 = vpop.f32.mrb[0].mxu0
      %v5187 = vadd.f32 0.0, %v5186
      %v5188 = vpop.f32.mrb[0].mxu0
      %5189 = vmatprep.mubr.bf16.mxu0 0
      %5190 = vmatmul.mubr.bf16.gmra.mrb[0].mxu0 %v5072
      %v5191 = vpop.f32.mrb[0].mxu0
      %v5192 = vadd.f32 0.0, %v5191
      %v5193 = vpop.f32.mrb[0].mxu0
      %v5194 = vpop.f32.mrb[0].mxu0
      %v5195 = vadd.f32 0.0, %v5194
      %v5196 = vpop.f32.mrb[0].mxu0
      %5197 = vmatprep.mubr.bf16.mxu0 0
      %5198 = vmatmul.mubr.bf16.gmra.mrb[0].mxu0 %v5075
      %v5199 = vpop.f32.mrb[0].mxu0
      %v5200 = vadd.f32 0.0, %v5199
      %v5201 = vpop.f32.mrb[0].mxu0
      %v5202 = vpop.f32.mrb[0].mxu0
      %v5203 = vadd.f32 0.0, %v5202
      %v5204 = vpop.f32.mrb[0].mxu0
      %5205 = vmatprep.mubr.bf16.mxu0 0
      %5206 = vmatmul.mubr.bf16.gmra.mrb[0].mxu0 %v5078
      %v5207 = vpop.f32.mrb[0].mxu0
      %v5208 = vadd.f32 0.0, %v5207
      %v5209 = vpop.f32.mrb[0].mxu0
      %v5210 = vpop.f32.mrb[0].mxu0
      %v5211 = vadd.f32 0.0, %v5210
      %v5212 = vpop.f32.mrb[0].mxu0
      %5213 = vmatprep.mubr.bf16.mxu0 0
      %5214 = vmatmul.mubr.bf16.gmra.mrb[0].mxu0 %v5081
      %v5215 = vpop.f32.mrb[0].mxu0
      %v5216 = vadd.f32 0.0, %v5215
      %v5217 = vpop.f32.mrb[0].mxu0
      %v5218 = vpop.f32.mrb[0].mxu0
      %v5219 = vadd.f32 0.0, %v5218
      %v5220 = vpop.f32.mrb[0].mxu0
      %5221 = vmatprep.mubr.bf16.mxu0 0
      %5222 = vmatmul.mubr.bf16.gmra.mrb[0].mxu0 %v5084
      %v5223 = vpop.f32.mrb[0].mxu0
      %v5224 = vadd.f32 0.0, %v5223
      %v5225 = vpop.f32.mrb[0].mxu0
      %v5226 = vpop.f32.mrb[0].mxu0
      %v5227 = vadd.f32 0.0, %v5226
      %v5228 = vpop.f32.mrb[0].mxu0
      %5229 = vmatprep.mubr.bf16.mxu0 0
      %5230 = vmatmul.mubr.bf16.gmra.mrb[0].mxu0 %v5087
      %v5231 = vpop.f32.mrb[0].mxu0
      %v5232 = vadd.f32 0.0, %v5231
      %v5233 = vpop.f32.mrb[0].mxu0
      %v5234 = vpop.f32.mrb[0].mxu0
      %v5235 = vadd.f32 0.0, %v5234
      %v5236 = vpop.f32.mrb[0].mxu0
      %5237 = vmatprep.mubr.bf16.mxu0 0
      %5238 = vmatmul.mubr.bf16.gmra.mrb[0].mxu0 %v5090
      %v5239 = vpop.f32.mrb[0].mxu0
      %v5240 = vadd.f32 0.0, %v5239
      %v5241 = vpop.f32.mrb[0].mxu0
      %v5242 = vpop.f32.mrb[0].mxu0
      %v5243 = vadd.f32 0.0, %v5242
      %v5244 = vpop.f32.mrb[0].mxu0
      %5245 = vmatprep.mubr.bf16.mxu0 0
      %5246 = vmatmul.mubr.bf16.gmra.mrb[0].mxu0 %v5093
      %v5247 = vpop.f32.mrb[0].mxu0
      %v5248 = vadd.f32 0.0, %v5247
      %v5249 = vpop.f32.mrb[0].mxu0
      %v5250 = vpop.f32.mrb[0].mxu0
      %v5251 = vadd.f32 0.0, %v5250
      %v5252 = vpop.f32.mrb[0].mxu0
      %5253 = vmatprep.mubr.bf16.mxu0 0
      %5254 = vmatmul.mubr.bf16.gmra.mrb[0].mxu0 %v5096
      %v5255 = vpop.f32.mrb[0].mxu0
      %v5256 = vadd.f32 0.0, %v5255
      %v5257 = vpop.f32.mrb[0].mxu0
      %v5258 = vpop.f32.mrb[0].mxu0
      %v5259 = vadd.f32 0.0, %v5258
      %v5260 = vpop.f32.mrb[0].mxu0
      %5261 = vdwg.mxu0
      %v5262 = vadd.f32 %v4903, %v5136
      %v5263 = vadd.f32 %v4904, %v5139
      %v5264 = vadd.f32 %v4905, %v5144
      %v5265 = vadd.f32 %v4906, %v5147
      %v5266 = vadd.f32 %v4907, %v5152
      %v5267 = vadd.f32 %v4908, %v5155
      %v5268 = vadd.f32 %v4909, %v5160
      %v5269 = vadd.f32 %v4910, %v5163
      %v5270 = vadd.f32 %v4911, %v5168
      %v5271 = vadd.f32 %v4912, %v5171
      %v5272 = vadd.f32 %v4913, %v5176
      %v5273 = vadd.f32 %v4914, %v5179
      %v5274 = vadd.f32 %v4915, %v5184
      %v5275 = vadd.f32 %v4916, %v5187
      %v5276 = vadd.f32 %v4917, %v5192
      %v5277 = vadd.f32 %v4918, %v5195
      %v5278 = vadd.f32 %v4919, %v5200
      %v5279 = vadd.f32 %v4920, %v5203
      %v5280 = vadd.f32 %v4921, %v5208
      %v5281 = vadd.f32 %v4922, %v5211
      %v5282 = vadd.f32 %v4923, %v5216
      %v5283 = vadd.f32 %v4924, %v5219
      %v5284 = vadd.f32 %v4925, %v5224
      %v5285 = vadd.f32 %v4926, %v5227
      %v5286 = vadd.f32 %v4927, %v5232
      %v5287 = vadd.f32 %v4928, %v5235
      %v5288 = vadd.f32 %v4929, %v5240
      %v5289 = vadd.f32 %v4930, %v5243
      %v5290 = vadd.f32 %v4931, %v5248
      %v5291 = vadd.f32 %v4932, %v5251
      %v5292 = vadd.f32 %v4933, %v5256
      %v5293 = vadd.f32 %v4934, %v5259
      %v5294 = vld [vmem:[%s4935] sm:$0xe]
      %v5295 = vld [vmem:[%s4935 + $0x4] sm:$0xf]
      %v5296 = vld [vmem:[%s4935 + $0x8] sm:$0x1]
      %v5297 = vld [vmem:[%s4935 + $0xc] sm:$0xe]
      %v5298 = vld [vmem:[%s4935 + $0x10] sm:$0xf]
      %v5299 = vld [vmem:[%s4935 + $0x14] sm:$0x1]
      %v5300 = vld [vmem:[%s4935 + $0x18] sm:$0xe]
      %v5301 = vld [vmem:[%s4935 + $0x1c] sm:$0xf]
      %v5302 = vld [vmem:[%s4935 + $0x20] sm:$0x1]
      %v5303 = vld [vmem:[%s4935 + $0x24] sm:$0xe]
      %v5304 = vld [vmem:[%s4935 + $0x28] sm:$0xf]
      %v5305 = vld [vmem:[%s4935 + $0x2c] sm:$0x1]
      %v5306 = vld [vmem:[%s4935 + $0x30] sm:$0xe]
      %v5307 = vld [vmem:[%s4935 + $0x34] sm:$0xf]
      %v5308 = vld [vmem:[%s4935 + $0x38] sm:$0x1]
      %v5309 = vld [vmem:[%s4935 + $0x3c] sm:$0xe]
      %v5310 = vld [vmem:[%s4935 + $0x40] sm:$0xf]
      %v5311 = vld [vmem:[%s4935 + $0x44] sm:$0x1]
      %v5312 = vld [vmem:[%s4935 + $0x48] sm:$0xe]
      %v5313 = vld [vmem:[%s4935 + $0x4c] sm:$0xf]
      %v5314 = vld [vmem:[%s4935 + $0x50] sm:$0x1]
      %v5315 = vld [vmem:[%s4935 + $0x54] sm:$0xe]
      %v5316 = vld [vmem:[%s4935 + $0x58] sm:$0xf]
      %v5317 = vld [vmem:[%s4935 + $0x5c] sm:$0x1]
      %v5318 = vld [vmem:[%s4935 + $0x60] sm:$0xe]
      %v5319 = vld [vmem:[%s4935 + $0x64] sm:$0xf]
      %v5320 = vld [vmem:[%s4935 + $0x68] sm:$0x1]
      %v5321 = vld [vmem:[%s4935 + $0x6c] sm:$0xe]
      %v5322 = vld [vmem:[%s4935 + $0x70] sm:$0xf]
      %v5323 = vld [vmem:[%s4935 + $0x74] sm:$0x1]
      %v5324 = vld [vmem:[%s4935 + $0x78] sm:$0xe]
      %v5325 = vld [vmem:[%s4935 + $0x7c] sm:$0xf]
      %v5326 = vld [vmem:[%s4935 + $0x80] sm:$0x1]
      %v5327 = vld [vmem:[%s4935 + $0x84] sm:$0xe]
      %v5328 = vld [vmem:[%s4935 + $0x88] sm:$0xf]
      %v5329 = vld [vmem:[%s4935 + $0x8c] sm:$0x1]
      %v5330 = vld [vmem:[%s4935 + $0x90] sm:$0xe]
      %v5331 = vld [vmem:[%s4935 + $0x94] sm:$0xf]
      %v5332 = vld [vmem:[%s4935 + $0x98] sm:$0x1]
      %v5333 = vld [vmem:[%s4935 + $0x9c] sm:$0xe]
      %v5334 = vld [vmem:[%s4935 + $0xa0] sm:$0xf]
      %v5335 = vld [vmem:[%s4935 + $0xa4] sm:$0x1]
      %v5336 = vld [vmem:[%s4935 + $0xa8] sm:$0xe]
      %v5337 = vld [vmem:[%s4935 + $0xac] sm:$0xf]
      %v5338 = vld [vmem:[%s4935 + $0xb0] sm:$0x1]
      %v5339 = vld [vmem:[%s4935 + $0xb4] sm:$0xe]
      %v5340 = vld [vmem:[%s4935 + $0xb8] sm:$0xf]
      %v5341 = vld [vmem:[%s4935 + $0xbc] sm:$0x1]
      %v5390 = vrot.slane %v5294, 5
      %v5391 = vrot.slane %v5390, 4
      %v5392 = vrot.slane %v5295, 5
      %v5393 = vsel %vm1995, %v5391, %v5392
      %v5394 = vrot.slane %v5392, 4
      %v5395 = vrot.slane %v5296, 5
      %v5396 = vsel %vm1995, %v5394, %v5395
      %v5397 = vrot.slane %v5297, 5
      %v5398 = vrot.slane %v5397, 4
      %v5399 = vrot.slane %v5298, 5
      %v5400 = vsel %vm1995, %v5398, %v5399
      %v5401 = vrot.slane %v5399, 4
      %v5402 = vrot.slane %v5299, 5
      %v5403 = vsel %vm1995, %v5401, %v5402
      %v5404 = vrot.slane %v5300, 5
      %v5405 = vrot.slane %v5404, 4
      %v5406 = vrot.slane %v5301, 5
      %v5407 = vsel %vm1995, %v5405, %v5406
      %v5408 = vrot.slane %v5406, 4
      %v5409 = vrot.slane %v5302, 5
      %v5410 = vsel %vm1995, %v5408, %v5409
      %v5411 = vrot.slane %v5303, 5
      %v5412 = vrot.slane %v5411, 4
      %v5413 = vrot.slane %v5304, 5
      %v5414 = vsel %vm1995, %v5412, %v5413
      %v5415 = vrot.slane %v5413, 4
      %v5416 = vrot.slane %v5305, 5
      %v5417 = vsel %vm1995, %v5415, %v5416
      %v5418 = vrot.slane %v5306, 5
      %v5419 = vrot.slane %v5418, 4
      %v5420 = vrot.slane %v5307, 5
      %v5421 = vsel %vm1995, %v5419, %v5420
      %v5422 = vrot.slane %v5420, 4
      %v5423 = vrot.slane %v5308, 5
      %v5424 = vsel %vm1995, %v5422, %v5423
      %v5425 = vrot.slane %v5309, 5
      %v5426 = vrot.slane %v5425, 4
      %v5427 = vrot.slane %v5310, 5
      %v5428 = vsel %vm1995, %v5426, %v5427
      %v5429 = vrot.slane %v5427, 4
      %v5430 = vrot.slane %v5311, 5
      %v5431 = vsel %vm1995, %v5429, %v5430
      %v5432 = vrot.slane %v5312, 5
      %v5433 = vrot.slane %v5432, 4
      %v5434 = vrot.slane %v5313, 5
      %v5435 = vsel %vm1995, %v5433, %v5434
      %v5436 = vrot.slane %v5434, 4
      %v5437 = vrot.slane %v5314, 5
      %v5438 = vsel %vm1995, %v5436, %v5437
      %v5439 = vrot.slane %v5315, 5
      %v5440 = vrot.slane %v5439, 4
      %v5441 = vrot.slane %v5316, 5
      %v5442 = vsel %vm1995, %v5440, %v5441
      %v5443 = vrot.slane %v5441, 4
      %v5444 = vrot.slane %v5317, 5
      %v5445 = vsel %vm1995, %v5443, %v5444
      %v5446 = vrot.slane %v5318, 5
      %v5447 = vrot.slane %v5446, 4
      %v5448 = vrot.slane %v5319, 5
      %v5449 = vsel %vm1995, %v5447, %v5448
      %v5450 = vrot.slane %v5448, 4
      %v5451 = vrot.slane %v5320, 5
      %v5452 = vsel %vm1995, %v5450, %v5451
      %v5453 = vrot.slane %v5321, 5
      %v5454 = vrot.slane %v5453, 4
      %v5455 = vrot.slane %v5322, 5
      %v5456 = vsel %vm1995, %v5454, %v5455
      %v5457 = vrot.slane %v5455, 4
      %v5458 = vrot.slane %v5323, 5
      %v5459 = vsel %vm1995, %v5457, %v5458
      %v5460 = vrot.slane %v5324, 5
      %v5461 = vrot.slane %v5460, 4
      %v5462 = vrot.slane %v5325, 5
      %v5463 = vsel %vm1995, %v5461, %v5462
      %v5464 = vrot.slane %v5462, 4
      %v5465 = vrot.slane %v5326, 5
      %v5466 = vsel %vm1995, %v5464, %v5465
      %v5467 = vrot.slane %v5327, 5
      %v5468 = vrot.slane %v5467, 4
      %v5469 = vrot.slane %v5328, 5
      %v5470 = vsel %vm1995, %v5468, %v5469
      %v5471 = vrot.slane %v5469, 4
      %v5472 = vrot.slane %v5329, 5
      %v5473 = vsel %vm1995, %v5471, %v5472
      %v5474 = vrot.slane %v5330, 5
      %v5475 = vrot.slane %v5474, 4
      %v5476 = vrot.slane %v5331, 5
      %v5477 = vsel %vm1995, %v5475, %v5476
      %v5478 = vrot.slane %v5476, 4
      %v5479 = vrot.slane %v5332, 5
      %v5480 = vsel %vm1995, %v5478, %v5479
      %v5481 = vrot.slane %v5333, 5
      %v5482 = vrot.slane %v5481, 4
      %v5483 = vrot.slane %v5334, 5
      %v5484 = vsel %vm1995, %v5482, %v5483
      %v5485 = vrot.slane %v5483, 4
      %v5486 = vrot.slane %v5335, 5
      %v5487 = vsel %vm1995, %v5485, %v5486
      %v5488 = vrot.slane %v5336, 5
      %v5489 = vrot.slane %v5488, 4
      %v5490 = vrot.slane %v5337, 5
      %v5491 = vsel %vm1995, %v5489, %v5490
      %v5492 = vrot.slane %v5490, 4
      %v5493 = vrot.slane %v5338, 5
      %v5494 = vsel %vm1995, %v5492, %v5493
      %v5495 = vrot.slane %v5339, 5
      %v5496 = vrot.slane %v5495, 4
      %v5497 = vrot.slane %v5340, 5
      %v5498 = vsel %vm1995, %v5496, %v5497
      %v5499 = vrot.slane %v5497, 4
      %v5500 = vrot.slane %v5341, 5
      %v5501 = vsel %vm1995, %v5499, %v5500
      %s5502 = scalar_lea.vmem %s5, 14
      %v5503 = vld [vmem:[%s5502] sm:$0x3]
      %v5504 = vunpack.c.l.b16 %v5393
      %v5505 = vunpack.c.l.b16 %v5396
      %v5506 = vunpack.c.l.b16 %v5400
      %v5507 = vunpack.c.l.b16 %v5403
      %v5508 = vunpack.c.l.b16 %v5407
      %v5509 = vunpack.c.l.b16 %v5410
      %v5510 = vunpack.c.l.b16 %v5414
      %v5511 = vunpack.c.l.b16 %v5417
      %v5512 = vunpack.c.l.b16 %v5421
      %v5513 = vunpack.c.l.b16 %v5424
      %v5514 = vunpack.c.l.b16 %v5428
      %v5515 = vunpack.c.l.b16 %v5431
      %v5516 = vunpack.c.l.b16 %v5435
      %v5517 = vunpack.c.l.b16 %v5438
      %v5518 = vunpack.c.l.b16 %v5442
      %v5519 = vunpack.c.l.b16 %v5445
      %v5520 = vunpack.c.l.b16 %v5449
      %v5521 = vunpack.c.l.b16 %v5452
      %v5522 = vunpack.c.l.b16 %v5456
      %v5523 = vunpack.c.l.b16 %v5459
      %v5524 = vunpack.c.l.b16 %v5463
      %v5525 = vunpack.c.l.b16 %v5466
      %v5526 = vunpack.c.l.b16 %v5470
      %v5527 = vunpack.c.l.b16 %v5473
      %v5528 = vunpack.c.l.b16 %v5477
      %v5529 = vunpack.c.l.b16 %v5480
      %v5530 = vunpack.c.l.b16 %v5484
      %v5531 = vunpack.c.l.b16 %v5487
      %v5532 = vunpack.c.l.b16 %v5491
      %v5533 = vunpack.c.l.b16 %v5494
      %v5534 = vunpack.c.l.b16 %v5498
      %v5535 = vunpack.c.l.b16 %v5501
      %v5536 = vpack.c.b16 %v5505, %v5504
      %v5537 = vpack.c.b16 %v5507, %v5506
      %v5538 = vpack.c.b16 %v5509, %v5508
      %v5539 = vpack.c.b16 %v5511, %v5510
      %v5540 = vpack.c.b16 %v5513, %v5512
      %v5541 = vpack.c.b16 %v5515, %v5514
      %v5542 = vpack.c.b16 %v5517, %v5516
      %v5543 = vpack.c.b16 %v5519, %v5518
      %v5544 = vpack.c.b16 %v5521, %v5520
      %v5545 = vpack.c.b16 %v5523, %v5522
      %v5546 = vpack.c.b16 %v5525, %v5524
      %v5547 = vpack.c.b16 %v5527, %v5526
      %v5548 = vpack.c.b16 %v5529, %v5528
      %v5549 = vpack.c.b16 %v5531, %v5530
      %v5550 = vpack.c.b16 %v5533, %v5532
      %v5551 = vpack.c.b16 %v5535, %v5534
      %v5553 = vsel %vm565, %v5536, 0
      %v5556 = vsel %vm565, %v5537, 0
      %v5559 = vsel %vm565, %v5538, 0
      %v5562 = vsel %vm565, %v5539, 0
      %v5565 = vsel %vm565, %v5540, 0
      %v5568 = vsel %vm565, %v5541, 0
      %v5571 = vsel %vm565, %v5542, 0
      %v5574 = vsel %vm565, %v5543, 0
      %v5577 = vsel %vm565, %v5544, 0
      %v5580 = vsel %vm565, %v5545, 0
      %v5583 = vsel %vm565, %v5546, 0
      %v5586 = vsel %vm565, %v5547, 0
      %v5589 = vsel %vm565, %v5548, 0
      %v5592 = vsel %vm565, %v5549, 0
      %v5595 = vsel %vm565, %v5550, 0
      %v5598 = vsel %vm565, %v5551, 0
      %v5601 = vsel %vm2204, %v5503, 0
      %5603 = vmatprep.subr.bf16.mxu0 0
      %5604 = vmatpush1.bf16.msra.mxu0 %v5601
      %5605 = vmatprep.subr.bf16.mxu0 0
      %5606 = vmatpush1.bf16.msra.mxu0 0
      %5607 = vmatprep.subr.bf16.mxu0 0
      %5608 = vmatpush1.bf16.msra.mxu0 0
      %5609 = vmatprep.subr.bf16.mxu0 0
      %5610 = vmatpush1.bf16.msra.mxu0 0
      %5611 = vmatprep.subr.bf16.mxu0 0
      %5612 = vmatpush1.bf16.msra.mxu0 0
      %5613 = vmatprep.subr.bf16.mxu0 0
      %5614 = vmatpush1.bf16.msra.mxu0 0
      %5615 = vmatprep.subr.bf16.mxu0 0
      %5616 = vmatpush1.bf16.msra.mxu0 0
      %5617 = vmatprep.subr.bf16.mxu0 0
      %5618 = vmatpush1.bf16.msra.mxu0 0
      %5619 = vmatprep.subr.bf16.mxu0 0
      %5620 = vmatpush1.bf16.msra.mxu0 0
      %5621 = vmatprep.subr.bf16.mxu0 0
      %5622 = vmatpush1.bf16.msra.mxu0 0
      %5623 = vmatprep.subr.bf16.mxu0 0
      %5624 = vmatpush1.bf16.msra.mxu0 0
      %5625 = vmatprep.subr.bf16.mxu0 0
      %5626 = vmatpush1.bf16.msra.mxu0 0
      %5627 = vmatprep.subr.bf16.mxu0 0
      %5628 = vmatpush1.bf16.msra.mxu0 0
      %5629 = vmatprep.subr.bf16.mxu0 0
      %5630 = vmatpush1.bf16.msra.mxu0 0
      %5631 = vmatprep.subr.bf16.mxu0 0
      %5632 = vmatpush1.bf16.msra.mxu0 0
      %5633 = vmatprep.subr.bf16.mxu0 0
      %5634 = vmatpush1.bf16.msra.mxu0 0
      %5635 = vmatprep.mubr.bf16.mxu0 0
      %5636 = vmatmul.mubr.bf16.gmra.mrb[0].mxu0 %v5553
      %v5637 = vpop.f32.mrb[0].mxu0
      %v5638 = vadd.f32 0.0, %v5637
      %v5639 = vpop.f32.mrb[0].mxu0
      %v5640 = vpop.f32.mrb[0].mxu0
      %v5641 = vadd.f32 0.0, %v5640
      %v5642 = vpop.f32.mrb[0].mxu0
      %5643 = vmatprep.mubr.bf16.mxu0 0
      %5644 = vmatmul.mubr.bf16.gmra.mrb[0].mxu0 %v5556
      %v5645 = vpop.f32.mrb[0].mxu0
      %v5646 = vadd.f32 0.0, %v5645
      %v5647 = vpop.f32.mrb[0].mxu0
      %v5648 = vpop.f32.mrb[0].mxu0
      %v5649 = vadd.f32 0.0, %v5648
      %v5650 = vpop.f32.mrb[0].mxu0
      %5651 = vmatprep.mubr.bf16.mxu0 0
      %5652 = vmatmul.mubr.bf16.gmra.mrb[0].mxu0 %v5559
      %v5653 = vpop.f32.mrb[0].mxu0
      %v5654 = vadd.f32 0.0, %v5653
      %v5655 = vpop.f32.mrb[0].mxu0
      %v5656 = vpop.f32.mrb[0].mxu0
      %v5657 = vadd.f32 0.0, %v5656
      %v5658 = vpop.f32.mrb[0].mxu0
      %5659 = vmatprep.mubr.bf16.mxu0 0
      %5660 = vmatmul.mubr.bf16.gmra.mrb[0].mxu0 %v5562
      %v5661 = vpop.f32.mrb[0].mxu0
      %v5662 = vadd.f32 0.0, %v5661
      %v5663 = vpop.f32.mrb[0].mxu0
      %v5664 = vpop.f32.mrb[0].mxu0
      %v5665 = vadd.f32 0.0, %v5664
      %v5666 = vpop.f32.mrb[0].mxu0
      %5667 = vmatprep.mubr.bf16.mxu0 0
      %5668 = vmatmul.mubr.bf16.gmra.mrb[0].mxu0 %v5565
      %v5669 = vpop.f32.mrb[0].mxu0
      %v5670 = vadd.f32 0.0, %v5669
      %v5671 = vpop.f32.mrb[0].mxu0
      %v5672 = vpop.f32.mrb[0].mxu0
      %v5673 = vadd.f32 0.0, %v5672
      %v5674 = vpop.f32.mrb[0].mxu0
      %5675 = vmatprep.mubr.bf16.mxu0 0
      %5676 = vmatmul.mubr.bf16.gmra.mrb[0].mxu0 %v5568
      %v5677 = vpop.f32.mrb[0].mxu0
      %v5678 = vadd.f32 0.0, %v5677
      %v5679 = vpop.f32.mrb[0].mxu0
      %v5680 = vpop.f32.mrb[0].mxu0
      %v5681 = vadd.f32 0.0, %v5680
      %v5682 = vpop.f32.mrb[0].mxu0
      %5683 = vmatprep.mubr.bf16.mxu0 0
      %5684 = vmatmul.mubr.bf16.gmra.mrb[0].mxu0 %v5571
      %v5685 = vpop.f32.mrb[0].mxu0
      %v5686 = vadd.f32 0.0, %v5685
      %v5687 = vpop.f32.mrb[0].mxu0
      %v5688 = vpop.f32.mrb[0].mxu0
      %v5689 = vadd.f32 0.0, %v5688
      %v5690 = vpop.f32.mrb[0].mxu0
      %5691 = vmatprep.mubr.bf16.mxu0 0
      %5692 = vmatmul.mubr.bf16.gmra.mrb[0].mxu0 %v5574
      %v5693 = vpop.f32.mrb[0].mxu0
      %v5694 = vadd.f32 0.0, %v5693
      %v5695 = vpop.f32.mrb[0].mxu0
      %v5696 = vpop.f32.mrb[0].mxu0
      %v5697 = vadd.f32 0.0, %v5696
      %v5698 = vpop.f32.mrb[0].mxu0
      %5699 = vmatprep.mubr.bf16.mxu0 0
      %5700 = vmatmul.mubr.bf16.gmra.mrb[0].mxu0 %v5577
      %v5701 = vpop.f32.mrb[0].mxu0
      %v5702 = vadd.f32 0.0, %v5701
      %v5703 = vpop.f32.mrb[0].mxu0
      %v5704 = vpop.f32.mrb[0].mxu0
      %v5705 = vadd.f32 0.0, %v5704
      %v5706 = vpop.f32.mrb[0].mxu0
      %5707 = vmatprep.mubr.bf16.mxu0 0
      %5708 = vmatmul.mubr.bf16.gmra.mrb[0].mxu0 %v5580
      %v5709 = vpop.f32.mrb[0].mxu0
      %v5710 = vadd.f32 0.0, %v5709
      %v5711 = vpop.f32.mrb[0].mxu0
      %v5712 = vpop.f32.mrb[0].mxu0
      %v5713 = vadd.f32 0.0, %v5712
      %v5714 = vpop.f32.mrb[0].mxu0
      %5715 = vmatprep.mubr.bf16.mxu0 0
      %5716 = vmatmul.mubr.bf16.gmra.mrb[0].mxu0 %v5583
      %v5717 = vpop.f32.mrb[0].mxu0
      %v5718 = vadd.f32 0.0, %v5717
      %v5719 = vpop.f32.mrb[0].mxu0
      %v5720 = vpop.f32.mrb[0].mxu0
      %v5721 = vadd.f32 0.0, %v5720
      %v5722 = vpop.f32.mrb[0].mxu0
      %5723 = vmatprep.mubr.bf16.mxu0 0
      %5724 = vmatmul.mubr.bf16.gmra.mrb[0].mxu0 %v5586
      %v5725 = vpop.f32.mrb[0].mxu0
      %v5726 = vadd.f32 0.0, %v5725
      %v5727 = vpop.f32.mrb[0].mxu0
      %v5728 = vpop.f32.mrb[0].mxu0
      %v5729 = vadd.f32 0.0, %v5728
      %v5730 = vpop.f32.mrb[0].mxu0
      %5731 = vmatprep.mubr.bf16.mxu0 0
      %5732 = vmatmul.mubr.bf16.gmra.mrb[0].mxu0 %v5589
      %v5733 = vpop.f32.mrb[0].mxu0
      %v5734 = vadd.f32 0.0, %v5733
      %v5735 = vpop.f32.mrb[0].mxu0
      %v5736 = vpop.f32.mrb[0].mxu0
      %v5737 = vadd.f32 0.0, %v5736
      %v5738 = vpop.f32.mrb[0].mxu0
      %5739 = vmatprep.mubr.bf16.mxu0 0
      %5740 = vmatmul.mubr.bf16.gmra.mrb[0].mxu0 %v5592
      %v5741 = vpop.f32.mrb[0].mxu0
      %v5742 = vadd.f32 0.0, %v5741
      %v5743 = vpop.f32.mrb[0].mxu0
      %v5744 = vpop.f32.mrb[0].mxu0
      %v5745 = vadd.f32 0.0, %v5744
      %v5746 = vpop.f32.mrb[0].mxu0
      %5747 = vmatprep.mubr.bf16.mxu0 0
      %5748 = vmatmul.mubr.bf16.gmra.mrb[0].mxu0 %v5595
      %v5749 = vpop.f32.mrb[0].mxu0
      %v5750 = vadd.f32 0.0, %v5749
      %v5751 = vpop.f32.mrb[0].mxu0
      %v5752 = vpop.f32.mrb[0].mxu0
      %v5753 = vadd.f32 0.0, %v5752
      %v5754 = vpop.f32.mrb[0].mxu0
      %5755 = vmatprep.mubr.bf16.mxu0 0
      %5756 = vmatmul.mubr.bf16.gmra.mrb[0].mxu0 %v5598
      %v5757 = vpop.f32.mrb[0].mxu0
      %v5758 = vadd.f32 0.0, %v5757
      %v5759 = vpop.f32.mrb[0].mxu0
      %v5760 = vpop.f32.mrb[0].mxu0
      %v5761 = vadd.f32 0.0, %v5760
      %v5762 = vpop.f32.mrb[0].mxu0
      %5763 = vdwg.mxu0
      %v5764 = vadd.f32 %v5262, %v5638
      %v5765 = vadd.f32 %v5263, %v5641
      %v5766 = vadd.f32 %v5264, %v5646
      %v5767 = vadd.f32 %v5265, %v5649
      %v5768 = vadd.f32 %v5266, %v5654
      %v5769 = vadd.f32 %v5267, %v5657
      %v5770 = vadd.f32 %v5268, %v5662
      %v5771 = vadd.f32 %v5269, %v5665
      %v5772 = vadd.f32 %v5270, %v5670
      %v5773 = vadd.f32 %v5271, %v5673
      %v5774 = vadd.f32 %v5272, %v5678
      %v5775 = vadd.f32 %v5273, %v5681
      %v5776 = vadd.f32 %v5274, %v5686
      %v5777 = vadd.f32 %v5275, %v5689
      %v5778 = vadd.f32 %v5276, %v5694
      %v5779 = vadd.f32 %v5277, %v5697
      %v5780 = vadd.f32 %v5278, %v5702
      %v5781 = vadd.f32 %v5279, %v5705
      %v5782 = vadd.f32 %v5280, %v5710
      %v5783 = vadd.f32 %v5281, %v5713
      %v5784 = vadd.f32 %v5282, %v5718
      %v5785 = vadd.f32 %v5283, %v5721
      %v5786 = vadd.f32 %v5284, %v5726
      %v5787 = vadd.f32 %v5285, %v5729
      %v5788 = vadd.f32 %v5286, %v5734
      %v5789 = vadd.f32 %v5287, %v5737
      %v5790 = vadd.f32 %v5288, %v5742
      %v5791 = vadd.f32 %v5289, %v5745
      %v5792 = vadd.f32 %v5290, %v5750
      %v5793 = vadd.f32 %v5291, %v5753
      %v5794 = vadd.f32 %v5292, %v5758
      %v5795 = vadd.f32 %v5293, %v5761
      %v5796 = vld [vmem:[%s4935] sm:$0xc]
      %v5797 = vld [vmem:[%s4935 + $0x8] sm:$0x3]
      %v5798 = vld [vmem:[%s4935 + $0xc] sm:$0xc]
      %v5799 = vld [vmem:[%s4935 + $0x14] sm:$0x3]
      %v5800 = vld [vmem:[%s4935 + $0x18] sm:$0xc]
      %v5801 = vld [vmem:[%s4935 + $0x20] sm:$0x3]
      %v5802 = vld [vmem:[%s4935 + $0x24] sm:$0xc]
      %v5803 = vld [vmem:[%s4935 + $0x2c] sm:$0x3]
      %v5804 = vld [vmem:[%s4935 + $0x30] sm:$0xc]
      %v5805 = vld [vmem:[%s4935 + $0x38] sm:$0x3]
      %v5806 = vld [vmem:[%s4935 + $0x3c] sm:$0xc]
      %v5807 = vld [vmem:[%s4935 + $0x44] sm:$0x3]
      %v5808 = vld [vmem:[%s4935 + $0x48] sm:$0xc]
      %v5809 = vld [vmem:[%s4935 + $0x50] sm:$0x3]
      %v5810 = vld [vmem:[%s4935 + $0x54] sm:$0xc]
      %v5811 = vld [vmem:[%s4935 + $0x5c] sm:$0x3]
      %v5812 = vld [vmem:[%s4935 + $0x60] sm:$0xc]
      %v5813 = vld [vmem:[%s4935 + $0x68] sm:$0x3]
      %v5814 = vld [vmem:[%s4935 + $0x6c] sm:$0xc]
      %v5815 = vld [vmem:[%s4935 + $0x74] sm:$0x3]
      %v5816 = vld [vmem:[%s4935 + $0x78] sm:$0xc]
      %v5817 = vld [vmem:[%s4935 + $0x80] sm:$0x3]
      %v5818 = vld [vmem:[%s4935 + $0x84] sm:$0xc]
      %v5819 = vld [vmem:[%s4935 + $0x8c] sm:$0x3]
      %v5820 = vld [vmem:[%s4935 + $0x90] sm:$0xc]
      %v5821 = vld [vmem:[%s4935 + $0x98] sm:$0x3]
      %v5822 = vld [vmem:[%s4935 + $0x9c] sm:$0xc]
      %v5823 = vld [vmem:[%s4935 + $0xa4] sm:$0x3]
      %v5824 = vld [vmem:[%s4935 + $0xa8] sm:$0xc]
      %v5825 = vld [vmem:[%s4935 + $0xb0] sm:$0x3]
      %v5826 = vld [vmem:[%s4935 + $0xb4] sm:$0xc]
      %v5827 = vld [vmem:[%s4935 + $0xbc] sm:$0x3]
      %v5860 = vrot.slane %v5796, 6
      %v5861 = vrot.slane %v5860, 4
      %v5862 = vrot.slane %v5295, 6
      %v5863 = vsel %vm3198, %v5861, %v5862
      %v5864 = vrot.slane %v5862, 4
      %v5865 = vrot.slane %v5797, 6
      %v5866 = vsel %vm3198, %v5864, %v5865
      %v5867 = vrot.slane %v5798, 6
      %v5868 = vrot.slane %v5867, 4
      %v5869 = vrot.slane %v5298, 6
      %v5870 = vsel %vm3198, %v5868, %v5869
      %v5871 = vrot.slane %v5869, 4
      %v5872 = vrot.slane %v5799, 6
      %v5873 = vsel %vm3198, %v5871, %v5872
      %v5874 = vrot.slane %v5800, 6
      %v5875 = vrot.slane %v5874, 4
      %v5876 = vrot.slane %v5301, 6
      %v5877 = vsel %vm3198, %v5875, %v5876
      %v5878 = vrot.slane %v5876, 4
      %v5879 = vrot.slane %v5801, 6
      %v5880 = vsel %vm3198, %v5878, %v5879
      %v5881 = vrot.slane %v5802, 6
      %v5882 = vrot.slane %v5881, 4
      %v5883 = vrot.slane %v5304, 6
      %v5884 = vsel %vm3198, %v5882, %v5883
      %v5885 = vrot.slane %v5883, 4
      %v5886 = vrot.slane %v5803, 6
      %v5887 = vsel %vm3198, %v5885, %v5886
      %v5888 = vrot.slane %v5804, 6
      %v5889 = vrot.slane %v5888, 4
      %v5890 = vrot.slane %v5307, 6
      %v5891 = vsel %vm3198, %v5889, %v5890
      %v5892 = vrot.slane %v5890, 4
      %v5893 = vrot.slane %v5805, 6
      %v5894 = vsel %vm3198, %v5892, %v5893
      %v5895 = vrot.slane %v5806, 6
      %v5896 = vrot.slane %v5895, 4
      %v5897 = vrot.slane %v5310, 6
      %v5898 = vsel %vm3198, %v5896, %v5897
      %v5899 = vrot.slane %v5897, 4
      %v5900 = vrot.slane %v5807, 6
      %v5901 = vsel %vm3198, %v5899, %v5900
      %v5902 = vrot.slane %v5808, 6
      %v5903 = vrot.slane %v5902, 4
      %v5904 = vrot.slane %v5313, 6
      %v5905 = vsel %vm3198, %v5903, %v5904
      %v5906 = vrot.slane %v5904, 4
      %v5907 = vrot.slane %v5809, 6
      %v5908 = vsel %vm3198, %v5906, %v5907
      %v5909 = vrot.slane %v5810, 6
      %v5910 = vrot.slane %v5909, 4
      %v5911 = vrot.slane %v5316, 6
      %v5912 = vsel %vm3198, %v5910, %v5911
      %v5913 = vrot.slane %v5911, 4
      %v5914 = vrot.slane %v5811, 6
      %v5915 = vsel %vm3198, %v5913, %v5914
      %v5916 = vrot.slane %v5812, 6
      %v5917 = vrot.slane %v5916, 4
      %v5918 = vrot.slane %v5319, 6
      %v5919 = vsel %vm3198, %v5917, %v5918
      %v5920 = vrot.slane %v5918, 4
      %v5921 = vrot.slane %v5813, 6
      %v5922 = vsel %vm3198, %v5920, %v5921
      %v5923 = vrot.slane %v5814, 6
      %v5924 = vrot.slane %v5923, 4
      %v5925 = vrot.slane %v5322, 6
      %v5926 = vsel %vm3198, %v5924, %v5925
      %v5927 = vrot.slane %v5925, 4
      %v5928 = vrot.slane %v5815, 6
      %v5929 = vsel %vm3198, %v5927, %v5928
      %v5930 = vrot.slane %v5816, 6
      %v5931 = vrot.slane %v5930, 4
      %v5932 = vrot.slane %v5325, 6
      %v5933 = vsel %vm3198, %v5931, %v5932
      %v5934 = vrot.slane %v5932, 4
      %v5935 = vrot.slane %v5817, 6
      %v5936 = vsel %vm3198, %v5934, %v5935
      %v5937 = vrot.slane %v5818, 6
      %v5938 = vrot.slane %v5937, 4
      %v5939 = vrot.slane %v5328, 6
      %v5940 = vsel %vm3198, %v5938, %v5939
      %v5941 = vrot.slane %v5939, 4
      %v5942 = vrot.slane %v5819, 6
      %v5943 = vsel %vm3198, %v5941, %v5942
      %v5944 = vrot.slane %v5820, 6
      %v5945 = vrot.slane %v5944, 4
      %v5946 = vrot.slane %v5331, 6
      %v5947 = vsel %vm3198, %v5945, %v5946
      %v5948 = vrot.slane %v5946, 4
      %v5949 = vrot.slane %v5821, 6
      %v5950 = vsel %vm3198, %v5948, %v5949
      %v5951 = vrot.slane %v5822, 6
      %v5952 = vrot.slane %v5951, 4
      %v5953 = vrot.slane %v5334, 6
      %v5954 = vsel %vm3198, %v5952, %v5953
      %v5955 = vrot.slane %v5953, 4
      %v5956 = vrot.slane %v5823, 6
      %v5957 = vsel %vm3198, %v5955, %v5956
      %v5958 = vrot.slane %v5824, 6
      %v5959 = vrot.slane %v5958, 4
      %v5960 = vrot.slane %v5337, 6
      %v5961 = vsel %vm3198, %v5959, %v5960
      %v5962 = vrot.slane %v5960, 4
      %v5963 = vrot.slane %v5825, 6
      %v5964 = vsel %vm3198, %v5962, %v5963
      %v5965 = vrot.slane %v5826, 6
      %v5966 = vrot.slane %v5965, 4
      %v5967 = vrot.slane %v5340, 6
      %v5968 = vsel %vm3198, %v5966, %v5967
      %v5969 = vrot.slane %v5967, 4
      %v5970 = vrot.slane %v5827, 6
      %v5971 = vsel %vm3198, %v5969, %v5970
      %s5972 = scalar_lea.vmem %s5, 16
      %v5973 = vld [vmem:[%s5972] sm:$0x3]
      %v5974 = vunpack.c.l.b16 %v5863
      %v5975 = vunpack.c.l.b16 %v5866
      %v5976 = vunpack.c.l.b16 %v5870
      %v5977 = vunpack.c.l.b16 %v5873
      %v5978 = vunpack.c.l.b16 %v5877
      %v5979 = vunpack.c.l.b16 %v5880
      %v5980 = vunpack.c.l.b16 %v5884
      %v5981 = vunpack.c.l.b16 %v5887
      %v5982 = vunpack.c.l.b16 %v5891
      %v5983 = vunpack.c.l.b16 %v5894
      %v5984 = vunpack.c.l.b16 %v5898
      %v5985 = vunpack.c.l.b16 %v5901
      %v5986 = vunpack.c.l.b16 %v5905
      %v5987 = vunpack.c.l.b16 %v5908
      %v5988 = vunpack.c.l.b16 %v5912
      %v5989 = vunpack.c.l.b16 %v5915
      %v5990 = vunpack.c.l.b16 %v5919
      %v5991 = vunpack.c.l.b16 %v5922
      %v5992 = vunpack.c.l.b16 %v5926
      %v5993 = vunpack.c.l.b16 %v5929
      %v5994 = vunpack.c.l.b16 %v5933
      %v5995 = vunpack.c.l.b16 %v5936
      %v5996 = vunpack.c.l.b16 %v5940
      %v5997 = vunpack.c.l.b16 %v5943
      %v5998 = vunpack.c.l.b16 %v5947
      %v5999 = vunpack.c.l.b16 %v5950
      %v6000 = vunpack.c.l.b16 %v5954
      %v6001 = vunpack.c.l.b16 %v5957
      %v6002 = vunpack.c.l.b16 %v5961
      %v6003 = vunpack.c.l.b16 %v5964
      %v6004 = vunpack.c.l.b16 %v5968
      %v6005 = vunpack.c.l.b16 %v5971
      %v6006 = vpack.c.b16 %v5975, %v5974
      %v6007 = vpack.c.b16 %v5977, %v5976
      %v6008 = vpack.c.b16 %v5979, %v5978
      %v6009 = vpack.c.b16 %v5981, %v5980
      %v6010 = vpack.c.b16 %v5983, %v5982
      %v6011 = vpack.c.b16 %v5985, %v5984
      %v6012 = vpack.c.b16 %v5987, %v5986
      %v6013 = vpack.c.b16 %v5989, %v5988
      %v6014 = vpack.c.b16 %v5991, %v5990
      %v6015 = vpack.c.b16 %v5993, %v5992
      %v6016 = vpack.c.b16 %v5995, %v5994
      %v6017 = vpack.c.b16 %v5997, %v5996
      %v6018 = vpack.c.b16 %v5999, %v5998
      %v6019 = vpack.c.b16 %v6001, %v6000
      %v6020 = vpack.c.b16 %v6003, %v6002
      %v6021 = vpack.c.b16 %v6005, %v6004
      %v6023 = vsel %vm565, %v6006, 0
      %v6026 = vsel %vm565, %v6007, 0
      %v6029 = vsel %vm565, %v6008, 0
      %v6032 = vsel %vm565, %v6009, 0
      %v6035 = vsel %vm565, %v6010, 0
      %v6038 = vsel %vm565, %v6011, 0
      %v6041 = vsel %vm565, %v6012, 0
      %v6044 = vsel %vm565, %v6013, 0
      %v6047 = vsel %vm565, %v6014, 0
      %v6050 = vsel %vm565, %v6015, 0
      %v6053 = vsel %vm565, %v6016, 0
      %v6056 = vsel %vm565, %v6017, 0
      %v6059 = vsel %vm565, %v6018, 0
      %v6062 = vsel %vm565, %v6019, 0
      %v6065 = vsel %vm565, %v6020, 0
      %v6068 = vsel %vm565, %v6021, 0
      %v6071 = vsel %vm2204, %v5973, 0
      %6073 = vmatprep.subr.bf16.mxu0 0
      %6074 = vmatpush1.bf16.msra.mxu0 %v6071
      %6075 = vmatprep.subr.bf16.mxu0 0
      %6076 = vmatpush1.bf16.msra.mxu0 0
      %6077 = vmatprep.subr.bf16.mxu0 0
      %6078 = vmatpush1.bf16.msra.mxu0 0
      %6079 = vmatprep.subr.bf16.mxu0 0
      %6080 = vmatpush1.bf16.msra.mxu0 0
      %6081 = vmatprep.subr.bf16.mxu0 0
      %6082 = vmatpush1.bf16.msra.mxu0 0
      %6083 = vmatprep.subr.bf16.mxu0 0
      %6084 = vmatpush1.bf16.msra.mxu0 0
      %6085 = vmatprep.subr.bf16.mxu0 0
      %6086 = vmatpush1.bf16.msra.mxu0 0
      %6087 = vmatprep.subr.bf16.mxu0 0
      %6088 = vmatpush1.bf16.msra.mxu0 0
      %6089 = vmatprep.subr.bf16.mxu0 0
      %6090 = vmatpush1.bf16.msra.mxu0 0
      %6091 = vmatprep.subr.bf16.mxu0 0
      %6092 = vmatpush1.bf16.msra.mxu0 0
      %6093 = vmatprep.subr.bf16.mxu0 0
      %6094 = vmatpush1.bf16.msra.mxu0 0
      %6095 = vmatprep.subr.bf16.mxu0 0
      %6096 = vmatpush1.bf16.msra.mxu0 0
      %6097 = vmatprep.subr.bf16.mxu0 0
      %6098 = vmatpush1.bf16.msra.mxu0 0
      %6099 = vmatprep.subr.bf16.mxu0 0
      %6100 = vmatpush1.bf16.msra.mxu0 0
      %6101 = vmatprep.subr.bf16.mxu0 0
      %6102 = vmatpush1.bf16.msra.mxu0 0
      %6103 = vmatprep.subr.bf16.mxu0 0
      %6104 = vmatpush1.bf16.msra.mxu0 0
      %6105 = vmatprep.mubr.bf16.mxu0 0
      %6106 = vmatmul.mubr.bf16.gmra.mrb[0].mxu0 %v6023
      %v6107 = vpop.f32.mrb[0].mxu0
      %v6108 = vadd.f32 0.0, %v6107
      %v6109 = vpop.f32.mrb[0].mxu0
      %v6110 = vpop.f32.mrb[0].mxu0
      %v6111 = vadd.f32 0.0, %v6110
      %v6112 = vpop.f32.mrb[0].mxu0
      %6113 = vmatprep.mubr.bf16.mxu0 0
      %6114 = vmatmul.mubr.bf16.gmra.mrb[0].mxu0 %v6026
      %v6115 = vpop.f32.mrb[0].mxu0
      %v6116 = vadd.f32 0.0, %v6115
      %v6117 = vpop.f32.mrb[0].mxu0
      %v6118 = vpop.f32.mrb[0].mxu0
      %v6119 = vadd.f32 0.0, %v6118
      %v6120 = vpop.f32.mrb[0].mxu0
      %6121 = vmatprep.mubr.bf16.mxu0 0
      %6122 = vmatmul.mubr.bf16.gmra.mrb[0].mxu0 %v6029
      %v6123 = vpop.f32.mrb[0].mxu0
      %v6124 = vadd.f32 0.0, %v6123
      %v6125 = vpop.f32.mrb[0].mxu0
      %v6126 = vpop.f32.mrb[0].mxu0
      %v6127 = vadd.f32 0.0, %v6126
      %v6128 = vpop.f32.mrb[0].mxu0
      %6129 = vmatprep.mubr.bf16.mxu0 0
      %6130 = vmatmul.mubr.bf16.gmra.mrb[0].mxu0 %v6032
      %v6131 = vpop.f32.mrb[0].mxu0
      %v6132 = vadd.f32 0.0, %v6131
      %v6133 = vpop.f32.mrb[0].mxu0
      %v6134 = vpop.f32.mrb[0].mxu0
      %v6135 = vadd.f32 0.0, %v6134
      %v6136 = vpop.f32.mrb[0].mxu0
      %6137 = vmatprep.mubr.bf16.mxu0 0
      %6138 = vmatmul.mubr.bf16.gmra.mrb[0].mxu0 %v6035
      %v6139 = vpop.f32.mrb[0].mxu0
      %v6140 = vadd.f32 0.0, %v6139
      %v6141 = vpop.f32.mrb[0].mxu0
      %v6142 = vpop.f32.mrb[0].mxu0
      %v6143 = vadd.f32 0.0, %v6142
      %v6144 = vpop.f32.mrb[0].mxu0
      %6145 = vmatprep.mubr.bf16.mxu0 0
      %6146 = vmatmul.mubr.bf16.gmra.mrb[0].mxu0 %v6038
      %v6147 = vpop.f32.mrb[0].mxu0
      %v6148 = vadd.f32 0.0, %v6147
      %v6149 = vpop.f32.mrb[0].mxu0
      %v6150 = vpop.f32.mrb[0].mxu0
      %v6151 = vadd.f32 0.0, %v6150
      %v6152 = vpop.f32.mrb[0].mxu0
      %6153 = vmatprep.mubr.bf16.mxu0 0
      %6154 = vmatmul.mubr.bf16.gmra.mrb[0].mxu0 %v6041
      %v6155 = vpop.f32.mrb[0].mxu0
      %v6156 = vadd.f32 0.0, %v6155
      %v6157 = vpop.f32.mrb[0].mxu0
      %v6158 = vpop.f32.mrb[0].mxu0
      %v6159 = vadd.f32 0.0, %v6158
      %v6160 = vpop.f32.mrb[0].mxu0
      %6161 = vmatprep.mubr.bf16.mxu0 0
      %6162 = vmatmul.mubr.bf16.gmra.mrb[0].mxu0 %v6044
      %v6163 = vpop.f32.mrb[0].mxu0
      %v6164 = vadd.f32 0.0, %v6163
      %v6165 = vpop.f32.mrb[0].mxu0
      %v6166 = vpop.f32.mrb[0].mxu0
      %v6167 = vadd.f32 0.0, %v6166
      %v6168 = vpop.f32.mrb[0].mxu0
      %6169 = vmatprep.mubr.bf16.mxu0 0
      %6170 = vmatmul.mubr.bf16.gmra.mrb[0].mxu0 %v6047
      %v6171 = vpop.f32.mrb[0].mxu0
      %v6172 = vadd.f32 0.0, %v6171
      %v6173 = vpop.f32.mrb[0].mxu0
      %v6174 = vpop.f32.mrb[0].mxu0
      %v6175 = vadd.f32 0.0, %v6174
      %v6176 = vpop.f32.mrb[0].mxu0
      %6177 = vmatprep.mubr.bf16.mxu0 0
      %6178 = vmatmul.mubr.bf16.gmra.mrb[0].mxu0 %v6050
      %v6179 = vpop.f32.mrb[0].mxu0
      %v6180 = vadd.f32 0.0, %v6179
      %v6181 = vpop.f32.mrb[0].mxu0
      %v6182 = vpop.f32.mrb[0].mxu0
      %v6183 = vadd.f32 0.0, %v6182
      %v6184 = vpop.f32.mrb[0].mxu0
      %6185 = vmatprep.mubr.bf16.mxu0 0
      %6186 = vmatmul.mubr.bf16.gmra.mrb[0].mxu0 %v6053
      %v6187 = vpop.f32.mrb[0].mxu0
      %v6188 = vadd.f32 0.0, %v6187
      %v6189 = vpop.f32.mrb[0].mxu0
      %v6190 = vpop.f32.mrb[0].mxu0
      %v6191 = vadd.f32 0.0, %v6190
      %v6192 = vpop.f32.mrb[0].mxu0
      %6193 = vmatprep.mubr.bf16.mxu0 0
      %6194 = vmatmul.mubr.bf16.gmra.mrb[0].mxu0 %v6056
      %v6195 = vpop.f32.mrb[0].mxu0
      %v6196 = vadd.f32 0.0, %v6195
      %v6197 = vpop.f32.mrb[0].mxu0
      %v6198 = vpop.f32.mrb[0].mxu0
      %v6199 = vadd.f32 0.0, %v6198
      %v6200 = vpop.f32.mrb[0].mxu0
      %6201 = vmatprep.mubr.bf16.mxu0 0
      %6202 = vmatmul.mubr.bf16.gmra.mrb[0].mxu0 %v6059
      %v6203 = vpop.f32.mrb[0].mxu0
      %v6204 = vadd.f32 0.0, %v6203
      %v6205 = vpop.f32.mrb[0].mxu0
      %v6206 = vpop.f32.mrb[0].mxu0
      %v6207 = vadd.f32 0.0, %v6206
      %v6208 = vpop.f32.mrb[0].mxu0
      %6209 = vmatprep.mubr.bf16.mxu0 0
      %6210 = vmatmul.mubr.bf16.gmra.mrb[0].mxu0 %v6062
      %v6211 = vpop.f32.mrb[0].mxu0
      %v6212 = vadd.f32 0.0, %v6211
      %v6213 = vpop.f32.mrb[0].mxu0
      %v6214 = vpop.f32.mrb[0].mxu0
      %v6215 = vadd.f32 0.0, %v6214
      %v6216 = vpop.f32.mrb[0].mxu0
      %6217 = vmatprep.mubr.bf16.mxu0 0
      %6218 = vmatmul.mubr.bf16.gmra.mrb[0].mxu0 %v6065
      %v6219 = vpop.f32.mrb[0].mxu0
      %v6220 = vadd.f32 0.0, %v6219
      %v6221 = vpop.f32.mrb[0].mxu0
      %v6222 = vpop.f32.mrb[0].mxu0
      %v6223 = vadd.f32 0.0, %v6222
      %v6224 = vpop.f32.mrb[0].mxu0
      %6225 = vmatprep.mubr.bf16.mxu0 0
      %6226 = vmatmul.mubr.bf16.gmra.mrb[0].mxu0 %v6068
      %v6227 = vpop.f32.mrb[0].mxu0
      %v6228 = vadd.f32 0.0, %v6227
      %v6229 = vpop.f32.mrb[0].mxu0
      %v6230 = vpop.f32.mrb[0].mxu0
      %v6231 = vadd.f32 0.0, %v6230
      %v6232 = vpop.f32.mrb[0].mxu0
      %6233 = vdwg.mxu0
      %v6234 = vadd.f32 %v5764, %v6108
      %v6235 = vadd.f32 %v5765, %v6111
      %v6236 = vadd.f32 %v5766, %v6116
      %v6237 = vadd.f32 %v5767, %v6119
      %v6238 = vadd.f32 %v5768, %v6124
      %v6239 = vadd.f32 %v5769, %v6127
      %v6240 = vadd.f32 %v5770, %v6132
      %v6241 = vadd.f32 %v5771, %v6135
      %v6242 = vadd.f32 %v5772, %v6140
      %v6243 = vadd.f32 %v5773, %v6143
      %v6244 = vadd.f32 %v5774, %v6148
      %v6245 = vadd.f32 %v5775, %v6151
      %v6246 = vadd.f32 %v5776, %v6156
      %v6247 = vadd.f32 %v5777, %v6159
      %v6248 = vadd.f32 %v5778, %v6164
      %v6249 = vadd.f32 %v5779, %v6167
      %v6250 = vadd.f32 %v5780, %v6172
      %v6251 = vadd.f32 %v5781, %v6175
      %v6252 = vadd.f32 %v5782, %v6180
      %v6253 = vadd.f32 %v5783, %v6183
      %v6254 = vadd.f32 %v5784, %v6188
      %v6255 = vadd.f32 %v5785, %v6191
      %v6256 = vadd.f32 %v5786, %v6196
      %v6257 = vadd.f32 %v5787, %v6199
      %v6258 = vadd.f32 %v5788, %v6204
      %v6259 = vadd.f32 %v5789, %v6207
      %v6260 = vadd.f32 %v5790, %v6212
      %v6261 = vadd.f32 %v5791, %v6215
      %v6262 = vadd.f32 %v5792, %v6220
      %v6263 = vadd.f32 %v5793, %v6223
      %v6264 = vadd.f32 %v5794, %v6228
      %v6265 = vadd.f32 %v5795, %v6231
      %v6266 = vld [vmem:[%s7 + $0x2] sm:$0x1]
      %v6267 = vlaneseq
      %v6268 = vshrl.u32 %v6267, 7
      %v6269 = vsub.s32 0, %v6268
      %v6270 = vrot.slane %v6266, %v6269
      %v6271 = vadd.f32 %v6234, %v6270
      %v6272 = vadd.f32 %v6235, %v6270
      %v6273 = vadd.f32 %v6236, %v6270
      %v6274 = vadd.f32 %v6237, %v6270
      %v6275 = vadd.f32 %v6238, %v6270
      %v6276 = vadd.f32 %v6239, %v6270
      %v6277 = vadd.f32 %v6240, %v6270
      %v6278 = vadd.f32 %v6241, %v6270
      %v6279 = vadd.f32 %v6242, %v6270
      %v6280 = vadd.f32 %v6243, %v6270
      %v6281 = vadd.f32 %v6244, %v6270
      %v6282 = vadd.f32 %v6245, %v6270
      %v6283 = vadd.f32 %v6246, %v6270
      %v6284 = vadd.f32 %v6247, %v6270
      %v6285 = vadd.f32 %v6248, %v6270
      %v6286 = vadd.f32 %v6249, %v6270
      %v6287 = vadd.f32 %v6250, %v6270
      %v6288 = vadd.f32 %v6251, %v6270
      %v6289 = vadd.f32 %v6252, %v6270
      %v6290 = vadd.f32 %v6253, %v6270
      %v6291 = vadd.f32 %v6254, %v6270
      %v6292 = vadd.f32 %v6255, %v6270
      %v6293 = vadd.f32 %v6256, %v6270
      %v6294 = vadd.f32 %v6257, %v6270
      %v6295 = vadd.f32 %v6258, %v6270
      %v6296 = vadd.f32 %v6259, %v6270
      %v6297 = vadd.f32 %v6260, %v6270
      %v6298 = vadd.f32 %v6261, %v6270
      %v6299 = vadd.f32 %v6262, %v6270
      %v6300 = vadd.f32 %v6263, %v6270
      %v6301 = vadd.f32 %v6264, %v6270
      %v6302 = vadd.f32 %v6265, %v6270
      %v6305 = vcombine.high %v1403, %v1403
      %v6307 = vunpack.c.l.s4 1966171168
      %v6308 = vunpack.c.0.s8 %v6307
      %v6309 = vlaneseq
      %v6310 = vshrl.u32 %v6309, 7
      %v6311 = vsub.s32 %v6308, %v6310
      %v6312 = vrot.slane %v1403, %v6311
      %v6314 = vunpack.c.l.s4 1966171168
      %v6315 = vunpack.c.0.s8 %v6314
      %v6316 = vlaneseq
      %v6317 = vshrl.u32 %v6316, 7
      %v6318 = vsub.s32 %v6315, %v6317
      %v6319 = vrot.slane %v6305, %v6318
      %v6320 = vcombine.high %v6312, %v6312
      %v6321 = vcombine.high %v6319, %v6319
      %v6323 = vunpack.c.l.s4 1966171168
      %v6324 = vunpack.c.0.s8 %v6323
      %v6325 = vlaneseq
      %v6326 = vshrl.u32 %v6325, 7
      %v6327 = vsub.s32 %v6324, %v6326
      %v6328 = vrot.slane %v6312, %v6327
      %v6330 = vunpack.c.l.s4 1966171168
      %v6331 = vunpack.c.0.s8 %v6330
      %v6332 = vlaneseq
      %v6333 = vshrl.u32 %v6332, 7
      %v6334 = vsub.s32 %v6331, %v6333
      %v6335 = vrot.slane %v6319, %v6334
      %v6337 = vunpack.c.l.s4 1966171168
      %v6338 = vunpack.c.0.s8 %v6337
      %v6339 = vlaneseq
      %v6340 = vshrl.u32 %v6339, 7
      %v6341 = vsub.s32 %v6338, %v6340
      %v6342 = vrot.slane %v6320, %v6341
      %v6344 = vunpack.c.l.s4 1966171168
      %v6345 = vunpack.c.0.s8 %v6344
      %v6346 = vlaneseq
      %v6347 = vshrl.u32 %v6346, 7
      %v6348 = vsub.s32 %v6345, %v6347
      %v6349 = vrot.slane %v6321, %v6348
      %v6350 = vcombine.high %v6328, %v6328
      %v6351 = vcombine.high %v6335, %v6335
      %v6352 = vcombine.high %v6342, %v6342
      %v6353 = vcombine.high %v6349, %v6349
      %v6354 = vcombine.high %v1404, %v1404
      %v6356 = vunpack.c.l.s4 1966171168
      %v6357 = vunpack.c.0.s8 %v6356
      %v6358 = vlaneseq
      %v6359 = vshrl.u32 %v6358, 7
      %v6360 = vsub.s32 %v6357, %v6359
      %v6361 = vrot.slane %v1404, %v6360
      %v6363 = vunpack.c.l.s4 1966171168
      %v6364 = vunpack.c.0.s8 %v6363
      %v6365 = vlaneseq
      %v6366 = vshrl.u32 %v6365, 7
      %v6367 = vsub.s32 %v6364, %v6366
      %v6368 = vrot.slane %v6354, %v6367
      %v6369 = vcombine.high %v6361, %v6361
      %v6370 = vcombine.high %v6368, %v6368
      %v6372 = vunpack.c.l.s4 1966171168
      %v6373 = vunpack.c.0.s8 %v6372
      %v6374 = vlaneseq
      %v6375 = vshrl.u32 %v6374, 7
      %v6376 = vsub.s32 %v6373, %v6375
      %v6377 = vrot.slane %v6361, %v6376
      %v6379 = vunpack.c.l.s4 1966171168
      %v6380 = vunpack.c.0.s8 %v6379
      %v6381 = vlaneseq
      %v6382 = vshrl.u32 %v6381, 7
      %v6383 = vsub.s32 %v6380, %v6382
      %v6384 = vrot.slane %v6368, %v6383
      %v6386 = vunpack.c.l.s4 1966171168
      %v6387 = vunpack.c.0.s8 %v6386
      %v6388 = vlaneseq
      %v6389 = vshrl.u32 %v6388, 7
      %v6390 = vsub.s32 %v6387, %v6389
      %v6391 = vrot.slane %v6369, %v6390
      %v6393 = vunpack.c.l.s4 1966171168
      %v6394 = vunpack.c.0.s8 %v6393
      %v6395 = vlaneseq
      %v6396 = vshrl.u32 %v6395, 7
      %v6397 = vsub.s32 %v6394, %v6396
      %v6398 = vrot.slane %v6370, %v6397
      %v6399 = vcombine.high %v6377, %v6377
      %v6400 = vcombine.high %v6384, %v6384
      %v6401 = vcombine.high %v6391, %v6391
      %v6402 = vcombine.high %v6398, %v6398
      %v6403 = vlaneseq
      %v6404 = vshrl.u32 %v6403, 7
      %v6405 = vsub.s32 0, %v6404
      %v6406 = vrot.slane %v6328, %v6405
      %v6407 = vlaneseq
      %v6408 = vshrl.u32 %v6407, 7
      %v6409 = vsub.s32 0, %v6408
      %v6410 = vrot.slane %v6342, %v6409
      %v6411 = vlaneseq
      %v6412 = vshrl.u32 %v6411, 7
      %v6413 = vsub.s32 0, %v6412
      %v6414 = vrot.slane %v6350, %v6413
      %v6415 = vlaneseq
      %v6416 = vshrl.u32 %v6415, 7
      %v6417 = vsub.s32 0, %v6416
      %v6418 = vrot.slane %v6352, %v6417
      %v6419 = vlaneseq
      %v6420 = vshrl.u32 %v6419, 7
      %v6421 = vsub.s32 0, %v6420
      %v6422 = vrot.slane %v6335, %v6421
      %v6423 = vlaneseq
      %v6424 = vshrl.u32 %v6423, 7
      %v6425 = vsub.s32 0, %v6424
      %v6426 = vrot.slane %v6349, %v6425
      %v6427 = vlaneseq
      %v6428 = vshrl.u32 %v6427, 7
      %v6429 = vsub.s32 0, %v6428
      %v6430 = vrot.slane %v6351, %v6429
      %v6431 = vlaneseq
      %v6432 = vshrl.u32 %v6431, 7
      %v6433 = vsub.s32 0, %v6432
      %v6434 = vrot.slane %v6353, %v6433
      %v6435 = vlaneseq
      %v6436 = vshrl.u32 %v6435, 7
      %v6437 = vsub.s32 0, %v6436
      %v6438 = vrot.slane %v6377, %v6437
      %v6439 = vlaneseq
      %v6440 = vshrl.u32 %v6439, 7
      %v6441 = vsub.s32 0, %v6440
      %v6442 = vrot.slane %v6391, %v6441
      %v6443 = vlaneseq
      %v6444 = vshrl.u32 %v6443, 7
      %v6445 = vsub.s32 0, %v6444
      %v6446 = vrot.slane %v6399, %v6445
      %v6447 = vlaneseq
      %v6448 = vshrl.u32 %v6447, 7
      %v6449 = vsub.s32 0, %v6448
      %v6450 = vrot.slane %v6401, %v6449
      %v6451 = vlaneseq
      %v6452 = vshrl.u32 %v6451, 7
      %v6453 = vsub.s32 0, %v6452
      %v6454 = vrot.slane %v6384, %v6453
      %v6455 = vlaneseq
      %v6456 = vshrl.u32 %v6455, 7
      %v6457 = vsub.s32 0, %v6456
      %v6458 = vrot.slane %v6398, %v6457
      %v6459 = vlaneseq
      %v6460 = vshrl.u32 %v6459, 7
      %v6461 = vsub.s32 0, %v6460
      %v6462 = vrot.slane %v6400, %v6461
      %v6463 = vlaneseq
      %v6464 = vshrl.u32 %v6463, 7
      %v6465 = vsub.s32 0, %v6464
      %v6466 = vrot.slane %v6402, %v6465
      %v6483 = vadd.f32 %v6271, %v6406
      %v6484 = vadd.f32 %v6272, %v6406
      %v6485 = vadd.f32 %v6273, %v6410
      %v6486 = vadd.f32 %v6274, %v6410
      %v6487 = vadd.f32 %v6275, %v6414
      %v6488 = vadd.f32 %v6276, %v6414
      %v6489 = vadd.f32 %v6277, %v6418
      %v6490 = vadd.f32 %v6278, %v6418
      %v6491 = vadd.f32 %v6279, %v6422
      %v6492 = vadd.f32 %v6280, %v6422
      %v6493 = vadd.f32 %v6281, %v6426
      %v6494 = vadd.f32 %v6282, %v6426
      %v6495 = vadd.f32 %v6283, %v6430
      %v6496 = vadd.f32 %v6284, %v6430
      %v6497 = vadd.f32 %v6285, %v6434
      %v6498 = vadd.f32 %v6286, %v6434
      %v6499 = vadd.f32 %v6287, %v6438
      %v6500 = vadd.f32 %v6288, %v6438
      %v6501 = vadd.f32 %v6289, %v6442
      %v6502 = vadd.f32 %v6290, %v6442
      %v6503 = vadd.f32 %v6291, %v6446
      %v6504 = vadd.f32 %v6292, %v6446
      %v6505 = vadd.f32 %v6293, %v6450
      %v6506 = vadd.f32 %v6294, %v6450
      %v6507 = vadd.f32 %v6295, %v6454
      %v6508 = vadd.f32 %v6296, %v6454
      %v6509 = vadd.f32 %v6297, %v6458
      %v6510 = vadd.f32 %v6298, %v6458
      %v6511 = vadd.f32 %v6299, %v6462
      %v6512 = vadd.f32 %v6300, %v6462
      %v6513 = vadd.f32 %v6301, %v6466
      %v6514 = vadd.f32 %v6302, %v6466
      %v6515 = vadd.f32 %v6483, %v1942
      %v6516 = vadd.f32 %v6484, %v1943
      %v6517 = vadd.f32 %v6485, %v1942
      %v6518 = vadd.f32 %v6486, %v1943
      %v6519 = vadd.f32 %v6487, %v1942
      %v6520 = vadd.f32 %v6488, %v1943
      %v6521 = vadd.f32 %v6489, %v1942
      %v6522 = vadd.f32 %v6490, %v1943
      %v6523 = vadd.f32 %v6491, %v1942
      %v6524 = vadd.f32 %v6492, %v1943
      %v6525 = vadd.f32 %v6493, %v1942
      %v6526 = vadd.f32 %v6494, %v1943
      %v6527 = vadd.f32 %v6495, %v1942
      %v6528 = vadd.f32 %v6496, %v1943
      %v6529 = vadd.f32 %v6497, %v1942
      %v6530 = vadd.f32 %v6498, %v1943
      %v6531 = vadd.f32 %v6499, %v1942
      %v6532 = vadd.f32 %v6500, %v1943
      %v6533 = vadd.f32 %v6501, %v1942
      %v6534 = vadd.f32 %v6502, %v1943
      %v6535 = vadd.f32 %v6503, %v1942
      %v6536 = vadd.f32 %v6504, %v1943
      %v6537 = vadd.f32 %v6505, %v1942
      %v6538 = vadd.f32 %v6506, %v1943
      %v6539 = vadd.f32 %v6507, %v1942
      %v6540 = vadd.f32 %v6508, %v1943
      %v6541 = vadd.f32 %v6509, %v1942
      %v6542 = vadd.f32 %v6510, %v1943
      %v6543 = vadd.f32 %v6511, %v1942
      %v6544 = vadd.f32 %v6512, %v1943
      %v6545 = vadd.f32 %v6513, %v1942
      %v6546 = vadd.f32 %v6514, %v1943
      %v6547 = vmul.f32 %v2243, %v6515
      %v6548 = vmul.f32 %v2246, %v6516
      %v6549 = vmul.f32 %v2251, %v6517
      %v6550 = vmul.f32 %v2254, %v6518
      %v6551 = vmul.f32 %v2259, %v6519
      %v6552 = vmul.f32 %v2262, %v6520
      %v6553 = vmul.f32 %v2267, %v6521
      %v6554 = vmul.f32 %v2270, %v6522
      %v6555 = vmul.f32 %v2275, %v6523
      %v6556 = vmul.f32 %v2278, %v6524
      %v6557 = vmul.f32 %v2283, %v6525
      %v6558 = vmul.f32 %v2286, %v6526
      %v6559 = vmul.f32 %v2291, %v6527
      %v6560 = vmul.f32 %v2294, %v6528
      %v6561 = vmul.f32 %v2299, %v6529
      %v6562 = vmul.f32 %v2302, %v6530
      %v6563 = vmul.f32 %v2307, %v6531
      %v6564 = vmul.f32 %v2310, %v6532
      %v6565 = vmul.f32 %v2315, %v6533
      %v6566 = vmul.f32 %v2318, %v6534
      %v6567 = vmul.f32 %v2323, %v6535
      %v6568 = vmul.f32 %v2326, %v6536
      %v6569 = vmul.f32 %v2331, %v6537
      %v6570 = vmul.f32 %v2334, %v6538
      %v6571 = vmul.f32 %v2339, %v6539
      %v6572 = vmul.f32 %v2342, %v6540
      %v6573 = vmul.f32 %v2347, %v6541
      %v6574 = vmul.f32 %v2350, %v6542
      %v6575 = vmul.f32 %v2355, %v6543
      %v6576 = vmul.f32 %v2358, %v6544
      %v6577 = vmul.f32 %v2363, %v6545
      %v6578 = vmul.f32 %v2366, %v6546
      %6579 = vst.msk [vmem:[%s305] sm:$0xff] %vm1142, %v6547
      %6580 = vst.msk [vmem:[%s305 + $0x8] sm:$0xff] %vm1142, %v6548
      %6581 = vst.msk [vmem:[%s305 + $0x10] sm:$0xff] %vm1142, %v6549
      %6582 = vst.msk [vmem:[%s305 + $0x18] sm:$0xff] %vm1142, %v6550
      %6583 = vst.msk [vmem:[%s305 + $0x20] sm:$0xff] %vm1142, %v6551
      %6584 = vst.msk [vmem:[%s305 + $0x28] sm:$0xff] %vm1142, %v6552
      %6585 = vst.msk [vmem:[%s305 + $0x30] sm:$0xff] %vm1142, %v6553
      %6586 = vst.msk [vmem:[%s305 + $0x38] sm:$0xff] %vm1142, %v6554
      %6587 = vst.msk [vmem:[%s305 + $0x40] sm:$0xff] %vm1142, %v6555
      %6588 = vst.msk [vmem:[%s305 + $0x48] sm:$0xff] %vm1142, %v6556
      %6589 = vst.msk [vmem:[%s305 + $0x50] sm:$0xff] %vm1142, %v6557
      %6590 = vst.msk [vmem:[%s305 + $0x58] sm:$0xff] %vm1142, %v6558
      %6591 = vst.msk [vmem:[%s305 + $0x60] sm:$0xff] %vm1142, %v6559
      %6592 = vst.msk [vmem:[%s305 + $0x68] sm:$0xff] %vm1142, %v6560
      %6593 = vst.msk [vmem:[%s305 + $0x70] sm:$0xff] %vm1142, %v6561
      %6594 = vst.msk [vmem:[%s305 + $0x78] sm:$0xff] %vm1142, %v6562
      %6595 = vst.msk [vmem:[%s305 + $0x80] sm:$0xff] %vm1142, %v6563
      %6596 = vst.msk [vmem:[%s305 + $0x88] sm:$0xff] %vm1142, %v6564
      %6597 = vst.msk [vmem:[%s305 + $0x90] sm:$0xff] %vm1142, %v6565
      %6598 = vst.msk [vmem:[%s305 + $0x98] sm:$0xff] %vm1142, %v6566
      %6599 = vst.msk [vmem:[%s305 + $0xa0] sm:$0xff] %vm1142, %v6567
      %6600 = vst.msk [vmem:[%s305 + $0xa8] sm:$0xff] %vm1142, %v6568
      %6601 = vst.msk [vmem:[%s305 + $0xb0] sm:$0xff] %vm1142, %v6569
      %6602 = vst.msk [vmem:[%s305 + $0xb8] sm:$0xff] %vm1142, %v6570
      %6603 = vst.msk [vmem:[%s305 + $0xc0] sm:$0xff] %vm1142, %v6571
      %6604 = vst.msk [vmem:[%s305 + $0xc8] sm:$0xff] %vm1142, %v6572
      %6605 = vst.msk [vmem:[%s305 + $0xd0] sm:$0xff] %vm1142, %v6573
      %6606 = vst.msk [vmem:[%s305 + $0xd8] sm:$0xff] %vm1142, %v6574
      %6607 = vst.msk [vmem:[%s305 + $0xe0] sm:$0xff] %vm1142, %v6575
      %6608 = vst.msk [vmem:[%s305 + $0xe8] sm:$0xff] %vm1142, %v6576
      %6609 = vst.msk [vmem:[%s305 + $0xf0] sm:$0xff] %vm1142, %v6577
      %6610 = vst.msk [vmem:[%s305 + $0xf8] sm:$0xff] %vm1142, %v6578
      %p6611 = scmp.lt.s32.totalorder %s19, 1
      %s6612 = scalar_select %p6611, %s19, 1
      %s6613 = smul.addr %s6612, 32
      %s6614 = smul.addr %s6613, 8
      %s6615 = scalar_lea.vmem %s8, %s6614
      // Predicated region
      $region53: #{cnb1lock_forward.1} parent=51 // pred_check
        %p6616 = pneg %p210
      $region54: #{cnb1lock_forward.1} parent=51 // pred_check_branch
        %6618 = sbr.rel (%p6616) target = $region56
      $region55: #{cnb1lock_forward.1} parent=51 // pred_region
        _
      $region56: #{cnb1lock_forward.1} parent=51 // pred_fallthru
        _
    $region52: #{cnb1lock_forward.1} parent=5 // pred_fallthru
      _
    %p6619 = scmp.le.s32.totalorder 2, %s14
    // Predicated region
    $region57: #{cnb1lock_forward.1} parent=5 // pred_check
      %p6620 = pneg %p6619
    $region58: #{cnb1lock_forward.1} parent=5 // pred_check_branch
      %6622 = sbr.rel (%p6620) target = $region60
    $region59: #{cnb1lock_forward.1} parent=5 // pred_region
      %s6623 = ssub.s32 %s14, 2
      // Predicated region
      $region61: #{cnb1lock_forward.1} parent=59 // pred_check
        %p6624 = pneg %p216
      $region62: #{cnb1lock_forward.1} parent=59 // pred_check_branch
        %6626 = sbr.rel (%p6624) target = $region64
      $region63: #{cnb1lock_forward.1} parent=59 // pred_region
        %p6627 = scmp.lt.s32.totalorder %s20, 1
        %s6628 = scalar_select %p6627, %s20, 1
        %s6629 = smul.addr %s6628, 32
        %s6630 = smul.addr %s6629, 8
        %s6631 = scalar_lea.vmem %s8, %s6630
      $region64: #{cnb1lock_forward.1} parent=59 // pred_fallthru
        _
    $region60: #{cnb1lock_forward.1} parent=5 // pred_fallthru
      _
  $region6: #{cnb1lock_forward.1} parent=0 // loop_footer
    %s18 = sadd.s32 1, %s14
  $region7: #{cnb1lock_forward.1} parent=0 // loop_footer_branch
    %13 = sbr.rel target = $region3
  $region8: #{cnb1lock_forward.1} parent=0 // loop_exit
    _

</llo_original>
